<compile_context>
chip_gen: v5e
topology: v5e:2x2
jax: 0.10.0
libtpu: 0.0.40
codegen_flags: <defaults>
</compile_context>

<pallas_src>
import functools

import jax
import jax.numpy as jnp
from jax.experimental import pallas as pl
from jax.experimental.pallas import tpu as pltpu


# ---------------------------------------------------------------------------
# In-kernel helper: 3x3 conv (+ folded BN bias) + SiLU on an explicit window
# ---------------------------------------------------------------------------
def _conv3x3_bias_silu(win_f32, w9_bf16, bias_f32):
    """win_f32: (Hw, Ww, C); w9_bf16: (9, C, Co), tap index = kh*3+kw; bias_f32: (1, Co).

    Returns SiLU(conv3x3(win) + bias) with shape (Hw-2, Ww-2, Co), f32.
    """
    Hw, Ww, C = win_f32.shape
    Ho, Wo = Hw - 2, Ww - 2
    Co = w9_bf16.shape[-1]
    win_bf = win_f32.astype(jnp.bfloat16)            # bf16 MXU inputs, f32 accumulation
    acc = jnp.zeros((Ho * Wo, Co), jnp.float32)
    for kh in range(3):
        rows = win_bf[kh:kh + Ho]                    # (Ho, Ww, C) static row shift
        for kw in range(3):
            patch = rows[:, kw:kw + Wo, :].reshape(Ho * Wo, C)
            acc = acc + jnp.dot(patch, w9_bf16[kh * 3 + kw],
                                preferred_element_type=jnp.float32)
    acc = acc + bias_f32                             # (1, Co) broadcast over rows
    acc = acc * jax.nn.sigmoid(acc)                  # SiLU
    return acc.reshape(Ho, Wo, Co)


# ---------------------------------------------------------------------------
# Tile-size heuristic (budget-bounded so tiles also fit v7x's smaller VMEM)
# ---------------------------------------------------------------------------
def _pick_tile_h(H, W, C, budget_bytes=4 * 1024 * 1024):
    """Largest even divisor of H whose fused-tile f32 working set fits the budget."""
    best = 0
    for th in range(2, H + 1, 2):
        if H % th:
            continue
        # rough f32 working set: double-buffered main in/out tile, halo window, h, tap patches
        tile_bytes = 4 * C * (4 * th * W + 3 * (th + 4) * (W + 4) + 2 * (th + 2) * (W + 2))
        if tile_bytes <= budget_bytes:
            best = th
    if best == 0:
        best = 2 if H % 2 == 0 else H   # TODO(synk): odd H needs a different halo scheme
    return best


# ---------------------------------------------------------------------------
# Fused ResNet block: conv1+BN+SiLU -> conv2+BN+SiLU -> +residual, one pallas_call
# ---------------------------------------------------------------------------
def resnet_block_pallas(x_nhwc, w1_bf, b1, w2_bf, b2, tile_h=None):
    N, H, W, C = x_nhwc.shape
    TH = _pick_tile_h(H, W, C) if tile_h is None else tile_h
    # TODO(synk): generalize halo plumbing to H odd / not divisible by tile_h (manual-DMA halo).
    assert H % TH == 0 and TH % 2 == 0, "tile_h must divide H and be even"
    num_h = H // TH
    hb = TH // 2                                     # head/tail blocks are 2 rows tall

    def kernel(xh_ref, xm_ref, xt_ref, w1_ref, b1_ref, w2_ref, b2_ref, o_ref):
        i = pl.program_id(1)
        nh = pl.num_programs(1)
        f32 = jnp.float32

        main = xm_ref[0].astype(f32)                                   # (TH, W, C)
        # 2-row halos above/below; the clamped neighbour blocks are garbage at the image
        # boundary, so replace them with zeros (== conv1's zero padding).
        top = jnp.where(i > 0, xh_ref[0].astype(f32), 0.0)             # (2, W, C)
        bot = jnp.where(i < nh - 1, xt_ref[0].astype(f32), 0.0)        # (2, W, C)
        xrows = jnp.concatenate([top, main, bot], axis=0)              # (TH+4, W, C)
        # 2-column zero halo built in VMEM (no padded HBM copy needed).
        zcol = jnp.zeros((TH + 4, 2, C), f32)
        xwin = jnp.concatenate([zcol, xrows, zcol], axis=1)            # (TH+4, W+4, C)

        # conv1 (+folded BN) + SiLU, evaluated with a 1-px halo: (TH+2, W+2, C)
        h = _conv3x3_bias_silu(xwin, w1_ref[...], b1_ref[...])

        # conv2 sees h zero-padded by 1 in the original module -> zero the halo positions of h
        # that fall outside the image (they are NOT conv1 evaluated out of range).
        row0 = i * TH - 1                                              # image row of h[0]
        r_idx = jax.lax.broadcasted_iota(jnp.int32, h.shape, 0) + row0
        c_idx = jax.lax.broadcasted_iota(jnp.int32, h.shape, 1) - 1
        valid = (r_idx >= 0) & (r_idx < H) & (c_idx >= 0) & (c_idx < W)
        h = jnp.where(valid, h, 0.0)

        # conv2 (+folded BN) + SiLU: (TH, W, C); intermediate h never touched HBM.
        y = _conv3x3_bias_silu(h, w2_ref[...], b2_ref[...])

        # residual add straight from the already-loaded main block (no extra input stream)
        o_ref[0] = (main + y).astype(o_ref.dtype)

    return pl.pallas_call(
        kernel,
        out_shape=jax.ShapeDtypeStruct((N, H, W, C), x_nhwc.dtype),
        grid=(N, num_h),
        in_specs=[
            # 2-row halo above this tile (clamped to the first 2 rows at the top boundary)
            pl.BlockSpec((1, 2, W, C),
                         lambda n, i: (n, jnp.maximum(i * hb - 1, 0), 0, 0)),
            # main TH rows of this tile (also serves as the residual)
            pl.BlockSpec((1, TH, W, C), lambda n, i: (n, i, 0, 0)),
            # 2-row halo below this tile (clamped to the last 2 rows at the bottom boundary)
            pl.BlockSpec((1, 2, W, C),
                         lambda n, i: (n, jnp.minimum((i + 1) * hb, H // 2 - 1), 0, 0)),
            # weights / biases: constant index_map -> loaded once, VMEM-resident
            pl.BlockSpec((9, C, C), lambda n, i: (0, 0, 0)),
            pl.BlockSpec((1, C), lambda n, i: (0, 0)),
            pl.BlockSpec((9, C, C), lambda n, i: (0, 0, 0)),
            pl.BlockSpec((1, C), lambda n, i: (0, 0)),
        ],
        out_specs=pl.BlockSpec((1, TH, W, C), lambda n, i: (n, i, 0, 0)),
        compiler_params=pltpu.CompilerParams(
            dimension_semantics=("parallel", "parallel"),
            vmem_limit_bytes=32 * 1024 * 1024,
        ),
    )(x_nhwc, x_nhwc, x_nhwc, w1_bf, b1, w2_bf, b2)


# ---------------------------------------------------------------------------
# Parameter setup (deterministic, BN folded into conv weight/bias)
# ---------------------------------------------------------------------------
def make_conv_params(key, c, eps=1e-3):
    # eps=1e-3 matches the ultralytics-style Conv's BatchNorm2d; plain torch default is 1e-5.
    kw_, _ = jax.random.split(key)
    # conv weight in (kh, kw, ci, co) layout (== transpose of PyTorch (co, ci, kh, kw))
    w = jax.random.normal(kw_, (3, 3, c, c), jnp.float32) * 0.1
    # deterministic BatchNorm2d params (eval mode)
    gamma = 1.0 + 0.05 * jnp.arange(c, dtype=jnp.float32)
    beta = 0.01 * jnp.arange(c, dtype=jnp.float32)
    running_mean = 0.02 * jnp.arange(c, dtype=jnp.float32)
    running_var = 1.0 + 0.03 * jnp.arange(c, dtype=jnp.float32)
    scale = gamma / jnp.sqrt(running_var + eps)           # per output channel
    w_folded = w * scale[None, None, None, :]
    b_folded = beta - running_mean * scale
    return w_folded.reshape(9, c, c), b_folded.reshape(1, c)


# ---------------------------------------------------------------------------
# Full CBL_n forward (NCHW in/out): n//2 applications of the shared ResNet block
# ---------------------------------------------------------------------------
@functools.partial(jax.jit, static_argnames=("n", "tile_h"))
def cbl_n_forward(x_nchw, w1, b1, w2, b2, *, n=2, tile_h=None):
    reps = max(1, n // 2)                                 # CBL_n applies self.res n//2 times
    w1_bf = w1.astype(jnp.bfloat16)                       # bf16 weights: native MXU fast path
    w2_bf = w2.astype(jnp.bfloat16)
    o = jnp.transpose(x_nchw, (0, 2, 3, 1))               # NCHW -> NHWC
    for _ in range(reps):
        o = resnet_block_pallas(o, w1_bf, b1, w2_bf, b2, tile_h=tile_h)
    return jnp.transpose(o, (0, 3, 1, 2))                 # NHWC -> NCHW


# ---------------------------------------------------------------------------
# Pure-JAX reference (same bf16-input / f32-accumulate numerics as the kernel)
# ---------------------------------------------------------------------------
def _ref_conv_silu(x_nhwc, w9, b2):
    ci = x_nhwc.shape[-1]
    co = w9.shape[-1]
    w = w9.astype(jnp.bfloat16).reshape(3, 3, ci, co)     # HWIO
    y = jax.lax.conv_general_dilated(
        x_nhwc.astype(jnp.bfloat16), w,
        window_strides=(1, 1), padding=((1, 1), (1, 1)),
        dimension_numbers=("NHWC", "HWIO", "NHWC"),
        preferred_element_type=jnp.float32)
    y = y + b2.reshape(1, 1, 1, co)
    return y * jax.nn.sigmoid(y)


def cbl_n_reference(x_nchw, w1, b1, w2, b2, *, n=2):
    reps = max(1, n // 2)
    o = jnp.transpose(x_nchw, (0, 2, 3, 1))
    for _ in range(reps):
        h = _ref_conv_silu(o, w1, b1)
        o = o + _ref_conv_silu(h, w2, b2)
    return jnp.transpose(o, (0, 3, 1, 2))


# ---------------------------------------------------------------------------
if __name__ == "__main__":
    key = jax.random.PRNGKey(0)
    kx, k1, k2 = jax.random.split(key, 3)

    N, C, H, W = 2, 4, 16, 16
    n_cbl = 4                      # CBL_n(c=4, n=4) -> n // 2 = 2 ResNet applications
    x = jax.random.normal(kx, (N, C, H, W), jnp.float32)

    w1, b1 = make_conv_params(k1, C)
    w2, b2 = make_conv_params(k2, C)

    # tile_h=8 -> grid (N=2, H/TH=2): exercises the interior halo AND both image boundaries.
    out = cbl_n_forward(x, w1, b1, w2, b2, n=n_cbl, tile_h=8)
    out = jax.block_until_ready(out)

    ref = cbl_n_reference(x, w1, b1, w2, b2, n=n_cbl)
    assert out.shape == (N, C, H, W)
    assert jnp.allclose(out, ref, atol=2e-2, rtol=2e-2), "mismatch vs reference"

    print("KERNEL_OK")
</pallas_src>

<mosaic_0001>
module attributes {stable_mosaic.version = 11 : i64} {
  func.func @kernel(%arg0: i32, %arg1: i32, %arg2: memref<1x2x16x4xf32, #tpu.memory_space<vmem>>, %arg3: memref<1x8x16x4xf32, #tpu.memory_space<vmem>>, %arg4: memref<1x2x16x4xf32, #tpu.memory_space<vmem>>, %arg5: memref<9x4x4xbf16, #tpu.memory_space<vmem>>, %arg6: memref<1x4xf32, #tpu.memory_space<vmem>>, %arg7: memref<9x4x4xbf16, #tpu.memory_space<vmem>>, %arg8: memref<1x4xf32, #tpu.memory_space<vmem>>, %arg9: memref<1x8x16x4xf32, #tpu.memory_space<vmem>>) attributes {dimension_semantics = [#tpu.dimension_semantics<parallel>, #tpu.dimension_semantics<parallel>], iteration_bounds = array<i64: 2, 2>, scalar_prefetch = 0 : i64, scratch_operands = 0 : i64, tpu.core_type = #tpu.core_type<tc>, window_params = [{transform_indices = @transform_0, window_bounds = array<i64: 1, 2, 16, 4>}, {transform_indices = @transform_1, window_bounds = array<i64: 1, 8, 16, 4>}, {transform_indices = @transform_2, window_bounds = array<i64: 1, 2, 16, 4>}, {pipeline_mode = #tpu.pipeline_mode<synchronous>, transform_indices = @transform_3, window_bounds = array<i64: 9, 4, 4>}, {pipeline_mode = #tpu.pipeline_mode<synchronous>, transform_indices = @transform_4, window_bounds = array<i64: 1, 4>}, {pipeline_mode = #tpu.pipeline_mode<synchronous>, transform_indices = @transform_5, window_bounds = array<i64: 9, 4, 4>}, {pipeline_mode = #tpu.pipeline_mode<synchronous>, transform_indices = @transform_6, window_bounds = array<i64: 1, 4>}, {transform_indices = @transform_7, window_bounds = array<i64: 1, 8, 16, 4>}]} {
    %c0 = arith.constant 0 : index
    %c0_0 = arith.constant 0 : index
    %c0_1 = arith.constant 0 : index
    %c0_2 = arith.constant 0 : index
    %0 = vector.load %arg3[%c0, %c0_0, %c0_1, %c0_2] : memref<1x8x16x4xf32, #tpu.memory_space<vmem>>, vector<1x8x16x4xf32>
    %1 = vector.shape_cast %0 : vector<1x8x16x4xf32> to vector<8x16x4xf32>
    %c0_i32 = arith.constant 0 : i32
    %2 = arith.cmpi sgt, %arg1, %c0_i32 : i32
    %c0_3 = arith.constant 0 : index
    %c0_4 = arith.constant 0 : index
    %c0_5 = arith.constant 0 : index
    %c0_6 = arith.constant 0 : index
    %3 = vector.load %arg2[%c0_3, %c0_4, %c0_5, %c0_6] : memref<1x2x16x4xf32, #tpu.memory_space<vmem>>, vector<1x2x16x4xf32>
    %4 = vector.shape_cast %3 : vector<1x2x16x4xf32> to vector<2x16x4xf32>
    %cst = arith.constant 0.000000e+00 : f32
    %5 = vector.broadcast %cst : f32 to vector<2x16x4xf32>
    %6 = arith.select %2, %4, %5 : vector<2x16x4xf32>
    %c1_i32 = arith.constant 1 : i32
    %7 = arith.cmpi slt, %arg1, %c1_i32 : i32
    %c0_7 = arith.constant 0 : index
    %c0_8 = arith.constant 0 : index
    %c0_9 = arith.constant 0 : index
    %c0_10 = arith.constant 0 : index
    %8 = vector.load %arg4[%c0_7, %c0_8, %c0_9, %c0_10] : memref<1x2x16x4xf32, #tpu.memory_space<vmem>>, vector<1x2x16x4xf32>
    %9 = vector.shape_cast %8 : vector<1x2x16x4xf32> to vector<2x16x4xf32>
    %cst_11 = arith.constant 0.000000e+00 : f32
    %10 = vector.broadcast %cst_11 : f32 to vector<2x16x4xf32>
    %11 = arith.select %7, %9, %10 : vector<2x16x4xf32>
    %12 = tpu.concatenate %6, %1, %11 in 0 : vector<2x16x4xf32>, vector<8x16x4xf32>, vector<2x16x4xf32> -> vector<12x16x4xf32>
    %cst_12 = arith.constant 0.000000e+00 : f32
    %13 = vector.broadcast %cst_12 : f32 to vector<12x2x4xf32>
    %14 = tpu.concatenate %13, %12, %13 in 1 : vector<12x2x4xf32>, vector<12x16x4xf32>, vector<12x2x4xf32> -> vector<12x20x4xf32>
    %c0_13 = arith.constant 0 : index
    %c0_14 = arith.constant 0 : index
    %c0_15 = arith.constant 0 : index
    %15 = vector.load %arg5[%c0_13, %c0_14, %c0_15] : memref<9x4x4xbf16, #tpu.memory_space<vmem>>, vector<9x4x4xbf16>
    %c0_16 = arith.constant 0 : index
    %c0_17 = arith.constant 0 : index
    %16 = vector.load %arg6[%c0_16, %c0_17] : memref<1x4xf32, #tpu.memory_space<vmem>>, vector<1x4xf32>
    %17 = arith.truncf %14 : vector<12x20x4xf32> to vector<12x20x4xbf16>
    %cst_18 = arith.constant 0.000000e+00 : f32
    %18 = vector.broadcast %cst_18 : f32 to vector<180x4xf32>
    %19 = vector.extract_strided_slice %17 {offsets = [0, 0, 0], sizes = [10, 20, 4], strides = [1, 1, 1]} : vector<12x20x4xbf16> to vector<10x20x4xbf16>
    %20 = vector.extract_strided_slice %19 {offsets = [0, 0, 0], sizes = [10, 18, 4], strides = [1, 1, 1]} : vector<10x20x4xbf16> to vector<10x18x4xbf16>
    %21 = vector.shape_cast %20 : vector<10x18x4xbf16> to vector<180x4xbf16>
    %22 = vector.extract_strided_slice %15 {offsets = [0, 0, 0], sizes = [1, 4, 4], strides = [1, 1, 1]} : vector<9x4x4xbf16> to vector<1x4x4xbf16>
    %23 = vector.shape_cast %22 : vector<1x4x4xbf16> to vector<4x4xbf16>
    %cst_19 = arith.constant dense<0.000000e+00> : vector<180x4xf32>
    %24 = tpu.matmul %21, %23, %cst_19 {dimension_numbers = #tpu.dot_dimension_numbers<[1], [0], [0], [1], [0, 0, 1, 1], [], []>} : vector<180x4xbf16>, vector<4x4xbf16>, vector<180x4xf32> -> vector<180x4xf32>
    %25 = arith.addf %18, %24 : vector<180x4xf32>
    %26 = vector.extract_strided_slice %19 {offsets = [0, 1, 0], sizes = [10, 18, 4], strides = [1, 1, 1]} : vector<10x20x4xbf16> to vector<10x18x4xbf16>
    %27 = vector.shape_cast %26 : vector<10x18x4xbf16> to vector<180x4xbf16>
    %28 = vector.extract_strided_slice %15 {offsets = [1, 0, 0], sizes = [1, 4, 4], strides = [1, 1, 1]} : vector<9x4x4xbf16> to vector<1x4x4xbf16>
    %29 = vector.shape_cast %28 : vector<1x4x4xbf16> to vector<4x4xbf16>
    %cst_20 = arith.constant dense<0.000000e+00> : vector<180x4xf32>
    %30 = tpu.matmul %27, %29, %cst_20 {dimension_numbers = #tpu.dot_dimension_numbers<[1], [0], [0], [1], [0, 0, 1, 1], [], []>} : vector<180x4xbf16>, vector<4x4xbf16>, vector<180x4xf32> -> vector<180x4xf32>
    %31 = arith.addf %25, %30 : vector<180x4xf32>
    %32 = vector.extract_strided_slice %19 {offsets = [0, 2, 0], sizes = [10, 18, 4], strides = [1, 1, 1]} : vector<10x20x4xbf16> to vector<10x18x4xbf16>
    %33 = vector.shape_cast %32 : vector<10x18x4xbf16> to vector<180x4xbf16>
    %34 = vector.extract_strided_slice %15 {offsets = [2, 0, 0], sizes = [1, 4, 4], strides = [1, 1, 1]} : vector<9x4x4xbf16> to vector<1x4x4xbf16>
    %35 = vector.shape_cast %34 : vector<1x4x4xbf16> to vector<4x4xbf16>
    %cst_21 = arith.constant dense<0.000000e+00> : vector<180x4xf32>
    %36 = tpu.matmul %33, %35, %cst_21 {dimension_numbers = #tpu.dot_dimension_numbers<[1], [0], [0], [1], [0, 0, 1, 1], [], []>} : vector<180x4xbf16>, vector<4x4xbf16>, vector<180x4xf32> -> vector<180x4xf32>
    %37 = arith.addf %31, %36 : vector<180x4xf32>
    %38 = vector.extract_strided_slice %17 {offsets = [1, 0, 0], sizes = [10, 20, 4], strides = [1, 1, 1]} : vector<12x20x4xbf16> to vector<10x20x4xbf16>
    %39 = vector.extract_strided_slice %38 {offsets = [0, 0, 0], sizes = [10, 18, 4], strides = [1, 1, 1]} : vector<10x20x4xbf16> to vector<10x18x4xbf16>
    %40 = vector.shape_cast %39 : vector<10x18x4xbf16> to vector<180x4xbf16>
    %41 = vector.extract_strided_slice %15 {offsets = [3, 0, 0], sizes = [1, 4, 4], strides = [1, 1, 1]} : vector<9x4x4xbf16> to vector<1x4x4xbf16>
    %42 = vector.shape_cast %41 : vector<1x4x4xbf16> to vector<4x4xbf16>
    %cst_22 = arith.constant dense<0.000000e+00> : vector<180x4xf32>
    %43 = tpu.matmul %40, %42, %cst_22 {dimension_numbers = #tpu.dot_dimension_numbers<[1], [0], [0], [1], [0, 0, 1, 1], [], []>} : vector<180x4xbf16>, vector<4x4xbf16>, vector<180x4xf32> -> vector<180x4xf32>
    %44 = arith.addf %37, %43 : vector<180x4xf32>
    %45 = vector.extract_strided_slice %38 {offsets = [0, 1, 0], sizes = [10, 18, 4], strides = [1, 1, 1]} : vector<10x20x4xbf16> to vector<10x18x4xbf16>
    %46 = vector.shape_cast %45 : vector<10x18x4xbf16> to vector<180x4xbf16>
    %47 = vector.extract_strided_slice %15 {offsets = [4, 0, 0], sizes = [1, 4, 4], strides = [1, 1, 1]} : vector<9x4x4xbf16> to vector<1x4x4xbf16>
    %48 = vector.shape_cast %47 : vector<1x4x4xbf16> to vector<4x4xbf16>
    %cst_23 = arith.constant dense<0.000000e+00> : vector<180x4xf32>
    %49 = tpu.matmul %46, %48, %cst_23 {dimension_numbers = #tpu.dot_dimension_numbers<[1], [0], [0], [1], [0, 0, 1, 1], [], []>} : vector<180x4xbf16>, vector<4x4xbf16>, vector<180x4xf32> -> vector<180x4xf32>
    %50 = arith.addf %44, %49 : vector<180x4xf32>
    %51 = vector.extract_strided_slice %38 {offsets = [0, 2, 0], sizes = [10, 18, 4], strides = [1, 1, 1]} : vector<10x20x4xbf16> to vector<10x18x4xbf16>
    %52 = vector.shape_cast %51 : vector<10x18x4xbf16> to vector<180x4xbf16>
    %53 = vector.extract_strided_slice %15 {offsets = [5, 0, 0], sizes = [1, 4, 4], strides = [1, 1, 1]} : vector<9x4x4xbf16> to vector<1x4x4xbf16>
    %54 = vector.shape_cast %53 : vector<1x4x4xbf16> to vector<4x4xbf16>
    %cst_24 = arith.constant dense<0.000000e+00> : vector<180x4xf32>
    %55 = tpu.matmul %52, %54, %cst_24 {dimension_numbers = #tpu.dot_dimension_numbers<[1], [0], [0], [1], [0, 0, 1, 1], [], []>} : vector<180x4xbf16>, vector<4x4xbf16>, vector<180x4xf32> -> vector<180x4xf32>
    %56 = arith.addf %50, %55 : vector<180x4xf32>
    %57 = vector.extract_strided_slice %17 {offsets = [2, 0, 0], sizes = [10, 20, 4], strides = [1, 1, 1]} : vector<12x20x4xbf16> to vector<10x20x4xbf16>
    %58 = vector.extract_strided_slice %57 {offsets = [0, 0, 0], sizes = [10, 18, 4], strides = [1, 1, 1]} : vector<10x20x4xbf16> to vector<10x18x4xbf16>
    %59 = vector.shape_cast %58 : vector<10x18x4xbf16> to vector<180x4xbf16>
    %60 = vector.extract_strided_slice %15 {offsets = [6, 0, 0], sizes = [1, 4, 4], strides = [1, 1, 1]} : vector<9x4x4xbf16> to vector<1x4x4xbf16>
    %61 = vector.shape_cast %60 : vector<1x4x4xbf16> to vector<4x4xbf16>
    %cst_25 = arith.constant dense<0.000000e+00> : vector<180x4xf32>
    %62 = tpu.matmul %59, %61, %cst_25 {dimension_numbers = #tpu.dot_dimension_numbers<[1], [0], [0], [1], [0, 0, 1, 1], [], []>} : vector<180x4xbf16>, vector<4x4xbf16>, vector<180x4xf32> -> vector<180x4xf32>
    %63 = arith.addf %56, %62 : vector<180x4xf32>
    %64 = vector.extract_strided_slice %57 {offsets = [0, 1, 0], sizes = [10, 18, 4], strides = [1, 1, 1]} : vector<10x20x4xbf16> to vector<10x18x4xbf16>
    %65 = vector.shape_cast %64 : vector<10x18x4xbf16> to vector<180x4xbf16>
    %66 = vector.extract_strided_slice %15 {offsets = [7, 0, 0], sizes = [1, 4, 4], strides = [1, 1, 1]} : vector<9x4x4xbf16> to vector<1x4x4xbf16>
    %67 = vector.shape_cast %66 : vector<1x4x4xbf16> to vector<4x4xbf16>
    %cst_26 = arith.constant dense<0.000000e+00> : vector<180x4xf32>
    %68 = tpu.matmul %65, %67, %cst_26 {dimension_numbers = #tpu.dot_dimension_numbers<[1], [0], [0], [1], [0, 0, 1, 1], [], []>} : vector<180x4xbf16>, vector<4x4xbf16>, vector<180x4xf32> -> vector<180x4xf32>
    %69 = arith.addf %63, %68 : vector<180x4xf32>
    %70 = vector.extract_strided_slice %57 {offsets = [0, 2, 0], sizes = [10, 18, 4], strides = [1, 1, 1]} : vector<10x20x4xbf16> to vector<10x18x4xbf16>
    %71 = vector.shape_cast %70 : vector<10x18x4xbf16> to vector<180x4xbf16>
    %72 = vector.extract_strided_slice %15 {offsets = [8, 0, 0], sizes = [1, 4, 4], strides = [1, 1, 1]} : vector<9x4x4xbf16> to vector<1x4x4xbf16>
    %73 = vector.shape_cast %72 : vector<1x4x4xbf16> to vector<4x4xbf16>
    %cst_27 = arith.constant dense<0.000000e+00> : vector<180x4xf32>
    %74 = tpu.matmul %71, %73, %cst_27 {dimension_numbers = #tpu.dot_dimension_numbers<[1], [0], [0], [1], [0, 0, 1, 1], [], []>} : vector<180x4xbf16>, vector<4x4xbf16>, vector<180x4xf32> -> vector<180x4xf32>
    %75 = arith.addf %69, %74 : vector<180x4xf32>
    %76 = vector.broadcast %16 : vector<1x4xf32> to vector<180x4xf32>
    %77 = arith.addf %75, %76 : vector<180x4xf32>
    %78 = arith.negf %77 : vector<180x4xf32>
    %79 = math.exp %78 : vector<180x4xf32>
    %cst_28 = arith.constant 1.000000e+00 : f32
    %80 = vector.broadcast %cst_28 : f32 to vector<180x4xf32>
    %81 = arith.addf %80, %79 : vector<180x4xf32>
    %82 = arith.divf %80, %81 : vector<180x4xf32>
    %83 = arith.mulf %77, %82 : vector<180x4xf32>
    %84 = vector.shape_cast %83 : vector<180x4xf32> to vector<10x18x4xf32>
    %c8_i32 = arith.constant 8 : i32
    %85 = arith.muli %arg1, %c8_i32 : i32
    %c1_i32_29 = arith.constant 1 : i32
    %86 = arith.subi %85, %c1_i32_29 : i32
    %87 = tpu.iota {dimensions = array<i32: 0>} : vector<10x18x4xi32>
    %88 = vector.broadcast %86 : i32 to vector<10x18x4xi32>
    %89 = arith.addi %87, %88 : vector<10x18x4xi32>
    %90 = tpu.iota {dimensions = array<i32: 1>} : vector<10x18x4xi32>
    %c1_i32_30 = arith.constant 1 : i32
    %91 = vector.broadcast %c1_i32_30 : i32 to vector<10x18x4xi32>
    %92 = arith.subi %90, %91 : vector<10x18x4xi32>
    %c0_i32_31 = arith.constant 0 : i32
    %93 = vector.broadcast %c0_i32_31 : i32 to vector<10x18x4xi32>
    %94 = arith.cmpi sge, %89, %93 : vector<10x18x4xi32>
    %c16_i32 = arith.constant 16 : i32
    %95 = vector.broadcast %c16_i32 : i32 to vector<10x18x4xi32>
    %96 = arith.cmpi slt, %89, %95 : vector<10x18x4xi32>
    %97 = arith.andi %94, %96 : vector<10x18x4xi1>
    %c0_i32_32 = arith.constant 0 : i32
    %98 = vector.broadcast %c0_i32_32 : i32 to vector<10x18x4xi32>
    %99 = arith.cmpi sge, %92, %98 : vector<10x18x4xi32>
    %100 = arith.andi %97, %99 : vector<10x18x4xi1>
    %c16_i32_33 = arith.constant 16 : i32
    %101 = vector.broadcast %c16_i32_33 : i32 to vector<10x18x4xi32>
    %102 = arith.cmpi slt, %92, %101 : vector<10x18x4xi32>
    %103 = arith.andi %100, %102 : vector<10x18x4xi1>
    %cst_34 = arith.constant 0.000000e+00 : f32
    %104 = vector.broadcast %cst_34 : f32 to vector<10x18x4xf32>
    %105 = arith.select %103, %84, %104 : vector<10x18x4xi1>, vector<10x18x4xf32>
    %c0_35 = arith.constant 0 : index
    %c0_36 = arith.constant 0 : index
    %c0_37 = arith.constant 0 : index
    %106 = vector.load %arg7[%c0_35, %c0_36, %c0_37] : memref<9x4x4xbf16, #tpu.memory_space<vmem>>, vector<9x4x4xbf16>
    %c0_38 = arith.constant 0 : index
    %c0_39 = arith.constant 0 : index
    %107 = vector.load %arg8[%c0_38, %c0_39] : memref<1x4xf32, #tpu.memory_space<vmem>>, vector<1x4xf32>
    %108 = arith.truncf %105 : vector<10x18x4xf32> to vector<10x18x4xbf16>
    %cst_40 = arith.constant 0.000000e+00 : f32
    %109 = vector.broadcast %cst_40 : f32 to vector<128x4xf32>
    %110 = vector.extract_strided_slice %108 {offsets = [0, 0, 0], sizes = [8, 18, 4], strides = [1, 1, 1]} : vector<10x18x4xbf16> to vector<8x18x4xbf16>
    %111 = vector.extract_strided_slice %110 {offsets = [0, 0, 0], sizes = [8, 16, 4], strides = [1, 1, 1]} : vector<8x18x4xbf16> to vector<8x16x4xbf16>
    %112 = vector.shape_cast %111 : vector<8x16x4xbf16> to vector<128x4xbf16>
    %113 = vector.extract_strided_slice %106 {offsets = [0, 0, 0], sizes = [1, 4, 4], strides = [1, 1, 1]} : vector<9x4x4xbf16> to vector<1x4x4xbf16>
    %114 = vector.shape_cast %113 : vector<1x4x4xbf16> to vector<4x4xbf16>
    %cst_41 = arith.constant dense<0.000000e+00> : vector<128x4xf32>
    %115 = tpu.matmul %112, %114, %cst_41 {dimension_numbers = #tpu.dot_dimension_numbers<[1], [0], [0], [1], [0, 0, 1, 1], [], []>} : vector<128x4xbf16>, vector<4x4xbf16>, vector<128x4xf32> -> vector<128x4xf32>
    %116 = arith.addf %109, %115 : vector<128x4xf32>
    %117 = vector.extract_strided_slice %110 {offsets = [0, 1, 0], sizes = [8, 16, 4], strides = [1, 1, 1]} : vector<8x18x4xbf16> to vector<8x16x4xbf16>
    %118 = vector.shape_cast %117 : vector<8x16x4xbf16> to vector<128x4xbf16>
    %119 = vector.extract_strided_slice %106 {offsets = [1, 0, 0], sizes = [1, 4, 4], strides = [1, 1, 1]} : vector<9x4x4xbf16> to vector<1x4x4xbf16>
    %120 = vector.shape_cast %119 : vector<1x4x4xbf16> to vector<4x4xbf16>
    %cst_42 = arith.constant dense<0.000000e+00> : vector<128x4xf32>
    %121 = tpu.matmul %118, %120, %cst_42 {dimension_numbers = #tpu.dot_dimension_numbers<[1], [0], [0], [1], [0, 0, 1, 1], [], []>} : vector<128x4xbf16>, vector<4x4xbf16>, vector<128x4xf32> -> vector<128x4xf32>
    %122 = arith.addf %116, %121 : vector<128x4xf32>
    %123 = vector.extract_strided_slice %110 {offsets = [0, 2, 0], sizes = [8, 16, 4], strides = [1, 1, 1]} : vector<8x18x4xbf16> to vector<8x16x4xbf16>
    %124 = vector.shape_cast %123 : vector<8x16x4xbf16> to vector<128x4xbf16>
    %125 = vector.extract_strided_slice %106 {offsets = [2, 0, 0], sizes = [1, 4, 4], strides = [1, 1, 1]} : vector<9x4x4xbf16> to vector<1x4x4xbf16>
    %126 = vector.shape_cast %125 : vector<1x4x4xbf16> to vector<4x4xbf16>
    %cst_43 = arith.constant dense<0.000000e+00> : vector<128x4xf32>
    %127 = tpu.matmul %124, %126, %cst_43 {dimension_numbers = #tpu.dot_dimension_numbers<[1], [0], [0], [1], [0, 0, 1, 1], [], []>} : vector<128x4xbf16>, vector<4x4xbf16>, vector<128x4xf32> -> vector<128x4xf32>
    %128 = arith.addf %122, %127 : vector<128x4xf32>
    %129 = vector.extract_strided_slice %108 {offsets = [1, 0, 0], sizes = [8, 18, 4], strides = [1, 1, 1]} : vector<10x18x4xbf16> to vector<8x18x4xbf16>
    %130 = vector.extract_strided_slice %129 {offsets = [0, 0, 0], sizes = [8, 16, 4], strides = [1, 1, 1]} : vector<8x18x4xbf16> to vector<8x16x4xbf16>
    %131 = vector.shape_cast %130 : vector<8x16x4xbf16> to vector<128x4xbf16>
    %132 = vector.extract_strided_slice %106 {offsets = [3, 0, 0], sizes = [1, 4, 4], strides = [1, 1, 1]} : vector<9x4x4xbf16> to vector<1x4x4xbf16>
    %133 = vector.shape_cast %132 : vector<1x4x4xbf16> to vector<4x4xbf16>
    %cst_44 = arith.constant dense<0.000000e+00> : vector<128x4xf32>
    %134 = tpu.matmul %131, %133, %cst_44 {dimension_numbers = #tpu.dot_dimension_numbers<[1], [0], [0], [1], [0, 0, 1, 1], [], []>} : vector<128x4xbf16>, vector<4x4xbf16>, vector<128x4xf32> -> vector<128x4xf32>
    %135 = arith.addf %128, %134 : vector<128x4xf32>
    %136 = vector.extract_strided_slice %129 {offsets = [0, 1, 0], sizes = [8, 16, 4], strides = [1, 1, 1]} : vector<8x18x4xbf16> to vector<8x16x4xbf16>
    %137 = vector.shape_cast %136 : vector<8x16x4xbf16> to vector<128x4xbf16>
    %138 = vector.extract_strided_slice %106 {offsets = [4, 0, 0], sizes = [1, 4, 4], strides = [1, 1, 1]} : vector<9x4x4xbf16> to vector<1x4x4xbf16>
    %139 = vector.shape_cast %138 : vector<1x4x4xbf16> to vector<4x4xbf16>
    %cst_45 = arith.constant dense<0.000000e+00> : vector<128x4xf32>
    %140 = tpu.matmul %137, %139, %cst_45 {dimension_numbers = #tpu.dot_dimension_numbers<[1], [0], [0], [1], [0, 0, 1, 1], [], []>} : vector<128x4xbf16>, vector<4x4xbf16>, vector<128x4xf32> -> vector<128x4xf32>
    %141 = arith.addf %135, %140 : vector<128x4xf32>
    %142 = vector.extract_strided_slice %129 {offsets = [0, 2, 0], sizes = [8, 16, 4], strides = [1, 1, 1]} : vector<8x18x4xbf16> to vector<8x16x4xbf16>
    %143 = vector.shape_cast %142 : vector<8x16x4xbf16> to vector<128x4xbf16>
    %144 = vector.extract_strided_slice %106 {offsets = [5, 0, 0], sizes = [1, 4, 4], strides = [1, 1, 1]} : vector<9x4x4xbf16> to vector<1x4x4xbf16>
    %145 = vector.shape_cast %144 : vector<1x4x4xbf16> to vector<4x4xbf16>
    %cst_46 = arith.constant dense<0.000000e+00> : vector<128x4xf32>
    %146 = tpu.matmul %143, %145, %cst_46 {dimension_numbers = #tpu.dot_dimension_numbers<[1], [0], [0], [1], [0, 0, 1, 1], [], []>} : vector<128x4xbf16>, vector<4x4xbf16>, vector<128x4xf32> -> vector<128x4xf32>
    %147 = arith.addf %141, %146 : vector<128x4xf32>
    %148 = vector.extract_strided_slice %108 {offsets = [2, 0, 0], sizes = [8, 18, 4], strides = [1, 1, 1]} : vector<10x18x4xbf16> to vector<8x18x4xbf16>
    %149 = vector.extract_strided_slice %148 {offsets = [0, 0, 0], sizes = [8, 16, 4], strides = [1, 1, 1]} : vector<8x18x4xbf16> to vector<8x16x4xbf16>
    %150 = vector.shape_cast %149 : vector<8x16x4xbf16> to vector<128x4xbf16>
    %151 = vector.extract_strided_slice %106 {offsets = [6, 0, 0], sizes = [1, 4, 4], strides = [1, 1, 1]} : vector<9x4x4xbf16> to vector<1x4x4xbf16>
    %152 = vector.shape_cast %151 : vector<1x4x4xbf16> to vector<4x4xbf16>
    %cst_47 = arith.constant dense<0.000000e+00> : vector<128x4xf32>
    %153 = tpu.matmul %150, %152, %cst_47 {dimension_numbers = #tpu.dot_dimension_numbers<[1], [0], [0], [1], [0, 0, 1, 1], [], []>} : vector<128x4xbf16>, vector<4x4xbf16>, vector<128x4xf32> -> vector<128x4xf32>
    %154 = arith.addf %147, %153 : vector<128x4xf32>
    %155 = vector.extract_strided_slice %148 {offsets = [0, 1, 0], sizes = [8, 16, 4], strides = [1, 1, 1]} : vector<8x18x4xbf16> to vector<8x16x4xbf16>
    %156 = vector.shape_cast %155 : vector<8x16x4xbf16> to vector<128x4xbf16>
    %157 = vector.extract_strided_slice %106 {offsets = [7, 0, 0], sizes = [1, 4, 4], strides = [1, 1, 1]} : vector<9x4x4xbf16> to vector<1x4x4xbf16>
    %158 = vector.shape_cast %157 : vector<1x4x4xbf16> to vector<4x4xbf16>
    %cst_48 = arith.constant dense<0.000000e+00> : vector<128x4xf32>
    %159 = tpu.matmul %156, %158, %cst_48 {dimension_numbers = #tpu.dot_dimension_numbers<[1], [0], [0], [1], [0, 0, 1, 1], [], []>} : vector<128x4xbf16>, vector<4x4xbf16>, vector<128x4xf32> -> vector<128x4xf32>
    %160 = arith.addf %154, %159 : vector<128x4xf32>
    %161 = vector.extract_strided_slice %148 {offsets = [0, 2, 0], sizes = [8, 16, 4], strides = [1, 1, 1]} : vector<8x18x4xbf16> to vector<8x16x4xbf16>
    %162 = vector.shape_cast %161 : vector<8x16x4xbf16> to vector<128x4xbf16>
    %163 = vector.extract_strided_slice %106 {offsets = [8, 0, 0], sizes = [1, 4, 4], strides = [1, 1, 1]} : vector<9x4x4xbf16> to vector<1x4x4xbf16>
    %164 = vector.shape_cast %163 : vector<1x4x4xbf16> to vector<4x4xbf16>
    %cst_49 = arith.constant dense<0.000000e+00> : vector<128x4xf32>
    %165 = tpu.matmul %162, %164, %cst_49 {dimension_numbers = #tpu.dot_dimension_numbers<[1], [0], [0], [1], [0, 0, 1, 1], [], []>} : vector<128x4xbf16>, vector<4x4xbf16>, vector<128x4xf32> -> vector<128x4xf32>
    %166 = arith.addf %160, %165 : vector<128x4xf32>
    %167 = vector.broadcast %107 : vector<1x4xf32> to vector<128x4xf32>
    %168 = arith.addf %166, %167 : vector<128x4xf32>
    %169 = arith.negf %168 : vector<128x4xf32>
    %170 = math.exp %169 : vector<128x4xf32>
    %cst_50 = arith.constant 1.000000e+00 : f32
    %171 = vector.broadcast %cst_50 : f32 to vector<128x4xf32>
    %172 = arith.addf %171, %170 : vector<128x4xf32>
    %173 = arith.divf %171, %172 : vector<128x4xf32>
    %174 = arith.mulf %168, %173 : vector<128x4xf32>
    %175 = vector.shape_cast %174 : vector<128x4xf32> to vector<8x16x4xf32>
    %176 = arith.addf %1, %175 : vector<8x16x4xf32>
    %c0_51 = arith.constant 0 : index
    %c0_52 = arith.constant 0 : index
    %c0_53 = arith.constant 0 : index
    %c0_54 = arith.constant 0 : index
    %177 = vector.load %arg9[%c0_51, %c0_52, %c0_53, %c0_54] : memref<1x8x16x4xf32, #tpu.memory_space<vmem>>, vector<1x8x16x4xf32>
    %178 = vector.shape_cast %177 : vector<1x8x16x4xf32> to vector<8x16x4xf32>
    %179 = vector.shape_cast %176 : vector<8x16x4xf32> to vector<1x8x16x4xf32>
    tpu.vector_store %arg9[%c0_51, %c0_52, %c0_53, %c0_54], %179 {strides = array<i32>} : memref<1x8x16x4xf32, #tpu.memory_space<vmem>>, vector<1x8x16x4xf32>,
    return
  }
  func.func @transform_0(%arg0: i32, %arg1: i32) -> (i32, i32, i32, i32) {
    %c4_i32 = arith.constant 4 : i32
    %0 = arith.muli %arg1, %c4_i32 : i32
    %c1_i32 = arith.constant 1 : i32
    %1 = arith.subi %0, %c1_i32 : i32
    %c0_i32 = arith.constant 0 : i32
    %2 = arith.maxsi %1, %c0_i32 : i32
    %c0_i32_0 = arith.constant 0 : i32
    %c0_i32_1 = arith.constant 0 : i32
    %c0_i32_2 = arith.constant 0 : i32
    return %arg0, %2, %c0_i32_0, %c0_i32_1 : i32, i32, i32, i32
  }
  func.func @transform_1(%arg0: i32, %arg1: i32) -> (i32, i32, i32, i32) {
    %c0_i32 = arith.constant 0 : i32
    %c0_i32_0 = arith.constant 0 : i32
    %c0_i32_1 = arith.constant 0 : i32
    return %arg0, %arg1, %c0_i32, %c0_i32_0 : i32, i32, i32, i32
  }
  func.func @transform_2(%arg0: i32, %arg1: i32) -> (i32, i32, i32, i32) {
    %c1_i32 = arith.constant 1 : i32
    %0 = arith.addi %arg1, %c1_i32 : i32
    %c4_i32 = arith.constant 4 : i32
    %1 = arith.muli %0, %c4_i32 : i32
    %c7_i32 = arith.constant 7 : i32
    %2 = arith.minsi %1, %c7_i32 : i32
    %c0_i32 = arith.constant 0 : i32
    %c0_i32_0 = arith.constant 0 : i32
    %c0_i32_1 = arith.constant 0 : i32
    return %arg0, %2, %c0_i32, %c0_i32_0 : i32, i32, i32, i32
  }
  func.func @transform_3(%arg0: i32, %arg1: i32) -> (i32, i32, i32) {
    %c0_i32 = arith.constant 0 : i32
    %c0_i32_0 = arith.constant 0 : i32
    %c0_i32_1 = arith.constant 0 : i32
    %c0_i32_2 = arith.constant 0 : i32
    return %c0_i32, %c0_i32_0, %c0_i32_1 : i32, i32, i32
  }
  func.func @transform_4(%arg0: i32, %arg1: i32) -> (i32, i32) {
    %c0_i32 = arith.constant 0 : i32
    %c0_i32_0 = arith.constant 0 : i32
    %c0_i32_1 = arith.constant 0 : i32
    return %c0_i32, %c0_i32_0 : i32, i32
  }
  func.func @transform_5(%arg0: i32, %arg1: i32) -> (i32, i32, i32) {
    %c0_i32 = arith.constant 0 : i32
    %c0_i32_0 = arith.constant 0 : i32
    %c0_i32_1 = arith.constant 0 : i32
    %c0_i32_2 = arith.constant 0 : i32
    return %c0_i32, %c0_i32_0, %c0_i32_1 : i32, i32, i32
  }
  func.func @transform_6(%arg0: i32, %arg1: i32) -> (i32, i32) {
    %c0_i32 = arith.constant 0 : i32
    %c0_i32_0 = arith.constant 0 : i32
    %c0_i32_1 = arith.constant 0 : i32
    return %c0_i32, %c0_i32_0 : i32, i32
  }
  func.func @transform_7(%arg0: i32, %arg1: i32) -> (i32, i32, i32, i32) {
    %c0_i32 = arith.constant 0 : i32
    %c0_i32_0 = arith.constant 0 : i32
    %c0_i32_1 = arith.constant 0 : i32
    return %arg0, %arg1, %c0_i32, %c0_i32_0 : i32, i32, i32, i32
  }
}

</mosaic_0001>

<llo_original>
// kernel: cbl_n_forward.2
$region0: #{cbl_n_forward.2}
  #allocation0 [shape = 'u32[]', space=smem, size = 0x4, offset = 0x4, fixed_abs, tag = 'smem constant byte address 0x4 - core index']
  #allocation1 [shape = 'u32[72,128]{1,0:T(1,128)}', space=vmem, size = 0x9000, scoped, tag = 'internal scratch']
  %s0 = inlined_call_operand.vmem [shape: f32[2,16,16,4], index: 0, kind: input, shape index: {}, may-alias: {0,1,2}]
  %s1 = inlined_call_operand.vmem [shape: f32[2,16,16,4], index: 1, kind: input, shape index: {}, may-alias: {0,1,2}]
  %s2 = inlined_call_operand.vmem [shape: f32[2,16,16,4], index: 2, kind: input, shape index: {}, may-alias: {0,1,2}]
  %s3 = inlined_call_operand.vmem [shape: bf16[9,4,4], index: 3, kind: input, shape index: {}]
  %s4 = inlined_call_operand.vmem [shape: f32[1,4], index: 4, kind: input, shape index: {}]
  %s5 = inlined_call_operand.vmem [shape: bf16[9,4,4], index: 5, kind: input, shape index: {}]
  %s6 = inlined_call_operand.vmem [shape: f32[1,4], index: 6, kind: input, shape index: {}]
  %s7 = inlined_call_operand.vmem [shape: f32[2,16,16,4], index: 7, kind: output, shape index: {}]
  %s8 = sld [smem:[#allocation0]]
  $region61: #{cbl_n_forward.2} parent=0
    _
  %s10 = ssub.s32 1, %s8
  %s11 = scalar_select 0, %s10, %s8
  loop: start=0, step=1, limit=6
  $region2: #{cbl_n_forward.2} parent=0 // loop_pre_header
    _
  $region3: #{cbl_n_forward.2} parent=0 // loop_header
    %s13 = sphi 0, %s17
    %p14 = scmp.ge.s32.totalorder %s13, 6
    %s20 = sphi 0, %s32
    %s21 = sphi 0, %s28
    %s22 = sphi 0, %s20
    %s23 = sphi 0, %s21
    %s24 = sphi 0, %s22
    %s25 = sphi 0, %s23
    %s45 = sphi 0, %s47
    %s48 = sphi 0, %s45
    %s49 = sphi 0, %s48
    %s65 = sphi 0, %s49
    %s73 = sphi 0, %s75
    %s76 = sphi 0, %s73
    %s77 = sphi 0, %s76
    %s93 = sphi 0, %s77
    %s109 = sphi 0, %s111
    %s112 = sphi 0, %s109
    %s113 = sphi 0, %s112
    %s129 = sphi 0, %s113
    %s133 = sphi 0, %s133
    %s135 = sphi 0, %s133
    %s136 = sphi 0, %s135
    %s150 = sphi 0, %s136
    %s154 = sphi 0, %s154
    %s156 = sphi 0, %s154
    %s157 = sphi 0, %s156
    %s171 = sphi 0, %s157
    %s175 = sphi 0, %s175
    %s177 = sphi 0, %s175
    %s178 = sphi 0, %s177
    %s192 = sphi 0, %s178
    %s196 = sphi 0, %s196
    %s198 = sphi 0, %s196
    %s199 = sphi 0, %s198
    %s213 = sphi 0, %s199
    %s221 = sphi 0, %s223
    %s224 = sphi 0, %s221
    %s225 = sphi 0, %s224
    %s241 = sphi 0, %s225
  $region4: #{cbl_n_forward.2} parent=0 // loop_header_branch
    %16 = sbr.rel (%p14) target = $region8
  $region5: #{cbl_n_forward.2} parent=0 // loop_body
    %s18 = ssub.s32 %s13, 1
    %s19 = ssub.s32 %s13, 2
    %s26 = sadd.s32 1, %s21
    %p27 = scmp.ge.s32.totalorder %s26, 2
    %s28 = scalar_select %p27, 0, %s26
    %s29 = sadd.s32 1, %s20
    %s30 = scalar_select %p27, %s29, %s20
    %p31 = scmp.ge.s32.totalorder %s30, 2
    %s32 = scalar_select %p31, 0, %s30
    %s33 = smul.u32 %s21, 4
    %s34 = ssub.s32 %s33, 1
    %p35 = scmp.gt.s32.totalorder %s34, 0
    %s36 = scalar_select %p35, %s34, 0
    %s37 = smul.u32 %s28, 4
    %s38 = ssub.s32 %s37, 1
    %p39 = scmp.gt.s32.totalorder %s38, 0
    %s40 = scalar_select %p39, %s38, 0
    %s41 = ssub.s32 %s20, %s32
    %s42 = ssub.s32 %s36, %s40
    %s43 = sor.u32 %s41, %s42
    %p44 = scmp.eq.s32.totalorder %s43, 0
    %s46 = sadd.s32 %s45, 1
    %s47 = scalar_select %p44, %s45, %s46
    %p50 = pneg %p44
    %p51 = scmp.eq.s32.totalorder %s13, 3
    %p52 = por %p50, %p51
    %p53 = scmp.ne.s32.totalorder %s45, %s48
    %p54 = scmp.eq.s32.totalorder %s13, 0
    %p55 = por %p53, %p54
    %p56 = scmp.ne.s32.totalorder %s45, %s48
    %p57 = scmp.eq.s32.totalorder %s18, 3
    %p58 = por %p56, %p57
    %p59 = scmp.ne.s32.totalorder %s48, %s49
    %p60 = scmp.eq.s32.totalorder %s18, 0
    %p61 = por %p59, %p60
    %p62 = scmp.ne.s32.totalorder %s48, %s49
    %p63 = scmp.eq.s32.totalorder %s19, 3
    %p64 = por %p62, %p63
    %p66 = scmp.ne.s32.totalorder %s49, %s65
    %p67 = scmp.eq.s32.totalorder %s19, 0
    %p68 = por %p66, %p67
    %s69 = ssub.s32 %s20, %s32
    %s70 = ssub.s32 %s21, %s28
    %s71 = sor.u32 %s69, %s70
    %p72 = scmp.eq.s32.totalorder %s71, 0
    %s74 = sadd.s32 %s73, 1
    %s75 = scalar_select %p72, %s73, %s74
    %p78 = pneg %p72
    %p79 = scmp.eq.s32.totalorder %s13, 3
    %p80 = por %p78, %p79
    %p81 = scmp.ne.s32.totalorder %s73, %s76
    %p82 = scmp.eq.s32.totalorder %s13, 0
    %p83 = por %p81, %p82
    %p84 = scmp.ne.s32.totalorder %s73, %s76
    %p85 = scmp.eq.s32.totalorder %s18, 3
    %p86 = por %p84, %p85
    %p87 = scmp.ne.s32.totalorder %s76, %s77
    %p88 = scmp.eq.s32.totalorder %s18, 0
    %p89 = por %p87, %p88
    %p90 = scmp.ne.s32.totalorder %s76, %s77
    %p91 = scmp.eq.s32.totalorder %s19, 3
    %p92 = por %p90, %p91
    %p94 = scmp.ne.s32.totalorder %s77, %s93
    %p95 = scmp.eq.s32.totalorder %s19, 0
    %p96 = por %p94, %p95
    %s97 = sadd.s32 %s21, 1
    %s98 = smul.u32 %s97, 4
    %p99 = scmp.lt.s32.totalorder %s98, 7
    %s100 = scalar_select %p99, %s98, 7
    %s101 = sadd.s32 %s28, 1
    %s102 = smul.u32 %s101, 4
    %p103 = scmp.lt.s32.totalorder %s102, 7
    %s104 = scalar_select %p103, %s102, 7
    %s105 = ssub.s32 %s20, %s32
    %s106 = ssub.s32 %s100, %s104
    %s107 = sor.u32 %s105, %s106
    %p108 = scmp.eq.s32.totalorder %s107, 0
    %s110 = sadd.s32 %s109, 1
    %s111 = scalar_select %p108, %s109, %s110
    %p114 = pneg %p108
    %p115 = scmp.eq.s32.totalorder %s13, 3
    %p116 = por %p114, %p115
    %p117 = scmp.ne.s32.totalorder %s109, %s112
    %p118 = scmp.eq.s32.totalorder %s13, 0
    %p119 = por %p117, %p118
    %p120 = scmp.ne.s32.totalorder %s109, %s112
    %p121 = scmp.eq.s32.totalorder %s18, 3
    %p122 = por %p120, %p121
    %p123 = scmp.ne.s32.totalorder %s112, %s113
    %p124 = scmp.eq.s32.totalorder %s18, 0
    %p125 = por %p123, %p124
    %p126 = scmp.ne.s32.totalorder %s112, %s113
    %p127 = scmp.eq.s32.totalorder %s19, 3
    %p128 = por %p126, %p127
    %p130 = scmp.ne.s32.totalorder %s113, %s129
    %p131 = scmp.eq.s32.totalorder %s19, 0
    %p132 = por %p130, %p131
    %s134 = sadd.s32 %s133, 1
    %p137 = scmp.eq.s32.totalorder %s13, 3
    %p138 = scmp.ne.s32.totalorder %s133, %s135
    %p139 = scmp.eq.s32.totalorder %s13, 0
    %p140 = por %p138, %p139
    %p141 = scmp.ne.s32.totalorder %s133, %s135
    %p142 = scmp.eq.s32.totalorder %s18, 3
    %p143 = por %p141, %p142
    %p144 = scmp.ne.s32.totalorder %s135, %s136
    %p145 = scmp.eq.s32.totalorder %s18, 0
    %p146 = por %p144, %p145
    %p147 = scmp.ne.s32.totalorder %s135, %s136
    %p148 = scmp.eq.s32.totalorder %s19, 3
    %p149 = por %p147, %p148
    %p151 = scmp.ne.s32.totalorder %s136, %s150
    %p152 = scmp.eq.s32.totalorder %s19, 0
    %p153 = por %p151, %p152
    %s155 = sadd.s32 %s154, 1
    %p158 = scmp.eq.s32.totalorder %s13, 3
    %p159 = scmp.ne.s32.totalorder %s154, %s156
    %p160 = scmp.eq.s32.totalorder %s13, 0
    %p161 = por %p159, %p160
    %p162 = scmp.ne.s32.totalorder %s154, %s156
    %p163 = scmp.eq.s32.totalorder %s18, 3
    %p164 = por %p162, %p163
    %p165 = scmp.ne.s32.totalorder %s156, %s157
    %p166 = scmp.eq.s32.totalorder %s18, 0
    %p167 = por %p165, %p166
    %p168 = scmp.ne.s32.totalorder %s156, %s157
    %p169 = scmp.eq.s32.totalorder %s19, 3
    %p170 = por %p168, %p169
    %p172 = scmp.ne.s32.totalorder %s157, %s171
    %p173 = scmp.eq.s32.totalorder %s19, 0
    %p174 = por %p172, %p173
    %s176 = sadd.s32 %s175, 1
    %p179 = scmp.eq.s32.totalorder %s13, 3
    %p180 = scmp.ne.s32.totalorder %s175, %s177
    %p181 = scmp.eq.s32.totalorder %s13, 0
    %p182 = por %p180, %p181
    %p183 = scmp.ne.s32.totalorder %s175, %s177
    %p184 = scmp.eq.s32.totalorder %s18, 3
    %p185 = por %p183, %p184
    %p186 = scmp.ne.s32.totalorder %s177, %s178
    %p187 = scmp.eq.s32.totalorder %s18, 0
    %p188 = por %p186, %p187
    %p189 = scmp.ne.s32.totalorder %s177, %s178
    %p190 = scmp.eq.s32.totalorder %s19, 3
    %p191 = por %p189, %p190
    %p193 = scmp.ne.s32.totalorder %s178, %s192
    %p194 = scmp.eq.s32.totalorder %s19, 0
    %p195 = por %p193, %p194
    %s197 = sadd.s32 %s196, 1
    %p200 = scmp.eq.s32.totalorder %s13, 3
    %p201 = scmp.ne.s32.totalorder %s196, %s198
    %p202 = scmp.eq.s32.totalorder %s13, 0
    %p203 = por %p201, %p202
    %p204 = scmp.ne.s32.totalorder %s196, %s198
    %p205 = scmp.eq.s32.totalorder %s18, 3
    %p206 = por %p204, %p205
    %p207 = scmp.ne.s32.totalorder %s198, %s199
    %p208 = scmp.eq.s32.totalorder %s18, 0
    %p209 = por %p207, %p208
    %p210 = scmp.ne.s32.totalorder %s198, %s199
    %p211 = scmp.eq.s32.totalorder %s19, 3
    %p212 = por %p210, %p211
    %p214 = scmp.ne.s32.totalorder %s199, %s213
    %p215 = scmp.eq.s32.totalorder %s19, 0
    %p216 = por %p214, %p215
    %s217 = ssub.s32 %s20, %s32
    %s218 = ssub.s32 %s21, %s28
    %s219 = sor.u32 %s217, %s218
    %p220 = scmp.eq.s32.totalorder %s219, 0
    %s222 = sadd.s32 %s221, 1
    %s223 = scalar_select %p220, %s221, %s222
    %p226 = pneg %p220
    %p227 = scmp.eq.s32.totalorder %s13, 3
    %p228 = por %p226, %p227
    %p229 = scmp.ne.s32.totalorder %s221, %s224
    %p230 = scmp.eq.s32.totalorder %s13, 0
    %p231 = por %p229, %p230
    %p232 = scmp.ne.s32.totalorder %s221, %s224
    %p233 = scmp.eq.s32.totalorder %s18, 3
    %p234 = por %p232, %p233
    %p235 = scmp.ne.s32.totalorder %s224, %s225
    %p236 = scmp.eq.s32.totalorder %s18, 0
    %p237 = por %p235, %p236
    %p238 = scmp.ne.s32.totalorder %s224, %s225
    %p239 = scmp.eq.s32.totalorder %s19, 3
    %p240 = por %p238, %p239
    %p242 = scmp.ne.s32.totalorder %s225, %s241
    %p243 = scmp.eq.s32.totalorder %s19, 0
    %p244 = por %p242, %p243
    %p245 = scmp.le.s32.totalorder 1, %s13
    %p246 = scmp.lt.s32.totalorder %s13, 5
    %p247 = pnand %p245, %p246
    %p248 = pneg %p247
    // Predicated region
    $region9: #{cbl_n_forward.2} parent=5 // pred_check
      _
    $region10: #{cbl_n_forward.2} parent=5 // pred_check_branch
      %250 = sbr.rel (%p247) target = $region12
    $region11: #{cbl_n_forward.2} parent=5 // pred_region
      %s251 = ssub.s32 %s13, 1
      // Predicated region
      $region13: #{cbl_n_forward.2} parent=11 // pred_check
        %p252 = pneg %p146
      $region14: #{cbl_n_forward.2} parent=11 // pred_check_branch
        %254 = sbr.rel (%p252) target = $region16
      $region15: #{cbl_n_forward.2} parent=11 // pred_region
        _
      $region16: #{cbl_n_forward.2} parent=11 // pred_fallthru
        _
      // Predicated region
      $region17: #{cbl_n_forward.2} parent=11 // pred_check
        %p255 = pneg %p167
      $region18: #{cbl_n_forward.2} parent=11 // pred_check_branch
        %257 = sbr.rel (%p255) target = $region20
      $region19: #{cbl_n_forward.2} parent=11 // pred_region
        _
      $region20: #{cbl_n_forward.2} parent=11 // pred_fallthru
        _
      // Predicated region
      $region21: #{cbl_n_forward.2} parent=11 // pred_check
        %p258 = pneg %p188
      $region22: #{cbl_n_forward.2} parent=11 // pred_check_branch
        %260 = sbr.rel (%p258) target = $region24
      $region23: #{cbl_n_forward.2} parent=11 // pred_region
        _
      $region24: #{cbl_n_forward.2} parent=11 // pred_fallthru
        _
      // Predicated region
      $region25: #{cbl_n_forward.2} parent=11 // pred_check
        %p261 = pneg %p209
      $region26: #{cbl_n_forward.2} parent=11 // pred_check_branch
        %263 = sbr.rel (%p261) target = $region28
      $region27: #{cbl_n_forward.2} parent=11 // pred_region
        _
      $region28: #{cbl_n_forward.2} parent=11 // pred_fallthru
        _
    $region12: #{cbl_n_forward.2} parent=5 // pred_fallthru
      _
    %p264 = scmp.lt.s32.totalorder %s13, 4
    // Predicated region
    $region29: #{cbl_n_forward.2} parent=5 // pred_check
      %p265 = pneg %p264
    $region30: #{cbl_n_forward.2} parent=5 // pred_check_branch
      %267 = sbr.rel (%p265) target = $region32
    $region31: #{cbl_n_forward.2} parent=5 // pred_region
      // Predicated region
      $region33: #{cbl_n_forward.2} parent=31 // pred_check
        %p268 = pneg %p55
      $region34: #{cbl_n_forward.2} parent=31 // pred_check_branch
        %270 = sbr.rel (%p268) target = $region36
      $region35: #{cbl_n_forward.2} parent=31 // pred_region
        %s271 = smul.u32 %s21, 4
        %s272 = ssub.s32 %s271, 1
        %p273 = scmp.gt.s32.totalorder %s272, 0
        %s274 = scalar_select %p273, %s272, 0
        %s275 = smul.u32 2, %s274
        %p276 = scmp.lt.s32.totalorder %s20, 1
        %s277 = scalar_select %p276, %s20, 1
        %p278 = scmp.lt.s32.totalorder %s275, 15
        %s279 = scalar_select %p278, %s275, 15
        %s280 = smul.addr %s279, 2
        %s281 = smul.addr %s277, 32
        %s282 = sadd.s32 %s280, %s281
        %s283 = smul.addr %s282, 8
        %s284 = scalar_lea.vmem %s0, %s283
        %s285 = smul.u32 %s21, 4
        %s286 = ssub.s32 %s285, 1
        %p287 = scmp.gt.s32.totalorder %s286, 0
        %s288 = scalar_select %p287, %s286, 0
        %s289 = smul.u32 2, %s288
      $region36: #{cbl_n_forward.2} parent=31 // pred_fallthru
        _
      // Predicated region
      $region37: #{cbl_n_forward.2} parent=31 // pred_check
        %p290 = pneg %p83
      $region38: #{cbl_n_forward.2} parent=31 // pred_check_branch
        %292 = sbr.rel (%p290) target = $region40
      $region39: #{cbl_n_forward.2} parent=31 // pred_region
        %s293 = smul.u32 8, %s21
        %p294 = scmp.lt.s32.totalorder %s20, 1
        %s295 = scalar_select %p294, %s20, 1
        %p296 = scmp.lt.s32.totalorder %s293, 15
        %s297 = scalar_select %p296, %s293, 15
        %s298 = smul.addr %s297, 2
        %s299 = smul.addr %s295, 32
        %s300 = sadd.s32 %s298, %s299
        %s301 = smul.addr %s300, 8
        %s302 = scalar_lea.vmem %s1, %s301
        %s303 = smul.u32 8, %s21
      $region40: #{cbl_n_forward.2} parent=31 // pred_fallthru
        _
      // Predicated region
      $region41: #{cbl_n_forward.2} parent=31 // pred_check
        %p304 = pneg %p119
      $region42: #{cbl_n_forward.2} parent=31 // pred_check_branch
        %306 = sbr.rel (%p304) target = $region44
      $region43: #{cbl_n_forward.2} parent=31 // pred_region
        %s307 = sadd.s32 %s21, 1
        %s308 = smul.u32 %s307, 4
        %p309 = scmp.lt.s32.totalorder %s308, 7
        %s310 = scalar_select %p309, %s308, 7
        %s311 = smul.u32 2, %s310
        %p312 = scmp.lt.s32.totalorder %s20, 1
        %s313 = scalar_select %p312, %s20, 1
        %p314 = scmp.lt.s32.totalorder %s311, 15
        %s315 = scalar_select %p314, %s311, 15
        %s316 = smul.addr %s315, 2
        %s317 = smul.addr %s313, 32
        %s318 = sadd.s32 %s316, %s317
        %s319 = smul.addr %s318, 8
        %s320 = scalar_lea.vmem %s2, %s319
        %s321 = sadd.s32 %s21, 1
        %s322 = smul.u32 %s321, 4
        %p323 = scmp.lt.s32.totalorder %s322, 7
        %s324 = scalar_select %p323, %s322, 7
        %s325 = smul.u32 2, %s324
      $region44: #{cbl_n_forward.2} parent=31 // pred_fallthru
        _
    $region32: #{cbl_n_forward.2} parent=5 // pred_fallthru
      _
    %p326 = scmp.le.s32.totalorder 1, %s13
    %p327 = scmp.lt.s32.totalorder %s13, 5
    %p328 = pnand %p326, %p327
    %p329 = pneg %p328
    // Predicated region
    $region45: #{cbl_n_forward.2} parent=5 // pred_check
      _
    $region46: #{cbl_n_forward.2} parent=5 // pred_check_branch
      %331 = sbr.rel (%p328) target = $region48
    $region47: #{cbl_n_forward.2} parent=5 // pred_region
      %s332 = ssub.s32 %s13, 1
      %s333 = smul.u32 %s23, 4
      %s334 = ssub.s32 %s333, 1
      %p335 = scmp.gt.s32.totalorder %s334, 0
      %s336 = scalar_select %p335, %s334, 0
      %s337 = smul.u32 2, %s336
      %p338 = scmp.lt.s32.totalorder %s22, 1
      %s339 = scalar_select %p338, %s22, 1
      %p340 = scmp.lt.s32.totalorder %s337, 15
      %s341 = scalar_select %p340, %s337, 15
      %s342 = smul.addr %s341, 2
      %s343 = smul.addr %s339, 32
      %s344 = sadd.s32 %s342, %s343
      %s345 = smul.addr %s344, 8
      %s346 = scalar_lea.vmem %s0, %s345
      %p347 = pneg %p61
      %p348 = pneg %p58
      %s349 = smul.u32 8, %s23
      %p350 = scmp.lt.s32.totalorder %s22, 1
      %s351 = scalar_select %p350, %s22, 1
      %p352 = scmp.lt.s32.totalorder %s349, 15
      %s353 = scalar_select %p352, %s349, 15
      %s354 = smul.addr %s353, 2
      %s355 = smul.addr %s351, 32
      %s356 = sadd.s32 %s354, %s355
      %s357 = smul.addr %s356, 8
      %s358 = scalar_lea.vmem %s1, %s357
      %p359 = pneg %p89
      %p360 = pneg %p86
      %s361 = sadd.s32 %s23, 1
      %s362 = smul.u32 %s361, 4
      %p363 = scmp.lt.s32.totalorder %s362, 7
      %s364 = scalar_select %p363, %s362, 7
      %s365 = smul.u32 2, %s364
      %p366 = scmp.lt.s32.totalorder %s22, 1
      %s367 = scalar_select %p366, %s22, 1
      %p368 = scmp.lt.s32.totalorder %s365, 15
      %s369 = scalar_select %p368, %s365, 15
      %s370 = smul.addr %s369, 2
      %s371 = smul.addr %s367, 32
      %s372 = sadd.s32 %s370, %s371
      %s373 = smul.addr %s372, 8
      %s374 = scalar_lea.vmem %s2, %s373
      %p375 = pneg %p125
      %p376 = pneg %p122
      %p377 = pneg %p146
      %p378 = pneg %p143
      %p379 = pneg %p167
      %p380 = pneg %p164
      %p381 = pneg %p188
      %p382 = pneg %p185
      %p383 = pneg %p209
      %p384 = pneg %p206
      %p385 = pneg %p237
      %p386 = pneg %p234
      %s387 = smul.u32 8, %s23
      %p388 = scmp.lt.s32.totalorder %s22, 1
      %s389 = scalar_select %p388, %s22, 1
      %p390 = scmp.lt.s32.totalorder %s387, 15
      %s391 = scalar_select %p390, %s387, 15
      %s392 = smul.addr %s391, 2
      %s393 = smul.addr %s389, 32
      %s394 = sadd.s32 %s392, %s393
      %s395 = smul.addr %s394, 8
      %s396 = scalar_lea.vmem %s7, %s395
      %s397 = smul.u32 %s23, 4
      %s398 = ssub.s32 %s397, 1
      %p399 = scmp.gt.s32.totalorder %s398, 0
      %s400 = scalar_select %p399, %s398, 0
      %s401 = smul.u32 2, %s400
      %p402 = scmp.lt.s32.totalorder %s22, 1
      %s403 = scalar_select %p402, %s22, 1
      %p404 = scmp.lt.s32.totalorder %s401, 15
      %s405 = scalar_select %p404, %s401, 15
      %s406 = smul.addr %s405, 2
      %s407 = smul.addr %s403, 32
      %s408 = sadd.s32 %s406, %s407
      %s409 = smul.addr %s408, 8
      %s410 = scalar_lea.vmem %s0, %s409
      %s411 = smul.u32 %s23, 4
      %s412 = ssub.s32 %s411, 1
      %p413 = scmp.gt.s32.totalorder %s412, 0
      %s414 = scalar_select %p413, %s412, 0
      %s415 = smul.u32 2, %s414
      %s416 = smul.u32 8, %s23
      %p417 = scmp.lt.s32.totalorder %s22, 1
      %s418 = scalar_select %p417, %s22, 1
      %p419 = scmp.lt.s32.totalorder %s416, 15
      %s420 = scalar_select %p419, %s416, 15
      %s421 = smul.addr %s420, 2
      %s422 = smul.addr %s418, 32
      %s423 = sadd.s32 %s421, %s422
      %s424 = smul.addr %s423, 8
      %s425 = scalar_lea.vmem %s1, %s424
      %s426 = smul.u32 8, %s23
      %s427 = sadd.s32 %s23, 1
      %s428 = smul.u32 %s427, 4
      %p429 = scmp.lt.s32.totalorder %s428, 7
      %s430 = scalar_select %p429, %s428, 7
      %s431 = smul.u32 2, %s430
      %p432 = scmp.lt.s32.totalorder %s22, 1
      %s433 = scalar_select %p432, %s22, 1
      %p434 = scmp.lt.s32.totalorder %s431, 15
      %s435 = scalar_select %p434, %s431, 15
      %s436 = smul.addr %s435, 2
      %s437 = smul.addr %s433, 32
      %s438 = sadd.s32 %s436, %s437
      %s439 = smul.addr %s438, 8
      %s440 = scalar_lea.vmem %s2, %s439
      %s441 = sadd.s32 %s23, 1
      %s442 = smul.u32 %s441, 4
      %p443 = scmp.lt.s32.totalorder %s442, 7
      %s444 = scalar_select %p443, %s442, 7
      %s445 = smul.u32 2, %s444
      %s446 = smul.u32 8, %s23
      %p447 = scmp.lt.s32.totalorder %s22, 1
      %s448 = scalar_select %p447, %s22, 1
      %p449 = scmp.lt.s32.totalorder %s446, 15
      %s450 = scalar_select %p449, %s446, 15
      %s451 = smul.addr %s450, 2
      %s452 = smul.addr %s448, 32
      %s453 = sadd.s32 %s451, %s452
      %s454 = smul.addr %s453, 8
      %s455 = scalar_lea.vmem %s7, %s454
      %s456 = smul.u32 8, %s23
      %v458 = vld [vmem:[%s425] sm:$0xff]
      %v459 = vld [vmem:[%s425 + $0x8] sm:$0xff]
      %v460 = vld [vmem:[%s425 + $0x10] sm:$0xff]
      %v461 = vld [vmem:[%s425 + $0x18] sm:$0xff]
      %v462 = vld [vmem:[%s425 + $0x20] sm:$0xff]
      %v463 = vld [vmem:[%s425 + $0x28] sm:$0xff]
      %v464 = vld [vmem:[%s425 + $0x30] sm:$0xff]
      %v465 = vld [vmem:[%s425 + $0x38] sm:$0xff]
      %v466 = vld [vmem:[%s425 + $0x40] sm:$0xff]
      %v467 = vld [vmem:[%s425 + $0x48] sm:$0xff]
      %v468 = vld [vmem:[%s425 + $0x50] sm:$0xff]
      %v469 = vld [vmem:[%s425 + $0x58] sm:$0xff]
      %v470 = vld [vmem:[%s425 + $0x60] sm:$0xff]
      %v471 = vld [vmem:[%s425 + $0x68] sm:$0xff]
      %v472 = vld [vmem:[%s425 + $0x70] sm:$0xff]
      %v473 = vld [vmem:[%s425 + $0x78] sm:$0xff]
      %p474 = scmp.gt.s32.totalorder %s23, 0
      %v475 = vld [vmem:[%s410] sm:$0xff]
      %v476 = vld [vmem:[%s410 + $0x8] sm:$0xff]
      %v477 = vld [vmem:[%s410 + $0x10] sm:$0xff]
      %v478 = vld [vmem:[%s410 + $0x18] sm:$0xff]
      %s479 = scalar_select %p474, 1, 0
      %v480 = vstv %s479
      %vm481 = vcmp.eq.s32.totalorder %v480, 1
      %v482 = vsel %vm481, %v475, 0.0
      %v483 = vsel %vm481, %v476, 0.0
      %v484 = vsel %vm481, %v477, 0.0
      %v485 = vsel %vm481, %v478, 0.0
      %p486 = scmp.lt.s32.totalorder %s23, 1
      %v487 = vld [vmem:[%s440] sm:$0xff]
      %v488 = vld [vmem:[%s440 + $0x8] sm:$0xff]
      %v489 = vld [vmem:[%s440 + $0x10] sm:$0xff]
      %v490 = vld [vmem:[%s440 + $0x18] sm:$0xff]
      %s491 = scalar_select %p486, 1, 0
      %v492 = vstv %s491
      %vm493 = vcmp.eq.s32.totalorder %v492, 1
      %v494 = vsel %vm493, %v487, 0.0
      %v495 = vsel %vm493, %v488, 0.0
      %v496 = vsel %vm493, %v489, 0.0
      %v497 = vsel %vm493, %v490, 0.0
      %vm522 = vcmask 1041408
      %v523 = vrot.slane %v482, 6
      %v524 = vrot.slane %v483, 6
      %v525 = vsel %vm522, %v523, %v524
      %v526 = vrot.slane %v484, 6
      %v527 = vrot.slane %v485, 6
      %v528 = vsel %vm522, %v526, %v527
      %v529 = vrot.slane %v458, 6
      %v530 = vrot.slane %v459, 6
      %v531 = vsel %vm522, %v529, %v530
      %v532 = vrot.slane %v460, 6
      %v533 = vrot.slane %v461, 6
      %v534 = vsel %vm522, %v532, %v533
      %v535 = vrot.slane %v462, 6
      %v536 = vrot.slane %v463, 6
      %v537 = vsel %vm522, %v535, %v536
      %v538 = vrot.slane %v464, 6
      %v539 = vrot.slane %v465, 6
      %v540 = vsel %vm522, %v538, %v539
      %v541 = vrot.slane %v466, 6
      %v542 = vrot.slane %v467, 6
      %v543 = vsel %vm522, %v541, %v542
      %v544 = vrot.slane %v468, 6
      %v545 = vrot.slane %v469, 6
      %v546 = vsel %vm522, %v544, %v545
      %v547 = vrot.slane %v470, 6
      %v548 = vrot.slane %v471, 6
      %v549 = vsel %vm522, %v547, %v548
      %v550 = vrot.slane %v472, 6
      %v551 = vrot.slane %v473, 6
      %v552 = vsel %vm522, %v550, %v551
      %v553 = vrot.slane %v494, 6
      %v554 = vrot.slane %v495, 6
      %v555 = vsel %vm522, %v553, %v554
      %v556 = vrot.slane %v496, 6
      %v557 = vrot.slane %v497, 6
      %v558 = vsel %vm522, %v556, %v557
      %v595 = vsel %vm522, 0.0, %v523
      %v596 = vsel %vm522, 0.0, %v526
      %v597 = vsel %vm522, 0.0, %v529
      %v598 = vsel %vm522, 0.0, %v532
      %v599 = vsel %vm522, 0.0, %v535
      %v600 = vsel %vm522, 0.0, %v538
      %v601 = vsel %vm522, 0.0, %v541
      %v602 = vsel %vm522, 0.0, %v544
      %v603 = vsel %vm522, 0.0, %v547
      %v604 = vsel %vm522, 0.0, %v550
      %v605 = vsel %vm522, 0.0, %v553
      %v606 = vsel %vm522, 0.0, %v556
      %v607 = vsel %vm522, %v524, 0.0
      %v608 = vsel %vm522, %v527, 0.0
      %v609 = vsel %vm522, %v530, 0.0
      %v610 = vsel %vm522, %v533, 0.0
      %v611 = vsel %vm522, %v536, 0.0
      %v612 = vsel %vm522, %v539, 0.0
      %v613 = vsel %vm522, %v542, 0.0
      %v614 = vsel %vm522, %v545, 0.0
      %v615 = vsel %vm522, %v548, 0.0
      %v616 = vsel %vm522, %v551, 0.0
      %v617 = vsel %vm522, %v554, 0.0
      %v618 = vsel %vm522, %v557, 0.0
      %v619 = vld [vmem:[%s3] sm:$0x3]
      %v620 = vld [vmem:[%s3 + $0x2] sm:$0x3]
      %v621 = vld [vmem:[%s3 + $0x4] sm:$0x3]
      %v622 = vld [vmem:[%s3 + $0x6] sm:$0x3]
      %v623 = vld [vmem:[%s3 + $0x8] sm:$0x3]
      %v624 = vld [vmem:[%s3 + $0xa] sm:$0x3]
      %v625 = vld [vmem:[%s3 + $0xc] sm:$0x3]
      %v626 = vld [vmem:[%s3 + $0xe] sm:$0x3]
      %v627 = vld [vmem:[%s3 + $0x10] sm:$0x3]
      %v628 = vld [vmem:[%s4] sm:$0x1]
      %v629 = vpack.c.bf16 %v595, %v595
      %v630 = vpack.c.bf16 %v525, %v525
      %v631 = vpack.c.bf16 %v607, %v607
      %v632 = vpack.c.bf16 %v596, %v596
      %v633 = vpack.c.bf16 %v528, %v528
      %v634 = vpack.c.bf16 %v608, %v608
      %v635 = vpack.c.bf16 %v597, %v597
      %v636 = vpack.c.bf16 %v531, %v531
      %v637 = vpack.c.bf16 %v609, %v609
      %v638 = vpack.c.bf16 %v598, %v598
      %v639 = vpack.c.bf16 %v534, %v534
      %v640 = vpack.c.bf16 %v610, %v610
      %v641 = vpack.c.bf16 %v599, %v599
      %v642 = vpack.c.bf16 %v537, %v537
      %v643 = vpack.c.bf16 %v611, %v611
      %v644 = vpack.c.bf16 %v600, %v600
      %v645 = vpack.c.bf16 %v540, %v540
      %v646 = vpack.c.bf16 %v612, %v612
      %v647 = vpack.c.bf16 %v601, %v601
      %v648 = vpack.c.bf16 %v543, %v543
      %v649 = vpack.c.bf16 %v613, %v613
      %v650 = vpack.c.bf16 %v602, %v602
      %v651 = vpack.c.bf16 %v546, %v546
      %v652 = vpack.c.bf16 %v614, %v614
      %v653 = vpack.c.bf16 %v603, %v603
      %v654 = vpack.c.bf16 %v549, %v549
      %v655 = vpack.c.bf16 %v615, %v615
      %v656 = vpack.c.bf16 %v604, %v604
      %v657 = vpack.c.bf16 %v552, %v552
      %v658 = vpack.c.bf16 %v616, %v616
      %v659 = vpack.c.bf16 %v605, %v605
      %v660 = vpack.c.bf16 %v555, %v555
      %v661 = vpack.c.bf16 %v617, %v617
      %v662 = vpack.c.bf16 %v606, %v606
      %v663 = vpack.c.bf16 %v558, %v558
      %v664 = vpack.c.bf16 %v618, %v618
      %v695 = vrot.slane %v629, 3
      %v696 = vrot.slane %v630, 3
      %v697 = vrot.slane %v631, 3
      %v698 = vrot.slane %v632, 3
      %v699 = vrot.slane %v633, 3
      %v700 = vrot.slane %v634, 3
      %v701 = vrot.slane %v635, 3
      %v702 = vrot.slane %v636, 3
      %v703 = vrot.slane %v637, 3
      %v704 = vrot.slane %v638, 3
      %v705 = vrot.slane %v639, 3
      %v706 = vrot.slane %v640, 3
      %v707 = vrot.slane %v641, 3
      %v708 = vrot.slane %v642, 3
      %v709 = vrot.slane %v643, 3
      %v710 = vrot.slane %v644, 3
      %v711 = vrot.slane %v645, 3
      %v712 = vrot.slane %v646, 3
      %v713 = vrot.slane %v647, 3
      %v714 = vrot.slane %v648, 3
      %v715 = vrot.slane %v649, 3
      %v716 = vrot.slane %v650, 3
      %v717 = vrot.slane %v651, 3
      %v718 = vrot.slane %v652, 3
      %v719 = vrot.slane %v653, 3
      %v720 = vrot.slane %v654, 3
      %v721 = vrot.slane %v655, 3
      %v722 = vrot.slane %v656, 3
      %v723 = vrot.slane %v657, 3
      %v724 = vrot.slane %v658, 3
      %vm725 = vcmask 1040384
      %v728 = vsel %vm725, %v629, %v695
      %vm729 = vcmask 1041409
      %v730 = vsel %vm729, %v629, %v695
      %v732 = vrot.slane %v730, 1
      %vm733 = vcmask 1042434
      %v734 = vsel %vm733, %v629, %v695
      %v736 = vrot.slane %v734, 2
      %vm737 = vcmask 1043459
      %v738 = vsel %vm737, %v629, %v695
      %v740 = vrot.slane %v738, 3
      %v743 = vsel %vm725, %v630, %v696
      %v744 = vsel %vm729, %v630, %v696
      %v746 = vrot.slane %v744, 1
      %v747 = vsel %vm733, %v630, %v696
      %v749 = vrot.slane %v747, 2
      %v750 = vsel %vm737, %v630, %v696
      %v752 = vrot.slane %v750, 3
      %v755 = vsel %vm725, %v631, %v697
      %v758 = vsel %vm725, %v632, %v698
      %v759 = vsel %vm729, %v632, %v698
      %v761 = vrot.slane %v759, 1
      %v762 = vsel %vm733, %v632, %v698
      %v764 = vrot.slane %v762, 2
      %v765 = vsel %vm737, %v632, %v698
      %v767 = vrot.slane %v765, 3
      %v770 = vsel %vm725, %v633, %v699
      %v771 = vsel %vm729, %v633, %v699
      %v773 = vrot.slane %v771, 1
      %v774 = vsel %vm733, %v633, %v699
      %v776 = vrot.slane %v774, 2
      %v777 = vsel %vm737, %v633, %v699
      %v779 = vrot.slane %v777, 3
      %v782 = vsel %vm725, %v634, %v700
      %v785 = vsel %vm725, %v635, %v701
      %v786 = vsel %vm729, %v635, %v701
      %v788 = vrot.slane %v786, 1
      %v789 = vsel %vm733, %v635, %v701
      %v791 = vrot.slane %v789, 2
      %v792 = vsel %vm737, %v635, %v701
      %v794 = vrot.slane %v792, 3
      %v797 = vsel %vm725, %v636, %v702
      %v798 = vsel %vm729, %v636, %v702
      %v800 = vrot.slane %v798, 1
      %v801 = vsel %vm733, %v636, %v702
      %v803 = vrot.slane %v801, 2
      %v804 = vsel %vm737, %v636, %v702
      %v806 = vrot.slane %v804, 3
      %v809 = vsel %vm725, %v637, %v703
      %v812 = vsel %vm725, %v638, %v704
      %v813 = vsel %vm729, %v638, %v704
      %v815 = vrot.slane %v813, 1
      %v816 = vsel %vm733, %v638, %v704
      %v818 = vrot.slane %v816, 2
      %v819 = vsel %vm737, %v638, %v704
      %v821 = vrot.slane %v819, 3
      %v824 = vsel %vm725, %v639, %v705
      %v825 = vsel %vm729, %v639, %v705
      %v827 = vrot.slane %v825, 1
      %v828 = vsel %vm733, %v639, %v705
      %v830 = vrot.slane %v828, 2
      %v831 = vsel %vm737, %v639, %v705
      %v833 = vrot.slane %v831, 3
      %v836 = vsel %vm725, %v640, %v706
      %v839 = vsel %vm725, %v641, %v707
      %v840 = vsel %vm729, %v641, %v707
      %v842 = vrot.slane %v840, 1
      %v843 = vsel %vm733, %v641, %v707
      %v845 = vrot.slane %v843, 2
      %v846 = vsel %vm737, %v641, %v707
      %v848 = vrot.slane %v846, 3
      %v851 = vsel %vm725, %v642, %v708
      %v852 = vsel %vm729, %v642, %v708
      %v854 = vrot.slane %v852, 1
      %v855 = vsel %vm733, %v642, %v708
      %v857 = vrot.slane %v855, 2
      %v858 = vsel %vm737, %v642, %v708
      %v860 = vrot.slane %v858, 3
      %v863 = vsel %vm725, %v643, %v709
      %v866 = vsel %vm725, %v644, %v710
      %v867 = vsel %vm729, %v644, %v710
      %v869 = vrot.slane %v867, 1
      %v870 = vsel %vm733, %v644, %v710
      %v872 = vrot.slane %v870, 2
      %v873 = vsel %vm737, %v644, %v710
      %v875 = vrot.slane %v873, 3
      %v878 = vsel %vm725, %v645, %v711
      %v879 = vsel %vm729, %v645, %v711
      %v881 = vrot.slane %v879, 1
      %v882 = vsel %vm733, %v645, %v711
      %v884 = vrot.slane %v882, 2
      %v885 = vsel %vm737, %v645, %v711
      %v887 = vrot.slane %v885, 3
      %v890 = vsel %vm725, %v646, %v712
      %v893 = vsel %vm725, %v647, %v713
      %v894 = vsel %vm729, %v647, %v713
      %v896 = vrot.slane %v894, 1
      %v897 = vsel %vm733, %v647, %v713
      %v899 = vrot.slane %v897, 2
      %v900 = vsel %vm737, %v647, %v713
      %v902 = vrot.slane %v900, 3
      %v905 = vsel %vm725, %v648, %v714
      %v906 = vsel %vm729, %v648, %v714
      %v908 = vrot.slane %v906, 1
      %v909 = vsel %vm733, %v648, %v714
      %v911 = vrot.slane %v909, 2
      %v912 = vsel %vm737, %v648, %v714
      %v914 = vrot.slane %v912, 3
      %v917 = vsel %vm725, %v649, %v715
      %v920 = vsel %vm725, %v650, %v716
      %v921 = vsel %vm729, %v650, %v716
      %v923 = vrot.slane %v921, 1
      %v924 = vsel %vm733, %v650, %v716
      %v926 = vrot.slane %v924, 2
      %v927 = vsel %vm737, %v650, %v716
      %v929 = vrot.slane %v927, 3
      %v932 = vsel %vm725, %v651, %v717
      %v933 = vsel %vm729, %v651, %v717
      %v935 = vrot.slane %v933, 1
      %v936 = vsel %vm733, %v651, %v717
      %v938 = vrot.slane %v936, 2
      %v939 = vsel %vm737, %v651, %v717
      %v941 = vrot.slane %v939, 3
      %v944 = vsel %vm725, %v652, %v718
      %v947 = vsel %vm725, %v653, %v719
      %v948 = vsel %vm729, %v653, %v719
      %v950 = vrot.slane %v948, 1
      %v951 = vsel %vm733, %v653, %v719
      %v953 = vrot.slane %v951, 2
      %v954 = vsel %vm737, %v653, %v719
      %v956 = vrot.slane %v954, 3
      %v959 = vsel %vm725, %v654, %v720
      %v960 = vsel %vm729, %v654, %v720
      %v962 = vrot.slane %v960, 1
      %v963 = vsel %vm733, %v654, %v720
      %v965 = vrot.slane %v963, 2
      %v966 = vsel %vm737, %v654, %v720
      %v968 = vrot.slane %v966, 3
      %v971 = vsel %vm725, %v655, %v721
      %v974 = vsel %vm725, %v656, %v722
      %v975 = vsel %vm729, %v656, %v722
      %v977 = vrot.slane %v975, 1
      %v978 = vsel %vm733, %v656, %v722
      %v980 = vrot.slane %v978, 2
      %v981 = vsel %vm737, %v656, %v722
      %v983 = vrot.slane %v981, 3
      %v986 = vsel %vm725, %v657, %v723
      %v987 = vsel %vm729, %v657, %v723
      %v989 = vrot.slane %v987, 1
      %v990 = vsel %vm733, %v657, %v723
      %v992 = vrot.slane %v990, 2
      %v993 = vsel %vm737, %v657, %v723
      %v995 = vrot.slane %v993, 3
      %v998 = vsel %vm725, %v658, %v724
      %v999 = vsel %vm729, %v631, %v697
      %v1001 = vrot.slane %v999, 1
      %v1002 = vsel %vm729, %v634, %v700
      %v1004 = vrot.slane %v1002, 1
      %v1005 = vsel %vm729, %v637, %v703
      %v1007 = vrot.slane %v1005, 1
      %v1008 = vsel %vm729, %v640, %v706
      %v1010 = vrot.slane %v1008, 1
      %v1011 = vsel %vm729, %v643, %v709
      %v1013 = vrot.slane %v1011, 1
      %v1014 = vsel %vm729, %v646, %v712
      %v1016 = vrot.slane %v1014, 1
      %v1017 = vsel %vm729, %v649, %v715
      %v1019 = vrot.slane %v1017, 1
      %v1020 = vsel %vm729, %v652, %v718
      %v1022 = vrot.slane %v1020, 1
      %v1023 = vsel %vm729, %v655, %v721
      %v1025 = vrot.slane %v1023, 1
      %v1026 = vsel %vm729, %v658, %v724
      %v1028 = vrot.slane %v1026, 1
      %vm1029 = vsmask.f32 256
      %vm1030 = vsmask.f32 1284
      %vm1031 = vmor %vm1029, %vm1030
      %vm1032 = vsmask.f32 2312
      %vm1033 = vmor %vm1031, %vm1032
      %vm1034 = vsmask.f32 3340
      %vm1035 = vmor %vm1033, %vm1034
      %vm1036 = vsmask.f32 4368
      %vm1037 = vmor %vm1035, %vm1036
      %vm1038 = vsmask.f32 5396
      %vm1039 = vmor %vm1037, %vm1038
      %vm1040 = vsmask.f32 6424
      %vm1041 = vmor %vm1039, %vm1040
      %vm1042 = vsmask.f32 7452
      %vm1043 = vmor %vm1041, %vm1042
      %v1044 = vshrl.u32 %v728, 16
      %v1046 = vrot.slane %v1044, 7
      %v1047 = vrot.slane %v1046, 1
      %v1049 = vshll.u32 %v732, 16
      %v1051 = vsel %vm1043, %v1047, %v1049
      %v1052 = vshrl.u32 %v732, 16
      %v1054 = vrot.slane %v1052, 7
      %v1055 = vrot.slane %v1054, 1
      %v1057 = vshll.u32 %v736, 16
      %v1059 = vsel %vm1043, %v1055, %v1057
      %v1060 = vshrl.u32 %v736, 16
      %v1062 = vrot.slane %v1060, 7
      %v1063 = vrot.slane %v1062, 1
      %v1065 = vshll.u32 %v740, 16
      %v1067 = vsel %vm1043, %v1063, %v1065
      %v1068 = vshrl.u32 %v740, 16
      %v1070 = vrot.slane %v1068, 7
      %v1071 = vrot.slane %v1070, 1
      %v1072 = vshll.u32 %v743, 16
      %v1074 = vsel %vm1043, %v1071, %v1072
      %v1075 = vshrl.u32 %v743, 16
      %v1077 = vrot.slane %v1075, 7
      %v1078 = vrot.slane %v1077, 1
      %v1080 = vshll.u32 %v746, 16
      %v1082 = vsel %vm1043, %v1078, %v1080
      %v1083 = vshrl.u32 %v746, 16
      %v1085 = vrot.slane %v1083, 7
      %v1086 = vrot.slane %v1085, 1
      %v1088 = vshll.u32 %v749, 16
      %v1090 = vsel %vm1043, %v1086, %v1088
      %v1091 = vshrl.u32 %v749, 16
      %v1093 = vrot.slane %v1091, 7
      %v1094 = vrot.slane %v1093, 1
      %v1096 = vshll.u32 %v752, 16
      %v1098 = vsel %vm1043, %v1094, %v1096
      %v1099 = vshrl.u32 %v752, 16
      %v1101 = vrot.slane %v1099, 7
      %v1102 = vrot.slane %v1101, 1
      %v1103 = vshll.u32 %v755, 16
      %v1105 = vsel %vm1043, %v1102, %v1103
      %v1106 = vshrl.u32 %v755, 16
      %v1108 = vrot.slane %v1106, 7
      %v1109 = vrot.slane %v1108, 1
      %v1111 = vshll.u32 %v1001, 16
      %v1113 = vsel %vm1043, %v1109, %v1111
      %v1114 = vshrl.u32 %v758, 16
      %v1116 = vrot.slane %v1114, 7
      %v1117 = vrot.slane %v1116, 1
      %v1119 = vshll.u32 %v761, 16
      %v1121 = vsel %vm1043, %v1117, %v1119
      %v1122 = vshrl.u32 %v761, 16
      %v1124 = vrot.slane %v1122, 7
      %v1125 = vrot.slane %v1124, 1
      %v1127 = vshll.u32 %v764, 16
      %v1129 = vsel %vm1043, %v1125, %v1127
      %v1130 = vshrl.u32 %v764, 16
      %v1132 = vrot.slane %v1130, 7
      %v1133 = vrot.slane %v1132, 1
      %v1135 = vshll.u32 %v767, 16
      %v1137 = vsel %vm1043, %v1133, %v1135
      %v1138 = vshrl.u32 %v767, 16
      %v1140 = vrot.slane %v1138, 7
      %v1141 = vrot.slane %v1140, 1
      %v1142 = vshll.u32 %v770, 16
      %v1144 = vsel %vm1043, %v1141, %v1142
      %v1145 = vshrl.u32 %v770, 16
      %v1147 = vrot.slane %v1145, 7
      %v1148 = vrot.slane %v1147, 1
      %v1150 = vshll.u32 %v773, 16
      %v1152 = vsel %vm1043, %v1148, %v1150
      %v1153 = vshrl.u32 %v773, 16
      %v1155 = vrot.slane %v1153, 7
      %v1156 = vrot.slane %v1155, 1
      %v1158 = vshll.u32 %v776, 16
      %v1160 = vsel %vm1043, %v1156, %v1158
      %v1161 = vshrl.u32 %v776, 16
      %v1163 = vrot.slane %v1161, 7
      %v1164 = vrot.slane %v1163, 1
      %v1166 = vshll.u32 %v779, 16
      %v1168 = vsel %vm1043, %v1164, %v1166
      %v1169 = vshrl.u32 %v779, 16
      %v1171 = vrot.slane %v1169, 7
      %v1172 = vrot.slane %v1171, 1
      %v1173 = vshll.u32 %v782, 16
      %v1175 = vsel %vm1043, %v1172, %v1173
      %v1176 = vshrl.u32 %v782, 16
      %v1178 = vrot.slane %v1176, 7
      %v1179 = vrot.slane %v1178, 1
      %v1181 = vshll.u32 %v1004, 16
      %v1183 = vsel %vm1043, %v1179, %v1181
      %v1184 = vshrl.u32 %v785, 16
      %v1186 = vrot.slane %v1184, 7
      %v1187 = vrot.slane %v1186, 1
      %v1189 = vshll.u32 %v788, 16
      %v1191 = vsel %vm1043, %v1187, %v1189
      %v1192 = vshrl.u32 %v788, 16
      %v1194 = vrot.slane %v1192, 7
      %v1195 = vrot.slane %v1194, 1
      %v1197 = vshll.u32 %v791, 16
      %v1199 = vsel %vm1043, %v1195, %v1197
      %v1200 = vshrl.u32 %v791, 16
      %v1202 = vrot.slane %v1200, 7
      %v1203 = vrot.slane %v1202, 1
      %v1205 = vshll.u32 %v794, 16
      %v1207 = vsel %vm1043, %v1203, %v1205
      %v1208 = vshrl.u32 %v794, 16
      %v1210 = vrot.slane %v1208, 7
      %v1211 = vrot.slane %v1210, 1
      %v1212 = vshll.u32 %v797, 16
      %v1214 = vsel %vm1043, %v1211, %v1212
      %v1215 = vshrl.u32 %v797, 16
      %v1217 = vrot.slane %v1215, 7
      %v1218 = vrot.slane %v1217, 1
      %v1220 = vshll.u32 %v800, 16
      %v1222 = vsel %vm1043, %v1218, %v1220
      %v1223 = vshrl.u32 %v800, 16
      %v1225 = vrot.slane %v1223, 7
      %v1226 = vrot.slane %v1225, 1
      %v1228 = vshll.u32 %v803, 16
      %v1230 = vsel %vm1043, %v1226, %v1228
      %v1231 = vshrl.u32 %v803, 16
      %v1233 = vrot.slane %v1231, 7
      %v1234 = vrot.slane %v1233, 1
      %v1236 = vshll.u32 %v806, 16
      %v1238 = vsel %vm1043, %v1234, %v1236
      %v1239 = vshrl.u32 %v806, 16
      %v1241 = vrot.slane %v1239, 7
      %v1242 = vrot.slane %v1241, 1
      %v1243 = vshll.u32 %v809, 16
      %v1245 = vsel %vm1043, %v1242, %v1243
      %v1246 = vshrl.u32 %v809, 16
      %v1248 = vrot.slane %v1246, 7
      %v1249 = vrot.slane %v1248, 1
      %v1251 = vshll.u32 %v1007, 16
      %v1253 = vsel %vm1043, %v1249, %v1251
      %v1254 = vshrl.u32 %v812, 16
      %v1256 = vrot.slane %v1254, 7
      %v1257 = vrot.slane %v1256, 1
      %v1259 = vshll.u32 %v815, 16
      %v1261 = vsel %vm1043, %v1257, %v1259
      %v1262 = vshrl.u32 %v815, 16
      %v1264 = vrot.slane %v1262, 7
      %v1265 = vrot.slane %v1264, 1
      %v1267 = vshll.u32 %v818, 16
      %v1269 = vsel %vm1043, %v1265, %v1267
      %v1270 = vshrl.u32 %v818, 16
      %v1272 = vrot.slane %v1270, 7
      %v1273 = vrot.slane %v1272, 1
      %v1275 = vshll.u32 %v821, 16
      %v1277 = vsel %vm1043, %v1273, %v1275
      %v1278 = vshrl.u32 %v821, 16
      %v1280 = vrot.slane %v1278, 7
      %v1281 = vrot.slane %v1280, 1
      %v1282 = vshll.u32 %v824, 16
      %v1284 = vsel %vm1043, %v1281, %v1282
      %v1285 = vshrl.u32 %v824, 16
      %v1287 = vrot.slane %v1285, 7
      %v1288 = vrot.slane %v1287, 1
      %v1290 = vshll.u32 %v827, 16
      %v1292 = vsel %vm1043, %v1288, %v1290
      %v1293 = vshrl.u32 %v827, 16
      %v1295 = vrot.slane %v1293, 7
      %v1296 = vrot.slane %v1295, 1
      %v1298 = vshll.u32 %v830, 16
      %v1300 = vsel %vm1043, %v1296, %v1298
      %v1301 = vshrl.u32 %v830, 16
      %v1303 = vrot.slane %v1301, 7
      %v1304 = vrot.slane %v1303, 1
      %v1306 = vshll.u32 %v833, 16
      %v1308 = vsel %vm1043, %v1304, %v1306
      %v1309 = vshrl.u32 %v833, 16
      %v1311 = vrot.slane %v1309, 7
      %v1312 = vrot.slane %v1311, 1
      %v1313 = vshll.u32 %v836, 16
      %v1315 = vsel %vm1043, %v1312, %v1313
      %v1316 = vshrl.u32 %v836, 16
      %v1318 = vrot.slane %v1316, 7
      %v1319 = vrot.slane %v1318, 1
      %v1321 = vshll.u32 %v1010, 16
      %v1323 = vsel %vm1043, %v1319, %v1321
      %v1324 = vshrl.u32 %v839, 16
      %v1326 = vrot.slane %v1324, 7
      %v1327 = vrot.slane %v1326, 1
      %v1329 = vshll.u32 %v842, 16
      %v1331 = vsel %vm1043, %v1327, %v1329
      %v1332 = vshrl.u32 %v842, 16
      %v1334 = vrot.slane %v1332, 7
      %v1335 = vrot.slane %v1334, 1
      %v1337 = vshll.u32 %v845, 16
      %v1339 = vsel %vm1043, %v1335, %v1337
      %v1340 = vshrl.u32 %v845, 16
      %v1342 = vrot.slane %v1340, 7
      %v1343 = vrot.slane %v1342, 1
      %v1345 = vshll.u32 %v848, 16
      %v1347 = vsel %vm1043, %v1343, %v1345
      %v1348 = vshrl.u32 %v848, 16
      %v1350 = vrot.slane %v1348, 7
      %v1351 = vrot.slane %v1350, 1
      %v1352 = vshll.u32 %v851, 16
      %v1354 = vsel %vm1043, %v1351, %v1352
      %v1355 = vshrl.u32 %v851, 16
      %v1357 = vrot.slane %v1355, 7
      %v1358 = vrot.slane %v1357, 1
      %v1360 = vshll.u32 %v854, 16
      %v1362 = vsel %vm1043, %v1358, %v1360
      %v1363 = vshrl.u32 %v854, 16
      %v1365 = vrot.slane %v1363, 7
      %v1366 = vrot.slane %v1365, 1
      %v1368 = vshll.u32 %v857, 16
      %v1370 = vsel %vm1043, %v1366, %v1368
      %v1371 = vshrl.u32 %v857, 16
      %v1373 = vrot.slane %v1371, 7
      %v1374 = vrot.slane %v1373, 1
      %v1376 = vshll.u32 %v860, 16
      %v1378 = vsel %vm1043, %v1374, %v1376
      %v1379 = vshrl.u32 %v860, 16
      %v1381 = vrot.slane %v1379, 7
      %v1382 = vrot.slane %v1381, 1
      %v1383 = vshll.u32 %v863, 16
      %v1385 = vsel %vm1043, %v1382, %v1383
      %v1386 = vshrl.u32 %v863, 16
      %v1388 = vrot.slane %v1386, 7
      %v1389 = vrot.slane %v1388, 1
      %v1391 = vshll.u32 %v1013, 16
      %v1393 = vsel %vm1043, %v1389, %v1391
      %v1394 = vshrl.u32 %v866, 16
      %v1396 = vrot.slane %v1394, 7
      %v1397 = vrot.slane %v1396, 1
      %v1399 = vshll.u32 %v869, 16
      %v1401 = vsel %vm1043, %v1397, %v1399
      %v1402 = vshrl.u32 %v869, 16
      %v1404 = vrot.slane %v1402, 7
      %v1405 = vrot.slane %v1404, 1
      %v1407 = vshll.u32 %v872, 16
      %v1409 = vsel %vm1043, %v1405, %v1407
      %v1410 = vshrl.u32 %v872, 16
      %v1412 = vrot.slane %v1410, 7
      %v1413 = vrot.slane %v1412, 1
      %v1415 = vshll.u32 %v875, 16
      %v1417 = vsel %vm1043, %v1413, %v1415
      %v1418 = vshrl.u32 %v875, 16
      %v1420 = vrot.slane %v1418, 7
      %v1421 = vrot.slane %v1420, 1
      %v1422 = vshll.u32 %v878, 16
      %v1424 = vsel %vm1043, %v1421, %v1422
      %v1425 = vshrl.u32 %v878, 16
      %v1427 = vrot.slane %v1425, 7
      %v1428 = vrot.slane %v1427, 1
      %v1430 = vshll.u32 %v881, 16
      %v1432 = vsel %vm1043, %v1428, %v1430
      %v1433 = vshrl.u32 %v881, 16
      %v1435 = vrot.slane %v1433, 7
      %v1436 = vrot.slane %v1435, 1
      %v1438 = vshll.u32 %v884, 16
      %v1440 = vsel %vm1043, %v1436, %v1438
      %v1441 = vshrl.u32 %v884, 16
      %v1443 = vrot.slane %v1441, 7
      %v1444 = vrot.slane %v1443, 1
      %v1446 = vshll.u32 %v887, 16
      %v1448 = vsel %vm1043, %v1444, %v1446
      %v1449 = vshrl.u32 %v887, 16
      %v1451 = vrot.slane %v1449, 7
      %v1452 = vrot.slane %v1451, 1
      %v1453 = vshll.u32 %v890, 16
      %v1455 = vsel %vm1043, %v1452, %v1453
      %v1456 = vshrl.u32 %v890, 16
      %v1458 = vrot.slane %v1456, 7
      %v1459 = vrot.slane %v1458, 1
      %v1461 = vshll.u32 %v1016, 16
      %v1463 = vsel %vm1043, %v1459, %v1461
      %v1464 = vshrl.u32 %v893, 16
      %v1466 = vrot.slane %v1464, 7
      %v1467 = vrot.slane %v1466, 1
      %v1469 = vshll.u32 %v896, 16
      %v1471 = vsel %vm1043, %v1467, %v1469
      %v1472 = vshrl.u32 %v896, 16
      %v1474 = vrot.slane %v1472, 7
      %v1475 = vrot.slane %v1474, 1
      %v1477 = vshll.u32 %v899, 16
      %v1479 = vsel %vm1043, %v1475, %v1477
      %v1480 = vshrl.u32 %v899, 16
      %v1482 = vrot.slane %v1480, 7
      %v1483 = vrot.slane %v1482, 1
      %v1485 = vshll.u32 %v902, 16
      %v1487 = vsel %vm1043, %v1483, %v1485
      %v1488 = vshrl.u32 %v902, 16
      %v1490 = vrot.slane %v1488, 7
      %v1491 = vrot.slane %v1490, 1
      %v1492 = vshll.u32 %v905, 16
      %v1494 = vsel %vm1043, %v1491, %v1492
      %v1495 = vshrl.u32 %v905, 16
      %v1497 = vrot.slane %v1495, 7
      %v1498 = vrot.slane %v1497, 1
      %v1500 = vshll.u32 %v908, 16
      %v1502 = vsel %vm1043, %v1498, %v1500
      %v1503 = vshrl.u32 %v908, 16
      %v1505 = vrot.slane %v1503, 7
      %v1506 = vrot.slane %v1505, 1
      %v1508 = vshll.u32 %v911, 16
      %v1510 = vsel %vm1043, %v1506, %v1508
      %v1511 = vshrl.u32 %v911, 16
      %v1513 = vrot.slane %v1511, 7
      %v1514 = vrot.slane %v1513, 1
      %v1516 = vshll.u32 %v914, 16
      %v1518 = vsel %vm1043, %v1514, %v1516
      %v1519 = vshrl.u32 %v914, 16
      %v1521 = vrot.slane %v1519, 7
      %v1522 = vrot.slane %v1521, 1
      %v1523 = vshll.u32 %v917, 16
      %v1525 = vsel %vm1043, %v1522, %v1523
      %v1526 = vshrl.u32 %v917, 16
      %v1528 = vrot.slane %v1526, 7
      %v1529 = vrot.slane %v1528, 1
      %v1531 = vshll.u32 %v1019, 16
      %v1533 = vsel %vm1043, %v1529, %v1531
      %v1534 = vshrl.u32 %v920, 16
      %v1536 = vrot.slane %v1534, 7
      %v1537 = vrot.slane %v1536, 1
      %v1539 = vshll.u32 %v923, 16
      %v1541 = vsel %vm1043, %v1537, %v1539
      %v1542 = vshrl.u32 %v923, 16
      %v1544 = vrot.slane %v1542, 7
      %v1545 = vrot.slane %v1544, 1
      %v1547 = vshll.u32 %v926, 16
      %v1549 = vsel %vm1043, %v1545, %v1547
      %v1550 = vshrl.u32 %v926, 16
      %v1552 = vrot.slane %v1550, 7
      %v1553 = vrot.slane %v1552, 1
      %v1555 = vshll.u32 %v929, 16
      %v1557 = vsel %vm1043, %v1553, %v1555
      %v1558 = vshrl.u32 %v929, 16
      %v1560 = vrot.slane %v1558, 7
      %v1561 = vrot.slane %v1560, 1
      %v1562 = vshll.u32 %v932, 16
      %v1564 = vsel %vm1043, %v1561, %v1562
      %v1565 = vshrl.u32 %v932, 16
      %v1567 = vrot.slane %v1565, 7
      %v1568 = vrot.slane %v1567, 1
      %v1570 = vshll.u32 %v935, 16
      %v1572 = vsel %vm1043, %v1568, %v1570
      %v1573 = vshrl.u32 %v935, 16
      %v1575 = vrot.slane %v1573, 7
      %v1576 = vrot.slane %v1575, 1
      %v1578 = vshll.u32 %v938, 16
      %v1580 = vsel %vm1043, %v1576, %v1578
      %v1581 = vshrl.u32 %v938, 16
      %v1583 = vrot.slane %v1581, 7
      %v1584 = vrot.slane %v1583, 1
      %v1586 = vshll.u32 %v941, 16
      %v1588 = vsel %vm1043, %v1584, %v1586
      %v1589 = vshrl.u32 %v941, 16
      %v1591 = vrot.slane %v1589, 7
      %v1592 = vrot.slane %v1591, 1
      %v1593 = vshll.u32 %v944, 16
      %v1595 = vsel %vm1043, %v1592, %v1593
      %v1596 = vshrl.u32 %v944, 16
      %v1598 = vrot.slane %v1596, 7
      %v1599 = vrot.slane %v1598, 1
      %v1601 = vshll.u32 %v1022, 16
      %v1603 = vsel %vm1043, %v1599, %v1601
      %v1604 = vshrl.u32 %v947, 16
      %v1606 = vrot.slane %v1604, 7
      %v1607 = vrot.slane %v1606, 1
      %v1609 = vshll.u32 %v950, 16
      %v1611 = vsel %vm1043, %v1607, %v1609
      %v1612 = vshrl.u32 %v950, 16
      %v1614 = vrot.slane %v1612, 7
      %v1615 = vrot.slane %v1614, 1
      %v1617 = vshll.u32 %v953, 16
      %v1619 = vsel %vm1043, %v1615, %v1617
      %v1620 = vshrl.u32 %v953, 16
      %v1622 = vrot.slane %v1620, 7
      %v1623 = vrot.slane %v1622, 1
      %v1625 = vshll.u32 %v956, 16
      %v1627 = vsel %vm1043, %v1623, %v1625
      %v1628 = vshrl.u32 %v956, 16
      %v1630 = vrot.slane %v1628, 7
      %v1631 = vrot.slane %v1630, 1
      %v1632 = vshll.u32 %v959, 16
      %v1634 = vsel %vm1043, %v1631, %v1632
      %v1635 = vshrl.u32 %v959, 16
      %v1637 = vrot.slane %v1635, 7
      %v1638 = vrot.slane %v1637, 1
      %v1640 = vshll.u32 %v962, 16
      %v1642 = vsel %vm1043, %v1638, %v1640
      %v1643 = vshrl.u32 %v962, 16
      %v1645 = vrot.slane %v1643, 7
      %v1646 = vrot.slane %v1645, 1
      %v1648 = vshll.u32 %v965, 16
      %v1650 = vsel %vm1043, %v1646, %v1648
      %v1651 = vshrl.u32 %v965, 16
      %v1653 = vrot.slane %v1651, 7
      %v1654 = vrot.slane %v1653, 1
      %v1656 = vshll.u32 %v968, 16
      %v1658 = vsel %vm1043, %v1654, %v1656
      %v1659 = vshrl.u32 %v968, 16
      %v1661 = vrot.slane %v1659, 7
      %v1662 = vrot.slane %v1661, 1
      %v1663 = vshll.u32 %v971, 16
      %v1665 = vsel %vm1043, %v1662, %v1663
      %v1666 = vshrl.u32 %v971, 16
      %v1668 = vrot.slane %v1666, 7
      %v1669 = vrot.slane %v1668, 1
      %v1671 = vshll.u32 %v1025, 16
      %v1673 = vsel %vm1043, %v1669, %v1671
      %v1674 = vshrl.u32 %v974, 16
      %v1676 = vrot.slane %v1674, 7
      %v1677 = vrot.slane %v1676, 1
      %v1679 = vshll.u32 %v977, 16
      %v1681 = vsel %vm1043, %v1677, %v1679
      %v1682 = vshrl.u32 %v977, 16
      %v1684 = vrot.slane %v1682, 7
      %v1685 = vrot.slane %v1684, 1
      %v1687 = vshll.u32 %v980, 16
      %v1689 = vsel %vm1043, %v1685, %v1687
      %v1690 = vshrl.u32 %v980, 16
      %v1692 = vrot.slane %v1690, 7
      %v1693 = vrot.slane %v1692, 1
      %v1695 = vshll.u32 %v983, 16
      %v1697 = vsel %vm1043, %v1693, %v1695
      %v1698 = vshrl.u32 %v983, 16
      %v1700 = vrot.slane %v1698, 7
      %v1701 = vrot.slane %v1700, 1
      %v1702 = vshll.u32 %v986, 16
      %v1704 = vsel %vm1043, %v1701, %v1702
      %v1705 = vshrl.u32 %v986, 16
      %v1707 = vrot.slane %v1705, 7
      %v1708 = vrot.slane %v1707, 1
      %v1710 = vshll.u32 %v989, 16
      %v1712 = vsel %vm1043, %v1708, %v1710
      %v1713 = vshrl.u32 %v989, 16
      %v1715 = vrot.slane %v1713, 7
      %v1716 = vrot.slane %v1715, 1
      %v1718 = vshll.u32 %v992, 16
      %v1720 = vsel %vm1043, %v1716, %v1718
      %v1721 = vshrl.u32 %v992, 16
      %v1723 = vrot.slane %v1721, 7
      %v1724 = vrot.slane %v1723, 1
      %v1726 = vshll.u32 %v995, 16
      %v1728 = vsel %vm1043, %v1724, %v1726
      %v1729 = vshrl.u32 %v995, 16
      %v1731 = vrot.slane %v1729, 7
      %v1732 = vrot.slane %v1731, 1
      %v1733 = vshll.u32 %v998, 16
      %v1735 = vsel %vm1043, %v1732, %v1733
      %v1736 = vshrl.u32 %v998, 16
      %v1738 = vrot.slane %v1736, 7
      %v1739 = vrot.slane %v1738, 1
      %v1741 = vshll.u32 %v1028, 16
      %v1743 = vsel %vm1043, %v1739, %v1741
      %1745 = vst [vmem:[#allocation1] ss:$9 sm:$0xff] %v1051
      %s1747 = scalar_lea.vmem [#allocation1], 1
      %1748 = vst [vmem:[%s1747] ss:$9 sm:$0xff] %v1059
      %s1750 = scalar_lea.vmem [#allocation1], 2
      %1751 = vst [vmem:[%s1750] ss:$9 sm:$0xff] %v1067
      %s1753 = scalar_lea.vmem [#allocation1], 3
      %1754 = vst [vmem:[%s1753] ss:$9 sm:$0xff] %v1074
      %s1756 = scalar_lea.vmem [#allocation1], 4
      %1757 = vst [vmem:[%s1756] ss:$9 sm:$0xff] %v1082
      %s1759 = scalar_lea.vmem [#allocation1], 5
      %1760 = vst [vmem:[%s1759] ss:$9 sm:$0xff] %v1090
      %s1762 = scalar_lea.vmem [#allocation1], 6
      %1763 = vst [vmem:[%s1762] ss:$9 sm:$0xff] %v1098
      %s1765 = scalar_lea.vmem [#allocation1], 7
      %1766 = vst [vmem:[%s1765] ss:$9 sm:$0xff] %v1105
      %v1767 = vld [vmem:[#allocation1] sm:$0xff]
      %1769 = vst [vmem:[#allocation1] ss:$9 sm:$0xff] %v1113
      %1771 = vst [vmem:[%s1747] ss:$9 sm:$0xff] %v1121
      %1773 = vst [vmem:[%s1750] ss:$9 sm:$0xff] %v1129
      %1775 = vst [vmem:[%s1753] ss:$9 sm:$0xff] %v1137
      %1777 = vst [vmem:[%s1756] ss:$9 sm:$0xff] %v1144
      %1779 = vst [vmem:[%s1759] ss:$9 sm:$0xff] %v1152
      %1781 = vst [vmem:[%s1762] ss:$9 sm:$0xff] %v1160
      %1783 = vst [vmem:[%s1765] ss:$9 sm:$0xff] %v1168
      %v1784 = vld [vmem:[#allocation1] sm:$0xff]
      %1786 = vst [vmem:[#allocation1] ss:$9 sm:$0xff] %v1175
      %1788 = vst [vmem:[%s1747] ss:$9 sm:$0xff] %v1183
      %1790 = vst [vmem:[%s1750] ss:$9 sm:$0xff] %v1191
      %1792 = vst [vmem:[%s1753] ss:$9 sm:$0xff] %v1199
      %1794 = vst [vmem:[%s1756] ss:$9 sm:$0xff] %v1207
      %1796 = vst [vmem:[%s1759] ss:$9 sm:$0xff] %v1214
      %1798 = vst [vmem:[%s1762] ss:$9 sm:$0xff] %v1222
      %1800 = vst [vmem:[%s1765] ss:$9 sm:$0xff] %v1230
      %v1801 = vld [vmem:[#allocation1] sm:$0xff]
      %1803 = vst [vmem:[#allocation1] ss:$9 sm:$0xff] %v1238
      %1805 = vst [vmem:[%s1747] ss:$9 sm:$0xff] %v1245
      %1807 = vst [vmem:[%s1750] ss:$9 sm:$0xff] %v1253
      %1809 = vst [vmem:[%s1753] ss:$9 sm:$0xff] %v1261
      %1811 = vst [vmem:[%s1756] ss:$9 sm:$0xff] %v1269
      %1813 = vst [vmem:[%s1759] ss:$9 sm:$0xff] %v1277
      %1815 = vst [vmem:[%s1762] ss:$9 sm:$0xff] %v1284
      %1817 = vst [vmem:[%s1765] ss:$9 sm:$0xff] %v1292
      %v1818 = vld [vmem:[#allocation1] sm:$0xff]
      %1820 = vst [vmem:[#allocation1] ss:$9 sm:$0xff] %v1300
      %1822 = vst [vmem:[%s1747] ss:$9 sm:$0xff] %v1308
      %1824 = vst [vmem:[%s1750] ss:$9 sm:$0xff] %v1315
      %1826 = vst [vmem:[%s1753] ss:$9 sm:$0xff] %v1323
      %1828 = vst [vmem:[%s1756] ss:$9 sm:$0xff] %v1331
      %1830 = vst [vmem:[%s1759] ss:$9 sm:$0xff] %v1339
      %1832 = vst [vmem:[%s1762] ss:$9 sm:$0xff] %v1347
      %1834 = vst [vmem:[%s1765] ss:$9 sm:$0xff] %v1354
      %v1835 = vld [vmem:[#allocation1] sm:$0xff]
      %1837 = vst [vmem:[#allocation1] ss:$9 sm:$0xff] %v1362
      %1839 = vst [vmem:[%s1747] ss:$9 sm:$0xff] %v1370
      %1841 = vst [vmem:[%s1750] ss:$9 sm:$0xff] %v1378
      %1843 = vst [vmem:[%s1753] ss:$9 sm:$0xff] %v1385
      %1845 = vst [vmem:[%s1756] ss:$9 sm:$0xff] %v1393
      %1847 = vst [vmem:[%s1759] ss:$9 sm:$0xff] %v1401
      %1849 = vst [vmem:[%s1762] ss:$9 sm:$0xff] %v1409
      %1851 = vst [vmem:[%s1765] ss:$9 sm:$0xff] %v1417
      %v1852 = vld [vmem:[#allocation1] sm:$0xff]
      %1854 = vst [vmem:[#allocation1] ss:$9 sm:$0xff] %v1424
      %1856 = vst [vmem:[%s1747] ss:$9 sm:$0xff] %v1432
      %1858 = vst [vmem:[%s1750] ss:$9 sm:$0xff] %v1440
      %1860 = vst [vmem:[%s1753] ss:$9 sm:$0xff] %v1448
      %1862 = vst [vmem:[%s1756] ss:$9 sm:$0xff] %v1455
      %1864 = vst [vmem:[%s1759] ss:$9 sm:$0xff] %v1463
      %1866 = vst [vmem:[%s1762] ss:$9 sm:$0xff] %v1471
      %1868 = vst [vmem:[%s1765] ss:$9 sm:$0xff] %v1479
      %v1869 = vld [vmem:[#allocation1] sm:$0xff]
      %1871 = vst [vmem:[#allocation1] ss:$9 sm:$0xff] %v1487
      %1873 = vst [vmem:[%s1747] ss:$9 sm:$0xff] %v1494
      %1875 = vst [vmem:[%s1750] ss:$9 sm:$0xff] %v1502
      %1877 = vst [vmem:[%s1753] ss:$9 sm:$0xff] %v1510
      %1879 = vst [vmem:[%s1756] ss:$9 sm:$0xff] %v1518
      %1881 = vst [vmem:[%s1759] ss:$9 sm:$0xff] %v1525
      %1883 = vst [vmem:[%s1762] ss:$9 sm:$0xff] %v1533
      %1885 = vst [vmem:[%s1765] ss:$9 sm:$0xff] %v1541
      %v1886 = vld [vmem:[#allocation1] sm:$0xff]
      %1888 = vst [vmem:[#allocation1] ss:$9 sm:$0xff] %v1549
      %1890 = vst [vmem:[%s1747] ss:$9 sm:$0xff] %v1557
      %1892 = vst [vmem:[%s1750] ss:$9 sm:$0xff] %v1564
      %1894 = vst [vmem:[%s1753] ss:$9 sm:$0xff] %v1572
      %1896 = vst [vmem:[%s1756] ss:$9 sm:$0xff] %v1580
      %1898 = vst [vmem:[%s1759] ss:$9 sm:$0xff] %v1588
      %1900 = vst [vmem:[%s1762] ss:$9 sm:$0xff] %v1595
      %1902 = vst [vmem:[%s1765] ss:$9 sm:$0xff] %v1603
      %v1903 = vld [vmem:[#allocation1] sm:$0xff]
      %1905 = vst [vmem:[#allocation1] ss:$9 sm:$0xff] %v1611
      %1907 = vst [vmem:[%s1747] ss:$9 sm:$0xff] %v1619
      %1909 = vst [vmem:[%s1750] ss:$9 sm:$0xff] %v1627
      %1911 = vst [vmem:[%s1753] ss:$9 sm:$0xff] %v1634
      %1913 = vst [vmem:[%s1756] ss:$9 sm:$0xff] %v1642
      %1915 = vst [vmem:[%s1759] ss:$9 sm:$0xff] %v1650
      %1917 = vst [vmem:[%s1762] ss:$9 sm:$0xff] %v1658
      %1919 = vst [vmem:[%s1765] ss:$9 sm:$0xff] %v1665
      %v1920 = vld [vmem:[#allocation1] sm:$0xff]
      %1922 = vst [vmem:[#allocation1] ss:$9 sm:$0xff] %v1673
      %1924 = vst [vmem:[%s1747] ss:$9 sm:$0xff] %v1681
      %1926 = vst [vmem:[%s1750] ss:$9 sm:$0xff] %v1689
      %1928 = vst [vmem:[%s1753] ss:$9 sm:$0xff] %v1697
      %1930 = vst [vmem:[%s1756] ss:$9 sm:$0xff] %v1704
      %1932 = vst [vmem:[%s1759] ss:$9 sm:$0xff] %v1712
      %1934 = vst [vmem:[%s1762] ss:$9 sm:$0xff] %v1720
      %1936 = vst [vmem:[%s1765] ss:$9 sm:$0xff] %v1728
      %v1937 = vld [vmem:[#allocation1] sm:$0xff]
      %1939 = vst [vmem:[#allocation1] ss:$9 sm:$0xff] %v1735
      %1941 = vst [vmem:[%s1747] ss:$9 sm:$0xff] %v1743
      %v1942 = vld [vmem:[#allocation1] sm:$0xff]
      %vm1943 = vcmask 31744
      %v1944 = vsel %vm1943, %v1767, 0
      %v1946 = vsel %vm1943, %v1784, 0
      %v1948 = vsel %vm1943, %v1801, 0
      %v1950 = vsel %vm1943, %v1818, 0
      %v1952 = vsel %vm1943, %v1835, 0
      %v1954 = vsel %vm1943, %v1852, 0
      %v1956 = vsel %vm1943, %v1869, 0
      %v1958 = vsel %vm1943, %v1886, 0
      %v1960 = vsel %vm1943, %v1903, 0
      %v1962 = vsel %vm1943, %v1920, 0
      %v1964 = vsel %vm1943, %v1937, 0
      %v1966 = vsel %vm1943, %v1942, 0
      %v1969 = vsel %vm522, %v620, 0
      %1971 = vmatpush.bf16.msra.mxu0 0
      %1972 = vmatpush.bf16.msra.mxu0 0
      %1973 = vmatpush.bf16.msra.mxu0 0
      %1974 = vmatpush.bf16.msra.mxu0 0
      %1975 = vmatpush.bf16.msra.mxu0 0
      %1976 = vmatpush.bf16.msra.mxu0 0
      %1977 = vmatpush.bf16.msra.mxu0 0
      %1978 = vmatpush.bf16.msra.mxu0 %v1969
      %1979 = vmatmul.bf16.gmra.mxu0 %v1944
      %v1980 = vpop.f32.mrf.mxu0
      %v1981 = vadd.f32 0.0, %v1980
      %v1982 = vpop.f32.mrf.mxu0
      %v1983 = vadd.f32 0.0, %v1982
      %1984 = vmatmul.bf16.gmra.mxu0 %v1946
      %v1985 = vpop.f32.mrf.mxu0
      %v1986 = vadd.f32 0.0, %v1985
      %v1987 = vpop.f32.mrf.mxu0
      %v1988 = vadd.f32 0.0, %v1987
      %1989 = vmatmul.bf16.gmra.mxu0 %v1948
      %v1990 = vpop.f32.mrf.mxu0
      %v1991 = vadd.f32 0.0, %v1990
      %v1992 = vpop.f32.mrf.mxu0
      %v1993 = vadd.f32 0.0, %v1992
      %1994 = vmatmul.bf16.gmra.mxu0 %v1950
      %v1995 = vpop.f32.mrf.mxu0
      %v1996 = vadd.f32 0.0, %v1995
      %v1997 = vpop.f32.mrf.mxu0
      %v1998 = vadd.f32 0.0, %v1997
      %1999 = vmatmul.bf16.gmra.mxu0 %v1952
      %v2000 = vpop.f32.mrf.mxu0
      %v2001 = vadd.f32 0.0, %v2000
      %v2002 = vpop.f32.mrf.mxu0
      %v2003 = vadd.f32 0.0, %v2002
      %2004 = vmatmul.bf16.gmra.mxu0 %v1954
      %v2005 = vpop.f32.mrf.mxu0
      %v2006 = vadd.f32 0.0, %v2005
      %v2007 = vpop.f32.mrf.mxu0
      %v2008 = vadd.f32 0.0, %v2007
      %2009 = vmatmul.bf16.gmra.mxu0 %v1956
      %v2010 = vpop.f32.mrf.mxu0
      %v2011 = vadd.f32 0.0, %v2010
      %v2012 = vpop.f32.mrf.mxu0
      %v2013 = vadd.f32 0.0, %v2012
      %2014 = vmatmul.bf16.gmra.mxu0 %v1958
      %v2015 = vpop.f32.mrf.mxu0
      %v2016 = vadd.f32 0.0, %v2015
      %v2017 = vpop.f32.mrf.mxu0
      %v2018 = vadd.f32 0.0, %v2017
      %2019 = vmatmul.bf16.gmra.mxu0 %v1960
      %v2020 = vpop.f32.mrf.mxu0
      %v2021 = vadd.f32 0.0, %v2020
      %v2022 = vpop.f32.mrf.mxu0
      %v2023 = vadd.f32 0.0, %v2022
      %2024 = vmatmul.bf16.gmra.mxu0 %v1962
      %v2025 = vpop.f32.mrf.mxu0
      %v2026 = vadd.f32 0.0, %v2025
      %v2027 = vpop.f32.mrf.mxu0
      %v2028 = vadd.f32 0.0, %v2027
      %2029 = vmatmul.bf16.gmra.mxu0 %v1964
      %v2030 = vpop.f32.mrf.mxu0
      %v2031 = vadd.f32 0.0, %v2030
      %v2032 = vpop.f32.mrf.mxu0
      %v2033 = vadd.f32 0.0, %v2032
      %2034 = vmatmul.bf16.gmra.mxu0 %v1966
      %v2035 = vpop.f32.mrf.mxu0
      %v2036 = vadd.f32 0.0, %v2035
      %v2037 = vpop.f32.mrf.mxu0
      %2038 = vdwg.mxu0
      %2039 = vst [vmem:[#allocation1] ss:$9 sm:$0xff] %v728
      %s2040 = scalar_lea.vmem [#allocation1], 1
      %2041 = vst [vmem:[%s2040] ss:$9 sm:$0xff] %v732
      %s2042 = scalar_lea.vmem [#allocation1], 2
      %2043 = vst [vmem:[%s2042] ss:$9 sm:$0xff] %v736
      %s2044 = scalar_lea.vmem [#allocation1], 3
      %2045 = vst [vmem:[%s2044] ss:$9 sm:$0xff] %v740
      %s2046 = scalar_lea.vmem [#allocation1], 4
      %2047 = vst [vmem:[%s2046] ss:$9 sm:$0xff] %v743
      %s2048 = scalar_lea.vmem [#allocation1], 5
      %2049 = vst [vmem:[%s2048] ss:$9 sm:$0xff] %v746
      %s2050 = scalar_lea.vmem [#allocation1], 6
      %2051 = vst [vmem:[%s2050] ss:$9 sm:$0xff] %v749
      %s2052 = scalar_lea.vmem [#allocation1], 7
      %2053 = vst [vmem:[%s2052] ss:$9 sm:$0xff] %v752
      %v2054 = vld [vmem:[#allocation1] sm:$0xff]
      %2055 = vst [vmem:[#allocation1] ss:$9 sm:$0xff] %v755
      %2056 = vst [vmem:[%s2040] ss:$9 sm:$0xff] %v758
      %2057 = vst [vmem:[%s2042] ss:$9 sm:$0xff] %v761
      %2058 = vst [vmem:[%s2044] ss:$9 sm:$0xff] %v764
      %2059 = vst [vmem:[%s2046] ss:$9 sm:$0xff] %v767
      %2060 = vst [vmem:[%s2048] ss:$9 sm:$0xff] %v770
      %2061 = vst [vmem:[%s2050] ss:$9 sm:$0xff] %v773
      %2062 = vst [vmem:[%s2052] ss:$9 sm:$0xff] %v776
      %v2063 = vld [vmem:[#allocation1] sm:$0xff]
      %2064 = vst [vmem:[#allocation1] ss:$9 sm:$0xff] %v779
      %2065 = vst [vmem:[%s2040] ss:$9 sm:$0xff] %v782
      %2066 = vst [vmem:[%s2042] ss:$9 sm:$0xff] %v785
      %2067 = vst [vmem:[%s2044] ss:$9 sm:$0xff] %v788
      %2068 = vst [vmem:[%s2046] ss:$9 sm:$0xff] %v791
      %2069 = vst [vmem:[%s2048] ss:$9 sm:$0xff] %v794
      %2070 = vst [vmem:[%s2050] ss:$9 sm:$0xff] %v797
      %2071 = vst [vmem:[%s2052] ss:$9 sm:$0xff] %v800
      %v2072 = vld [vmem:[#allocation1] sm:$0xff]
      %2073 = vst [vmem:[#allocation1] ss:$9 sm:$0xff] %v803
      %2074 = vst [vmem:[%s2040] ss:$9 sm:$0xff] %v806
      %2075 = vst [vmem:[%s2042] ss:$9 sm:$0xff] %v809
      %2076 = vst [vmem:[%s2044] ss:$9 sm:$0xff] %v812
      %2077 = vst [vmem:[%s2046] ss:$9 sm:$0xff] %v815
      %2078 = vst [vmem:[%s2048] ss:$9 sm:$0xff] %v818
      %2079 = vst [vmem:[%s2050] ss:$9 sm:$0xff] %v821
      %2080 = vst [vmem:[%s2052] ss:$9 sm:$0xff] %v824
      %v2081 = vld [vmem:[#allocation1] sm:$0xff]
      %2082 = vst [vmem:[#allocation1] ss:$9 sm:$0xff] %v827
      %2083 = vst [vmem:[%s2040] ss:$9 sm:$0xff] %v830
      %2084 = vst [vmem:[%s2042] ss:$9 sm:$0xff] %v833
      %2085 = vst [vmem:[%s2044] ss:$9 sm:$0xff] %v836
      %2086 = vst [vmem:[%s2046] ss:$9 sm:$0xff] %v839
      %2087 = vst [vmem:[%s2048] ss:$9 sm:$0xff] %v842
      %2088 = vst [vmem:[%s2050] ss:$9 sm:$0xff] %v845
      %2089 = vst [vmem:[%s2052] ss:$9 sm:$0xff] %v848
      %v2090 = vld [vmem:[#allocation1] sm:$0xff]
      %2091 = vst [vmem:[#allocation1] ss:$9 sm:$0xff] %v851
      %2092 = vst [vmem:[%s2040] ss:$9 sm:$0xff] %v854
      %2093 = vst [vmem:[%s2042] ss:$9 sm:$0xff] %v857
      %2094 = vst [vmem:[%s2044] ss:$9 sm:$0xff] %v860
      %2095 = vst [vmem:[%s2046] ss:$9 sm:$0xff] %v863
      %2096 = vst [vmem:[%s2048] ss:$9 sm:$0xff] %v866
      %2097 = vst [vmem:[%s2050] ss:$9 sm:$0xff] %v869
      %2098 = vst [vmem:[%s2052] ss:$9 sm:$0xff] %v872
      %v2099 = vld [vmem:[#allocation1] sm:$0xff]
      %2100 = vst [vmem:[#allocation1] ss:$9 sm:$0xff] %v875
      %2101 = vst [vmem:[%s2040] ss:$9 sm:$0xff] %v878
      %2102 = vst [vmem:[%s2042] ss:$9 sm:$0xff] %v881
      %2103 = vst [vmem:[%s2044] ss:$9 sm:$0xff] %v884
      %2104 = vst [vmem:[%s2046] ss:$9 sm:$0xff] %v887
      %2105 = vst [vmem:[%s2048] ss:$9 sm:$0xff] %v890
      %2106 = vst [vmem:[%s2050] ss:$9 sm:$0xff] %v893
      %2107 = vst [vmem:[%s2052] ss:$9 sm:$0xff] %v896
      %v2108 = vld [vmem:[#allocation1] sm:$0xff]
      %2109 = vst [vmem:[#allocation1] ss:$9 sm:$0xff] %v899
      %2110 = vst [vmem:[%s2040] ss:$9 sm:$0xff] %v902
      %2111 = vst [vmem:[%s2042] ss:$9 sm:$0xff] %v905
      %2112 = vst [vmem:[%s2044] ss:$9 sm:$0xff] %v908
      %2113 = vst [vmem:[%s2046] ss:$9 sm:$0xff] %v911
      %2114 = vst [vmem:[%s2048] ss:$9 sm:$0xff] %v914
      %2115 = vst [vmem:[%s2050] ss:$9 sm:$0xff] %v917
      %2116 = vst [vmem:[%s2052] ss:$9 sm:$0xff] %v920
      %v2117 = vld [vmem:[#allocation1] sm:$0xff]
      %2118 = vst [vmem:[#allocation1] ss:$9 sm:$0xff] %v923
      %2119 = vst [vmem:[%s2040] ss:$9 sm:$0xff] %v926
      %2120 = vst [vmem:[%s2042] ss:$9 sm:$0xff] %v929
      %2121 = vst [vmem:[%s2044] ss:$9 sm:$0xff] %v932
      %2122 = vst [vmem:[%s2046] ss:$9 sm:$0xff] %v935
      %2123 = vst [vmem:[%s2048] ss:$9 sm:$0xff] %v938
      %2124 = vst [vmem:[%s2050] ss:$9 sm:$0xff] %v941
      %2125 = vst [vmem:[%s2052] ss:$9 sm:$0xff] %v944
      %v2126 = vld [vmem:[#allocation1] sm:$0xff]
      %2127 = vst [vmem:[#allocation1] ss:$9 sm:$0xff] %v947
      %2128 = vst [vmem:[%s2040] ss:$9 sm:$0xff] %v950
      %2129 = vst [vmem:[%s2042] ss:$9 sm:$0xff] %v953
      %2130 = vst [vmem:[%s2044] ss:$9 sm:$0xff] %v956
      %2131 = vst [vmem:[%s2046] ss:$9 sm:$0xff] %v959
      %2132 = vst [vmem:[%s2048] ss:$9 sm:$0xff] %v962
      %2133 = vst [vmem:[%s2050] ss:$9 sm:$0xff] %v965
      %2134 = vst [vmem:[%s2052] ss:$9 sm:$0xff] %v968
      %v2135 = vld [vmem:[#allocation1] sm:$0xff]
      %2136 = vst [vmem:[#allocation1] ss:$9 sm:$0xff] %v971
      %2137 = vst [vmem:[%s2040] ss:$9 sm:$0xff] %v974
      %2138 = vst [vmem:[%s2042] ss:$9 sm:$0xff] %v977
      %2139 = vst [vmem:[%s2044] ss:$9 sm:$0xff] %v980
      %2140 = vst [vmem:[%s2046] ss:$9 sm:$0xff] %v983
      %2141 = vst [vmem:[%s2048] ss:$9 sm:$0xff] %v986
      %2142 = vst [vmem:[%s2050] ss:$9 sm:$0xff] %v989
      %2143 = vst [vmem:[%s2052] ss:$9 sm:$0xff] %v992
      %v2144 = vld [vmem:[#allocation1] sm:$0xff]
      %2145 = vst [vmem:[#allocation1] ss:$9 sm:$0xff] %v995
      %2146 = vst [vmem:[%s2040] ss:$9 sm:$0xff] %v998
      %v2147 = vld [vmem:[#allocation1] sm:$0xff]
      %v2148 = vsel %vm1943, %v2054, 0
      %v2150 = vsel %vm1943, %v2063, 0
      %v2152 = vsel %vm1943, %v2072, 0
      %v2154 = vsel %vm1943, %v2081, 0
      %v2156 = vsel %vm1943, %v2090, 0
      %v2158 = vsel %vm1943, %v2099, 0
      %v2160 = vsel %vm1943, %v2108, 0
      %v2162 = vsel %vm1943, %v2117, 0
      %v2164 = vsel %vm1943, %v2126, 0
      %v2166 = vsel %vm1943, %v2135, 0
      %v2168 = vsel %vm1943, %v2144, 0
      %v2170 = vsel %vm1943, %v2147, 0
      %v2173 = vsel %vm522, %v619, 0
      %2175 = vmatpush.bf16.msra.mxu0 0
      %2176 = vmatpush.bf16.msra.mxu0 0
      %2177 = vmatpush.bf16.msra.mxu0 0
      %2178 = vmatpush.bf16.msra.mxu0 0
      %2179 = vmatpush.bf16.msra.mxu0 0
      %2180 = vmatpush.bf16.msra.mxu0 0
      %2181 = vmatpush.bf16.msra.mxu0 0
      %2182 = vmatpush.bf16.msra.mxu0 %v2173
      %2183 = vmatmul.bf16.gmra.mxu0 %v2148
      %v2184 = vpop.f32.mrf.mxu0
      %v2185 = vadd.f32 %v1981, %v2184
      %v2186 = vpop.f32.mrf.mxu0
      %v2187 = vadd.f32 %v1983, %v2186
      %2188 = vmatmul.bf16.gmra.mxu0 %v2150
      %v2189 = vpop.f32.mrf.mxu0
      %v2190 = vadd.f32 %v1986, %v2189
      %v2191 = vpop.f32.mrf.mxu0
      %v2192 = vadd.f32 %v1988, %v2191
      %2193 = vmatmul.bf16.gmra.mxu0 %v2152
      %v2194 = vpop.f32.mrf.mxu0
      %v2195 = vadd.f32 %v1991, %v2194
      %v2196 = vpop.f32.mrf.mxu0
      %v2197 = vadd.f32 %v1993, %v2196
      %2198 = vmatmul.bf16.gmra.mxu0 %v2154
      %v2199 = vpop.f32.mrf.mxu0
      %v2200 = vadd.f32 %v1996, %v2199
      %v2201 = vpop.f32.mrf.mxu0
      %v2202 = vadd.f32 %v1998, %v2201
      %2203 = vmatmul.bf16.gmra.mxu0 %v2156
      %v2204 = vpop.f32.mrf.mxu0
      %v2205 = vadd.f32 %v2001, %v2204
      %v2206 = vpop.f32.mrf.mxu0
      %v2207 = vadd.f32 %v2003, %v2206
      %2208 = vmatmul.bf16.gmra.mxu0 %v2158
      %v2209 = vpop.f32.mrf.mxu0
      %v2210 = vadd.f32 %v2006, %v2209
      %v2211 = vpop.f32.mrf.mxu0
      %v2212 = vadd.f32 %v2008, %v2211
      %2213 = vmatmul.bf16.gmra.mxu0 %v2160
      %v2214 = vpop.f32.mrf.mxu0
      %v2215 = vadd.f32 %v2011, %v2214
      %v2216 = vpop.f32.mrf.mxu0
      %v2217 = vadd.f32 %v2013, %v2216
      %2218 = vmatmul.bf16.gmra.mxu0 %v2162
      %v2219 = vpop.f32.mrf.mxu0
      %v2220 = vadd.f32 %v2016, %v2219
      %v2221 = vpop.f32.mrf.mxu0
      %v2222 = vadd.f32 %v2018, %v2221
      %2223 = vmatmul.bf16.gmra.mxu0 %v2164
      %v2224 = vpop.f32.mrf.mxu0
      %v2225 = vadd.f32 %v2021, %v2224
      %v2226 = vpop.f32.mrf.mxu0
      %v2227 = vadd.f32 %v2023, %v2226
      %2228 = vmatmul.bf16.gmra.mxu0 %v2166
      %v2229 = vpop.f32.mrf.mxu0
      %v2230 = vadd.f32 %v2026, %v2229
      %v2231 = vpop.f32.mrf.mxu0
      %v2232 = vadd.f32 %v2028, %v2231
      %2233 = vmatmul.bf16.gmra.mxu0 %v2168
      %v2234 = vpop.f32.mrf.mxu0
      %v2235 = vadd.f32 %v2031, %v2234
      %v2236 = vpop.f32.mrf.mxu0
      %v2237 = vadd.f32 %v2033, %v2236
      %2238 = vmatmul.bf16.gmra.mxu0 %v2170
      %v2239 = vpop.f32.mrf.mxu0
      %v2240 = vadd.f32 %v2036, %v2239
      %v2241 = vpop.f32.mrf.mxu0
      %2242 = vdwg.mxu0
      %2243 = vst [vmem:[#allocation1] sm:$0xff] %v629
      %2244 = vst [vmem:[#allocation1 + $0x20] sm:$0xff] %v630
      %s2245 = scalar_lea.vmem [#allocation1], 1
      %v2246 = vld [vmem:[%s2245] ss:$4 sm:$0xff]
      %s2247 = scalar_lea.vmem [#allocation1], 2
      %v2248 = vld [vmem:[%s2247] ss:$4 sm:$0xff]
      %s2249 = scalar_lea.vmem [#allocation1], 3
      %v2250 = vld [vmem:[%s2249] ss:$4 sm:$0xff]
      %s2251 = scalar_lea.vmem [#allocation1], 32
      %v2252 = vld [vmem:[%s2251] ss:$4 sm:$0xff]
      %s2253 = scalar_lea.vmem [#allocation1], 33
      %v2254 = vld [vmem:[%s2253] ss:$4 sm:$0xff]
      %s2255 = scalar_lea.vmem [#allocation1], 34
      %v2256 = vld [vmem:[%s2255] ss:$4 sm:$0xff]
      %s2257 = scalar_lea.vmem [#allocation1], 35
      %v2258 = vld [vmem:[%s2257] ss:$4 sm:$0xff]
      %2259 = vst [vmem:[#allocation1] sm:$0xff] %v631
      %v2260 = vld [vmem:[#allocation1] ss:$4 sm:$0xff]
      %v2261 = vld [vmem:[%s2245] ss:$4 sm:$0xff]
      %2262 = vst [vmem:[#allocation1 + $0x20] sm:$0xff] %v632
      %v2263 = vld [vmem:[%s2253] ss:$4 sm:$0xff]
      %v2264 = vld [vmem:[%s2255] ss:$4 sm:$0xff]
      %v2265 = vld [vmem:[%s2257] ss:$4 sm:$0xff]
      %2266 = vst [vmem:[#allocation1] sm:$0xff] %v633
      %2267 = vst [vmem:[#allocation1 + $0x20] sm:$0xff] %v634
      %v2268 = vld [vmem:[#allocation1] ss:$4 sm:$0xff]
      %v2269 = vld [vmem:[%s2245] ss:$4 sm:$0xff]
      %v2270 = vld [vmem:[%s2247] ss:$4 sm:$0xff]
      %v2271 = vld [vmem:[%s2249] ss:$4 sm:$0xff]
      %v2272 = vld [vmem:[%s2251] ss:$4 sm:$0xff]
      %v2273 = vld [vmem:[%s2253] ss:$4 sm:$0xff]
      %2274 = vst [vmem:[#allocation1] sm:$0xff] %v635
      %2275 = vst [vmem:[#allocation1 + $0x20] sm:$0xff] %v636
      %v2276 = vld [vmem:[%s2245] ss:$4 sm:$0xff]
      %v2277 = vld [vmem:[%s2247] ss:$4 sm:$0xff]
      %v2278 = vld [vmem:[%s2249] ss:$4 sm:$0xff]
      %v2279 = vld [vmem:[%s2251] ss:$4 sm:$0xff]
      %v2280 = vld [vmem:[%s2253] ss:$4 sm:$0xff]
      %v2281 = vld [vmem:[%s2255] ss:$4 sm:$0xff]
      %v2282 = vld [vmem:[%s2257] ss:$4 sm:$0xff]
      %2283 = vst [vmem:[#allocation1] sm:$0xff] %v637
      %v2284 = vld [vmem:[#allocation1] ss:$4 sm:$0xff]
      %v2285 = vld [vmem:[%s2245] ss:$4 sm:$0xff]
      %2286 = vst [vmem:[#allocation1 + $0x20] sm:$0xff] %v638
      %v2287 = vld [vmem:[%s2253] ss:$4 sm:$0xff]
      %v2288 = vld [vmem:[%s2255] ss:$4 sm:$0xff]
      %v2289 = vld [vmem:[%s2257] ss:$4 sm:$0xff]
      %2290 = vst [vmem:[#allocation1] sm:$0xff] %v639
      %2291 = vst [vmem:[#allocation1 + $0x20] sm:$0xff] %v640
      %v2292 = vld [vmem:[#allocation1] ss:$4 sm:$0xff]
      %v2293 = vld [vmem:[%s2245] ss:$4 sm:$0xff]
      %v2294 = vld [vmem:[%s2247] ss:$4 sm:$0xff]
      %v2295 = vld [vmem:[%s2249] ss:$4 sm:$0xff]
      %v2296 = vld [vmem:[%s2251] ss:$4 sm:$0xff]
      %v2297 = vld [vmem:[%s2253] ss:$4 sm:$0xff]
      %2298 = vst [vmem:[#allocation1] sm:$0xff] %v641
      %2299 = vst [vmem:[#allocation1 + $0x20] sm:$0xff] %v642
      %v2300 = vld [vmem:[%s2245] ss:$4 sm:$0xff]
      %v2301 = vld [vmem:[%s2247] ss:$4 sm:$0xff]
      %v2302 = vld [vmem:[%s2249] ss:$4 sm:$0xff]
      %v2303 = vld [vmem:[%s2251] ss:$4 sm:$0xff]
      %v2304 = vld [vmem:[%s2253] ss:$4 sm:$0xff]
      %v2305 = vld [vmem:[%s2255] ss:$4 sm:$0xff]
      %v2306 = vld [vmem:[%s2257] ss:$4 sm:$0xff]
      %2307 = vst [vmem:[#allocation1] sm:$0xff] %v643
      %v2308 = vld [vmem:[#allocation1] ss:$4 sm:$0xff]
      %v2309 = vld [vmem:[%s2245] ss:$4 sm:$0xff]
      %2310 = vst [vmem:[#allocation1 + $0x20] sm:$0xff] %v644
      %v2311 = vld [vmem:[%s2253] ss:$4 sm:$0xff]
      %v2312 = vld [vmem:[%s2255] ss:$4 sm:$0xff]
      %v2313 = vld [vmem:[%s2257] ss:$4 sm:$0xff]
      %2314 = vst [vmem:[#allocation1] sm:$0xff] %v645
      %2315 = vst [vmem:[#allocation1 + $0x20] sm:$0xff] %v646
      %v2316 = vld [vmem:[#allocation1] ss:$4 sm:$0xff]
      %v2317 = vld [vmem:[%s2245] ss:$4 sm:$0xff]
      %v2318 = vld [vmem:[%s2247] ss:$4 sm:$0xff]
      %v2319 = vld [vmem:[%s2249] ss:$4 sm:$0xff]
      %v2320 = vld [vmem:[%s2251] ss:$4 sm:$0xff]
      %v2321 = vld [vmem:[%s2253] ss:$4 sm:$0xff]
      %2322 = vst [vmem:[#allocation1] sm:$0xff] %v647
      %2323 = vst [vmem:[#allocation1 + $0x20] sm:$0xff] %v648
      %v2324 = vld [vmem:[%s2245] ss:$4 sm:$0xff]
      %v2325 = vld [vmem:[%s2247] ss:$4 sm:$0xff]
      %v2326 = vld [vmem:[%s2249] ss:$4 sm:$0xff]
      %v2327 = vld [vmem:[%s2251] ss:$4 sm:$0xff]
      %v2328 = vld [vmem:[%s2253] ss:$4 sm:$0xff]
      %v2329 = vld [vmem:[%s2255] ss:$4 sm:$0xff]
      %v2330 = vld [vmem:[%s2257] ss:$4 sm:$0xff]
      %2331 = vst [vmem:[#allocation1] sm:$0xff] %v649
      %v2332 = vld [vmem:[#allocation1] ss:$4 sm:$0xff]
      %v2333 = vld [vmem:[%s2245] ss:$4 sm:$0xff]
      %2334 = vst [vmem:[#allocation1 + $0x20] sm:$0xff] %v650
      %v2335 = vld [vmem:[%s2253] ss:$4 sm:$0xff]
      %v2336 = vld [vmem:[%s2255] ss:$4 sm:$0xff]
      %v2337 = vld [vmem:[%s2257] ss:$4 sm:$0xff]
      %2338 = vst [vmem:[#allocation1] sm:$0xff] %v651
      %2339 = vst [vmem:[#allocation1 + $0x20] sm:$0xff] %v652
      %v2340 = vld [vmem:[#allocation1] ss:$4 sm:$0xff]
      %v2341 = vld [vmem:[%s2245] ss:$4 sm:$0xff]
      %v2342 = vld [vmem:[%s2247] ss:$4 sm:$0xff]
      %v2343 = vld [vmem:[%s2249] ss:$4 sm:$0xff]
      %v2344 = vld [vmem:[%s2251] ss:$4 sm:$0xff]
      %v2345 = vld [vmem:[%s2253] ss:$4 sm:$0xff]
      %2346 = vst [vmem:[#allocation1] sm:$0xff] %v653
      %2347 = vst [vmem:[#allocation1 + $0x20] sm:$0xff] %v654
      %v2348 = vld [vmem:[%s2245] ss:$4 sm:$0xff]
      %v2349 = vld [vmem:[%s2247] ss:$4 sm:$0xff]
      %v2350 = vld [vmem:[%s2249] ss:$4 sm:$0xff]
      %v2351 = vld [vmem:[%s2251] ss:$4 sm:$0xff]
      %v2352 = vld [vmem:[%s2253] ss:$4 sm:$0xff]
      %v2353 = vld [vmem:[%s2255] ss:$4 sm:$0xff]
      %v2354 = vld [vmem:[%s2257] ss:$4 sm:$0xff]
      %2355 = vst [vmem:[#allocation1] sm:$0xff] %v655
      %v2356 = vld [vmem:[#allocation1] ss:$4 sm:$0xff]
      %v2357 = vld [vmem:[%s2245] ss:$4 sm:$0xff]
      %2358 = vst [vmem:[#allocation1 + $0x20] sm:$0xff] %v656
      %v2359 = vld [vmem:[%s2253] ss:$4 sm:$0xff]
      %v2360 = vld [vmem:[%s2255] ss:$4 sm:$0xff]
      %v2361 = vld [vmem:[%s2257] ss:$4 sm:$0xff]
      %2362 = vst [vmem:[#allocation1] sm:$0xff] %v657
      %2363 = vst [vmem:[#allocation1 + $0x20] sm:$0xff] %v658
      %v2364 = vld [vmem:[#allocation1] ss:$4 sm:$0xff]
      %v2365 = vld [vmem:[%s2245] ss:$4 sm:$0xff]
      %v2366 = vld [vmem:[%s2247] ss:$4 sm:$0xff]
      %v2367 = vld [vmem:[%s2249] ss:$4 sm:$0xff]
      %v2368 = vld [vmem:[%s2251] ss:$4 sm:$0xff]
      %v2369 = vld [vmem:[%s2253] ss:$4 sm:$0xff]
      %2370 = vst [vmem:[#allocation1] ss:$9 sm:$0xff] %v2246
      %s2371 = scalar_lea.vmem [#allocation1], 1
      %2372 = vst [vmem:[%s2371] ss:$9 sm:$0xff] %v2248
      %s2373 = scalar_lea.vmem [#allocation1], 2
      %2374 = vst [vmem:[%s2373] ss:$9 sm:$0xff] %v2250
      %s2375 = scalar_lea.vmem [#allocation1], 3
      %2376 = vst [vmem:[%s2375] ss:$9 sm:$0xff] %v2252
      %s2377 = scalar_lea.vmem [#allocation1], 4
      %2378 = vst [vmem:[%s2377] ss:$9 sm:$0xff] %v2254
      %s2379 = scalar_lea.vmem [#allocation1], 5
      %2380 = vst [vmem:[%s2379] ss:$9 sm:$0xff] %v2256
      %s2381 = scalar_lea.vmem [#allocation1], 6
      %2382 = vst [vmem:[%s2381] ss:$9 sm:$0xff] %v2258
      %s2383 = scalar_lea.vmem [#allocation1], 7
      %2384 = vst [vmem:[%s2383] ss:$9 sm:$0xff] %v2260
      %v2385 = vld [vmem:[#allocation1] sm:$0xff]
      %2386 = vst [vmem:[#allocation1] ss:$9 sm:$0xff] %v2261
      %2387 = vst [vmem:[%s2371] ss:$9 sm:$0xff] %v2263
      %2388 = vst [vmem:[%s2373] ss:$9 sm:$0xff] %v2264
      %2389 = vst [vmem:[%s2375] ss:$9 sm:$0xff] %v2265
      %2390 = vst [vmem:[%s2377] ss:$9 sm:$0xff] %v2268
      %2391 = vst [vmem:[%s2379] ss:$9 sm:$0xff] %v2269
      %2392 = vst [vmem:[%s2381] ss:$9 sm:$0xff] %v2270
      %2393 = vst [vmem:[%s2383] ss:$9 sm:$0xff] %v2271
      %v2394 = vld [vmem:[#allocation1] sm:$0xff]
      %2395 = vst [vmem:[#allocation1] ss:$9 sm:$0xff] %v2272
      %2396 = vst [vmem:[%s2371] ss:$9 sm:$0xff] %v2273
      %2397 = vst [vmem:[%s2373] ss:$9 sm:$0xff] %v2276
      %2398 = vst [vmem:[%s2375] ss:$9 sm:$0xff] %v2277
      %2399 = vst [vmem:[%s2377] ss:$9 sm:$0xff] %v2278
      %2400 = vst [vmem:[%s2379] ss:$9 sm:$0xff] %v2279
      %2401 = vst [vmem:[%s2381] ss:$9 sm:$0xff] %v2280
      %2402 = vst [vmem:[%s2383] ss:$9 sm:$0xff] %v2281
      %v2403 = vld [vmem:[#allocation1] sm:$0xff]
      %2404 = vst [vmem:[#allocation1] ss:$9 sm:$0xff] %v2282
      %2405 = vst [vmem:[%s2371] ss:$9 sm:$0xff] %v2284
      %2406 = vst [vmem:[%s2373] ss:$9 sm:$0xff] %v2285
      %2407 = vst [vmem:[%s2375] ss:$9 sm:$0xff] %v2287
      %2408 = vst [vmem:[%s2377] ss:$9 sm:$0xff] %v2288
      %2409 = vst [vmem:[%s2379] ss:$9 sm:$0xff] %v2289
      %2410 = vst [vmem:[%s2381] ss:$9 sm:$0xff] %v2292
      %2411 = vst [vmem:[%s2383] ss:$9 sm:$0xff] %v2293
      %v2412 = vld [vmem:[#allocation1] sm:$0xff]
      %2413 = vst [vmem:[#allocation1] ss:$9 sm:$0xff] %v2294
      %2414 = vst [vmem:[%s2371] ss:$9 sm:$0xff] %v2295
      %2415 = vst [vmem:[%s2373] ss:$9 sm:$0xff] %v2296
      %2416 = vst [vmem:[%s2375] ss:$9 sm:$0xff] %v2297
      %2417 = vst [vmem:[%s2377] ss:$9 sm:$0xff] %v2300
      %2418 = vst [vmem:[%s2379] ss:$9 sm:$0xff] %v2301
      %2419 = vst [vmem:[%s2381] ss:$9 sm:$0xff] %v2302
      %2420 = vst [vmem:[%s2383] ss:$9 sm:$0xff] %v2303
      %v2421 = vld [vmem:[#allocation1] sm:$0xff]
      %2422 = vst [vmem:[#allocation1] ss:$9 sm:$0xff] %v2304
      %2423 = vst [vmem:[%s2371] ss:$9 sm:$0xff] %v2305
      %2424 = vst [vmem:[%s2373] ss:$9 sm:$0xff] %v2306
      %2425 = vst [vmem:[%s2375] ss:$9 sm:$0xff] %v2308
      %2426 = vst [vmem:[%s2377] ss:$9 sm:$0xff] %v2309
      %2427 = vst [vmem:[%s2379] ss:$9 sm:$0xff] %v2311
      %2428 = vst [vmem:[%s2381] ss:$9 sm:$0xff] %v2312
      %2429 = vst [vmem:[%s2383] ss:$9 sm:$0xff] %v2313
      %v2430 = vld [vmem:[#allocation1] sm:$0xff]
      %2431 = vst [vmem:[#allocation1] ss:$9 sm:$0xff] %v2316
      %2432 = vst [vmem:[%s2371] ss:$9 sm:$0xff] %v2317
      %2433 = vst [vmem:[%s2373] ss:$9 sm:$0xff] %v2318
      %2434 = vst [vmem:[%s2375] ss:$9 sm:$0xff] %v2319
      %2435 = vst [vmem:[%s2377] ss:$9 sm:$0xff] %v2320
      %2436 = vst [vmem:[%s2379] ss:$9 sm:$0xff] %v2321
      %2437 = vst [vmem:[%s2381] ss:$9 sm:$0xff] %v2324
      %2438 = vst [vmem:[%s2383] ss:$9 sm:$0xff] %v2325
      %v2439 = vld [vmem:[#allocation1] sm:$0xff]
      %2440 = vst [vmem:[#allocation1] ss:$9 sm:$0xff] %v2326
      %2441 = vst [vmem:[%s2371] ss:$9 sm:$0xff] %v2327
      %2442 = vst [vmem:[%s2373] ss:$9 sm:$0xff] %v2328
      %2443 = vst [vmem:[%s2375] ss:$9 sm:$0xff] %v2329
      %2444 = vst [vmem:[%s2377] ss:$9 sm:$0xff] %v2330
      %2445 = vst [vmem:[%s2379] ss:$9 sm:$0xff] %v2332
      %2446 = vst [vmem:[%s2381] ss:$9 sm:$0xff] %v2333
      %2447 = vst [vmem:[%s2383] ss:$9 sm:$0xff] %v2335
      %v2448 = vld [vmem:[#allocation1] sm:$0xff]
      %2449 = vst [vmem:[#allocation1] ss:$9 sm:$0xff] %v2336
      %2450 = vst [vmem:[%s2371] ss:$9 sm:$0xff] %v2337
      %2451 = vst [vmem:[%s2373] ss:$9 sm:$0xff] %v2340
      %2452 = vst [vmem:[%s2375] ss:$9 sm:$0xff] %v2341
      %2453 = vst [vmem:[%s2377] ss:$9 sm:$0xff] %v2342
      %2454 = vst [vmem:[%s2379] ss:$9 sm:$0xff] %v2343
      %2455 = vst [vmem:[%s2381] ss:$9 sm:$0xff] %v2344
      %2456 = vst [vmem:[%s2383] ss:$9 sm:$0xff] %v2345
      %v2457 = vld [vmem:[#allocation1] sm:$0xff]
      %2458 = vst [vmem:[#allocation1] ss:$9 sm:$0xff] %v2348
      %2459 = vst [vmem:[%s2371] ss:$9 sm:$0xff] %v2349
      %2460 = vst [vmem:[%s2373] ss:$9 sm:$0xff] %v2350
      %2461 = vst [vmem:[%s2375] ss:$9 sm:$0xff] %v2351
      %2462 = vst [vmem:[%s2377] ss:$9 sm:$0xff] %v2352
      %2463 = vst [vmem:[%s2379] ss:$9 sm:$0xff] %v2353
      %2464 = vst [vmem:[%s2381] ss:$9 sm:$0xff] %v2354
      %2465 = vst [vmem:[%s2383] ss:$9 sm:$0xff] %v2356
      %v2466 = vld [vmem:[#allocation1] sm:$0xff]
      %2467 = vst [vmem:[#allocation1] ss:$9 sm:$0xff] %v2357
      %2468 = vst [vmem:[%s2371] ss:$9 sm:$0xff] %v2359
      %2469 = vst [vmem:[%s2373] ss:$9 sm:$0xff] %v2360
      %2470 = vst [vmem:[%s2375] ss:$9 sm:$0xff] %v2361
      %2471 = vst [vmem:[%s2377] ss:$9 sm:$0xff] %v2364
      %2472 = vst [vmem:[%s2379] ss:$9 sm:$0xff] %v2365
      %2473 = vst [vmem:[%s2381] ss:$9 sm:$0xff] %v2366
      %2474 = vst [vmem:[%s2383] ss:$9 sm:$0xff] %v2367
      %v2475 = vld [vmem:[#allocation1] sm:$0xff]
      %2476 = vst [vmem:[#allocation1] ss:$9 sm:$0xff] %v2368
      %2477 = vst [vmem:[%s2371] ss:$9 sm:$0xff] %v2369
      %v2478 = vld [vmem:[#allocation1] sm:$0xff]
      %v2479 = vsel %vm1943, %v2385, 0
      %v2481 = vsel %vm1943, %v2394, 0
      %v2483 = vsel %vm1943, %v2403, 0
      %v2485 = vsel %vm1943, %v2412, 0
      %v2487 = vsel %vm1943, %v2421, 0
      %v2489 = vsel %vm1943, %v2430, 0
      %v2491 = vsel %vm1943, %v2439, 0
      %v2493 = vsel %vm1943, %v2448, 0
      %v2495 = vsel %vm1943, %v2457, 0
      %v2497 = vsel %vm1943, %v2466, 0
      %v2499 = vsel %vm1943, %v2475, 0
      %v2501 = vsel %vm1943, %v2478, 0
      %v2504 = vsel %vm522, %v621, 0
      %2506 = vmatpush.bf16.msra.mxu0 0
      %2507 = vmatpush.bf16.msra.mxu0 0
      %2508 = vmatpush.bf16.msra.mxu0 0
      %2509 = vmatpush.bf16.msra.mxu0 0
      %2510 = vmatpush.bf16.msra.mxu0 0
      %2511 = vmatpush.bf16.msra.mxu0 0
      %2512 = vmatpush.bf16.msra.mxu0 0
      %2513 = vmatpush.bf16.msra.mxu0 %v2504
      %2514 = vmatmul.bf16.gmra.mxu0 %v2479
      %v2515 = vpop.f32.mrf.mxu0
      %v2516 = vadd.f32 0.0, %v2515
      %v2517 = vpop.f32.mrf.mxu0
      %v2518 = vadd.f32 0.0, %v2517
      %2519 = vmatmul.bf16.gmra.mxu0 %v2481
      %v2520 = vpop.f32.mrf.mxu0
      %v2521 = vadd.f32 0.0, %v2520
      %v2522 = vpop.f32.mrf.mxu0
      %v2523 = vadd.f32 0.0, %v2522
      %2524 = vmatmul.bf16.gmra.mxu0 %v2483
      %v2525 = vpop.f32.mrf.mxu0
      %v2526 = vadd.f32 0.0, %v2525
      %v2527 = vpop.f32.mrf.mxu0
      %v2528 = vadd.f32 0.0, %v2527
      %2529 = vmatmul.bf16.gmra.mxu0 %v2485
      %v2530 = vpop.f32.mrf.mxu0
      %v2531 = vadd.f32 0.0, %v2530
      %v2532 = vpop.f32.mrf.mxu0
      %v2533 = vadd.f32 0.0, %v2532
      %2534 = vmatmul.bf16.gmra.mxu0 %v2487
      %v2535 = vpop.f32.mrf.mxu0
      %v2536 = vadd.f32 0.0, %v2535
      %v2537 = vpop.f32.mrf.mxu0
      %v2538 = vadd.f32 0.0, %v2537
      %2539 = vmatmul.bf16.gmra.mxu0 %v2489
      %v2540 = vpop.f32.mrf.mxu0
      %v2541 = vadd.f32 0.0, %v2540
      %v2542 = vpop.f32.mrf.mxu0
      %v2543 = vadd.f32 0.0, %v2542
      %2544 = vmatmul.bf16.gmra.mxu0 %v2491
      %v2545 = vpop.f32.mrf.mxu0
      %v2546 = vadd.f32 0.0, %v2545
      %v2547 = vpop.f32.mrf.mxu0
      %v2548 = vadd.f32 0.0, %v2547
      %2549 = vmatmul.bf16.gmra.mxu0 %v2493
      %v2550 = vpop.f32.mrf.mxu0
      %v2551 = vadd.f32 0.0, %v2550
      %v2552 = vpop.f32.mrf.mxu0
      %v2553 = vadd.f32 0.0, %v2552
      %2554 = vmatmul.bf16.gmra.mxu0 %v2495
      %v2555 = vpop.f32.mrf.mxu0
      %v2556 = vadd.f32 0.0, %v2555
      %v2557 = vpop.f32.mrf.mxu0
      %v2558 = vadd.f32 0.0, %v2557
      %2559 = vmatmul.bf16.gmra.mxu0 %v2497
      %v2560 = vpop.f32.mrf.mxu0
      %v2561 = vadd.f32 0.0, %v2560
      %v2562 = vpop.f32.mrf.mxu0
      %v2563 = vadd.f32 0.0, %v2562
      %2564 = vmatmul.bf16.gmra.mxu0 %v2499
      %v2565 = vpop.f32.mrf.mxu0
      %v2566 = vadd.f32 0.0, %v2565
      %v2567 = vpop.f32.mrf.mxu0
      %v2568 = vadd.f32 0.0, %v2567
      %2569 = vmatmul.bf16.gmra.mxu0 %v2501
      %v2570 = vpop.f32.mrf.mxu0
      %v2571 = vadd.f32 0.0, %v2570
      %v2572 = vpop.f32.mrf.mxu0
      %2573 = vdwg.mxu0
      %v2574 = vadd.f32 %v2185, %v2516
      %v2575 = vadd.f32 %v2187, %v2518
      %v2576 = vadd.f32 %v2190, %v2521
      %v2577 = vadd.f32 %v2192, %v2523
      %v2578 = vadd.f32 %v2195, %v2526
      %v2579 = vadd.f32 %v2197, %v2528
      %v2580 = vadd.f32 %v2200, %v2531
      %v2581 = vadd.f32 %v2202, %v2533
      %v2582 = vadd.f32 %v2205, %v2536
      %v2583 = vadd.f32 %v2207, %v2538
      %v2584 = vadd.f32 %v2210, %v2541
      %v2585 = vadd.f32 %v2212, %v2543
      %v2586 = vadd.f32 %v2215, %v2546
      %v2587 = vadd.f32 %v2217, %v2548
      %v2588 = vadd.f32 %v2220, %v2551
      %v2589 = vadd.f32 %v2222, %v2553
      %v2590 = vadd.f32 %v2225, %v2556
      %v2591 = vadd.f32 %v2227, %v2558
      %v2592 = vadd.f32 %v2230, %v2561
      %v2593 = vadd.f32 %v2232, %v2563
      %v2594 = vadd.f32 %v2235, %v2566
      %v2595 = vadd.f32 %v2237, %v2568
      %v2596 = vadd.f32 %v2240, %v2571
      %v2600 = vrot.slane %v659, 3
      %v2601 = vrot.slane %v660, 3
      %v2602 = vrot.slane %v661, 3
      %v2605 = vsel %vm725, %v659, %v2600
      %v2606 = vsel %vm729, %v659, %v2600
      %v2608 = vrot.slane %v2606, 1
      %v2609 = vsel %vm733, %v659, %v2600
      %v2611 = vrot.slane %v2609, 2
      %v2612 = vsel %vm737, %v659, %v2600
      %v2614 = vrot.slane %v2612, 3
      %v2617 = vsel %vm725, %v660, %v2601
      %v2618 = vsel %vm729, %v660, %v2601
      %v2620 = vrot.slane %v2618, 1
      %v2621 = vsel %vm733, %v660, %v2601
      %v2623 = vrot.slane %v2621, 2
      %v2624 = vsel %vm737, %v660, %v2601
      %v2626 = vrot.slane %v2624, 3
      %v2629 = vsel %vm725, %v661, %v2602
      %2630 = vst [vmem:[#allocation1] ss:$9 sm:$0xff] %v758
      %s2631 = scalar_lea.vmem [#allocation1], 1
      %2632 = vst [vmem:[%s2631] ss:$9 sm:$0xff] %v761
      %s2633 = scalar_lea.vmem [#allocation1], 2
      %2634 = vst [vmem:[%s2633] ss:$9 sm:$0xff] %v764
      %s2635 = scalar_lea.vmem [#allocation1], 3
      %2636 = vst [vmem:[%s2635] ss:$9 sm:$0xff] %v767
      %s2637 = scalar_lea.vmem [#allocation1], 4
      %2638 = vst [vmem:[%s2637] ss:$9 sm:$0xff] %v770
      %s2639 = scalar_lea.vmem [#allocation1], 5
      %2640 = vst [vmem:[%s2639] ss:$9 sm:$0xff] %v773
      %s2641 = scalar_lea.vmem [#allocation1], 6
      %2642 = vst [vmem:[%s2641] ss:$9 sm:$0xff] %v776
      %s2643 = scalar_lea.vmem [#allocation1], 7
      %2644 = vst [vmem:[%s2643] ss:$9 sm:$0xff] %v779
      %v2645 = vld [vmem:[#allocation1] sm:$0xff]
      %2646 = vst [vmem:[#allocation1] ss:$9 sm:$0xff] %v782
      %2647 = vst [vmem:[%s2631] ss:$9 sm:$0xff] %v785
      %2648 = vst [vmem:[%s2633] ss:$9 sm:$0xff] %v788
      %2649 = vst [vmem:[%s2635] ss:$9 sm:$0xff] %v791
      %2650 = vst [vmem:[%s2637] ss:$9 sm:$0xff] %v794
      %2651 = vst [vmem:[%s2639] ss:$9 sm:$0xff] %v797
      %2652 = vst [vmem:[%s2641] ss:$9 sm:$0xff] %v800
      %2653 = vst [vmem:[%s2643] ss:$9 sm:$0xff] %v803
      %v2654 = vld [vmem:[#allocation1] sm:$0xff]
      %2655 = vst [vmem:[#allocation1] ss:$9 sm:$0xff] %v806
      %2656 = vst [vmem:[%s2631] ss:$9 sm:$0xff] %v809
      %2657 = vst [vmem:[%s2633] ss:$9 sm:$0xff] %v812
      %2658 = vst [vmem:[%s2635] ss:$9 sm:$0xff] %v815
      %2659 = vst [vmem:[%s2637] ss:$9 sm:$0xff] %v818
      %2660 = vst [vmem:[%s2639] ss:$9 sm:$0xff] %v821
      %2661 = vst [vmem:[%s2641] ss:$9 sm:$0xff] %v824
      %2662 = vst [vmem:[%s2643] ss:$9 sm:$0xff] %v827
      %v2663 = vld [vmem:[#allocation1] sm:$0xff]
      %2664 = vst [vmem:[#allocation1] ss:$9 sm:$0xff] %v830
      %2665 = vst [vmem:[%s2631] ss:$9 sm:$0xff] %v833
      %2666 = vst [vmem:[%s2633] ss:$9 sm:$0xff] %v836
      %2667 = vst [vmem:[%s2635] ss:$9 sm:$0xff] %v839
      %2668 = vst [vmem:[%s2637] ss:$9 sm:$0xff] %v842
      %2669 = vst [vmem:[%s2639] ss:$9 sm:$0xff] %v845
      %2670 = vst [vmem:[%s2641] ss:$9 sm:$0xff] %v848
      %2671 = vst [vmem:[%s2643] ss:$9 sm:$0xff] %v851
      %v2672 = vld [vmem:[#allocation1] sm:$0xff]
      %2673 = vst [vmem:[#allocation1] ss:$9 sm:$0xff] %v854
      %2674 = vst [vmem:[%s2631] ss:$9 sm:$0xff] %v857
      %2675 = vst [vmem:[%s2633] ss:$9 sm:$0xff] %v860
      %2676 = vst [vmem:[%s2635] ss:$9 sm:$0xff] %v863
      %2677 = vst [vmem:[%s2637] ss:$9 sm:$0xff] %v866
      %2678 = vst [vmem:[%s2639] ss:$9 sm:$0xff] %v869
      %2679 = vst [vmem:[%s2641] ss:$9 sm:$0xff] %v872
      %2680 = vst [vmem:[%s2643] ss:$9 sm:$0xff] %v875
      %v2681 = vld [vmem:[#allocation1] sm:$0xff]
      %2682 = vst [vmem:[#allocation1] ss:$9 sm:$0xff] %v878
      %2683 = vst [vmem:[%s2631] ss:$9 sm:$0xff] %v881
      %2684 = vst [vmem:[%s2633] ss:$9 sm:$0xff] %v884
      %2685 = vst [vmem:[%s2635] ss:$9 sm:$0xff] %v887
      %2686 = vst [vmem:[%s2637] ss:$9 sm:$0xff] %v890
      %2687 = vst [vmem:[%s2639] ss:$9 sm:$0xff] %v893
      %2688 = vst [vmem:[%s2641] ss:$9 sm:$0xff] %v896
      %2689 = vst [vmem:[%s2643] ss:$9 sm:$0xff] %v899
      %v2690 = vld [vmem:[#allocation1] sm:$0xff]
      %2691 = vst [vmem:[#allocation1] ss:$9 sm:$0xff] %v902
      %2692 = vst [vmem:[%s2631] ss:$9 sm:$0xff] %v905
      %2693 = vst [vmem:[%s2633] ss:$9 sm:$0xff] %v908
      %2694 = vst [vmem:[%s2635] ss:$9 sm:$0xff] %v911
      %2695 = vst [vmem:[%s2637] ss:$9 sm:$0xff] %v914
      %2696 = vst [vmem:[%s2639] ss:$9 sm:$0xff] %v917
      %2697 = vst [vmem:[%s2641] ss:$9 sm:$0xff] %v920
      %2698 = vst [vmem:[%s2643] ss:$9 sm:$0xff] %v923
      %v2699 = vld [vmem:[#allocation1] sm:$0xff]
      %2700 = vst [vmem:[#allocation1] ss:$9 sm:$0xff] %v926
      %2701 = vst [vmem:[%s2631] ss:$9 sm:$0xff] %v929
      %2702 = vst [vmem:[%s2633] ss:$9 sm:$0xff] %v932
      %2703 = vst [vmem:[%s2635] ss:$9 sm:$0xff] %v935
      %2704 = vst [vmem:[%s2637] ss:$9 sm:$0xff] %v938
      %2705 = vst [vmem:[%s2639] ss:$9 sm:$0xff] %v941
      %2706 = vst [vmem:[%s2641] ss:$9 sm:$0xff] %v944
      %2707 = vst [vmem:[%s2643] ss:$9 sm:$0xff] %v947
      %v2708 = vld [vmem:[#allocation1] sm:$0xff]
      %2709 = vst [vmem:[#allocation1] ss:$9 sm:$0xff] %v950
      %2710 = vst [vmem:[%s2631] ss:$9 sm:$0xff] %v953
      %2711 = vst [vmem:[%s2633] ss:$9 sm:$0xff] %v956
      %2712 = vst [vmem:[%s2635] ss:$9 sm:$0xff] %v959
      %2713 = vst [vmem:[%s2637] ss:$9 sm:$0xff] %v962
      %2714 = vst [vmem:[%s2639] ss:$9 sm:$0xff] %v965
      %2715 = vst [vmem:[%s2641] ss:$9 sm:$0xff] %v968
      %2716 = vst [vmem:[%s2643] ss:$9 sm:$0xff] %v971
      %v2717 = vld [vmem:[#allocation1] sm:$0xff]
      %2718 = vst [vmem:[#allocation1] ss:$9 sm:$0xff] %v974
      %2719 = vst [vmem:[%s2631] ss:$9 sm:$0xff] %v977
      %2720 = vst [vmem:[%s2633] ss:$9 sm:$0xff] %v980
      %2721 = vst [vmem:[%s2635] ss:$9 sm:$0xff] %v983
      %2722 = vst [vmem:[%s2637] ss:$9 sm:$0xff] %v986
      %2723 = vst [vmem:[%s2639] ss:$9 sm:$0xff] %v989
      %2724 = vst [vmem:[%s2641] ss:$9 sm:$0xff] %v992
      %2725 = vst [vmem:[%s2643] ss:$9 sm:$0xff] %v995
      %v2726 = vld [vmem:[#allocation1] sm:$0xff]
      %2727 = vst [vmem:[#allocation1] ss:$9 sm:$0xff] %v998
      %2728 = vst [vmem:[%s2631] ss:$9 sm:$0xff] %v2605
      %2730 = vst [vmem:[%s2633] ss:$9 sm:$0xff] %v2608
      %2732 = vst [vmem:[%s2635] ss:$9 sm:$0xff] %v2611
      %2734 = vst [vmem:[%s2637] ss:$9 sm:$0xff] %v2614
      %2735 = vst [vmem:[%s2639] ss:$9 sm:$0xff] %v2617
      %2737 = vst [vmem:[%s2641] ss:$9 sm:$0xff] %v2620
      %2739 = vst [vmem:[%s2643] ss:$9 sm:$0xff] %v2623
      %v2740 = vld [vmem:[#allocation1] sm:$0xff]
      %2742 = vst [vmem:[#allocation1] ss:$9 sm:$0xff] %v2626
      %2743 = vst [vmem:[%s2631] ss:$9 sm:$0xff] %v2629
      %v2744 = vld [vmem:[#allocation1] sm:$0xff]
      %v2745 = vsel %vm1943, %v2645, 0
      %v2747 = vsel %vm1943, %v2654, 0
      %v2749 = vsel %vm1943, %v2663, 0
      %v2751 = vsel %vm1943, %v2672, 0
      %v2753 = vsel %vm1943, %v2681, 0
      %v2755 = vsel %vm1943, %v2690, 0
      %v2757 = vsel %vm1943, %v2699, 0
      %v2759 = vsel %vm1943, %v2708, 0
      %v2761 = vsel %vm1943, %v2717, 0
      %v2763 = vsel %vm1943, %v2726, 0
      %v2765 = vsel %vm1943, %v2740, 0
      %v2767 = vsel %vm1943, %v2744, 0
      %v2770 = vsel %vm522, %v622, 0
      %2772 = vmatpush.bf16.msra.mxu0 0
      %2773 = vmatpush.bf16.msra.mxu0 0
      %2774 = vmatpush.bf16.msra.mxu0 0
      %2775 = vmatpush.bf16.msra.mxu0 0
      %2776 = vmatpush.bf16.msra.mxu0 0
      %2777 = vmatpush.bf16.msra.mxu0 0
      %2778 = vmatpush.bf16.msra.mxu0 0
      %2779 = vmatpush.bf16.msra.mxu0 %v2770
      %2780 = vmatmul.bf16.gmra.mxu0 %v2745
      %v2781 = vpop.f32.mrf.mxu0
      %v2782 = vadd.f32 0.0, %v2781
      %v2783 = vpop.f32.mrf.mxu0
      %v2784 = vadd.f32 0.0, %v2783
      %2785 = vmatmul.bf16.gmra.mxu0 %v2747
      %v2786 = vpop.f32.mrf.mxu0
      %v2787 = vadd.f32 0.0, %v2786
      %v2788 = vpop.f32.mrf.mxu0
      %v2789 = vadd.f32 0.0, %v2788
      %2790 = vmatmul.bf16.gmra.mxu0 %v2749
      %v2791 = vpop.f32.mrf.mxu0
      %v2792 = vadd.f32 0.0, %v2791
      %v2793 = vpop.f32.mrf.mxu0
      %v2794 = vadd.f32 0.0, %v2793
      %2795 = vmatmul.bf16.gmra.mxu0 %v2751
      %v2796 = vpop.f32.mrf.mxu0
      %v2797 = vadd.f32 0.0, %v2796
      %v2798 = vpop.f32.mrf.mxu0
      %v2799 = vadd.f32 0.0, %v2798
      %2800 = vmatmul.bf16.gmra.mxu0 %v2753
      %v2801 = vpop.f32.mrf.mxu0
      %v2802 = vadd.f32 0.0, %v2801
      %v2803 = vpop.f32.mrf.mxu0
      %v2804 = vadd.f32 0.0, %v2803
      %2805 = vmatmul.bf16.gmra.mxu0 %v2755
      %v2806 = vpop.f32.mrf.mxu0
      %v2807 = vadd.f32 0.0, %v2806
      %v2808 = vpop.f32.mrf.mxu0
      %v2809 = vadd.f32 0.0, %v2808
      %2810 = vmatmul.bf16.gmra.mxu0 %v2757
      %v2811 = vpop.f32.mrf.mxu0
      %v2812 = vadd.f32 0.0, %v2811
      %v2813 = vpop.f32.mrf.mxu0
      %v2814 = vadd.f32 0.0, %v2813
      %2815 = vmatmul.bf16.gmra.mxu0 %v2759
      %v2816 = vpop.f32.mrf.mxu0
      %v2817 = vadd.f32 0.0, %v2816
      %v2818 = vpop.f32.mrf.mxu0
      %v2819 = vadd.f32 0.0, %v2818
      %2820 = vmatmul.bf16.gmra.mxu0 %v2761
      %v2821 = vpop.f32.mrf.mxu0
      %v2822 = vadd.f32 0.0, %v2821
      %v2823 = vpop.f32.mrf.mxu0
      %v2824 = vadd.f32 0.0, %v2823
      %2825 = vmatmul.bf16.gmra.mxu0 %v2763
      %v2826 = vpop.f32.mrf.mxu0
      %v2827 = vadd.f32 0.0, %v2826
      %v2828 = vpop.f32.mrf.mxu0
      %v2829 = vadd.f32 0.0, %v2828
      %2830 = vmatmul.bf16.gmra.mxu0 %v2765
      %v2831 = vpop.f32.mrf.mxu0
      %v2832 = vadd.f32 0.0, %v2831
      %v2833 = vpop.f32.mrf.mxu0
      %v2834 = vadd.f32 0.0, %v2833
      %2835 = vmatmul.bf16.gmra.mxu0 %v2767
      %v2836 = vpop.f32.mrf.mxu0
      %v2837 = vadd.f32 0.0, %v2836
      %v2838 = vpop.f32.mrf.mxu0
      %2839 = vdwg.mxu0
      %v2840 = vadd.f32 %v2574, %v2782
      %v2841 = vadd.f32 %v2575, %v2784
      %v2842 = vadd.f32 %v2576, %v2787
      %v2843 = vadd.f32 %v2577, %v2789
      %v2844 = vadd.f32 %v2578, %v2792
      %v2845 = vadd.f32 %v2579, %v2794
      %v2846 = vadd.f32 %v2580, %v2797
      %v2847 = vadd.f32 %v2581, %v2799
      %v2848 = vadd.f32 %v2582, %v2802
      %v2849 = vadd.f32 %v2583, %v2804
      %v2850 = vadd.f32 %v2584, %v2807
      %v2851 = vadd.f32 %v2585, %v2809
      %v2852 = vadd.f32 %v2586, %v2812
      %v2853 = vadd.f32 %v2587, %v2814
      %v2854 = vadd.f32 %v2588, %v2817
      %v2855 = vadd.f32 %v2589, %v2819
      %v2856 = vadd.f32 %v2590, %v2822
      %v2857 = vadd.f32 %v2591, %v2824
      %v2858 = vadd.f32 %v2592, %v2827
      %v2859 = vadd.f32 %v2593, %v2829
      %v2860 = vadd.f32 %v2594, %v2832
      %v2861 = vadd.f32 %v2595, %v2834
      %v2862 = vadd.f32 %v2596, %v2837
      %v2863 = vsel %vm729, %v661, %v2602
      %v2865 = vrot.slane %v2863, 1
      %v2866 = vshrl.u32 %v2605, 16
      %v2868 = vrot.slane %v2866, 7
      %v2869 = vrot.slane %v2868, 1
      %v2870 = vshll.u32 %v2608, 16
      %v2872 = vsel %vm1043, %v2869, %v2870
      %v2873 = vshrl.u32 %v2608, 16
      %v2875 = vrot.slane %v2873, 7
      %v2876 = vrot.slane %v2875, 1
      %v2877 = vshll.u32 %v2611, 16
      %v2879 = vsel %vm1043, %v2876, %v2877
      %v2880 = vshrl.u32 %v2611, 16
      %v2882 = vrot.slane %v2880, 7
      %v2883 = vrot.slane %v2882, 1
      %v2884 = vshll.u32 %v2614, 16
      %v2886 = vsel %vm1043, %v2883, %v2884
      %v2887 = vshrl.u32 %v2614, 16
      %v2889 = vrot.slane %v2887, 7
      %v2890 = vrot.slane %v2889, 1
      %v2891 = vshll.u32 %v2617, 16
      %v2893 = vsel %vm1043, %v2890, %v2891
      %v2894 = vshrl.u32 %v2617, 16
      %v2896 = vrot.slane %v2894, 7
      %v2897 = vrot.slane %v2896, 1
      %v2898 = vshll.u32 %v2620, 16
      %v2900 = vsel %vm1043, %v2897, %v2898
      %v2901 = vshrl.u32 %v2620, 16
      %v2903 = vrot.slane %v2901, 7
      %v2904 = vrot.slane %v2903, 1
      %v2905 = vshll.u32 %v2623, 16
      %v2907 = vsel %vm1043, %v2904, %v2905
      %v2908 = vshrl.u32 %v2623, 16
      %v2910 = vrot.slane %v2908, 7
      %v2911 = vrot.slane %v2910, 1
      %v2912 = vshll.u32 %v2626, 16
      %v2914 = vsel %vm1043, %v2911, %v2912
      %v2915 = vshrl.u32 %v2626, 16
      %v2917 = vrot.slane %v2915, 7
      %v2918 = vrot.slane %v2917, 1
      %v2919 = vshll.u32 %v2629, 16
      %v2921 = vsel %vm1043, %v2918, %v2919
      %v2922 = vshrl.u32 %v2629, 16
      %v2924 = vrot.slane %v2922, 7
      %v2925 = vrot.slane %v2924, 1
      %v2927 = vshll.u32 %v2865, 16
      %v2929 = vsel %vm1043, %v2925, %v2927
      %2930 = vst [vmem:[#allocation1] ss:$9 sm:$0xff] %v1121
      %s2931 = scalar_lea.vmem [#allocation1], 1
      %2932 = vst [vmem:[%s2931] ss:$9 sm:$0xff] %v1129
      %s2933 = scalar_lea.vmem [#allocation1], 2
      %2934 = vst [vmem:[%s2933] ss:$9 sm:$0xff] %v1137
      %s2935 = scalar_lea.vmem [#allocation1], 3
      %2936 = vst [vmem:[%s2935] ss:$9 sm:$0xff] %v1144
      %s2937 = scalar_lea.vmem [#allocation1], 4
      %2938 = vst [vmem:[%s2937] ss:$9 sm:$0xff] %v1152
      %s2939 = scalar_lea.vmem [#allocation1], 5
      %2940 = vst [vmem:[%s2939] ss:$9 sm:$0xff] %v1160
      %s2941 = scalar_lea.vmem [#allocation1], 6
      %2942 = vst [vmem:[%s2941] ss:$9 sm:$0xff] %v1168
      %s2943 = scalar_lea.vmem [#allocation1], 7
      %2944 = vst [vmem:[%s2943] ss:$9 sm:$0xff] %v1175
      %v2945 = vld [vmem:[#allocation1] sm:$0xff]
      %2946 = vst [vmem:[#allocation1] ss:$9 sm:$0xff] %v1183
      %2947 = vst [vmem:[%s2931] ss:$9 sm:$0xff] %v1191
      %2948 = vst [vmem:[%s2933] ss:$9 sm:$0xff] %v1199
      %2949 = vst [vmem:[%s2935] ss:$9 sm:$0xff] %v1207
      %2950 = vst [vmem:[%s2937] ss:$9 sm:$0xff] %v1214
      %2951 = vst [vmem:[%s2939] ss:$9 sm:$0xff] %v1222
      %2952 = vst [vmem:[%s2941] ss:$9 sm:$0xff] %v1230
      %2953 = vst [vmem:[%s2943] ss:$9 sm:$0xff] %v1238
      %v2954 = vld [vmem:[#allocation1] sm:$0xff]
      %2955 = vst [vmem:[#allocation1] ss:$9 sm:$0xff] %v1245
      %2956 = vst [vmem:[%s2931] ss:$9 sm:$0xff] %v1253
      %2957 = vst [vmem:[%s2933] ss:$9 sm:$0xff] %v1261
      %2958 = vst [vmem:[%s2935] ss:$9 sm:$0xff] %v1269
      %2959 = vst [vmem:[%s2937] ss:$9 sm:$0xff] %v1277
      %2960 = vst [vmem:[%s2939] ss:$9 sm:$0xff] %v1284
      %2961 = vst [vmem:[%s2941] ss:$9 sm:$0xff] %v1292
      %2962 = vst [vmem:[%s2943] ss:$9 sm:$0xff] %v1300
      %v2963 = vld [vmem:[#allocation1] sm:$0xff]
      %2964 = vst [vmem:[#allocation1] ss:$9 sm:$0xff] %v1308
      %2965 = vst [vmem:[%s2931] ss:$9 sm:$0xff] %v1315
      %2966 = vst [vmem:[%s2933] ss:$9 sm:$0xff] %v1323
      %2967 = vst [vmem:[%s2935] ss:$9 sm:$0xff] %v1331
      %2968 = vst [vmem:[%s2937] ss:$9 sm:$0xff] %v1339
      %2969 = vst [vmem:[%s2939] ss:$9 sm:$0xff] %v1347
      %2970 = vst [vmem:[%s2941] ss:$9 sm:$0xff] %v1354
      %2971 = vst [vmem:[%s2943] ss:$9 sm:$0xff] %v1362
      %v2972 = vld [vmem:[#allocation1] sm:$0xff]
      %2973 = vst [vmem:[#allocation1] ss:$9 sm:$0xff] %v1370
      %2974 = vst [vmem:[%s2931] ss:$9 sm:$0xff] %v1378
      %2975 = vst [vmem:[%s2933] ss:$9 sm:$0xff] %v1385
      %2976 = vst [vmem:[%s2935] ss:$9 sm:$0xff] %v1393
      %2977 = vst [vmem:[%s2937] ss:$9 sm:$0xff] %v1401
      %2978 = vst [vmem:[%s2939] ss:$9 sm:$0xff] %v1409
      %2979 = vst [vmem:[%s2941] ss:$9 sm:$0xff] %v1417
      %2980 = vst [vmem:[%s2943] ss:$9 sm:$0xff] %v1424
      %v2981 = vld [vmem:[#allocation1] sm:$0xff]
      %2982 = vst [vmem:[#allocation1] ss:$9 sm:$0xff] %v1432
      %2983 = vst [vmem:[%s2931] ss:$9 sm:$0xff] %v1440
      %2984 = vst [vmem:[%s2933] ss:$9 sm:$0xff] %v1448
      %2985 = vst [vmem:[%s2935] ss:$9 sm:$0xff] %v1455
      %2986 = vst [vmem:[%s2937] ss:$9 sm:$0xff] %v1463
      %2987 = vst [vmem:[%s2939] ss:$9 sm:$0xff] %v1471
      %2988 = vst [vmem:[%s2941] ss:$9 sm:$0xff] %v1479
      %2989 = vst [vmem:[%s2943] ss:$9 sm:$0xff] %v1487
      %v2990 = vld [vmem:[#allocation1] sm:$0xff]
      %2991 = vst [vmem:[#allocation1] ss:$9 sm:$0xff] %v1494
      %2992 = vst [vmem:[%s2931] ss:$9 sm:$0xff] %v1502
      %2993 = vst [vmem:[%s2933] ss:$9 sm:$0xff] %v1510
      %2994 = vst [vmem:[%s2935] ss:$9 sm:$0xff] %v1518
      %2995 = vst [vmem:[%s2937] ss:$9 sm:$0xff] %v1525
      %2996 = vst [vmem:[%s2939] ss:$9 sm:$0xff] %v1533
      %2997 = vst [vmem:[%s2941] ss:$9 sm:$0xff] %v1541
      %2998 = vst [vmem:[%s2943] ss:$9 sm:$0xff] %v1549
      %v2999 = vld [vmem:[#allocation1] sm:$0xff]
      %3000 = vst [vmem:[#allocation1] ss:$9 sm:$0xff] %v1557
      %3001 = vst [vmem:[%s2931] ss:$9 sm:$0xff] %v1564
      %3002 = vst [vmem:[%s2933] ss:$9 sm:$0xff] %v1572
      %3003 = vst [vmem:[%s2935] ss:$9 sm:$0xff] %v1580
      %3004 = vst [vmem:[%s2937] ss:$9 sm:$0xff] %v1588
      %3005 = vst [vmem:[%s2939] ss:$9 sm:$0xff] %v1595
      %3006 = vst [vmem:[%s2941] ss:$9 sm:$0xff] %v1603
      %3007 = vst [vmem:[%s2943] ss:$9 sm:$0xff] %v1611
      %v3008 = vld [vmem:[#allocation1] sm:$0xff]
      %3009 = vst [vmem:[#allocation1] ss:$9 sm:$0xff] %v1619
      %3010 = vst [vmem:[%s2931] ss:$9 sm:$0xff] %v1627
      %3011 = vst [vmem:[%s2933] ss:$9 sm:$0xff] %v1634
      %3012 = vst [vmem:[%s2935] ss:$9 sm:$0xff] %v1642
      %3013 = vst [vmem:[%s2937] ss:$9 sm:$0xff] %v1650
      %3014 = vst [vmem:[%s2939] ss:$9 sm:$0xff] %v1658
      %3015 = vst [vmem:[%s2941] ss:$9 sm:$0xff] %v1665
      %3016 = vst [vmem:[%s2943] ss:$9 sm:$0xff] %v1673
      %v3017 = vld [vmem:[#allocation1] sm:$0xff]
      %3018 = vst [vmem:[#allocation1] ss:$9 sm:$0xff] %v1681
      %3019 = vst [vmem:[%s2931] ss:$9 sm:$0xff] %v1689
      %3020 = vst [vmem:[%s2933] ss:$9 sm:$0xff] %v1697
      %3021 = vst [vmem:[%s2935] ss:$9 sm:$0xff] %v1704
      %3022 = vst [vmem:[%s2937] ss:$9 sm:$0xff] %v1712
      %3023 = vst [vmem:[%s2939] ss:$9 sm:$0xff] %v1720
      %3024 = vst [vmem:[%s2941] ss:$9 sm:$0xff] %v1728
      %3025 = vst [vmem:[%s2943] ss:$9 sm:$0xff] %v1735
      %v3026 = vld [vmem:[#allocation1] sm:$0xff]
      %3027 = vst [vmem:[#allocation1] ss:$9 sm:$0xff] %v1743
      %3029 = vst [vmem:[%s2931] ss:$9 sm:$0xff] %v2872
      %3031 = vst [vmem:[%s2933] ss:$9 sm:$0xff] %v2879
      %3033 = vst [vmem:[%s2935] ss:$9 sm:$0xff] %v2886
      %3035 = vst [vmem:[%s2937] ss:$9 sm:$0xff] %v2893
      %3037 = vst [vmem:[%s2939] ss:$9 sm:$0xff] %v2900
      %3039 = vst [vmem:[%s2941] ss:$9 sm:$0xff] %v2907
      %3041 = vst [vmem:[%s2943] ss:$9 sm:$0xff] %v2914
      %v3042 = vld [vmem:[#allocation1] sm:$0xff]
      %3044 = vst [vmem:[#allocation1] ss:$9 sm:$0xff] %v2921
      %3046 = vst [vmem:[%s2931] ss:$9 sm:$0xff] %v2929
      %v3047 = vld [vmem:[#allocation1] sm:$0xff]
      %v3048 = vsel %vm1943, %v2945, 0
      %v3050 = vsel %vm1943, %v2954, 0
      %v3052 = vsel %vm1943, %v2963, 0
      %v3054 = vsel %vm1943, %v2972, 0
      %v3056 = vsel %vm1943, %v2981, 0
      %v3058 = vsel %vm1943, %v2990, 0
      %v3060 = vsel %vm1943, %v2999, 0
      %v3062 = vsel %vm1943, %v3008, 0
      %v3064 = vsel %vm1943, %v3017, 0
      %v3066 = vsel %vm1943, %v3026, 0
      %v3068 = vsel %vm1943, %v3042, 0
      %v3070 = vsel %vm1943, %v3047, 0
      %v3073 = vsel %vm522, %v623, 0
      %3075 = vmatpush.bf16.msra.mxu0 0
      %3076 = vmatpush.bf16.msra.mxu0 0
      %3077 = vmatpush.bf16.msra.mxu0 0
      %3078 = vmatpush.bf16.msra.mxu0 0
      %3079 = vmatpush.bf16.msra.mxu0 0
      %3080 = vmatpush.bf16.msra.mxu0 0
      %3081 = vmatpush.bf16.msra.mxu0 0
      %3082 = vmatpush.bf16.msra.mxu0 %v3073
      %3083 = vmatmul.bf16.gmra.mxu0 %v3048
      %v3084 = vpop.f32.mrf.mxu0
      %v3085 = vadd.f32 0.0, %v3084
      %v3086 = vpop.f32.mrf.mxu0
      %v3087 = vadd.f32 0.0, %v3086
      %3088 = vmatmul.bf16.gmra.mxu0 %v3050
      %v3089 = vpop.f32.mrf.mxu0
      %v3090 = vadd.f32 0.0, %v3089
      %v3091 = vpop.f32.mrf.mxu0
      %v3092 = vadd.f32 0.0, %v3091
      %3093 = vmatmul.bf16.gmra.mxu0 %v3052
      %v3094 = vpop.f32.mrf.mxu0
      %v3095 = vadd.f32 0.0, %v3094
      %v3096 = vpop.f32.mrf.mxu0
      %v3097 = vadd.f32 0.0, %v3096
      %3098 = vmatmul.bf16.gmra.mxu0 %v3054
      %v3099 = vpop.f32.mrf.mxu0
      %v3100 = vadd.f32 0.0, %v3099
      %v3101 = vpop.f32.mrf.mxu0
      %v3102 = vadd.f32 0.0, %v3101
      %3103 = vmatmul.bf16.gmra.mxu0 %v3056
      %v3104 = vpop.f32.mrf.mxu0
      %v3105 = vadd.f32 0.0, %v3104
      %v3106 = vpop.f32.mrf.mxu0
      %v3107 = vadd.f32 0.0, %v3106
      %3108 = vmatmul.bf16.gmra.mxu0 %v3058
      %v3109 = vpop.f32.mrf.mxu0
      %v3110 = vadd.f32 0.0, %v3109
      %v3111 = vpop.f32.mrf.mxu0
      %v3112 = vadd.f32 0.0, %v3111
      %3113 = vmatmul.bf16.gmra.mxu0 %v3060
      %v3114 = vpop.f32.mrf.mxu0
      %v3115 = vadd.f32 0.0, %v3114
      %v3116 = vpop.f32.mrf.mxu0
      %v3117 = vadd.f32 0.0, %v3116
      %3118 = vmatmul.bf16.gmra.mxu0 %v3062
      %v3119 = vpop.f32.mrf.mxu0
      %v3120 = vadd.f32 0.0, %v3119
      %v3121 = vpop.f32.mrf.mxu0
      %v3122 = vadd.f32 0.0, %v3121
      %3123 = vmatmul.bf16.gmra.mxu0 %v3064
      %v3124 = vpop.f32.mrf.mxu0
      %v3125 = vadd.f32 0.0, %v3124
      %v3126 = vpop.f32.mrf.mxu0
      %v3127 = vadd.f32 0.0, %v3126
      %3128 = vmatmul.bf16.gmra.mxu0 %v3066
      %v3129 = vpop.f32.mrf.mxu0
      %v3130 = vadd.f32 0.0, %v3129
      %v3131 = vpop.f32.mrf.mxu0
      %v3132 = vadd.f32 0.0, %v3131
      %3133 = vmatmul.bf16.gmra.mxu0 %v3068
      %v3134 = vpop.f32.mrf.mxu0
      %v3135 = vadd.f32 0.0, %v3134
      %v3136 = vpop.f32.mrf.mxu0
      %v3137 = vadd.f32 0.0, %v3136
      %3138 = vmatmul.bf16.gmra.mxu0 %v3070
      %v3139 = vpop.f32.mrf.mxu0
      %v3140 = vadd.f32 0.0, %v3139
      %v3141 = vpop.f32.mrf.mxu0
      %3142 = vdwg.mxu0
      %v3143 = vadd.f32 %v2840, %v3085
      %v3144 = vadd.f32 %v2841, %v3087
      %v3145 = vadd.f32 %v2842, %v3090
      %v3146 = vadd.f32 %v2843, %v3092
      %v3147 = vadd.f32 %v2844, %v3095
      %v3148 = vadd.f32 %v2845, %v3097
      %v3149 = vadd.f32 %v2846, %v3100
      %v3150 = vadd.f32 %v2847, %v3102
      %v3151 = vadd.f32 %v2848, %v3105
      %v3152 = vadd.f32 %v2849, %v3107
      %v3153 = vadd.f32 %v2850, %v3110
      %v3154 = vadd.f32 %v2851, %v3112
      %v3155 = vadd.f32 %v2852, %v3115
      %v3156 = vadd.f32 %v2853, %v3117
      %v3157 = vadd.f32 %v2854, %v3120
      %v3158 = vadd.f32 %v2855, %v3122
      %v3159 = vadd.f32 %v2856, %v3125
      %v3160 = vadd.f32 %v2857, %v3127
      %v3161 = vadd.f32 %v2858, %v3130
      %v3162 = vadd.f32 %v2859, %v3132
      %v3163 = vadd.f32 %v2860, %v3135
      %v3164 = vadd.f32 %v2861, %v3137
      %v3165 = vadd.f32 %v2862, %v3140
      %3166 = vst [vmem:[#allocation1] sm:$0xff] %v632
      %3167 = vst [vmem:[#allocation1 + $0x20] sm:$0xff] %v633
      %s3168 = scalar_lea.vmem [#allocation1], 1
      %v3169 = vld [vmem:[%s3168] ss:$4 sm:$0xff]
      %s3170 = scalar_lea.vmem [#allocation1], 2
      %v3171 = vld [vmem:[%s3170] ss:$4 sm:$0xff]
      %s3172 = scalar_lea.vmem [#allocation1], 3
      %v3173 = vld [vmem:[%s3172] ss:$4 sm:$0xff]
      %s3174 = scalar_lea.vmem [#allocation1], 32
      %v3175 = vld [vmem:[%s3174] ss:$4 sm:$0xff]
      %s3176 = scalar_lea.vmem [#allocation1], 33
      %v3177 = vld [vmem:[%s3176] ss:$4 sm:$0xff]
      %s3178 = scalar_lea.vmem [#allocation1], 34
      %v3179 = vld [vmem:[%s3178] ss:$4 sm:$0xff]
      %s3180 = scalar_lea.vmem [#allocation1], 35
      %v3181 = vld [vmem:[%s3180] ss:$4 sm:$0xff]
      %3182 = vst [vmem:[#allocation1] sm:$0xff] %v634
      %v3183 = vld [vmem:[#allocation1] ss:$4 sm:$0xff]
      %v3184 = vld [vmem:[%s3168] ss:$4 sm:$0xff]
      %3185 = vst [vmem:[#allocation1 + $0x20] sm:$0xff] %v635
      %v3186 = vld [vmem:[%s3176] ss:$4 sm:$0xff]
      %v3187 = vld [vmem:[%s3178] ss:$4 sm:$0xff]
      %v3188 = vld [vmem:[%s3180] ss:$4 sm:$0xff]
      %3189 = vst [vmem:[#allocation1] sm:$0xff] %v636
      %3190 = vst [vmem:[#allocation1 + $0x20] sm:$0xff] %v637
      %v3191 = vld [vmem:[#allocation1] ss:$4 sm:$0xff]
      %v3192 = vld [vmem:[%s3168] ss:$4 sm:$0xff]
      %v3193 = vld [vmem:[%s3170] ss:$4 sm:$0xff]
      %v3194 = vld [vmem:[%s3172] ss:$4 sm:$0xff]
      %v3195 = vld [vmem:[%s3174] ss:$4 sm:$0xff]
      %v3196 = vld [vmem:[%s3176] ss:$4 sm:$0xff]
      %3197 = vst [vmem:[#allocation1] sm:$0xff] %v638
      %3198 = vst [vmem:[#allocation1 + $0x20] sm:$0xff] %v639
      %v3199 = vld [vmem:[%s3168] ss:$4 sm:$0xff]
      %v3200 = vld [vmem:[%s3170] ss:$4 sm:$0xff]
      %v3201 = vld [vmem:[%s3172] ss:$4 sm:$0xff]
      %v3202 = vld [vmem:[%s3174] ss:$4 sm:$0xff]
      %v3203 = vld [vmem:[%s3176] ss:$4 sm:$0xff]
      %v3204 = vld [vmem:[%s3178] ss:$4 sm:$0xff]
      %v3205 = vld [vmem:[%s3180] ss:$4 sm:$0xff]
      %3206 = vst [vmem:[#allocation1] sm:$0xff] %v640
      %v3207 = vld [vmem:[#allocation1] ss:$4 sm:$0xff]
      %v3208 = vld [vmem:[%s3168] ss:$4 sm:$0xff]
      %3209 = vst [vmem:[#allocation1 + $0x20] sm:$0xff] %v641
      %v3210 = vld [vmem:[%s3176] ss:$4 sm:$0xff]
      %v3211 = vld [vmem:[%s3178] ss:$4 sm:$0xff]
      %v3212 = vld [vmem:[%s3180] ss:$4 sm:$0xff]
      %3213 = vst [vmem:[#allocation1] sm:$0xff] %v642
      %3214 = vst [vmem:[#allocation1 + $0x20] sm:$0xff] %v643
      %v3215 = vld [vmem:[#allocation1] ss:$4 sm:$0xff]
      %v3216 = vld [vmem:[%s3168] ss:$4 sm:$0xff]
      %v3217 = vld [vmem:[%s3170] ss:$4 sm:$0xff]
      %v3218 = vld [vmem:[%s3172] ss:$4 sm:$0xff]
      %v3219 = vld [vmem:[%s3174] ss:$4 sm:$0xff]
      %v3220 = vld [vmem:[%s3176] ss:$4 sm:$0xff]
      %3221 = vst [vmem:[#allocation1] sm:$0xff] %v644
      %3222 = vst [vmem:[#allocation1 + $0x20] sm:$0xff] %v645
      %v3223 = vld [vmem:[%s3168] ss:$4 sm:$0xff]
      %v3224 = vld [vmem:[%s3170] ss:$4 sm:$0xff]
      %v3225 = vld [vmem:[%s3172] ss:$4 sm:$0xff]
      %v3226 = vld [vmem:[%s3174] ss:$4 sm:$0xff]
      %v3227 = vld [vmem:[%s3176] ss:$4 sm:$0xff]
      %v3228 = vld [vmem:[%s3178] ss:$4 sm:$0xff]
      %v3229 = vld [vmem:[%s3180] ss:$4 sm:$0xff]
      %3230 = vst [vmem:[#allocation1] sm:$0xff] %v646
      %v3231 = vld [vmem:[#allocation1] ss:$4 sm:$0xff]
      %v3232 = vld [vmem:[%s3168] ss:$4 sm:$0xff]
      %3233 = vst [vmem:[#allocation1 + $0x20] sm:$0xff] %v647
      %v3234 = vld [vmem:[%s3176] ss:$4 sm:$0xff]
      %v3235 = vld [vmem:[%s3178] ss:$4 sm:$0xff]
      %v3236 = vld [vmem:[%s3180] ss:$4 sm:$0xff]
      %3237 = vst [vmem:[#allocation1] sm:$0xff] %v648
      %3238 = vst [vmem:[#allocation1 + $0x20] sm:$0xff] %v649
      %v3239 = vld [vmem:[#allocation1] ss:$4 sm:$0xff]
      %v3240 = vld [vmem:[%s3168] ss:$4 sm:$0xff]
      %v3241 = vld [vmem:[%s3170] ss:$4 sm:$0xff]
      %v3242 = vld [vmem:[%s3172] ss:$4 sm:$0xff]
      %v3243 = vld [vmem:[%s3174] ss:$4 sm:$0xff]
      %v3244 = vld [vmem:[%s3176] ss:$4 sm:$0xff]
      %3245 = vst [vmem:[#allocation1] sm:$0xff] %v650
      %3246 = vst [vmem:[#allocation1 + $0x20] sm:$0xff] %v651
      %v3247 = vld [vmem:[%s3168] ss:$4 sm:$0xff]
      %v3248 = vld [vmem:[%s3170] ss:$4 sm:$0xff]
      %v3249 = vld [vmem:[%s3172] ss:$4 sm:$0xff]
      %v3250 = vld [vmem:[%s3174] ss:$4 sm:$0xff]
      %v3251 = vld [vmem:[%s3176] ss:$4 sm:$0xff]
      %v3252 = vld [vmem:[%s3178] ss:$4 sm:$0xff]
      %v3253 = vld [vmem:[%s3180] ss:$4 sm:$0xff]
      %3254 = vst [vmem:[#allocation1] sm:$0xff] %v652
      %v3255 = vld [vmem:[#allocation1] ss:$4 sm:$0xff]
      %v3256 = vld [vmem:[%s3168] ss:$4 sm:$0xff]
      %3257 = vst [vmem:[#allocation1 + $0x20] sm:$0xff] %v653
      %v3258 = vld [vmem:[%s3176] ss:$4 sm:$0xff]
      %v3259 = vld [vmem:[%s3178] ss:$4 sm:$0xff]
      %v3260 = vld [vmem:[%s3180] ss:$4 sm:$0xff]
      %3261 = vst [vmem:[#allocation1] sm:$0xff] %v654
      %3262 = vst [vmem:[#allocation1 + $0x20] sm:$0xff] %v655
      %v3263 = vld [vmem:[#allocation1] ss:$4 sm:$0xff]
      %v3264 = vld [vmem:[%s3168] ss:$4 sm:$0xff]
      %v3265 = vld [vmem:[%s3170] ss:$4 sm:$0xff]
      %v3266 = vld [vmem:[%s3172] ss:$4 sm:$0xff]
      %v3267 = vld [vmem:[%s3174] ss:$4 sm:$0xff]
      %v3268 = vld [vmem:[%s3176] ss:$4 sm:$0xff]
      %3269 = vst [vmem:[#allocation1] sm:$0xff] %v656
      %3270 = vst [vmem:[#allocation1 + $0x20] sm:$0xff] %v657
      %v3271 = vld [vmem:[%s3168] ss:$4 sm:$0xff]
      %v3272 = vld [vmem:[%s3170] ss:$4 sm:$0xff]
      %v3273 = vld [vmem:[%s3172] ss:$4 sm:$0xff]
      %v3274 = vld [vmem:[%s3174] ss:$4 sm:$0xff]
      %v3275 = vld [vmem:[%s3176] ss:$4 sm:$0xff]
      %v3276 = vld [vmem:[%s3178] ss:$4 sm:$0xff]
      %v3277 = vld [vmem:[%s3180] ss:$4 sm:$0xff]
      %3278 = vst [vmem:[#allocation1] sm:$0xff] %v658
      %v3279 = vld [vmem:[#allocation1] ss:$4 sm:$0xff]
      %v3280 = vld [vmem:[%s3168] ss:$4 sm:$0xff]
      %3281 = vst [vmem:[#allocation1 + $0x20] sm:$0xff] %v659
      %v3282 = vld [vmem:[%s3176] ss:$4 sm:$0xff]
      %v3283 = vld [vmem:[%s3178] ss:$4 sm:$0xff]
      %v3284 = vld [vmem:[%s3180] ss:$4 sm:$0xff]
      %3285 = vst [vmem:[#allocation1] sm:$0xff] %v660
      %3286 = vst [vmem:[#allocation1 + $0x20] sm:$0xff] %v661
      %v3287 = vld [vmem:[#allocation1] ss:$4 sm:$0xff]
      %v3288 = vld [vmem:[%s3168] ss:$4 sm:$0xff]
      %v3289 = vld [vmem:[%s3170] ss:$4 sm:$0xff]
      %v3290 = vld [vmem:[%s3172] ss:$4 sm:$0xff]
      %v3291 = vld [vmem:[%s3174] ss:$4 sm:$0xff]
      %v3292 = vld [vmem:[%s3176] ss:$4 sm:$0xff]
      %3293 = vst [vmem:[#allocation1] ss:$9 sm:$0xff] %v3169
      %s3294 = scalar_lea.vmem [#allocation1], 1
      %3295 = vst [vmem:[%s3294] ss:$9 sm:$0xff] %v3171
      %s3296 = scalar_lea.vmem [#allocation1], 2
      %3297 = vst [vmem:[%s3296] ss:$9 sm:$0xff] %v3173
      %s3298 = scalar_lea.vmem [#allocation1], 3
      %3299 = vst [vmem:[%s3298] ss:$9 sm:$0xff] %v3175
      %s3300 = scalar_lea.vmem [#allocation1], 4
      %3301 = vst [vmem:[%s3300] ss:$9 sm:$0xff] %v3177
      %s3302 = scalar_lea.vmem [#allocation1], 5
      %3303 = vst [vmem:[%s3302] ss:$9 sm:$0xff] %v3179
      %s3304 = scalar_lea.vmem [#allocation1], 6
      %3305 = vst [vmem:[%s3304] ss:$9 sm:$0xff] %v3181
      %s3306 = scalar_lea.vmem [#allocation1], 7
      %3307 = vst [vmem:[%s3306] ss:$9 sm:$0xff] %v3183
      %v3308 = vld [vmem:[#allocation1] sm:$0xff]
      %3309 = vst [vmem:[#allocation1] ss:$9 sm:$0xff] %v3184
      %3310 = vst [vmem:[%s3294] ss:$9 sm:$0xff] %v3186
      %3311 = vst [vmem:[%s3296] ss:$9 sm:$0xff] %v3187
      %3312 = vst [vmem:[%s3298] ss:$9 sm:$0xff] %v3188
      %3313 = vst [vmem:[%s3300] ss:$9 sm:$0xff] %v3191
      %3314 = vst [vmem:[%s3302] ss:$9 sm:$0xff] %v3192
      %3315 = vst [vmem:[%s3304] ss:$9 sm:$0xff] %v3193
      %3316 = vst [vmem:[%s3306] ss:$9 sm:$0xff] %v3194
      %v3317 = vld [vmem:[#allocation1] sm:$0xff]
      %3318 = vst [vmem:[#allocation1] ss:$9 sm:$0xff] %v3195
      %3319 = vst [vmem:[%s3294] ss:$9 sm:$0xff] %v3196
      %3320 = vst [vmem:[%s3296] ss:$9 sm:$0xff] %v3199
      %3321 = vst [vmem:[%s3298] ss:$9 sm:$0xff] %v3200
      %3322 = vst [vmem:[%s3300] ss:$9 sm:$0xff] %v3201
      %3323 = vst [vmem:[%s3302] ss:$9 sm:$0xff] %v3202
      %3324 = vst [vmem:[%s3304] ss:$9 sm:$0xff] %v3203
      %3325 = vst [vmem:[%s3306] ss:$9 sm:$0xff] %v3204
      %v3326 = vld [vmem:[#allocation1] sm:$0xff]
      %3327 = vst [vmem:[#allocation1] ss:$9 sm:$0xff] %v3205
      %3328 = vst [vmem:[%s3294] ss:$9 sm:$0xff] %v3207
      %3329 = vst [vmem:[%s3296] ss:$9 sm:$0xff] %v3208
      %3330 = vst [vmem:[%s3298] ss:$9 sm:$0xff] %v3210
      %3331 = vst [vmem:[%s3300] ss:$9 sm:$0xff] %v3211
      %3332 = vst [vmem:[%s3302] ss:$9 sm:$0xff] %v3212
      %3333 = vst [vmem:[%s3304] ss:$9 sm:$0xff] %v3215
      %3334 = vst [vmem:[%s3306] ss:$9 sm:$0xff] %v3216
      %v3335 = vld [vmem:[#allocation1] sm:$0xff]
      %3336 = vst [vmem:[#allocation1] ss:$9 sm:$0xff] %v3217
      %3337 = vst [vmem:[%s3294] ss:$9 sm:$0xff] %v3218
      %3338 = vst [vmem:[%s3296] ss:$9 sm:$0xff] %v3219
      %3339 = vst [vmem:[%s3298] ss:$9 sm:$0xff] %v3220
      %3340 = vst [vmem:[%s3300] ss:$9 sm:$0xff] %v3223
      %3341 = vst [vmem:[%s3302] ss:$9 sm:$0xff] %v3224
      %3342 = vst [vmem:[%s3304] ss:$9 sm:$0xff] %v3225
      %3343 = vst [vmem:[%s3306] ss:$9 sm:$0xff] %v3226
      %v3344 = vld [vmem:[#allocation1] sm:$0xff]
      %3345 = vst [vmem:[#allocation1] ss:$9 sm:$0xff] %v3227
      %3346 = vst [vmem:[%s3294] ss:$9 sm:$0xff] %v3228
      %3347 = vst [vmem:[%s3296] ss:$9 sm:$0xff] %v3229
      %3348 = vst [vmem:[%s3298] ss:$9 sm:$0xff] %v3231
      %3349 = vst [vmem:[%s3300] ss:$9 sm:$0xff] %v3232
      %3350 = vst [vmem:[%s3302] ss:$9 sm:$0xff] %v3234
      %3351 = vst [vmem:[%s3304] ss:$9 sm:$0xff] %v3235
      %3352 = vst [vmem:[%s3306] ss:$9 sm:$0xff] %v3236
      %v3353 = vld [vmem:[#allocation1] sm:$0xff]
      %3354 = vst [vmem:[#allocation1] ss:$9 sm:$0xff] %v3239
      %3355 = vst [vmem:[%s3294] ss:$9 sm:$0xff] %v3240
      %3356 = vst [vmem:[%s3296] ss:$9 sm:$0xff] %v3241
      %3357 = vst [vmem:[%s3298] ss:$9 sm:$0xff] %v3242
      %3358 = vst [vmem:[%s3300] ss:$9 sm:$0xff] %v3243
      %3359 = vst [vmem:[%s3302] ss:$9 sm:$0xff] %v3244
      %3360 = vst [vmem:[%s3304] ss:$9 sm:$0xff] %v3247
      %3361 = vst [vmem:[%s3306] ss:$9 sm:$0xff] %v3248
      %v3362 = vld [vmem:[#allocation1] sm:$0xff]
      %3363 = vst [vmem:[#allocation1] ss:$9 sm:$0xff] %v3249
      %3364 = vst [vmem:[%s3294] ss:$9 sm:$0xff] %v3250
      %3365 = vst [vmem:[%s3296] ss:$9 sm:$0xff] %v3251
      %3366 = vst [vmem:[%s3298] ss:$9 sm:$0xff] %v3252
      %3367 = vst [vmem:[%s3300] ss:$9 sm:$0xff] %v3253
      %3368 = vst [vmem:[%s3302] ss:$9 sm:$0xff] %v3255
      %3369 = vst [vmem:[%s3304] ss:$9 sm:$0xff] %v3256
      %3370 = vst [vmem:[%s3306] ss:$9 sm:$0xff] %v3258
      %v3371 = vld [vmem:[#allocation1] sm:$0xff]
      %3372 = vst [vmem:[#allocation1] ss:$9 sm:$0xff] %v3259
      %3373 = vst [vmem:[%s3294] ss:$9 sm:$0xff] %v3260
      %3374 = vst [vmem:[%s3296] ss:$9 sm:$0xff] %v3263
      %3375 = vst [vmem:[%s3298] ss:$9 sm:$0xff] %v3264
      %3376 = vst [vmem:[%s3300] ss:$9 sm:$0xff] %v3265
      %3377 = vst [vmem:[%s3302] ss:$9 sm:$0xff] %v3266
      %3378 = vst [vmem:[%s3304] ss:$9 sm:$0xff] %v3267
      %3379 = vst [vmem:[%s3306] ss:$9 sm:$0xff] %v3268
      %v3380 = vld [vmem:[#allocation1] sm:$0xff]
      %3381 = vst [vmem:[#allocation1] ss:$9 sm:$0xff] %v3271
      %3382 = vst [vmem:[%s3294] ss:$9 sm:$0xff] %v3272
      %3383 = vst [vmem:[%s3296] ss:$9 sm:$0xff] %v3273
      %3384 = vst [vmem:[%s3298] ss:$9 sm:$0xff] %v3274
      %3385 = vst [vmem:[%s3300] ss:$9 sm:$0xff] %v3275
      %3386 = vst [vmem:[%s3302] ss:$9 sm:$0xff] %v3276
      %3387 = vst [vmem:[%s3304] ss:$9 sm:$0xff] %v3277
      %3388 = vst [vmem:[%s3306] ss:$9 sm:$0xff] %v3279
      %v3389 = vld [vmem:[#allocation1] sm:$0xff]
      %3390 = vst [vmem:[#allocation1] ss:$9 sm:$0xff] %v3280
      %3391 = vst [vmem:[%s3294] ss:$9 sm:$0xff] %v3282
      %3392 = vst [vmem:[%s3296] ss:$9 sm:$0xff] %v3283
      %3393 = vst [vmem:[%s3298] ss:$9 sm:$0xff] %v3284
      %3394 = vst [vmem:[%s3300] ss:$9 sm:$0xff] %v3287
      %3395 = vst [vmem:[%s3302] ss:$9 sm:$0xff] %v3288
      %3396 = vst [vmem:[%s3304] ss:$9 sm:$0xff] %v3289
      %3397 = vst [vmem:[%s3306] ss:$9 sm:$0xff] %v3290
      %v3398 = vld [vmem:[#allocation1] sm:$0xff]
      %3399 = vst [vmem:[#allocation1] ss:$9 sm:$0xff] %v3291
      %3400 = vst [vmem:[%s3294] ss:$9 sm:$0xff] %v3292
      %v3401 = vld [vmem:[#allocation1] sm:$0xff]
      %v3402 = vsel %vm1943, %v3308, 0
      %v3404 = vsel %vm1943, %v3317, 0
      %v3406 = vsel %vm1943, %v3326, 0
      %v3408 = vsel %vm1943, %v3335, 0
      %v3410 = vsel %vm1943, %v3344, 0
      %v3412 = vsel %vm1943, %v3353, 0
      %v3414 = vsel %vm1943, %v3362, 0
      %v3416 = vsel %vm1943, %v3371, 0
      %v3418 = vsel %vm1943, %v3380, 0
      %v3420 = vsel %vm1943, %v3389, 0
      %v3422 = vsel %vm1943, %v3398, 0
      %v3424 = vsel %vm1943, %v3401, 0
      %v3427 = vsel %vm522, %v624, 0
      %3429 = vmatpush.bf16.msra.mxu0 0
      %3430 = vmatpush.bf16.msra.mxu0 0
      %3431 = vmatpush.bf16.msra.mxu0 0
      %3432 = vmatpush.bf16.msra.mxu0 0
      %3433 = vmatpush.bf16.msra.mxu0 0
      %3434 = vmatpush.bf16.msra.mxu0 0
      %3435 = vmatpush.bf16.msra.mxu0 0
      %3436 = vmatpush.bf16.msra.mxu0 %v3427
      %3437 = vmatmul.bf16.gmra.mxu0 %v3402
      %v3438 = vpop.f32.mrf.mxu0
      %v3439 = vadd.f32 0.0, %v3438
      %v3440 = vpop.f32.mrf.mxu0
      %v3441 = vadd.f32 0.0, %v3440
      %3442 = vmatmul.bf16.gmra.mxu0 %v3404
      %v3443 = vpop.f32.mrf.mxu0
      %v3444 = vadd.f32 0.0, %v3443
      %v3445 = vpop.f32.mrf.mxu0
      %v3446 = vadd.f32 0.0, %v3445
      %3447 = vmatmul.bf16.gmra.mxu0 %v3406
      %v3448 = vpop.f32.mrf.mxu0
      %v3449 = vadd.f32 0.0, %v3448
      %v3450 = vpop.f32.mrf.mxu0
      %v3451 = vadd.f32 0.0, %v3450
      %3452 = vmatmul.bf16.gmra.mxu0 %v3408
      %v3453 = vpop.f32.mrf.mxu0
      %v3454 = vadd.f32 0.0, %v3453
      %v3455 = vpop.f32.mrf.mxu0
      %v3456 = vadd.f32 0.0, %v3455
      %3457 = vmatmul.bf16.gmra.mxu0 %v3410
      %v3458 = vpop.f32.mrf.mxu0
      %v3459 = vadd.f32 0.0, %v3458
      %v3460 = vpop.f32.mrf.mxu0
      %v3461 = vadd.f32 0.0, %v3460
      %3462 = vmatmul.bf16.gmra.mxu0 %v3412
      %v3463 = vpop.f32.mrf.mxu0
      %v3464 = vadd.f32 0.0, %v3463
      %v3465 = vpop.f32.mrf.mxu0
      %v3466 = vadd.f32 0.0, %v3465
      %3467 = vmatmul.bf16.gmra.mxu0 %v3414
      %v3468 = vpop.f32.mrf.mxu0
      %v3469 = vadd.f32 0.0, %v3468
      %v3470 = vpop.f32.mrf.mxu0
      %v3471 = vadd.f32 0.0, %v3470
      %3472 = vmatmul.bf16.gmra.mxu0 %v3416
      %v3473 = vpop.f32.mrf.mxu0
      %v3474 = vadd.f32 0.0, %v3473
      %v3475 = vpop.f32.mrf.mxu0
      %v3476 = vadd.f32 0.0, %v3475
      %3477 = vmatmul.bf16.gmra.mxu0 %v3418
      %v3478 = vpop.f32.mrf.mxu0
      %v3479 = vadd.f32 0.0, %v3478
      %v3480 = vpop.f32.mrf.mxu0
      %v3481 = vadd.f32 0.0, %v3480
      %3482 = vmatmul.bf16.gmra.mxu0 %v3420
      %v3483 = vpop.f32.mrf.mxu0
      %v3484 = vadd.f32 0.0, %v3483
      %v3485 = vpop.f32.mrf.mxu0
      %v3486 = vadd.f32 0.0, %v3485
      %3487 = vmatmul.bf16.gmra.mxu0 %v3422
      %v3488 = vpop.f32.mrf.mxu0
      %v3489 = vadd.f32 0.0, %v3488
      %v3490 = vpop.f32.mrf.mxu0
      %v3491 = vadd.f32 0.0, %v3490
      %3492 = vmatmul.bf16.gmra.mxu0 %v3424
      %v3493 = vpop.f32.mrf.mxu0
      %v3494 = vadd.f32 0.0, %v3493
      %v3495 = vpop.f32.mrf.mxu0
      %3496 = vdwg.mxu0
      %v3497 = vadd.f32 %v3143, %v3439
      %v3498 = vadd.f32 %v3144, %v3441
      %v3499 = vadd.f32 %v3145, %v3444
      %v3500 = vadd.f32 %v3146, %v3446
      %v3501 = vadd.f32 %v3147, %v3449
      %v3502 = vadd.f32 %v3148, %v3451
      %v3503 = vadd.f32 %v3149, %v3454
      %v3504 = vadd.f32 %v3150, %v3456
      %v3505 = vadd.f32 %v3151, %v3459
      %v3506 = vadd.f32 %v3152, %v3461
      %v3507 = vadd.f32 %v3153, %v3464
      %v3508 = vadd.f32 %v3154, %v3466
      %v3509 = vadd.f32 %v3155, %v3469
      %v3510 = vadd.f32 %v3156, %v3471
      %v3511 = vadd.f32 %v3157, %v3474
      %v3512 = vadd.f32 %v3158, %v3476
      %v3513 = vadd.f32 %v3159, %v3479
      %v3514 = vadd.f32 %v3160, %v3481
      %v3515 = vadd.f32 %v3161, %v3484
      %v3516 = vadd.f32 %v3162, %v3486
      %v3517 = vadd.f32 %v3163, %v3489
      %v3518 = vadd.f32 %v3164, %v3491
      %v3519 = vadd.f32 %v3165, %v3494
      %v3523 = vrot.slane %v662, 3
      %v3524 = vrot.slane %v663, 3
      %v3525 = vrot.slane %v664, 3
      %v3528 = vsel %vm725, %v662, %v3523
      %v3529 = vsel %vm729, %v662, %v3523
      %v3531 = vrot.slane %v3529, 1
      %v3532 = vsel %vm733, %v662, %v3523
      %v3534 = vrot.slane %v3532, 2
      %v3535 = vsel %vm737, %v662, %v3523
      %v3537 = vrot.slane %v3535, 3
      %v3540 = vsel %vm725, %v663, %v3524
      %v3541 = vsel %vm729, %v663, %v3524
      %v3543 = vrot.slane %v3541, 1
      %v3544 = vsel %vm733, %v663, %v3524
      %v3546 = vrot.slane %v3544, 2
      %v3547 = vsel %vm737, %v663, %v3524
      %v3549 = vrot.slane %v3547, 3
      %v3552 = vsel %vm725, %v664, %v3525
      %3553 = vst [vmem:[#allocation1] ss:$9 sm:$0xff] %v785
      %s3554 = scalar_lea.vmem [#allocation1], 1
      %3555 = vst [vmem:[%s3554] ss:$9 sm:$0xff] %v788
      %s3556 = scalar_lea.vmem [#allocation1], 2
      %3557 = vst [vmem:[%s3556] ss:$9 sm:$0xff] %v791
      %s3558 = scalar_lea.vmem [#allocation1], 3
      %3559 = vst [vmem:[%s3558] ss:$9 sm:$0xff] %v794
      %s3560 = scalar_lea.vmem [#allocation1], 4
      %3561 = vst [vmem:[%s3560] ss:$9 sm:$0xff] %v797
      %s3562 = scalar_lea.vmem [#allocation1], 5
      %3563 = vst [vmem:[%s3562] ss:$9 sm:$0xff] %v800
      %s3564 = scalar_lea.vmem [#allocation1], 6
      %3565 = vst [vmem:[%s3564] ss:$9 sm:$0xff] %v803
      %s3566 = scalar_lea.vmem [#allocation1], 7
      %3567 = vst [vmem:[%s3566] ss:$9 sm:$0xff] %v806
      %v3568 = vld [vmem:[#allocation1] sm:$0xff]
      %3569 = vst [vmem:[#allocation1] ss:$9 sm:$0xff] %v809
      %3570 = vst [vmem:[%s3554] ss:$9 sm:$0xff] %v812
      %3571 = vst [vmem:[%s3556] ss:$9 sm:$0xff] %v815
      %3572 = vst [vmem:[%s3558] ss:$9 sm:$0xff] %v818
      %3573 = vst [vmem:[%s3560] ss:$9 sm:$0xff] %v821
      %3574 = vst [vmem:[%s3562] ss:$9 sm:$0xff] %v824
      %3575 = vst [vmem:[%s3564] ss:$9 sm:$0xff] %v827
      %3576 = vst [vmem:[%s3566] ss:$9 sm:$0xff] %v830
      %v3577 = vld [vmem:[#allocation1] sm:$0xff]
      %3578 = vst [vmem:[#allocation1] ss:$9 sm:$0xff] %v833
      %3579 = vst [vmem:[%s3554] ss:$9 sm:$0xff] %v836
      %3580 = vst [vmem:[%s3556] ss:$9 sm:$0xff] %v839
      %3581 = vst [vmem:[%s3558] ss:$9 sm:$0xff] %v842
      %3582 = vst [vmem:[%s3560] ss:$9 sm:$0xff] %v845
      %3583 = vst [vmem:[%s3562] ss:$9 sm:$0xff] %v848
      %3584 = vst [vmem:[%s3564] ss:$9 sm:$0xff] %v851
      %3585 = vst [vmem:[%s3566] ss:$9 sm:$0xff] %v854
      %v3586 = vld [vmem:[#allocation1] sm:$0xff]
      %3587 = vst [vmem:[#allocation1] ss:$9 sm:$0xff] %v857
      %3588 = vst [vmem:[%s3554] ss:$9 sm:$0xff] %v860
      %3589 = vst [vmem:[%s3556] ss:$9 sm:$0xff] %v863
      %3590 = vst [vmem:[%s3558] ss:$9 sm:$0xff] %v866
      %3591 = vst [vmem:[%s3560] ss:$9 sm:$0xff] %v869
      %3592 = vst [vmem:[%s3562] ss:$9 sm:$0xff] %v872
      %3593 = vst [vmem:[%s3564] ss:$9 sm:$0xff] %v875
      %3594 = vst [vmem:[%s3566] ss:$9 sm:$0xff] %v878
      %v3595 = vld [vmem:[#allocation1] sm:$0xff]
      %3596 = vst [vmem:[#allocation1] ss:$9 sm:$0xff] %v881
      %3597 = vst [vmem:[%s3554] ss:$9 sm:$0xff] %v884
      %3598 = vst [vmem:[%s3556] ss:$9 sm:$0xff] %v887
      %3599 = vst [vmem:[%s3558] ss:$9 sm:$0xff] %v890
      %3600 = vst [vmem:[%s3560] ss:$9 sm:$0xff] %v893
      %3601 = vst [vmem:[%s3562] ss:$9 sm:$0xff] %v896
      %3602 = vst [vmem:[%s3564] ss:$9 sm:$0xff] %v899
      %3603 = vst [vmem:[%s3566] ss:$9 sm:$0xff] %v902
      %v3604 = vld [vmem:[#allocation1] sm:$0xff]
      %3605 = vst [vmem:[#allocation1] ss:$9 sm:$0xff] %v905
      %3606 = vst [vmem:[%s3554] ss:$9 sm:$0xff] %v908
      %3607 = vst [vmem:[%s3556] ss:$9 sm:$0xff] %v911
      %3608 = vst [vmem:[%s3558] ss:$9 sm:$0xff] %v914
      %3609 = vst [vmem:[%s3560] ss:$9 sm:$0xff] %v917
      %3610 = vst [vmem:[%s3562] ss:$9 sm:$0xff] %v920
      %3611 = vst [vmem:[%s3564] ss:$9 sm:$0xff] %v923
      %3612 = vst [vmem:[%s3566] ss:$9 sm:$0xff] %v926
      %v3613 = vld [vmem:[#allocation1] sm:$0xff]
      %3614 = vst [vmem:[#allocation1] ss:$9 sm:$0xff] %v929
      %3615 = vst [vmem:[%s3554] ss:$9 sm:$0xff] %v932
      %3616 = vst [vmem:[%s3556] ss:$9 sm:$0xff] %v935
      %3617 = vst [vmem:[%s3558] ss:$9 sm:$0xff] %v938
      %3618 = vst [vmem:[%s3560] ss:$9 sm:$0xff] %v941
      %3619 = vst [vmem:[%s3562] ss:$9 sm:$0xff] %v944
      %3620 = vst [vmem:[%s3564] ss:$9 sm:$0xff] %v947
      %3621 = vst [vmem:[%s3566] ss:$9 sm:$0xff] %v950
      %v3622 = vld [vmem:[#allocation1] sm:$0xff]
      %3623 = vst [vmem:[#allocation1] ss:$9 sm:$0xff] %v953
      %3624 = vst [vmem:[%s3554] ss:$9 sm:$0xff] %v956
      %3625 = vst [vmem:[%s3556] ss:$9 sm:$0xff] %v959
      %3626 = vst [vmem:[%s3558] ss:$9 sm:$0xff] %v962
      %3627 = vst [vmem:[%s3560] ss:$9 sm:$0xff] %v965
      %3628 = vst [vmem:[%s3562] ss:$9 sm:$0xff] %v968
      %3629 = vst [vmem:[%s3564] ss:$9 sm:$0xff] %v971
      %3630 = vst [vmem:[%s3566] ss:$9 sm:$0xff] %v974
      %v3631 = vld [vmem:[#allocation1] sm:$0xff]
      %3632 = vst [vmem:[#allocation1] ss:$9 sm:$0xff] %v977
      %3633 = vst [vmem:[%s3554] ss:$9 sm:$0xff] %v980
      %3634 = vst [vmem:[%s3556] ss:$9 sm:$0xff] %v983
      %3635 = vst [vmem:[%s3558] ss:$9 sm:$0xff] %v986
      %3636 = vst [vmem:[%s3560] ss:$9 sm:$0xff] %v989
      %3637 = vst [vmem:[%s3562] ss:$9 sm:$0xff] %v992
      %3638 = vst [vmem:[%s3564] ss:$9 sm:$0xff] %v995
      %3639 = vst [vmem:[%s3566] ss:$9 sm:$0xff] %v998
      %v3640 = vld [vmem:[#allocation1] sm:$0xff]
      %3641 = vst [vmem:[#allocation1] ss:$9 sm:$0xff] %v2605
      %3642 = vst [vmem:[%s3554] ss:$9 sm:$0xff] %v2608
      %3643 = vst [vmem:[%s3556] ss:$9 sm:$0xff] %v2611
      %3644 = vst [vmem:[%s3558] ss:$9 sm:$0xff] %v2614
      %3645 = vst [vmem:[%s3560] ss:$9 sm:$0xff] %v2617
      %3646 = vst [vmem:[%s3562] ss:$9 sm:$0xff] %v2620
      %3647 = vst [vmem:[%s3564] ss:$9 sm:$0xff] %v2623
      %3648 = vst [vmem:[%s3566] ss:$9 sm:$0xff] %v2626
      %v3649 = vld [vmem:[#allocation1] sm:$0xff]
      %3650 = vst [vmem:[#allocation1] ss:$9 sm:$0xff] %v2629
      %3651 = vst [vmem:[%s3554] ss:$9 sm:$0xff] %v3528
      %3653 = vst [vmem:[%s3556] ss:$9 sm:$0xff] %v3531
      %3655 = vst [vmem:[%s3558] ss:$9 sm:$0xff] %v3534
      %3657 = vst [vmem:[%s3560] ss:$9 sm:$0xff] %v3537
      %3658 = vst [vmem:[%s3562] ss:$9 sm:$0xff] %v3540
      %3660 = vst [vmem:[%s3564] ss:$9 sm:$0xff] %v3543
      %3662 = vst [vmem:[%s3566] ss:$9 sm:$0xff] %v3546
      %v3663 = vld [vmem:[#allocation1] sm:$0xff]
      %3665 = vst [vmem:[#allocation1] ss:$9 sm:$0xff] %v3549
      %3666 = vst [vmem:[%s3554] ss:$9 sm:$0xff] %v3552
      %v3667 = vld [vmem:[#allocation1] sm:$0xff]
      %v3668 = vsel %vm1943, %v3568, 0
      %v3670 = vsel %vm1943, %v3577, 0
      %v3672 = vsel %vm1943, %v3586, 0
      %v3674 = vsel %vm1943, %v3595, 0
      %v3676 = vsel %vm1943, %v3604, 0
      %v3678 = vsel %vm1943, %v3613, 0
      %v3680 = vsel %vm1943, %v3622, 0
      %v3682 = vsel %vm1943, %v3631, 0
      %v3684 = vsel %vm1943, %v3640, 0
      %v3686 = vsel %vm1943, %v3649, 0
      %v3688 = vsel %vm1943, %v3663, 0
      %v3690 = vsel %vm1943, %v3667, 0
      %v3693 = vsel %vm522, %v625, 0
      %3695 = vmatpush.bf16.msra.mxu0 0
      %3696 = vmatpush.bf16.msra.mxu0 0
      %3697 = vmatpush.bf16.msra.mxu0 0
      %3698 = vmatpush.bf16.msra.mxu0 0
      %3699 = vmatpush.bf16.msra.mxu0 0
      %3700 = vmatpush.bf16.msra.mxu0 0
      %3701 = vmatpush.bf16.msra.mxu0 0
      %3702 = vmatpush.bf16.msra.mxu0 %v3693
      %3703 = vmatmul.bf16.gmra.mxu0 %v3668
      %v3704 = vpop.f32.mrf.mxu0
      %v3705 = vadd.f32 0.0, %v3704
      %v3706 = vpop.f32.mrf.mxu0
      %v3707 = vadd.f32 0.0, %v3706
      %3708 = vmatmul.bf16.gmra.mxu0 %v3670
      %v3709 = vpop.f32.mrf.mxu0
      %v3710 = vadd.f32 0.0, %v3709
      %v3711 = vpop.f32.mrf.mxu0
      %v3712 = vadd.f32 0.0, %v3711
      %3713 = vmatmul.bf16.gmra.mxu0 %v3672
      %v3714 = vpop.f32.mrf.mxu0
      %v3715 = vadd.f32 0.0, %v3714
      %v3716 = vpop.f32.mrf.mxu0
      %v3717 = vadd.f32 0.0, %v3716
      %3718 = vmatmul.bf16.gmra.mxu0 %v3674
      %v3719 = vpop.f32.mrf.mxu0
      %v3720 = vadd.f32 0.0, %v3719
      %v3721 = vpop.f32.mrf.mxu0
      %v3722 = vadd.f32 0.0, %v3721
      %3723 = vmatmul.bf16.gmra.mxu0 %v3676
      %v3724 = vpop.f32.mrf.mxu0
      %v3725 = vadd.f32 0.0, %v3724
      %v3726 = vpop.f32.mrf.mxu0
      %v3727 = vadd.f32 0.0, %v3726
      %3728 = vmatmul.bf16.gmra.mxu0 %v3678
      %v3729 = vpop.f32.mrf.mxu0
      %v3730 = vadd.f32 0.0, %v3729
      %v3731 = vpop.f32.mrf.mxu0
      %v3732 = vadd.f32 0.0, %v3731
      %3733 = vmatmul.bf16.gmra.mxu0 %v3680
      %v3734 = vpop.f32.mrf.mxu0
      %v3735 = vadd.f32 0.0, %v3734
      %v3736 = vpop.f32.mrf.mxu0
      %v3737 = vadd.f32 0.0, %v3736
      %3738 = vmatmul.bf16.gmra.mxu0 %v3682
      %v3739 = vpop.f32.mrf.mxu0
      %v3740 = vadd.f32 0.0, %v3739
      %v3741 = vpop.f32.mrf.mxu0
      %v3742 = vadd.f32 0.0, %v3741
      %3743 = vmatmul.bf16.gmra.mxu0 %v3684
      %v3744 = vpop.f32.mrf.mxu0
      %v3745 = vadd.f32 0.0, %v3744
      %v3746 = vpop.f32.mrf.mxu0
      %v3747 = vadd.f32 0.0, %v3746
      %3748 = vmatmul.bf16.gmra.mxu0 %v3686
      %v3749 = vpop.f32.mrf.mxu0
      %v3750 = vadd.f32 0.0, %v3749
      %v3751 = vpop.f32.mrf.mxu0
      %v3752 = vadd.f32 0.0, %v3751
      %3753 = vmatmul.bf16.gmra.mxu0 %v3688
      %v3754 = vpop.f32.mrf.mxu0
      %v3755 = vadd.f32 0.0, %v3754
      %v3756 = vpop.f32.mrf.mxu0
      %v3757 = vadd.f32 0.0, %v3756
      %3758 = vmatmul.bf16.gmra.mxu0 %v3690
      %v3759 = vpop.f32.mrf.mxu0
      %v3760 = vadd.f32 0.0, %v3759
      %v3761 = vpop.f32.mrf.mxu0
      %3762 = vdwg.mxu0
      %v3763 = vadd.f32 %v3497, %v3705
      %v3764 = vadd.f32 %v3498, %v3707
      %v3765 = vadd.f32 %v3499, %v3710
      %v3766 = vadd.f32 %v3500, %v3712
      %v3767 = vadd.f32 %v3501, %v3715
      %v3768 = vadd.f32 %v3502, %v3717
      %v3769 = vadd.f32 %v3503, %v3720
      %v3770 = vadd.f32 %v3504, %v3722
      %v3771 = vadd.f32 %v3505, %v3725
      %v3772 = vadd.f32 %v3506, %v3727
      %v3773 = vadd.f32 %v3507, %v3730
      %v3774 = vadd.f32 %v3508, %v3732
      %v3775 = vadd.f32 %v3509, %v3735
      %v3776 = vadd.f32 %v3510, %v3737
      %v3777 = vadd.f32 %v3511, %v3740
      %v3778 = vadd.f32 %v3512, %v3742
      %v3779 = vadd.f32 %v3513, %v3745
      %v3780 = vadd.f32 %v3514, %v3747
      %v3781 = vadd.f32 %v3515, %v3750
      %v3782 = vadd.f32 %v3516, %v3752
      %v3783 = vadd.f32 %v3517, %v3755
      %v3784 = vadd.f32 %v3518, %v3757
      %v3785 = vadd.f32 %v3519, %v3760
      %v3786 = vsel %vm729, %v664, %v3525
      %v3788 = vrot.slane %v3786, 1
      %v3789 = vshrl.u32 %v3528, 16
      %v3791 = vrot.slane %v3789, 7
      %v3792 = vrot.slane %v3791, 1
      %v3793 = vshll.u32 %v3531, 16
      %v3795 = vsel %vm1043, %v3792, %v3793
      %v3796 = vshrl.u32 %v3531, 16
      %v3798 = vrot.slane %v3796, 7
      %v3799 = vrot.slane %v3798, 1
      %v3800 = vshll.u32 %v3534, 16
      %v3802 = vsel %vm1043, %v3799, %v3800
      %v3803 = vshrl.u32 %v3534, 16
      %v3805 = vrot.slane %v3803, 7
      %v3806 = vrot.slane %v3805, 1
      %v3807 = vshll.u32 %v3537, 16
      %v3809 = vsel %vm1043, %v3806, %v3807
      %v3810 = vshrl.u32 %v3537, 16
      %v3812 = vrot.slane %v3810, 7
      %v3813 = vrot.slane %v3812, 1
      %v3814 = vshll.u32 %v3540, 16
      %v3816 = vsel %vm1043, %v3813, %v3814
      %v3817 = vshrl.u32 %v3540, 16
      %v3819 = vrot.slane %v3817, 7
      %v3820 = vrot.slane %v3819, 1
      %v3821 = vshll.u32 %v3543, 16
      %v3823 = vsel %vm1043, %v3820, %v3821
      %v3824 = vshrl.u32 %v3543, 16
      %v3826 = vrot.slane %v3824, 7
      %v3827 = vrot.slane %v3826, 1
      %v3828 = vshll.u32 %v3546, 16
      %v3830 = vsel %vm1043, %v3827, %v3828
      %v3831 = vshrl.u32 %v3546, 16
      %v3833 = vrot.slane %v3831, 7
      %v3834 = vrot.slane %v3833, 1
      %v3835 = vshll.u32 %v3549, 16
      %v3837 = vsel %vm1043, %v3834, %v3835
      %v3838 = vshrl.u32 %v3549, 16
      %v3840 = vrot.slane %v3838, 7
      %v3841 = vrot.slane %v3840, 1
      %v3842 = vshll.u32 %v3552, 16
      %v3844 = vsel %vm1043, %v3841, %v3842
      %v3845 = vshrl.u32 %v3552, 16
      %v3847 = vrot.slane %v3845, 7
      %v3848 = vrot.slane %v3847, 1
      %v3850 = vshll.u32 %v3788, 16
      %v3852 = vsel %vm1043, %v3848, %v3850
      %3853 = vst [vmem:[#allocation1] ss:$9 sm:$0xff] %v1191
      %s3854 = scalar_lea.vmem [#allocation1], 1
      %3855 = vst [vmem:[%s3854] ss:$9 sm:$0xff] %v1199
      %s3856 = scalar_lea.vmem [#allocation1], 2
      %3857 = vst [vmem:[%s3856] ss:$9 sm:$0xff] %v1207
      %s3858 = scalar_lea.vmem [#allocation1], 3
      %3859 = vst [vmem:[%s3858] ss:$9 sm:$0xff] %v1214
      %s3860 = scalar_lea.vmem [#allocation1], 4
      %3861 = vst [vmem:[%s3860] ss:$9 sm:$0xff] %v1222
      %s3862 = scalar_lea.vmem [#allocation1], 5
      %3863 = vst [vmem:[%s3862] ss:$9 sm:$0xff] %v1230
      %s3864 = scalar_lea.vmem [#allocation1], 6
      %3865 = vst [vmem:[%s3864] ss:$9 sm:$0xff] %v1238
      %s3866 = scalar_lea.vmem [#allocation1], 7
      %3867 = vst [vmem:[%s3866] ss:$9 sm:$0xff] %v1245
      %v3868 = vld [vmem:[#allocation1] sm:$0xff]
      %3869 = vst [vmem:[#allocation1] ss:$9 sm:$0xff] %v1253
      %3870 = vst [vmem:[%s3854] ss:$9 sm:$0xff] %v1261
      %3871 = vst [vmem:[%s3856] ss:$9 sm:$0xff] %v1269
      %3872 = vst [vmem:[%s3858] ss:$9 sm:$0xff] %v1277
      %3873 = vst [vmem:[%s3860] ss:$9 sm:$0xff] %v1284
      %3874 = vst [vmem:[%s3862] ss:$9 sm:$0xff] %v1292
      %3875 = vst [vmem:[%s3864] ss:$9 sm:$0xff] %v1300
      %3876 = vst [vmem:[%s3866] ss:$9 sm:$0xff] %v1308
      %v3877 = vld [vmem:[#allocation1] sm:$0xff]
      %3878 = vst [vmem:[#allocation1] ss:$9 sm:$0xff] %v1315
      %3879 = vst [vmem:[%s3854] ss:$9 sm:$0xff] %v1323
      %3880 = vst [vmem:[%s3856] ss:$9 sm:$0xff] %v1331
      %3881 = vst [vmem:[%s3858] ss:$9 sm:$0xff] %v1339
      %3882 = vst [vmem:[%s3860] ss:$9 sm:$0xff] %v1347
      %3883 = vst [vmem:[%s3862] ss:$9 sm:$0xff] %v1354
      %3884 = vst [vmem:[%s3864] ss:$9 sm:$0xff] %v1362
      %3885 = vst [vmem:[%s3866] ss:$9 sm:$0xff] %v1370
      %v3886 = vld [vmem:[#allocation1] sm:$0xff]
      %3887 = vst [vmem:[#allocation1] ss:$9 sm:$0xff] %v1378
      %3888 = vst [vmem:[%s3854] ss:$9 sm:$0xff] %v1385
      %3889 = vst [vmem:[%s3856] ss:$9 sm:$0xff] %v1393
      %3890 = vst [vmem:[%s3858] ss:$9 sm:$0xff] %v1401
      %3891 = vst [vmem:[%s3860] ss:$9 sm:$0xff] %v1409
      %3892 = vst [vmem:[%s3862] ss:$9 sm:$0xff] %v1417
      %3893 = vst [vmem:[%s3864] ss:$9 sm:$0xff] %v1424
      %3894 = vst [vmem:[%s3866] ss:$9 sm:$0xff] %v1432
      %v3895 = vld [vmem:[#allocation1] sm:$0xff]
      %3896 = vst [vmem:[#allocation1] ss:$9 sm:$0xff] %v1440
      %3897 = vst [vmem:[%s3854] ss:$9 sm:$0xff] %v1448
      %3898 = vst [vmem:[%s3856] ss:$9 sm:$0xff] %v1455
      %3899 = vst [vmem:[%s3858] ss:$9 sm:$0xff] %v1463
      %3900 = vst [vmem:[%s3860] ss:$9 sm:$0xff] %v1471
      %3901 = vst [vmem:[%s3862] ss:$9 sm:$0xff] %v1479
      %3902 = vst [vmem:[%s3864] ss:$9 sm:$0xff] %v1487
      %3903 = vst [vmem:[%s3866] ss:$9 sm:$0xff] %v1494
      %v3904 = vld [vmem:[#allocation1] sm:$0xff]
      %3905 = vst [vmem:[#allocation1] ss:$9 sm:$0xff] %v1502
      %3906 = vst [vmem:[%s3854] ss:$9 sm:$0xff] %v1510
      %3907 = vst [vmem:[%s3856] ss:$9 sm:$0xff] %v1518
      %3908 = vst [vmem:[%s3858] ss:$9 sm:$0xff] %v1525
      %3909 = vst [vmem:[%s3860] ss:$9 sm:$0xff] %v1533
      %3910 = vst [vmem:[%s3862] ss:$9 sm:$0xff] %v1541
      %3911 = vst [vmem:[%s3864] ss:$9 sm:$0xff] %v1549
      %3912 = vst [vmem:[%s3866] ss:$9 sm:$0xff] %v1557
      %v3913 = vld [vmem:[#allocation1] sm:$0xff]
      %3914 = vst [vmem:[#allocation1] ss:$9 sm:$0xff] %v1564
      %3915 = vst [vmem:[%s3854] ss:$9 sm:$0xff] %v1572
      %3916 = vst [vmem:[%s3856] ss:$9 sm:$0xff] %v1580
      %3917 = vst [vmem:[%s3858] ss:$9 sm:$0xff] %v1588
      %3918 = vst [vmem:[%s3860] ss:$9 sm:$0xff] %v1595
      %3919 = vst [vmem:[%s3862] ss:$9 sm:$0xff] %v1603
      %3920 = vst [vmem:[%s3864] ss:$9 sm:$0xff] %v1611
      %3921 = vst [vmem:[%s3866] ss:$9 sm:$0xff] %v1619
      %v3922 = vld [vmem:[#allocation1] sm:$0xff]
      %3923 = vst [vmem:[#allocation1] ss:$9 sm:$0xff] %v1627
      %3924 = vst [vmem:[%s3854] ss:$9 sm:$0xff] %v1634
      %3925 = vst [vmem:[%s3856] ss:$9 sm:$0xff] %v1642
      %3926 = vst [vmem:[%s3858] ss:$9 sm:$0xff] %v1650
      %3927 = vst [vmem:[%s3860] ss:$9 sm:$0xff] %v1658
      %3928 = vst [vmem:[%s3862] ss:$9 sm:$0xff] %v1665
      %3929 = vst [vmem:[%s3864] ss:$9 sm:$0xff] %v1673
      %3930 = vst [vmem:[%s3866] ss:$9 sm:$0xff] %v1681
      %v3931 = vld [vmem:[#allocation1] sm:$0xff]
      %3932 = vst [vmem:[#allocation1] ss:$9 sm:$0xff] %v1689
      %3933 = vst [vmem:[%s3854] ss:$9 sm:$0xff] %v1697
      %3934 = vst [vmem:[%s3856] ss:$9 sm:$0xff] %v1704
      %3935 = vst [vmem:[%s3858] ss:$9 sm:$0xff] %v1712
      %3936 = vst [vmem:[%s3860] ss:$9 sm:$0xff] %v1720
      %3937 = vst [vmem:[%s3862] ss:$9 sm:$0xff] %v1728
      %3938 = vst [vmem:[%s3864] ss:$9 sm:$0xff] %v1735
      %3939 = vst [vmem:[%s3866] ss:$9 sm:$0xff] %v1743
      %v3940 = vld [vmem:[#allocation1] sm:$0xff]
      %3941 = vst [vmem:[#allocation1] ss:$9 sm:$0xff] %v2872
      %3942 = vst [vmem:[%s3854] ss:$9 sm:$0xff] %v2879
      %3943 = vst [vmem:[%s3856] ss:$9 sm:$0xff] %v2886
      %3944 = vst [vmem:[%s3858] ss:$9 sm:$0xff] %v2893
      %3945 = vst [vmem:[%s3860] ss:$9 sm:$0xff] %v2900
      %3946 = vst [vmem:[%s3862] ss:$9 sm:$0xff] %v2907
      %3947 = vst [vmem:[%s3864] ss:$9 sm:$0xff] %v2914
      %3948 = vst [vmem:[%s3866] ss:$9 sm:$0xff] %v2921
      %v3949 = vld [vmem:[#allocation1] sm:$0xff]
      %3950 = vst [vmem:[#allocation1] ss:$9 sm:$0xff] %v2929
      %3952 = vst [vmem:[%s3854] ss:$9 sm:$0xff] %v3795
      %3954 = vst [vmem:[%s3856] ss:$9 sm:$0xff] %v3802
      %3956 = vst [vmem:[%s3858] ss:$9 sm:$0xff] %v3809
      %3958 = vst [vmem:[%s3860] ss:$9 sm:$0xff] %v3816
      %3960 = vst [vmem:[%s3862] ss:$9 sm:$0xff] %v3823
      %3962 = vst [vmem:[%s3864] ss:$9 sm:$0xff] %v3830
      %3964 = vst [vmem:[%s3866] ss:$9 sm:$0xff] %v3837
      %v3965 = vld [vmem:[#allocation1] sm:$0xff]
      %3967 = vst [vmem:[#allocation1] ss:$9 sm:$0xff] %v3844
      %3969 = vst [vmem:[%s3854] ss:$9 sm:$0xff] %v3852
      %v3970 = vld [vmem:[#allocation1] sm:$0xff]
      %v3971 = vsel %vm1943, %v3868, 0
      %v3973 = vsel %vm1943, %v3877, 0
      %v3975 = vsel %vm1943, %v3886, 0
      %v3977 = vsel %vm1943, %v3895, 0
      %v3979 = vsel %vm1943, %v3904, 0
      %v3981 = vsel %vm1943, %v3913, 0
      %v3983 = vsel %vm1943, %v3922, 0
      %v3985 = vsel %vm1943, %v3931, 0
      %v3987 = vsel %vm1943, %v3940, 0
      %v3989 = vsel %vm1943, %v3949, 0
      %v3991 = vsel %vm1943, %v3965, 0
      %v3993 = vsel %vm1943, %v3970, 0
      %v3996 = vsel %vm522, %v626, 0
      %3998 = vmatpush.bf16.msra.mxu0 0
      %3999 = vmatpush.bf16.msra.mxu0 0
      %4000 = vmatpush.bf16.msra.mxu0 0
      %4001 = vmatpush.bf16.msra.mxu0 0
      %4002 = vmatpush.bf16.msra.mxu0 0
      %4003 = vmatpush.bf16.msra.mxu0 0
      %4004 = vmatpush.bf16.msra.mxu0 0
      %4005 = vmatpush.bf16.msra.mxu0 %v3996
      %4006 = vmatmul.bf16.gmra.mxu0 %v3971
      %v4007 = vpop.f32.mrf.mxu0
      %v4008 = vadd.f32 0.0, %v4007
      %v4009 = vpop.f32.mrf.mxu0
      %v4010 = vadd.f32 0.0, %v4009
      %4011 = vmatmul.bf16.gmra.mxu0 %v3973
      %v4012 = vpop.f32.mrf.mxu0
      %v4013 = vadd.f32 0.0, %v4012
      %v4014 = vpop.f32.mrf.mxu0
      %v4015 = vadd.f32 0.0, %v4014
      %4016 = vmatmul.bf16.gmra.mxu0 %v3975
      %v4017 = vpop.f32.mrf.mxu0
      %v4018 = vadd.f32 0.0, %v4017
      %v4019 = vpop.f32.mrf.mxu0
      %v4020 = vadd.f32 0.0, %v4019
      %4021 = vmatmul.bf16.gmra.mxu0 %v3977
      %v4022 = vpop.f32.mrf.mxu0
      %v4023 = vadd.f32 0.0, %v4022
      %v4024 = vpop.f32.mrf.mxu0
      %v4025 = vadd.f32 0.0, %v4024
      %4026 = vmatmul.bf16.gmra.mxu0 %v3979
      %v4027 = vpop.f32.mrf.mxu0
      %v4028 = vadd.f32 0.0, %v4027
      %v4029 = vpop.f32.mrf.mxu0
      %v4030 = vadd.f32 0.0, %v4029
      %4031 = vmatmul.bf16.gmra.mxu0 %v3981
      %v4032 = vpop.f32.mrf.mxu0
      %v4033 = vadd.f32 0.0, %v4032
      %v4034 = vpop.f32.mrf.mxu0
      %v4035 = vadd.f32 0.0, %v4034
      %4036 = vmatmul.bf16.gmra.mxu0 %v3983
      %v4037 = vpop.f32.mrf.mxu0
      %v4038 = vadd.f32 0.0, %v4037
      %v4039 = vpop.f32.mrf.mxu0
      %v4040 = vadd.f32 0.0, %v4039
      %4041 = vmatmul.bf16.gmra.mxu0 %v3985
      %v4042 = vpop.f32.mrf.mxu0
      %v4043 = vadd.f32 0.0, %v4042
      %v4044 = vpop.f32.mrf.mxu0
      %v4045 = vadd.f32 0.0, %v4044
      %4046 = vmatmul.bf16.gmra.mxu0 %v3987
      %v4047 = vpop.f32.mrf.mxu0
      %v4048 = vadd.f32 0.0, %v4047
      %v4049 = vpop.f32.mrf.mxu0
      %v4050 = vadd.f32 0.0, %v4049
      %4051 = vmatmul.bf16.gmra.mxu0 %v3989
      %v4052 = vpop.f32.mrf.mxu0
      %v4053 = vadd.f32 0.0, %v4052
      %v4054 = vpop.f32.mrf.mxu0
      %v4055 = vadd.f32 0.0, %v4054
      %4056 = vmatmul.bf16.gmra.mxu0 %v3991
      %v4057 = vpop.f32.mrf.mxu0
      %v4058 = vadd.f32 0.0, %v4057
      %v4059 = vpop.f32.mrf.mxu0
      %v4060 = vadd.f32 0.0, %v4059
      %4061 = vmatmul.bf16.gmra.mxu0 %v3993
      %v4062 = vpop.f32.mrf.mxu0
      %v4063 = vadd.f32 0.0, %v4062
      %v4064 = vpop.f32.mrf.mxu0
      %4065 = vdwg.mxu0
      %v4066 = vadd.f32 %v3763, %v4008
      %v4067 = vadd.f32 %v3764, %v4010
      %v4068 = vadd.f32 %v3765, %v4013
      %v4069 = vadd.f32 %v3766, %v4015
      %v4070 = vadd.f32 %v3767, %v4018
      %v4071 = vadd.f32 %v3768, %v4020
      %v4072 = vadd.f32 %v3769, %v4023
      %v4073 = vadd.f32 %v3770, %v4025
      %v4074 = vadd.f32 %v3771, %v4028
      %v4075 = vadd.f32 %v3772, %v4030
      %v4076 = vadd.f32 %v3773, %v4033
      %v4077 = vadd.f32 %v3774, %v4035
      %v4078 = vadd.f32 %v3775, %v4038
      %v4079 = vadd.f32 %v3776, %v4040
      %v4080 = vadd.f32 %v3777, %v4043
      %v4081 = vadd.f32 %v3778, %v4045
      %v4082 = vadd.f32 %v3779, %v4048
      %v4083 = vadd.f32 %v3780, %v4050
      %v4084 = vadd.f32 %v3781, %v4053
      %v4085 = vadd.f32 %v3782, %v4055
      %v4086 = vadd.f32 %v3783, %v4058
      %v4087 = vadd.f32 %v3784, %v4060
      %v4088 = vadd.f32 %v3785, %v4063
      %4089 = vst [vmem:[#allocation1] sm:$0xff] %v635
      %4090 = vst [vmem:[#allocation1 + $0x20] sm:$0xff] %v636
      %s4091 = scalar_lea.vmem [#allocation1], 1
      %v4092 = vld [vmem:[%s4091] ss:$4 sm:$0xff]
      %s4093 = scalar_lea.vmem [#allocation1], 2
      %v4094 = vld [vmem:[%s4093] ss:$4 sm:$0xff]
      %s4095 = scalar_lea.vmem [#allocation1], 3
      %v4096 = vld [vmem:[%s4095] ss:$4 sm:$0xff]
      %s4097 = scalar_lea.vmem [#allocation1], 32
      %v4098 = vld [vmem:[%s4097] ss:$4 sm:$0xff]
      %s4099 = scalar_lea.vmem [#allocation1], 33
      %v4100 = vld [vmem:[%s4099] ss:$4 sm:$0xff]
      %s4101 = scalar_lea.vmem [#allocation1], 34
      %v4102 = vld [vmem:[%s4101] ss:$4 sm:$0xff]
      %s4103 = scalar_lea.vmem [#allocation1], 35
      %v4104 = vld [vmem:[%s4103] ss:$4 sm:$0xff]
      %4105 = vst [vmem:[#allocation1] sm:$0xff] %v637
      %v4106 = vld [vmem:[#allocation1] ss:$4 sm:$0xff]
      %v4107 = vld [vmem:[%s4091] ss:$4 sm:$0xff]
      %4108 = vst [vmem:[#allocation1 + $0x20] sm:$0xff] %v638
      %v4109 = vld [vmem:[%s4099] ss:$4 sm:$0xff]
      %v4110 = vld [vmem:[%s4101] ss:$4 sm:$0xff]
      %v4111 = vld [vmem:[%s4103] ss:$4 sm:$0xff]
      %4112 = vst [vmem:[#allocation1] sm:$0xff] %v639
      %4113 = vst [vmem:[#allocation1 + $0x20] sm:$0xff] %v640
      %v4114 = vld [vmem:[#allocation1] ss:$4 sm:$0xff]
      %v4115 = vld [vmem:[%s4091] ss:$4 sm:$0xff]
      %v4116 = vld [vmem:[%s4093] ss:$4 sm:$0xff]
      %v4117 = vld [vmem:[%s4095] ss:$4 sm:$0xff]
      %v4118 = vld [vmem:[%s4097] ss:$4 sm:$0xff]
      %v4119 = vld [vmem:[%s4099] ss:$4 sm:$0xff]
      %4120 = vst [vmem:[#allocation1] sm:$0xff] %v641
      %4121 = vst [vmem:[#allocation1 + $0x20] sm:$0xff] %v642
      %v4122 = vld [vmem:[%s4091] ss:$4 sm:$0xff]
      %v4123 = vld [vmem:[%s4093] ss:$4 sm:$0xff]
      %v4124 = vld [vmem:[%s4095] ss:$4 sm:$0xff]
      %v4125 = vld [vmem:[%s4097] ss:$4 sm:$0xff]
      %v4126 = vld [vmem:[%s4099] ss:$4 sm:$0xff]
      %v4127 = vld [vmem:[%s4101] ss:$4 sm:$0xff]
      %v4128 = vld [vmem:[%s4103] ss:$4 sm:$0xff]
      %4129 = vst [vmem:[#allocation1] sm:$0xff] %v643
      %v4130 = vld [vmem:[#allocation1] ss:$4 sm:$0xff]
      %v4131 = vld [vmem:[%s4091] ss:$4 sm:$0xff]
      %4132 = vst [vmem:[#allocation1 + $0x20] sm:$0xff] %v644
      %v4133 = vld [vmem:[%s4099] ss:$4 sm:$0xff]
      %v4134 = vld [vmem:[%s4101] ss:$4 sm:$0xff]
      %v4135 = vld [vmem:[%s4103] ss:$4 sm:$0xff]
      %4136 = vst [vmem:[#allocation1] sm:$0xff] %v645
      %4137 = vst [vmem:[#allocation1 + $0x20] sm:$0xff] %v646
      %v4138 = vld [vmem:[#allocation1] ss:$4 sm:$0xff]
      %v4139 = vld [vmem:[%s4091] ss:$4 sm:$0xff]
      %v4140 = vld [vmem:[%s4093] ss:$4 sm:$0xff]
      %v4141 = vld [vmem:[%s4095] ss:$4 sm:$0xff]
      %v4142 = vld [vmem:[%s4097] ss:$4 sm:$0xff]
      %v4143 = vld [vmem:[%s4099] ss:$4 sm:$0xff]
      %4144 = vst [vmem:[#allocation1] sm:$0xff] %v647
      %4145 = vst [vmem:[#allocation1 + $0x20] sm:$0xff] %v648
      %v4146 = vld [vmem:[%s4091] ss:$4 sm:$0xff]
      %v4147 = vld [vmem:[%s4093] ss:$4 sm:$0xff]
      %v4148 = vld [vmem:[%s4095] ss:$4 sm:$0xff]
      %v4149 = vld [vmem:[%s4097] ss:$4 sm:$0xff]
      %v4150 = vld [vmem:[%s4099] ss:$4 sm:$0xff]
      %v4151 = vld [vmem:[%s4101] ss:$4 sm:$0xff]
      %v4152 = vld [vmem:[%s4103] ss:$4 sm:$0xff]
      %4153 = vst [vmem:[#allocation1] sm:$0xff] %v649
      %v4154 = vld [vmem:[#allocation1] ss:$4 sm:$0xff]
      %v4155 = vld [vmem:[%s4091] ss:$4 sm:$0xff]
      %4156 = vst [vmem:[#allocation1 + $0x20] sm:$0xff] %v650
      %v4157 = vld [vmem:[%s4099] ss:$4 sm:$0xff]
      %v4158 = vld [vmem:[%s4101] ss:$4 sm:$0xff]
      %v4159 = vld [vmem:[%s4103] ss:$4 sm:$0xff]
      %4160 = vst [vmem:[#allocation1] sm:$0xff] %v651
      %4161 = vst [vmem:[#allocation1 + $0x20] sm:$0xff] %v652
      %v4162 = vld [vmem:[#allocation1] ss:$4 sm:$0xff]
      %v4163 = vld [vmem:[%s4091] ss:$4 sm:$0xff]
      %v4164 = vld [vmem:[%s4093] ss:$4 sm:$0xff]
      %v4165 = vld [vmem:[%s4095] ss:$4 sm:$0xff]
      %v4166 = vld [vmem:[%s4097] ss:$4 sm:$0xff]
      %v4167 = vld [vmem:[%s4099] ss:$4 sm:$0xff]
      %4168 = vst [vmem:[#allocation1] sm:$0xff] %v653
      %4169 = vst [vmem:[#allocation1 + $0x20] sm:$0xff] %v654
      %v4170 = vld [vmem:[%s4091] ss:$4 sm:$0xff]
      %v4171 = vld [vmem:[%s4093] ss:$4 sm:$0xff]
      %v4172 = vld [vmem:[%s4095] ss:$4 sm:$0xff]
      %v4173 = vld [vmem:[%s4097] ss:$4 sm:$0xff]
      %v4174 = vld [vmem:[%s4099] ss:$4 sm:$0xff]
      %v4175 = vld [vmem:[%s4101] ss:$4 sm:$0xff]
      %v4176 = vld [vmem:[%s4103] ss:$4 sm:$0xff]
      %4177 = vst [vmem:[#allocation1] sm:$0xff] %v655
      %v4178 = vld [vmem:[#allocation1] ss:$4 sm:$0xff]
      %v4179 = vld [vmem:[%s4091] ss:$4 sm:$0xff]
      %4180 = vst [vmem:[#allocation1 + $0x20] sm:$0xff] %v656
      %v4181 = vld [vmem:[%s4099] ss:$4 sm:$0xff]
      %v4182 = vld [vmem:[%s4101] ss:$4 sm:$0xff]
      %v4183 = vld [vmem:[%s4103] ss:$4 sm:$0xff]
      %4184 = vst [vmem:[#allocation1] sm:$0xff] %v657
      %4185 = vst [vmem:[#allocation1 + $0x20] sm:$0xff] %v658
      %v4186 = vld [vmem:[#allocation1] ss:$4 sm:$0xff]
      %v4187 = vld [vmem:[%s4091] ss:$4 sm:$0xff]
      %v4188 = vld [vmem:[%s4093] ss:$4 sm:$0xff]
      %v4189 = vld [vmem:[%s4095] ss:$4 sm:$0xff]
      %v4190 = vld [vmem:[%s4097] ss:$4 sm:$0xff]
      %v4191 = vld [vmem:[%s4099] ss:$4 sm:$0xff]
      %4192 = vst [vmem:[#allocation1] sm:$0xff] %v659
      %4193 = vst [vmem:[#allocation1 + $0x20] sm:$0xff] %v660
      %v4194 = vld [vmem:[%s4091] ss:$4 sm:$0xff]
      %v4195 = vld [vmem:[%s4093] ss:$4 sm:$0xff]
      %v4196 = vld [vmem:[%s4095] ss:$4 sm:$0xff]
      %v4197 = vld [vmem:[%s4097] ss:$4 sm:$0xff]
      %v4198 = vld [vmem:[%s4099] ss:$4 sm:$0xff]
      %v4199 = vld [vmem:[%s4101] ss:$4 sm:$0xff]
      %v4200 = vld [vmem:[%s4103] ss:$4 sm:$0xff]
      %4201 = vst [vmem:[#allocation1] sm:$0xff] %v661
      %v4202 = vld [vmem:[#allocation1] ss:$4 sm:$0xff]
      %v4203 = vld [vmem:[%s4091] ss:$4 sm:$0xff]
      %4204 = vst [vmem:[#allocation1 + $0x20] sm:$0xff] %v662
      %v4205 = vld [vmem:[%s4099] ss:$4 sm:$0xff]
      %v4206 = vld [vmem:[%s4101] ss:$4 sm:$0xff]
      %v4207 = vld [vmem:[%s4103] ss:$4 sm:$0xff]
      %4208 = vst [vmem:[#allocation1] sm:$0xff] %v663
      %4209 = vst [vmem:[#allocation1 + $0x20] sm:$0xff] %v664
      %v4210 = vld [vmem:[#allocation1] ss:$4 sm:$0xff]
      %v4211 = vld [vmem:[%s4091] ss:$4 sm:$0xff]
      %v4212 = vld [vmem:[%s4093] ss:$4 sm:$0xff]
      %v4213 = vld [vmem:[%s4095] ss:$4 sm:$0xff]
      %v4214 = vld [vmem:[%s4097] ss:$4 sm:$0xff]
      %v4215 = vld [vmem:[%s4099] ss:$4 sm:$0xff]
      %4216 = vst [vmem:[#allocation1] ss:$9 sm:$0xff] %v4092
      %s4217 = scalar_lea.vmem [#allocation1], 1
      %4218 = vst [vmem:[%s4217] ss:$9 sm:$0xff] %v4094
      %s4219 = scalar_lea.vmem [#allocation1], 2
      %4220 = vst [vmem:[%s4219] ss:$9 sm:$0xff] %v4096
      %s4221 = scalar_lea.vmem [#allocation1], 3
      %4222 = vst [vmem:[%s4221] ss:$9 sm:$0xff] %v4098
      %s4223 = scalar_lea.vmem [#allocation1], 4
      %4224 = vst [vmem:[%s4223] ss:$9 sm:$0xff] %v4100
      %s4225 = scalar_lea.vmem [#allocation1], 5
      %4226 = vst [vmem:[%s4225] ss:$9 sm:$0xff] %v4102
      %s4227 = scalar_lea.vmem [#allocation1], 6
      %4228 = vst [vmem:[%s4227] ss:$9 sm:$0xff] %v4104
      %s4229 = scalar_lea.vmem [#allocation1], 7
      %4230 = vst [vmem:[%s4229] ss:$9 sm:$0xff] %v4106
      %v4231 = vld [vmem:[#allocation1] sm:$0xff]
      %4232 = vst [vmem:[#allocation1] ss:$9 sm:$0xff] %v4107
      %4233 = vst [vmem:[%s4217] ss:$9 sm:$0xff] %v4109
      %4234 = vst [vmem:[%s4219] ss:$9 sm:$0xff] %v4110
      %4235 = vst [vmem:[%s4221] ss:$9 sm:$0xff] %v4111
      %4236 = vst [vmem:[%s4223] ss:$9 sm:$0xff] %v4114
      %4237 = vst [vmem:[%s4225] ss:$9 sm:$0xff] %v4115
      %4238 = vst [vmem:[%s4227] ss:$9 sm:$0xff] %v4116
      %4239 = vst [vmem:[%s4229] ss:$9 sm:$0xff] %v4117
      %v4240 = vld [vmem:[#allocation1] sm:$0xff]
      %4241 = vst [vmem:[#allocation1] ss:$9 sm:$0xff] %v4118
      %4242 = vst [vmem:[%s4217] ss:$9 sm:$0xff] %v4119
      %4243 = vst [vmem:[%s4219] ss:$9 sm:$0xff] %v4122
      %4244 = vst [vmem:[%s4221] ss:$9 sm:$0xff] %v4123
      %4245 = vst [vmem:[%s4223] ss:$9 sm:$0xff] %v4124
      %4246 = vst [vmem:[%s4225] ss:$9 sm:$0xff] %v4125
      %4247 = vst [vmem:[%s4227] ss:$9 sm:$0xff] %v4126
      %4248 = vst [vmem:[%s4229] ss:$9 sm:$0xff] %v4127
      %v4249 = vld [vmem:[#allocation1] sm:$0xff]
      %4250 = vst [vmem:[#allocation1] ss:$9 sm:$0xff] %v4128
      %4251 = vst [vmem:[%s4217] ss:$9 sm:$0xff] %v4130
      %4252 = vst [vmem:[%s4219] ss:$9 sm:$0xff] %v4131
      %4253 = vst [vmem:[%s4221] ss:$9 sm:$0xff] %v4133
      %4254 = vst [vmem:[%s4223] ss:$9 sm:$0xff] %v4134
      %4255 = vst [vmem:[%s4225] ss:$9 sm:$0xff] %v4135
      %4256 = vst [vmem:[%s4227] ss:$9 sm:$0xff] %v4138
      %4257 = vst [vmem:[%s4229] ss:$9 sm:$0xff] %v4139
      %v4258 = vld [vmem:[#allocation1] sm:$0xff]
      %4259 = vst [vmem:[#allocation1] ss:$9 sm:$0xff] %v4140
      %4260 = vst [vmem:[%s4217] ss:$9 sm:$0xff] %v4141
      %4261 = vst [vmem:[%s4219] ss:$9 sm:$0xff] %v4142
      %4262 = vst [vmem:[%s4221] ss:$9 sm:$0xff] %v4143
      %4263 = vst [vmem:[%s4223] ss:$9 sm:$0xff] %v4146
      %4264 = vst [vmem:[%s4225] ss:$9 sm:$0xff] %v4147
      %4265 = vst [vmem:[%s4227] ss:$9 sm:$0xff] %v4148
      %4266 = vst [vmem:[%s4229] ss:$9 sm:$0xff] %v4149
      %v4267 = vld [vmem:[#allocation1] sm:$0xff]
      %4268 = vst [vmem:[#allocation1] ss:$9 sm:$0xff] %v4150
      %4269 = vst [vmem:[%s4217] ss:$9 sm:$0xff] %v4151
      %4270 = vst [vmem:[%s4219] ss:$9 sm:$0xff] %v4152
      %4271 = vst [vmem:[%s4221] ss:$9 sm:$0xff] %v4154
      %4272 = vst [vmem:[%s4223] ss:$9 sm:$0xff] %v4155
      %4273 = vst [vmem:[%s4225] ss:$9 sm:$0xff] %v4157
      %4274 = vst [vmem:[%s4227] ss:$9 sm:$0xff] %v4158
      %4275 = vst [vmem:[%s4229] ss:$9 sm:$0xff] %v4159
      %v4276 = vld [vmem:[#allocation1] sm:$0xff]
      %4277 = vst [vmem:[#allocation1] ss:$9 sm:$0xff] %v4162
      %4278 = vst [vmem:[%s4217] ss:$9 sm:$0xff] %v4163
      %4279 = vst [vmem:[%s4219] ss:$9 sm:$0xff] %v4164
      %4280 = vst [vmem:[%s4221] ss:$9 sm:$0xff] %v4165
      %4281 = vst [vmem:[%s4223] ss:$9 sm:$0xff] %v4166
      %4282 = vst [vmem:[%s4225] ss:$9 sm:$0xff] %v4167
      %4283 = vst [vmem:[%s4227] ss:$9 sm:$0xff] %v4170
      %4284 = vst [vmem:[%s4229] ss:$9 sm:$0xff] %v4171
      %v4285 = vld [vmem:[#allocation1] sm:$0xff]
      %4286 = vst [vmem:[#allocation1] ss:$9 sm:$0xff] %v4172
      %4287 = vst [vmem:[%s4217] ss:$9 sm:$0xff] %v4173
      %4288 = vst [vmem:[%s4219] ss:$9 sm:$0xff] %v4174
      %4289 = vst [vmem:[%s4221] ss:$9 sm:$0xff] %v4175
      %4290 = vst [vmem:[%s4223] ss:$9 sm:$0xff] %v4176
      %4291 = vst [vmem:[%s4225] ss:$9 sm:$0xff] %v4178
      %4292 = vst [vmem:[%s4227] ss:$9 sm:$0xff] %v4179
      %4293 = vst [vmem:[%s4229] ss:$9 sm:$0xff] %v4181
      %v4294 = vld [vmem:[#allocation1] sm:$0xff]
      %4295 = vst [vmem:[#allocation1] ss:$9 sm:$0xff] %v4182
      %4296 = vst [vmem:[%s4217] ss:$9 sm:$0xff] %v4183
      %4297 = vst [vmem:[%s4219] ss:$9 sm:$0xff] %v4186
      %4298 = vst [vmem:[%s4221] ss:$9 sm:$0xff] %v4187
      %4299 = vst [vmem:[%s4223] ss:$9 sm:$0xff] %v4188
      %4300 = vst [vmem:[%s4225] ss:$9 sm:$0xff] %v4189
      %4301 = vst [vmem:[%s4227] ss:$9 sm:$0xff] %v4190
      %4302 = vst [vmem:[%s4229] ss:$9 sm:$0xff] %v4191
      %v4303 = vld [vmem:[#allocation1] sm:$0xff]
      %4304 = vst [vmem:[#allocation1] ss:$9 sm:$0xff] %v4194
      %4305 = vst [vmem:[%s4217] ss:$9 sm:$0xff] %v4195
      %4306 = vst [vmem:[%s4219] ss:$9 sm:$0xff] %v4196
      %4307 = vst [vmem:[%s4221] ss:$9 sm:$0xff] %v4197
      %4308 = vst [vmem:[%s4223] ss:$9 sm:$0xff] %v4198
      %4309 = vst [vmem:[%s4225] ss:$9 sm:$0xff] %v4199
      %4310 = vst [vmem:[%s4227] ss:$9 sm:$0xff] %v4200
      %4311 = vst [vmem:[%s4229] ss:$9 sm:$0xff] %v4202
      %v4312 = vld [vmem:[#allocation1] sm:$0xff]
      %4313 = vst [vmem:[#allocation1] ss:$9 sm:$0xff] %v4203
      %4314 = vst [vmem:[%s4217] ss:$9 sm:$0xff] %v4205
      %4315 = vst [vmem:[%s4219] ss:$9 sm:$0xff] %v4206
      %4316 = vst [vmem:[%s4221] ss:$9 sm:$0xff] %v4207
      %4317 = vst [vmem:[%s4223] ss:$9 sm:$0xff] %v4210
      %4318 = vst [vmem:[%s4225] ss:$9 sm:$0xff] %v4211
      %4319 = vst [vmem:[%s4227] ss:$9 sm:$0xff] %v4212
      %4320 = vst [vmem:[%s4229] ss:$9 sm:$0xff] %v4213
      %v4321 = vld [vmem:[#allocation1] sm:$0xff]
      %4322 = vst [vmem:[#allocation1] ss:$9 sm:$0xff] %v4214
      %4323 = vst [vmem:[%s4217] ss:$9 sm:$0xff] %v4215
      %v4324 = vld [vmem:[#allocation1] sm:$0xff]
      %v4325 = vsel %vm1943, %v4231, 0
      %v4327 = vsel %vm1943, %v4240, 0
      %v4329 = vsel %vm1943, %v4249, 0
      %v4331 = vsel %vm1943, %v4258, 0
      %v4333 = vsel %vm1943, %v4267, 0
      %v4335 = vsel %vm1943, %v4276, 0
      %v4337 = vsel %vm1943, %v4285, 0
      %v4339 = vsel %vm1943, %v4294, 0
      %v4341 = vsel %vm1943, %v4303, 0
      %v4343 = vsel %vm1943, %v4312, 0
      %v4345 = vsel %vm1943, %v4321, 0
      %v4347 = vsel %vm1943, %v4324, 0
      %v4350 = vsel %vm522, %v627, 0
      %4352 = vmatpush.bf16.msra.mxu0 0
      %4353 = vmatpush.bf16.msra.mxu0 0
      %4354 = vmatpush.bf16.msra.mxu0 0
      %4355 = vmatpush.bf16.msra.mxu0 0
      %4356 = vmatpush.bf16.msra.mxu0 0
      %4357 = vmatpush.bf16.msra.mxu0 0
      %4358 = vmatpush.bf16.msra.mxu0 0
      %4359 = vmatpush.bf16.msra.mxu0 %v4350
      %4360 = vmatmul.bf16.gmra.mxu0 %v4325
      %v4361 = vpop.f32.mrf.mxu0
      %v4362 = vadd.f32 0.0, %v4361
      %v4363 = vpop.f32.mrf.mxu0
      %v4364 = vadd.f32 0.0, %v4363
      %4365 = vmatmul.bf16.gmra.mxu0 %v4327
      %v4366 = vpop.f32.mrf.mxu0
      %v4367 = vadd.f32 0.0, %v4366
      %v4368 = vpop.f32.mrf.mxu0
      %v4369 = vadd.f32 0.0, %v4368
      %4370 = vmatmul.bf16.gmra.mxu0 %v4329
      %v4371 = vpop.f32.mrf.mxu0
      %v4372 = vadd.f32 0.0, %v4371
      %v4373 = vpop.f32.mrf.mxu0
      %v4374 = vadd.f32 0.0, %v4373
      %4375 = vmatmul.bf16.gmra.mxu0 %v4331
      %v4376 = vpop.f32.mrf.mxu0
      %v4377 = vadd.f32 0.0, %v4376
      %v4378 = vpop.f32.mrf.mxu0
      %v4379 = vadd.f32 0.0, %v4378
      %4380 = vmatmul.bf16.gmra.mxu0 %v4333
      %v4381 = vpop.f32.mrf.mxu0
      %v4382 = vadd.f32 0.0, %v4381
      %v4383 = vpop.f32.mrf.mxu0
      %v4384 = vadd.f32 0.0, %v4383
      %4385 = vmatmul.bf16.gmra.mxu0 %v4335
      %v4386 = vpop.f32.mrf.mxu0
      %v4387 = vadd.f32 0.0, %v4386
      %v4388 = vpop.f32.mrf.mxu0
      %v4389 = vadd.f32 0.0, %v4388
      %4390 = vmatmul.bf16.gmra.mxu0 %v4337
      %v4391 = vpop.f32.mrf.mxu0
      %v4392 = vadd.f32 0.0, %v4391
      %v4393 = vpop.f32.mrf.mxu0
      %v4394 = vadd.f32 0.0, %v4393
      %4395 = vmatmul.bf16.gmra.mxu0 %v4339
      %v4396 = vpop.f32.mrf.mxu0
      %v4397 = vadd.f32 0.0, %v4396
      %v4398 = vpop.f32.mrf.mxu0
      %v4399 = vadd.f32 0.0, %v4398
      %4400 = vmatmul.bf16.gmra.mxu0 %v4341
      %v4401 = vpop.f32.mrf.mxu0
      %v4402 = vadd.f32 0.0, %v4401
      %v4403 = vpop.f32.mrf.mxu0
      %v4404 = vadd.f32 0.0, %v4403
      %4405 = vmatmul.bf16.gmra.mxu0 %v4343
      %v4406 = vpop.f32.mrf.mxu0
      %v4407 = vadd.f32 0.0, %v4406
      %v4408 = vpop.f32.mrf.mxu0
      %v4409 = vadd.f32 0.0, %v4408
      %4410 = vmatmul.bf16.gmra.mxu0 %v4345
      %v4411 = vpop.f32.mrf.mxu0
      %v4412 = vadd.f32 0.0, %v4411
      %v4413 = vpop.f32.mrf.mxu0
      %v4414 = vadd.f32 0.0, %v4413
      %4415 = vmatmul.bf16.gmra.mxu0 %v4347
      %v4416 = vpop.f32.mrf.mxu0
      %v4417 = vadd.f32 0.0, %v4416
      %v4418 = vpop.f32.mrf.mxu0
      %4419 = vdwg.mxu0
      %v4420 = vadd.f32 %v4066, %v4362
      %v4421 = vadd.f32 %v4067, %v4364
      %v4422 = vadd.f32 %v4068, %v4367
      %v4423 = vadd.f32 %v4069, %v4369
      %v4424 = vadd.f32 %v4070, %v4372
      %v4425 = vadd.f32 %v4071, %v4374
      %v4426 = vadd.f32 %v4072, %v4377
      %v4427 = vadd.f32 %v4073, %v4379
      %v4428 = vadd.f32 %v4074, %v4382
      %v4429 = vadd.f32 %v4075, %v4384
      %v4430 = vadd.f32 %v4076, %v4387
      %v4431 = vadd.f32 %v4077, %v4389
      %v4432 = vadd.f32 %v4078, %v4392
      %v4433 = vadd.f32 %v4079, %v4394
      %v4434 = vadd.f32 %v4080, %v4397
      %v4435 = vadd.f32 %v4081, %v4399
      %v4436 = vadd.f32 %v4082, %v4402
      %v4437 = vadd.f32 %v4083, %v4404
      %v4438 = vadd.f32 %v4084, %v4407
      %v4439 = vadd.f32 %v4085, %v4409
      %v4440 = vadd.f32 %v4086, %v4412
      %v4441 = vadd.f32 %v4087, %v4414
      %v4442 = vadd.f32 %v4088, %v4417
      %v4444 = vperm.slane %v628, 0
      %v4446 = vadd.f32 %v4420, %v4444
      %v4447 = vadd.f32 %v4421, %v4444
      %v4448 = vadd.f32 %v4422, %v4444
      %v4449 = vadd.f32 %v4423, %v4444
      %v4450 = vadd.f32 %v4424, %v4444
      %v4451 = vadd.f32 %v4425, %v4444
      %v4452 = vadd.f32 %v4426, %v4444
      %v4453 = vadd.f32 %v4427, %v4444
      %v4454 = vadd.f32 %v4428, %v4444
      %v4455 = vadd.f32 %v4429, %v4444
      %v4456 = vadd.f32 %v4430, %v4444
      %v4457 = vadd.f32 %v4431, %v4444
      %v4458 = vadd.f32 %v4432, %v4444
      %v4459 = vadd.f32 %v4433, %v4444
      %v4460 = vadd.f32 %v4434, %v4444
      %v4461 = vadd.f32 %v4435, %v4444
      %v4462 = vadd.f32 %v4436, %v4444
      %v4463 = vadd.f32 %v4437, %v4444
      %v4464 = vadd.f32 %v4438, %v4444
      %v4465 = vadd.f32 %v4439, %v4444
      %v4466 = vadd.f32 %v4440, %v4444
      %v4467 = vadd.f32 %v4441, %v4444
      %v4468 = vadd.f32 %v4442, %v4444
      %v4469 = vxor.u32 %v4446, 2147483648
      %v4470 = vxor.u32 %v4447, 2147483648
      %v4471 = vxor.u32 %v4448, 2147483648
      %v4472 = vxor.u32 %v4449, 2147483648
      %v4473 = vxor.u32 %v4450, 2147483648
      %v4474 = vxor.u32 %v4451, 2147483648
      %v4475 = vxor.u32 %v4452, 2147483648
      %v4476 = vxor.u32 %v4453, 2147483648
      %v4477 = vxor.u32 %v4454, 2147483648
      %v4478 = vxor.u32 %v4455, 2147483648
      %v4479 = vxor.u32 %v4456, 2147483648
      %v4480 = vxor.u32 %v4457, 2147483648
      %v4481 = vxor.u32 %v4458, 2147483648
      %v4482 = vxor.u32 %v4459, 2147483648
      %v4483 = vxor.u32 %v4460, 2147483648
      %v4484 = vxor.u32 %v4461, 2147483648
      %v4485 = vxor.u32 %v4462, 2147483648
      %v4486 = vxor.u32 %v4463, 2147483648
      %v4487 = vxor.u32 %v4464, 2147483648
      %v4488 = vxor.u32 %v4465, 2147483648
      %v4489 = vxor.u32 %v4466, 2147483648
      %v4490 = vxor.u32 %v4467, 2147483648
      %v4491 = vxor.u32 %v4468, 2147483648
      %v4492 = vmul.f32 %v4469, 1.442695
      %v4493 = vpow.pop %v4492
      %v4494 = vmul.f32 %v4470, 1.442695
      %v4495 = vpow.pop %v4494
      %v4496 = vmul.f32 %v4471, 1.442695
      %v4497 = vpow.pop %v4496
      %v4498 = vmul.f32 %v4472, 1.442695
      %v4499 = vpow.pop %v4498
      %v4500 = vmul.f32 %v4473, 1.442695
      %v4501 = vpow.pop %v4500
      %v4502 = vmul.f32 %v4474, 1.442695
      %v4503 = vpow.pop %v4502
      %v4504 = vmul.f32 %v4475, 1.442695
      %v4505 = vpow.pop %v4504
      %v4506 = vmul.f32 %v4476, 1.442695
      %v4507 = vpow.pop %v4506
      %v4508 = vmul.f32 %v4477, 1.442695
      %v4509 = vpow.pop %v4508
      %v4510 = vmul.f32 %v4478, 1.442695
      %v4511 = vpow.pop %v4510
      %v4512 = vmul.f32 %v4479, 1.442695
      %v4513 = vpow.pop %v4512
      %v4514 = vmul.f32 %v4480, 1.442695
      %v4515 = vpow.pop %v4514
      %v4516 = vmul.f32 %v4481, 1.442695
      %v4517 = vpow.pop %v4516
      %v4518 = vmul.f32 %v4482, 1.442695
      %v4519 = vpow.pop %v4518
      %v4520 = vmul.f32 %v4483, 1.442695
      %v4521 = vpow.pop %v4520
      %v4522 = vmul.f32 %v4484, 1.442695
      %v4523 = vpow.pop %v4522
      %v4524 = vmul.f32 %v4485, 1.442695
      %v4525 = vpow.pop %v4524
      %v4526 = vmul.f32 %v4486, 1.442695
      %v4527 = vpow.pop %v4526
      %v4528 = vmul.f32 %v4487, 1.442695
      %v4529 = vpow.pop %v4528
      %v4530 = vmul.f32 %v4488, 1.442695
      %v4531 = vpow.pop %v4530
      %v4532 = vmul.f32 %v4489, 1.442695
      %v4533 = vpow.pop %v4532
      %v4534 = vmul.f32 %v4490, 1.442695
      %v4535 = vpow.pop %v4534
      %v4536 = vmul.f32 %v4491, 1.442695
      %v4537 = vpow.pop %v4536
      %v4538 = vadd.f32 %v4493, 1.0
      %v4539 = vadd.f32 %v4495, 1.0
      %v4540 = vadd.f32 %v4497, 1.0
      %v4541 = vadd.f32 %v4499, 1.0
      %v4542 = vadd.f32 %v4501, 1.0
      %v4543 = vadd.f32 %v4503, 1.0
      %v4544 = vadd.f32 %v4505, 1.0
      %v4545 = vadd.f32 %v4507, 1.0
      %v4546 = vadd.f32 %v4509, 1.0
      %v4547 = vadd.f32 %v4511, 1.0
      %v4548 = vadd.f32 %v4513, 1.0
      %v4549 = vadd.f32 %v4515, 1.0
      %v4550 = vadd.f32 %v4517, 1.0
      %v4551 = vadd.f32 %v4519, 1.0
      %v4552 = vadd.f32 %v4521, 1.0
      %v4553 = vadd.f32 %v4523, 1.0
      %v4554 = vadd.f32 %v4525, 1.0
      %v4555 = vadd.f32 %v4527, 1.0
      %v4556 = vadd.f32 %v4529, 1.0
      %v4557 = vadd.f32 %v4531, 1.0
      %v4558 = vadd.f32 %v4533, 1.0
      %v4559 = vadd.f32 %v4535, 1.0
      %v4560 = vadd.f32 %v4537, 1.0
      %v4561 = vrcp.pop %v4538
      %v4562 = vmul.f32 %v4538, %v4561
      %v4563 = vsub.f32 1.0, %v4562
      %v4564 = vmul.f32 %v4561, %v4563
      %v4565 = vadd.f32 %v4561, %v4564
      %vm4566 = vweird.f32 %v4538
      %vm4567 = vweird.f32 %v4561
      %vm4568 = vmor %vm4566, %vm4567
      %v4569 = vsel %vm4568, %v4561, %v4565
      %v4570 = vand.u32 2147483647, %v4538
      %vm4571 = vcmp.eq.f32.partialorder %v4570, 8.507059e+37
      %v4572 = vand.u32 %v4538, 2147483648
      %v4573 = vor.u32 1.1754944e-38, %v4572
      %v4574 = vsel %vm4571, %v4573, %v4569
      %v4575 = vmul.f32 1.0, %v4574
      %v4576 = vrcp.pop %v4539
      %v4577 = vmul.f32 %v4539, %v4576
      %v4578 = vsub.f32 1.0, %v4577
      %v4579 = vmul.f32 %v4576, %v4578
      %v4580 = vadd.f32 %v4576, %v4579
      %vm4581 = vweird.f32 %v4539
      %vm4582 = vweird.f32 %v4576
      %vm4583 = vmor %vm4581, %vm4582
      %v4584 = vsel %vm4583, %v4576, %v4580
      %v4585 = vand.u32 2147483647, %v4539
      %vm4586 = vcmp.eq.f32.partialorder %v4585, 8.507059e+37
      %v4587 = vand.u32 %v4539, 2147483648
      %v4588 = vor.u32 1.1754944e-38, %v4587
      %v4589 = vsel %vm4586, %v4588, %v4584
      %v4590 = vmul.f32 1.0, %v4589
      %v4591 = vrcp.pop %v4540
      %v4592 = vmul.f32 %v4540, %v4591
      %v4593 = vsub.f32 1.0, %v4592
      %v4594 = vmul.f32 %v4591, %v4593
      %v4595 = vadd.f32 %v4591, %v4594
      %vm4596 = vweird.f32 %v4540
      %vm4597 = vweird.f32 %v4591
      %vm4598 = vmor %vm4596, %vm4597
      %v4599 = vsel %vm4598, %v4591, %v4595
      %v4600 = vand.u32 2147483647, %v4540
      %vm4601 = vcmp.eq.f32.partialorder %v4600, 8.507059e+37
      %v4602 = vand.u32 %v4540, 2147483648
      %v4603 = vor.u32 1.1754944e-38, %v4602
      %v4604 = vsel %vm4601, %v4603, %v4599
      %v4605 = vmul.f32 1.0, %v4604
      %v4606 = vrcp.pop %v4541
      %v4607 = vmul.f32 %v4541, %v4606
      %v4608 = vsub.f32 1.0, %v4607
      %v4609 = vmul.f32 %v4606, %v4608
      %v4610 = vadd.f32 %v4606, %v4609
      %vm4611 = vweird.f32 %v4541
      %vm4612 = vweird.f32 %v4606
      %vm4613 = vmor %vm4611, %vm4612
      %v4614 = vsel %vm4613, %v4606, %v4610
      %v4615 = vand.u32 2147483647, %v4541
      %vm4616 = vcmp.eq.f32.partialorder %v4615, 8.507059e+37
      %v4617 = vand.u32 %v4541, 2147483648
      %v4618 = vor.u32 1.1754944e-38, %v4617
      %v4619 = vsel %vm4616, %v4618, %v4614
      %v4620 = vmul.f32 1.0, %v4619
      %v4621 = vrcp.pop %v4542
      %v4622 = vmul.f32 %v4542, %v4621
      %v4623 = vsub.f32 1.0, %v4622
      %v4624 = vmul.f32 %v4621, %v4623
      %v4625 = vadd.f32 %v4621, %v4624
      %vm4626 = vweird.f32 %v4542
      %vm4627 = vweird.f32 %v4621
      %vm4628 = vmor %vm4626, %vm4627
      %v4629 = vsel %vm4628, %v4621, %v4625
      %v4630 = vand.u32 2147483647, %v4542
      %vm4631 = vcmp.eq.f32.partialorder %v4630, 8.507059e+37
      %v4632 = vand.u32 %v4542, 2147483648
      %v4633 = vor.u32 1.1754944e-38, %v4632
      %v4634 = vsel %vm4631, %v4633, %v4629
      %v4635 = vmul.f32 1.0, %v4634
      %v4636 = vrcp.pop %v4543
      %v4637 = vmul.f32 %v4543, %v4636
      %v4638 = vsub.f32 1.0, %v4637
      %v4639 = vmul.f32 %v4636, %v4638
      %v4640 = vadd.f32 %v4636, %v4639
      %vm4641 = vweird.f32 %v4543
      %vm4642 = vweird.f32 %v4636
      %vm4643 = vmor %vm4641, %vm4642
      %v4644 = vsel %vm4643, %v4636, %v4640
      %v4645 = vand.u32 2147483647, %v4543
      %vm4646 = vcmp.eq.f32.partialorder %v4645, 8.507059e+37
      %v4647 = vand.u32 %v4543, 2147483648
      %v4648 = vor.u32 1.1754944e-38, %v4647
      %v4649 = vsel %vm4646, %v4648, %v4644
      %v4650 = vmul.f32 1.0, %v4649
      %v4651 = vrcp.pop %v4544
      %v4652 = vmul.f32 %v4544, %v4651
      %v4653 = vsub.f32 1.0, %v4652
      %v4654 = vmul.f32 %v4651, %v4653
      %v4655 = vadd.f32 %v4651, %v4654
      %vm4656 = vweird.f32 %v4544
      %vm4657 = vweird.f32 %v4651
      %vm4658 = vmor %vm4656, %vm4657
      %v4659 = vsel %vm4658, %v4651, %v4655
      %v4660 = vand.u32 2147483647, %v4544
      %vm4661 = vcmp.eq.f32.partialorder %v4660, 8.507059e+37
      %v4662 = vand.u32 %v4544, 2147483648
      %v4663 = vor.u32 1.1754944e-38, %v4662
      %v4664 = vsel %vm4661, %v4663, %v4659
      %v4665 = vmul.f32 1.0, %v4664
      %v4666 = vrcp.pop %v4545
      %v4667 = vmul.f32 %v4545, %v4666
      %v4668 = vsub.f32 1.0, %v4667
      %v4669 = vmul.f32 %v4666, %v4668
      %v4670 = vadd.f32 %v4666, %v4669
      %vm4671 = vweird.f32 %v4545
      %vm4672 = vweird.f32 %v4666
      %vm4673 = vmor %vm4671, %vm4672
      %v4674 = vsel %vm4673, %v4666, %v4670
      %v4675 = vand.u32 2147483647, %v4545
      %vm4676 = vcmp.eq.f32.partialorder %v4675, 8.507059e+37
      %v4677 = vand.u32 %v4545, 2147483648
      %v4678 = vor.u32 1.1754944e-38, %v4677
      %v4679 = vsel %vm4676, %v4678, %v4674
      %v4680 = vmul.f32 1.0, %v4679
      %v4681 = vrcp.pop %v4546
      %v4682 = vmul.f32 %v4546, %v4681
      %v4683 = vsub.f32 1.0, %v4682
      %v4684 = vmul.f32 %v4681, %v4683
      %v4685 = vadd.f32 %v4681, %v4684
      %vm4686 = vweird.f32 %v4546
      %vm4687 = vweird.f32 %v4681
      %vm4688 = vmor %vm4686, %vm4687
      %v4689 = vsel %vm4688, %v4681, %v4685
      %v4690 = vand.u32 2147483647, %v4546
      %vm4691 = vcmp.eq.f32.partialorder %v4690, 8.507059e+37
      %v4692 = vand.u32 %v4546, 2147483648
      %v4693 = vor.u32 1.1754944e-38, %v4692
      %v4694 = vsel %vm4691, %v4693, %v4689
      %v4695 = vmul.f32 1.0, %v4694
      %v4696 = vrcp.pop %v4547
      %v4697 = vmul.f32 %v4547, %v4696
      %v4698 = vsub.f32 1.0, %v4697
      %v4699 = vmul.f32 %v4696, %v4698
      %v4700 = vadd.f32 %v4696, %v4699
      %vm4701 = vweird.f32 %v4547
      %vm4702 = vweird.f32 %v4696
      %vm4703 = vmor %vm4701, %vm4702
      %v4704 = vsel %vm4703, %v4696, %v4700
      %v4705 = vand.u32 2147483647, %v4547
      %vm4706 = vcmp.eq.f32.partialorder %v4705, 8.507059e+37
      %v4707 = vand.u32 %v4547, 2147483648
      %v4708 = vor.u32 1.1754944e-38, %v4707
      %v4709 = vsel %vm4706, %v4708, %v4704
      %v4710 = vmul.f32 1.0, %v4709
      %v4711 = vrcp.pop %v4548
      %v4712 = vmul.f32 %v4548, %v4711
      %v4713 = vsub.f32 1.0, %v4712
      %v4714 = vmul.f32 %v4711, %v4713
      %v4715 = vadd.f32 %v4711, %v4714
      %vm4716 = vweird.f32 %v4548
      %vm4717 = vweird.f32 %v4711
      %vm4718 = vmor %vm4716, %vm4717
      %v4719 = vsel %vm4718, %v4711, %v4715
      %v4720 = vand.u32 2147483647, %v4548
      %vm4721 = vcmp.eq.f32.partialorder %v4720, 8.507059e+37
      %v4722 = vand.u32 %v4548, 2147483648
      %v4723 = vor.u32 1.1754944e-38, %v4722
      %v4724 = vsel %vm4721, %v4723, %v4719
      %v4725 = vmul.f32 1.0, %v4724
      %v4726 = vrcp.pop %v4549
      %v4727 = vmul.f32 %v4549, %v4726
      %v4728 = vsub.f32 1.0, %v4727
      %v4729 = vmul.f32 %v4726, %v4728
      %v4730 = vadd.f32 %v4726, %v4729
      %vm4731 = vweird.f32 %v4549
      %vm4732 = vweird.f32 %v4726
      %vm4733 = vmor %vm4731, %vm4732
      %v4734 = vsel %vm4733, %v4726, %v4730
      %v4735 = vand.u32 2147483647, %v4549
      %vm4736 = vcmp.eq.f32.partialorder %v4735, 8.507059e+37
      %v4737 = vand.u32 %v4549, 2147483648
      %v4738 = vor.u32 1.1754944e-38, %v4737
      %v4739 = vsel %vm4736, %v4738, %v4734
      %v4740 = vmul.f32 1.0, %v4739
      %v4741 = vrcp.pop %v4550
      %v4742 = vmul.f32 %v4550, %v4741
      %v4743 = vsub.f32 1.0, %v4742
      %v4744 = vmul.f32 %v4741, %v4743
      %v4745 = vadd.f32 %v4741, %v4744
      %vm4746 = vweird.f32 %v4550
      %vm4747 = vweird.f32 %v4741
      %vm4748 = vmor %vm4746, %vm4747
      %v4749 = vsel %vm4748, %v4741, %v4745
      %v4750 = vand.u32 2147483647, %v4550
      %vm4751 = vcmp.eq.f32.partialorder %v4750, 8.507059e+37
      %v4752 = vand.u32 %v4550, 2147483648
      %v4753 = vor.u32 1.1754944e-38, %v4752
      %v4754 = vsel %vm4751, %v4753, %v4749
      %v4755 = vmul.f32 1.0, %v4754
      %v4756 = vrcp.pop %v4551
      %v4757 = vmul.f32 %v4551, %v4756
      %v4758 = vsub.f32 1.0, %v4757
      %v4759 = vmul.f32 %v4756, %v4758
      %v4760 = vadd.f32 %v4756, %v4759
      %vm4761 = vweird.f32 %v4551
      %vm4762 = vweird.f32 %v4756
      %vm4763 = vmor %vm4761, %vm4762
      %v4764 = vsel %vm4763, %v4756, %v4760
      %v4765 = vand.u32 2147483647, %v4551
      %vm4766 = vcmp.eq.f32.partialorder %v4765, 8.507059e+37
      %v4767 = vand.u32 %v4551, 2147483648
      %v4768 = vor.u32 1.1754944e-38, %v4767
      %v4769 = vsel %vm4766, %v4768, %v4764
      %v4770 = vmul.f32 1.0, %v4769
      %v4771 = vrcp.pop %v4552
      %v4772 = vmul.f32 %v4552, %v4771
      %v4773 = vsub.f32 1.0, %v4772
      %v4774 = vmul.f32 %v4771, %v4773
      %v4775 = vadd.f32 %v4771, %v4774
      %vm4776 = vweird.f32 %v4552
      %vm4777 = vweird.f32 %v4771
      %vm4778 = vmor %vm4776, %vm4777
      %v4779 = vsel %vm4778, %v4771, %v4775
      %v4780 = vand.u32 2147483647, %v4552
      %vm4781 = vcmp.eq.f32.partialorder %v4780, 8.507059e+37
      %v4782 = vand.u32 %v4552, 2147483648
      %v4783 = vor.u32 1.1754944e-38, %v4782
      %v4784 = vsel %vm4781, %v4783, %v4779
      %v4785 = vmul.f32 1.0, %v4784
      %v4786 = vrcp.pop %v4553
      %v4787 = vmul.f32 %v4553, %v4786
      %v4788 = vsub.f32 1.0, %v4787
      %v4789 = vmul.f32 %v4786, %v4788
      %v4790 = vadd.f32 %v4786, %v4789
      %vm4791 = vweird.f32 %v4553
      %vm4792 = vweird.f32 %v4786
      %vm4793 = vmor %vm4791, %vm4792
      %v4794 = vsel %vm4793, %v4786, %v4790
      %v4795 = vand.u32 2147483647, %v4553
      %vm4796 = vcmp.eq.f32.partialorder %v4795, 8.507059e+37
      %v4797 = vand.u32 %v4553, 2147483648
      %v4798 = vor.u32 1.1754944e-38, %v4797
      %v4799 = vsel %vm4796, %v4798, %v4794
      %v4800 = vmul.f32 1.0, %v4799
      %v4801 = vrcp.pop %v4554
      %v4802 = vmul.f32 %v4554, %v4801
      %v4803 = vsub.f32 1.0, %v4802
      %v4804 = vmul.f32 %v4801, %v4803
      %v4805 = vadd.f32 %v4801, %v4804
      %vm4806 = vweird.f32 %v4554
      %vm4807 = vweird.f32 %v4801
      %vm4808 = vmor %vm4806, %vm4807
      %v4809 = vsel %vm4808, %v4801, %v4805
      %v4810 = vand.u32 2147483647, %v4554
      %vm4811 = vcmp.eq.f32.partialorder %v4810, 8.507059e+37
      %v4812 = vand.u32 %v4554, 2147483648
      %v4813 = vor.u32 1.1754944e-38, %v4812
      %v4814 = vsel %vm4811, %v4813, %v4809
      %v4815 = vmul.f32 1.0, %v4814
      %v4816 = vrcp.pop %v4555
      %v4817 = vmul.f32 %v4555, %v4816
      %v4818 = vsub.f32 1.0, %v4817
      %v4819 = vmul.f32 %v4816, %v4818
      %v4820 = vadd.f32 %v4816, %v4819
      %vm4821 = vweird.f32 %v4555
      %vm4822 = vweird.f32 %v4816
      %vm4823 = vmor %vm4821, %vm4822
      %v4824 = vsel %vm4823, %v4816, %v4820
      %v4825 = vand.u32 2147483647, %v4555
      %vm4826 = vcmp.eq.f32.partialorder %v4825, 8.507059e+37
      %v4827 = vand.u32 %v4555, 2147483648
      %v4828 = vor.u32 1.1754944e-38, %v4827
      %v4829 = vsel %vm4826, %v4828, %v4824
      %v4830 = vmul.f32 1.0, %v4829
      %v4831 = vrcp.pop %v4556
      %v4832 = vmul.f32 %v4556, %v4831
      %v4833 = vsub.f32 1.0, %v4832
      %v4834 = vmul.f32 %v4831, %v4833
      %v4835 = vadd.f32 %v4831, %v4834
      %vm4836 = vweird.f32 %v4556
      %vm4837 = vweird.f32 %v4831
      %vm4838 = vmor %vm4836, %vm4837
      %v4839 = vsel %vm4838, %v4831, %v4835
      %v4840 = vand.u32 2147483647, %v4556
      %vm4841 = vcmp.eq.f32.partialorder %v4840, 8.507059e+37
      %v4842 = vand.u32 %v4556, 2147483648
      %v4843 = vor.u32 1.1754944e-38, %v4842
      %v4844 = vsel %vm4841, %v4843, %v4839
      %v4845 = vmul.f32 1.0, %v4844
      %v4846 = vrcp.pop %v4557
      %v4847 = vmul.f32 %v4557, %v4846
      %v4848 = vsub.f32 1.0, %v4847
      %v4849 = vmul.f32 %v4846, %v4848
      %v4850 = vadd.f32 %v4846, %v4849
      %vm4851 = vweird.f32 %v4557
      %vm4852 = vweird.f32 %v4846
      %vm4853 = vmor %vm4851, %vm4852
      %v4854 = vsel %vm4853, %v4846, %v4850
      %v4855 = vand.u32 2147483647, %v4557
      %vm4856 = vcmp.eq.f32.partialorder %v4855, 8.507059e+37
      %v4857 = vand.u32 %v4557, 2147483648
      %v4858 = vor.u32 1.1754944e-38, %v4857
      %v4859 = vsel %vm4856, %v4858, %v4854
      %v4860 = vmul.f32 1.0, %v4859
      %v4861 = vrcp.pop %v4558
      %v4862 = vmul.f32 %v4558, %v4861
      %v4863 = vsub.f32 1.0, %v4862
      %v4864 = vmul.f32 %v4861, %v4863
      %v4865 = vadd.f32 %v4861, %v4864
      %vm4866 = vweird.f32 %v4558
      %vm4867 = vweird.f32 %v4861
      %vm4868 = vmor %vm4866, %vm4867
      %v4869 = vsel %vm4868, %v4861, %v4865
      %v4870 = vand.u32 2147483647, %v4558
      %vm4871 = vcmp.eq.f32.partialorder %v4870, 8.507059e+37
      %v4872 = vand.u32 %v4558, 2147483648
      %v4873 = vor.u32 1.1754944e-38, %v4872
      %v4874 = vsel %vm4871, %v4873, %v4869
      %v4875 = vmul.f32 1.0, %v4874
      %v4876 = vrcp.pop %v4559
      %v4877 = vmul.f32 %v4559, %v4876
      %v4878 = vsub.f32 1.0, %v4877
      %v4879 = vmul.f32 %v4876, %v4878
      %v4880 = vadd.f32 %v4876, %v4879
      %vm4881 = vweird.f32 %v4559
      %vm4882 = vweird.f32 %v4876
      %vm4883 = vmor %vm4881, %vm4882
      %v4884 = vsel %vm4883, %v4876, %v4880
      %v4885 = vand.u32 2147483647, %v4559
      %vm4886 = vcmp.eq.f32.partialorder %v4885, 8.507059e+37
      %v4887 = vand.u32 %v4559, 2147483648
      %v4888 = vor.u32 1.1754944e-38, %v4887
      %v4889 = vsel %vm4886, %v4888, %v4884
      %v4890 = vmul.f32 1.0, %v4889
      %v4891 = vrcp.pop %v4560
      %v4892 = vmul.f32 %v4560, %v4891
      %v4893 = vsub.f32 1.0, %v4892
      %v4894 = vmul.f32 %v4891, %v4893
      %v4895 = vadd.f32 %v4891, %v4894
      %vm4896 = vweird.f32 %v4560
      %vm4897 = vweird.f32 %v4891
      %vm4898 = vmor %vm4896, %vm4897
      %v4899 = vsel %vm4898, %v4891, %v4895
      %v4900 = vand.u32 2147483647, %v4560
      %vm4901 = vcmp.eq.f32.partialorder %v4900, 8.507059e+37
      %v4902 = vand.u32 %v4560, 2147483648
      %v4903 = vor.u32 1.1754944e-38, %v4902
      %v4904 = vsel %vm4901, %v4903, %v4899
      %v4905 = vmul.f32 1.0, %v4904
      %v4906 = vmul.f32 %v4446, %v4575
      %v4907 = vmul.f32 %v4447, %v4590
      %v4908 = vmul.f32 %v4448, %v4605
      %v4909 = vmul.f32 %v4449, %v4620
      %v4910 = vmul.f32 %v4450, %v4635
      %v4911 = vmul.f32 %v4451, %v4650
      %v4912 = vmul.f32 %v4452, %v4665
      %v4913 = vmul.f32 %v4453, %v4680
      %v4914 = vmul.f32 %v4454, %v4695
      %v4915 = vmul.f32 %v4455, %v4710
      %v4916 = vmul.f32 %v4456, %v4725
      %v4917 = vmul.f32 %v4457, %v4740
      %v4918 = vmul.f32 %v4458, %v4755
      %v4919 = vmul.f32 %v4459, %v4770
      %v4920 = vmul.f32 %v4460, %v4785
      %v4921 = vmul.f32 %v4461, %v4800
      %v4922 = vmul.f32 %v4462, %v4815
      %v4923 = vmul.f32 %v4463, %v4830
      %v4924 = vmul.f32 %v4464, %v4845
      %v4925 = vmul.f32 %v4465, %v4860
      %v4926 = vmul.f32 %v4466, %v4875
      %v4927 = vmul.f32 %v4467, %v4890
      %v4928 = vmul.f32 %v4468, %v4905
      %v4952 = vrot.slane %v4906, 2
      %v4953 = vrot.slane %v4906, 4
      %v4954 = vrot.slane %v4906, 6
      %v4955 = vrot.slane %v4907, 2
      %v4956 = vrot.slane %v4907, 4
      %v4957 = vrot.slane %v4907, 6
      %v4958 = vrot.slane %v4908, 2
      %v4959 = vrot.slane %v4908, 4
      %v4960 = vrot.slane %v4908, 6
      %v4961 = vrot.slane %v4909, 2
      %v4962 = vrot.slane %v4909, 4
      %v4963 = vrot.slane %v4909, 6
      %v4964 = vrot.slane %v4910, 2
      %v4965 = vrot.slane %v4910, 4
      %v4966 = vrot.slane %v4910, 6
      %v4967 = vrot.slane %v4911, 2
      %v4968 = vrot.slane %v4911, 4
      %v4969 = vrot.slane %v4911, 6
      %v4970 = vrot.slane %v4912, 2
      %v4971 = vrot.slane %v4912, 4
      %v4972 = vrot.slane %v4912, 6
      %v4973 = vrot.slane %v4913, 2
      %v4974 = vrot.slane %v4913, 4
      %v4975 = vrot.slane %v4913, 6
      %v4976 = vrot.slane %v4914, 2
      %v4977 = vrot.slane %v4914, 4
      %v4978 = vrot.slane %v4914, 6
      %v4979 = vrot.slane %v4915, 2
      %v4980 = vrot.slane %v4915, 4
      %v4981 = vrot.slane %v4915, 6
      %v4982 = vrot.slane %v4916, 2
      %v4983 = vrot.slane %v4916, 4
      %v4984 = vrot.slane %v4916, 6
      %v4985 = vrot.slane %v4917, 2
      %v4986 = vrot.slane %v4917, 4
      %v4987 = vrot.slane %v4917, 6
      %v4988 = vrot.slane %v4918, 2
      %v4989 = vrot.slane %v4918, 4
      %v4990 = vrot.slane %v4918, 6
      %v4991 = vrot.slane %v4919, 2
      %v4992 = vrot.slane %v4919, 4
      %v4993 = vrot.slane %v4919, 6
      %v4994 = vrot.slane %v4920, 2
      %v4995 = vrot.slane %v4920, 4
      %v4996 = vrot.slane %v4920, 6
      %v4997 = vrot.slane %v4921, 2
      %v4998 = vrot.slane %v4921, 4
      %v4999 = vrot.slane %v4921, 6
      %v5000 = vrot.slane %v4922, 2
      %v5001 = vrot.slane %v4922, 4
      %v5002 = vrot.slane %v4922, 6
      %v5003 = vrot.slane %v4923, 2
      %v5004 = vrot.slane %v4923, 4
      %v5005 = vrot.slane %v4923, 6
      %v5006 = vrot.slane %v4924, 2
      %v5007 = vrot.slane %v4924, 4
      %v5008 = vrot.slane %v4924, 6
      %v5009 = vrot.slane %v4925, 2
      %v5010 = vrot.slane %v4925, 4
      %v5011 = vrot.slane %v4925, 6
      %v5012 = vrot.slane %v4926, 2
      %v5013 = vrot.slane %v4926, 4
      %v5014 = vrot.slane %v4926, 6
      %v5015 = vrot.slane %v4927, 2
      %v5016 = vrot.slane %v4927, 4
      %v5017 = vrot.slane %v4927, 6
      %v5018 = vrot.slane %v4928, 2
      %s5019 = smul.u32 %s23, 8
      %s5020 = ssub.s32 %s5019, 1
      %v5021 = vstv %s5020
      %v5022 = vadd.s32 %v5021, 1
      %v5023 = vadd.s32 %v5021, 2
      %v5024 = vadd.s32 %v5021, 3
      %v5025 = vadd.s32 %v5021, 4
      %v5026 = vadd.s32 %v5021, 5
      %v5027 = vadd.s32 %v5021, 6
      %v5028 = vadd.s32 %v5021, 7
      %v5029 = vadd.s32 %v5021, 8
      %v5030 = vadd.s32 %v5021, 9
      %v5031 = vlaneseq
      %v5032 = vshrl.u32 %v5031, 7
      %v5033 = vadd.s32 %v5032, 8
      %v5034 = vadd.s32 %v5032, 16
      %v5035 = vsub.s32 %v5032, 1
      %v5036 = vsub.s32 %v5033, 1
      %v5037 = vsub.s32 %v5034, 1
      %vm5038 = vcmp.ge.s32.totalorder %v5021, 0
      %vm5039 = vcmp.ge.s32.totalorder %v5022, 0
      %vm5040 = vcmp.ge.s32.totalorder %v5023, 0
      %vm5041 = vcmp.ge.s32.totalorder %v5024, 0
      %vm5042 = vcmp.ge.s32.totalorder %v5025, 0
      %vm5043 = vcmp.ge.s32.totalorder %v5026, 0
      %vm5044 = vcmp.ge.s32.totalorder %v5027, 0
      %vm5045 = vcmp.ge.s32.totalorder %v5028, 0
      %vm5046 = vcmp.ge.s32.totalorder %v5029, 0
      %vm5047 = vcmp.ge.s32.totalorder %v5030, 0
      %vm5048 = vcmp.lt.s32.totalorder %v5021, 16
      %vm5049 = vcmp.lt.s32.totalorder %v5022, 16
      %vm5050 = vcmp.lt.s32.totalorder %v5023, 16
      %vm5051 = vcmp.lt.s32.totalorder %v5024, 16
      %vm5052 = vcmp.lt.s32.totalorder %v5025, 16
      %vm5053 = vcmp.lt.s32.totalorder %v5026, 16
      %vm5054 = vcmp.lt.s32.totalorder %v5027, 16
      %vm5055 = vcmp.lt.s32.totalorder %v5028, 16
      %vm5056 = vcmp.lt.s32.totalorder %v5029, 16
      %vm5057 = vcmp.lt.s32.totalorder %v5030, 16
      %vm5058 = vmand %vm5038, %vm5048
      %vm5059 = vmand %vm5039, %vm5049
      %vm5060 = vmand %vm5040, %vm5050
      %vm5061 = vmand %vm5041, %vm5051
      %vm5062 = vmand %vm5042, %vm5052
      %vm5063 = vmand %vm5043, %vm5053
      %vm5064 = vmand %vm5044, %vm5054
      %vm5065 = vmand %vm5045, %vm5055
      %vm5066 = vmand %vm5046, %vm5056
      %vm5067 = vmand %vm5047, %vm5057
      %vm5068 = vcmp.ge.s32.totalorder %v5035, 0
      %vm5069 = vcmp.ge.s32.totalorder %v5036, 0
      %vm5070 = vcmp.ge.s32.totalorder %v5037, 0
      %vm5071 = vmand %vm5058, %vm5068
      %vm5072 = vmand %vm5058, %vm5069
      %vm5073 = vmand %vm5058, %vm5070
      %vm5074 = vmand %vm5059, %vm5068
      %vm5075 = vmand %vm5059, %vm5069
      %vm5076 = vmand %vm5059, %vm5070
      %vm5077 = vmand %vm5060, %vm5068
      %vm5078 = vmand %vm5060, %vm5069
      %vm5079 = vmand %vm5060, %vm5070
      %vm5080 = vmand %vm5061, %vm5068
      %vm5081 = vmand %vm5061, %vm5069
      %vm5082 = vmand %vm5061, %vm5070
      %vm5083 = vmand %vm5062, %vm5068
      %vm5084 = vmand %vm5062, %vm5069
      %vm5085 = vmand %vm5062, %vm5070
      %vm5086 = vmand %vm5063, %vm5068
      %vm5087 = vmand %vm5063, %vm5069
      %vm5088 = vmand %vm5063, %vm5070
      %vm5089 = vmand %vm5064, %vm5068
      %vm5090 = vmand %vm5064, %vm5069
      %vm5091 = vmand %vm5064, %vm5070
      %vm5092 = vmand %vm5065, %vm5068
      %vm5093 = vmand %vm5065, %vm5069
      %vm5094 = vmand %vm5065, %vm5070
      %vm5095 = vmand %vm5066, %vm5068
      %vm5096 = vmand %vm5066, %vm5069
      %vm5097 = vmand %vm5066, %vm5070
      %vm5098 = vmand %vm5067, %vm5068
      %vm5099 = vmand %vm5067, %vm5069
      %vm5100 = vmand %vm5067, %vm5070
      %vm5101 = vcmp.lt.s32.totalorder %v5035, 16
      %vm5102 = vcmp.lt.s32.totalorder %v5036, 16
      %vm5103 = vcmp.lt.s32.totalorder %v5037, 16
      %vm5104 = vmand %vm5071, %vm5101
      %vm5105 = vmand %vm5072, %vm5102
      %vm5106 = vmand %vm5073, %vm5103
      %vm5107 = vmand %vm5074, %vm5101
      %vm5108 = vmand %vm5075, %vm5102
      %vm5109 = vmand %vm5076, %vm5103
      %vm5110 = vmand %vm5077, %vm5101
      %vm5111 = vmand %vm5078, %vm5102
      %vm5112 = vmand %vm5079, %vm5103
      %vm5113 = vmand %vm5080, %vm5101
      %vm5114 = vmand %vm5081, %vm5102
      %vm5115 = vmand %vm5082, %vm5103
      %vm5116 = vmand %vm5083, %vm5101
      %vm5117 = vmand %vm5084, %vm5102
      %vm5118 = vmand %vm5085, %vm5103
      %vm5119 = vmand %vm5086, %vm5101
      %vm5120 = vmand %vm5087, %vm5102
      %vm5121 = vmand %vm5088, %vm5103
      %vm5122 = vmand %vm5089, %vm5101
      %vm5123 = vmand %vm5090, %vm5102
      %vm5124 = vmand %vm5091, %vm5103
      %vm5125 = vmand %vm5092, %vm5101
      %vm5126 = vmand %vm5093, %vm5102
      %vm5127 = vmand %vm5094, %vm5103
      %vm5128 = vmand %vm5095, %vm5101
      %vm5129 = vmand %vm5096, %vm5102
      %vm5130 = vmand %vm5097, %vm5103
      %vm5131 = vmand %vm5098, %vm5101
      %vm5132 = vmand %vm5099, %vm5102
      %vm5133 = vmand %vm5100, %vm5103
      %5134 = vst [vmem:[#allocation1] ss:$4 sm:$0xff] %v4906
      %s5135 = scalar_lea.vmem [#allocation1], 1
      %5136 = vst [vmem:[%s5135] ss:$4 sm:$0xff] %v4952
      %s5137 = scalar_lea.vmem [#allocation1], 2
      %5138 = vst [vmem:[%s5137] ss:$4 sm:$0xff] %v4953
      %s5139 = scalar_lea.vmem [#allocation1], 3
      %5140 = vst [vmem:[%s5139] ss:$4 sm:$0xff] %v4954
      %s5141 = scalar_lea.vmem [#allocation1], 32
      %5142 = vst [vmem:[%s5141] ss:$4 sm:$0xff] %v4907
      %s5143 = scalar_lea.vmem [#allocation1], 33
      %5144 = vst [vmem:[%s5143] ss:$4 sm:$0xff] %v4955
      %s5145 = scalar_lea.vmem [#allocation1], 34
      %5146 = vst [vmem:[%s5145] ss:$4 sm:$0xff] %v4956
      %s5147 = scalar_lea.vmem [#allocation1], 35
      %5148 = vst [vmem:[%s5147] ss:$4 sm:$0xff] %v4957
      %v5149 = vld.sshfl [vmem:[#allocation1] sm:$0xff pattern:$0x73625140]
      %v5150 = vld.sshfl [vmem:[#allocation1 + $0x20] sm:$0xff pattern:$0x73625140]
      %5151 = vst [vmem:[#allocation1] ss:$4 sm:$0xff] %v4908
      %v5152 = vld.sshfl [vmem:[#allocation1] sm:$0xff pattern:$0x73625140]
      %5153 = vst [vmem:[%s5141] ss:$4 sm:$0xff] %v4958
      %5154 = vst [vmem:[%s5143] ss:$4 sm:$0xff] %v4959
      %5155 = vst [vmem:[%s5145] ss:$4 sm:$0xff] %v4960
      %5156 = vst [vmem:[%s5147] ss:$4 sm:$0xff] %v4909
      %v5157 = vld.sshfl [vmem:[#allocation1 + $0x20] sm:$0xff pattern:$0x73625140]
      %5158 = vst [vmem:[#allocation1] ss:$4 sm:$0xff] %v4961
      %5159 = vst [vmem:[%s5135] ss:$4 sm:$0xff] %v4962
      %5160 = vst [vmem:[%s5137] ss:$4 sm:$0xff] %v4963
      %5161 = vst [vmem:[%s5139] ss:$4 sm:$0xff] %v4910
      %5162 = vst [vmem:[%s5141] ss:$4 sm:$0xff] %v4964
      %v5163 = vld.sshfl [vmem:[#allocation1] sm:$0xff pattern:$0x73625140]
      %v5164 = vld.sshfl [vmem:[#allocation1 + $0x20] sm:$0xff pattern:$0x73625140]
      %5165 = vst [vmem:[#allocation1] ss:$4 sm:$0xff] %v4965
      %5166 = vst [vmem:[%s5135] ss:$4 sm:$0xff] %v4966
      %5167 = vst [vmem:[%s5137] ss:$4 sm:$0xff] %v4911
      %5168 = vst [vmem:[%s5139] ss:$4 sm:$0xff] %v4967
      %5169 = vst [vmem:[%s5141] ss:$4 sm:$0xff] %v4968
      %5170 = vst [vmem:[%s5143] ss:$4 sm:$0xff] %v4969
      %5171 = vst [vmem:[%s5145] ss:$4 sm:$0xff] %v4912
      %5172 = vst [vmem:[%s5147] ss:$4 sm:$0xff] %v4970
      %v5173 = vld.sshfl [vmem:[#allocation1] sm:$0xff pattern:$0x73625140]
      %v5174 = vld.sshfl [vmem:[#allocation1 + $0x20] sm:$0xff pattern:$0x73625140]
      %5175 = vst [vmem:[#allocation1] ss:$4 sm:$0xff] %v4971
      %v5176 = vld.sshfl [vmem:[#allocation1] sm:$0xff pattern:$0x73625140]
      %5177 = vst [vmem:[%s5141] ss:$4 sm:$0xff] %v4972
      %5178 = vst [vmem:[%s5143] ss:$4 sm:$0xff] %v4913
      %5179 = vst [vmem:[%s5145] ss:$4 sm:$0xff] %v4973
      %5180 = vst [vmem:[%s5147] ss:$4 sm:$0xff] %v4974
      %v5181 = vld.sshfl [vmem:[#allocation1 + $0x20] sm:$0xff pattern:$0x73625140]
      %5182 = vst [vmem:[#allocation1] ss:$4 sm:$0xff] %v4975
      %5183 = vst [vmem:[%s5135] ss:$4 sm:$0xff] %v4914
      %5184 = vst [vmem:[%s5137] ss:$4 sm:$0xff] %v4976
      %5185 = vst [vmem:[%s5139] ss:$4 sm:$0xff] %v4977
      %5186 = vst [vmem:[%s5141] ss:$4 sm:$0xff] %v4978
      %v5187 = vld.sshfl [vmem:[#allocation1] sm:$0xff pattern:$0x73625140]
      %v5188 = vld.sshfl [vmem:[#allocation1 + $0x20] sm:$0xff pattern:$0x73625140]
      %5189 = vst [vmem:[#allocation1] ss:$4 sm:$0xff] %v4915
      %5190 = vst [vmem:[%s5135] ss:$4 sm:$0xff] %v4979
      %5191 = vst [vmem:[%s5137] ss:$4 sm:$0xff] %v4980
      %5192 = vst [vmem:[%s5139] ss:$4 sm:$0xff] %v4981
      %5193 = vst [vmem:[%s5141] ss:$4 sm:$0xff] %v4916
      %5194 = vst [vmem:[%s5143] ss:$4 sm:$0xff] %v4982
      %5195 = vst [vmem:[%s5145] ss:$4 sm:$0xff] %v4983
      %5196 = vst [vmem:[%s5147] ss:$4 sm:$0xff] %v4984
      %v5197 = vld.sshfl [vmem:[#allocation1] sm:$0xff pattern:$0x73625140]
      %v5198 = vld.sshfl [vmem:[#allocation1 + $0x20] sm:$0xff pattern:$0x73625140]
      %5199 = vst [vmem:[#allocation1] ss:$4 sm:$0xff] %v4917
      %v5200 = vld.sshfl [vmem:[#allocation1] sm:$0xff pattern:$0x73625140]
      %5201 = vst [vmem:[%s5141] ss:$4 sm:$0xff] %v4985
      %5202 = vst [vmem:[%s5143] ss:$4 sm:$0xff] %v4986
      %5203 = vst [vmem:[%s5145] ss:$4 sm:$0xff] %v4987
      %5204 = vst [vmem:[%s5147] ss:$4 sm:$0xff] %v4918
      %v5205 = vld.sshfl [vmem:[#allocation1 + $0x20] sm:$0xff pattern:$0x73625140]
      %5206 = vst [vmem:[#allocation1] ss:$4 sm:$0xff] %v4988
      %5207 = vst [vmem:[%s5135] ss:$4 sm:$0xff] %v4989
      %5208 = vst [vmem:[%s5137] ss:$4 sm:$0xff] %v4990
      %5209 = vst [vmem:[%s5139] ss:$4 sm:$0xff] %v4919
      %5210 = vst [vmem:[%s5141] ss:$4 sm:$0xff] %v4991
      %v5211 = vld.sshfl [vmem:[#allocation1] sm:$0xff pattern:$0x73625140]
      %v5212 = vld.sshfl [vmem:[#allocation1 + $0x20] sm:$0xff pattern:$0x73625140]
      %5213 = vst [vmem:[#allocation1] ss:$4 sm:$0xff] %v4992
      %5214 = vst [vmem:[%s5135] ss:$4 sm:$0xff] %v4993
      %5215 = vst [vmem:[%s5137] ss:$4 sm:$0xff] %v4920
      %5216 = vst [vmem:[%s5139] ss:$4 sm:$0xff] %v4994
      %5217 = vst [vmem:[%s5141] ss:$4 sm:$0xff] %v4995
      %5218 = vst [vmem:[%s5143] ss:$4 sm:$0xff] %v4996
      %5219 = vst [vmem:[%s5145] ss:$4 sm:$0xff] %v4921
      %5220 = vst [vmem:[%s5147] ss:$4 sm:$0xff] %v4997
      %v5221 = vld.sshfl [vmem:[#allocation1] sm:$0xff pattern:$0x73625140]
      %v5222 = vld.sshfl [vmem:[#allocation1 + $0x20] sm:$0xff pattern:$0x73625140]
      %5223 = vst [vmem:[#allocation1] ss:$4 sm:$0xff] %v4998
      %v5224 = vld.sshfl [vmem:[#allocation1] sm:$0xff pattern:$0x73625140]
      %5225 = vst [vmem:[%s5141] ss:$4 sm:$0xff] %v4999
      %5226 = vst [vmem:[%s5143] ss:$4 sm:$0xff] %v4922
      %5227 = vst [vmem:[%s5145] ss:$4 sm:$0xff] %v5000
      %5228 = vst [vmem:[%s5147] ss:$4 sm:$0xff] %v5001
      %v5229 = vld.sshfl [vmem:[#allocation1 + $0x20] sm:$0xff pattern:$0x73625140]
      %5230 = vst [vmem:[#allocation1] ss:$4 sm:$0xff] %v5002
      %5231 = vst [vmem:[%s5135] ss:$4 sm:$0xff] %v4923
      %5232 = vst [vmem:[%s5137] ss:$4 sm:$0xff] %v5003
      %5233 = vst [vmem:[%s5139] ss:$4 sm:$0xff] %v5004
      %5234 = vst [vmem:[%s5141] ss:$4 sm:$0xff] %v5005
      %v5235 = vld.sshfl [vmem:[#allocation1] sm:$0xff pattern:$0x73625140]
      %v5236 = vld.sshfl [vmem:[#allocation1 + $0x20] sm:$0xff pattern:$0x73625140]
      %5237 = vst [vmem:[#allocation1] ss:$4 sm:$0xff] %v4924
      %5238 = vst [vmem:[%s5135] ss:$4 sm:$0xff] %v5006
      %5239 = vst [vmem:[%s5137] ss:$4 sm:$0xff] %v5007
      %5240 = vst [vmem:[%s5139] ss:$4 sm:$0xff] %v5008
      %5241 = vst [vmem:[%s5141] ss:$4 sm:$0xff] %v4925
      %5242 = vst [vmem:[%s5143] ss:$4 sm:$0xff] %v5009
      %5243 = vst [vmem:[%s5145] ss:$4 sm:$0xff] %v5010
      %5244 = vst [vmem:[%s5147] ss:$4 sm:$0xff] %v5011
      %v5245 = vld.sshfl [vmem:[#allocation1] sm:$0xff pattern:$0x73625140]
      %v5246 = vld.sshfl [vmem:[#allocation1 + $0x20] sm:$0xff pattern:$0x73625140]
      %5247 = vst [vmem:[#allocation1] ss:$4 sm:$0xff] %v4926
      %v5248 = vld.sshfl [vmem:[#allocation1] sm:$0xff pattern:$0x73625140]
      %5249 = vst [vmem:[%s5141] ss:$4 sm:$0xff] %v5012
      %5250 = vst [vmem:[%s5143] ss:$4 sm:$0xff] %v5013
      %5251 = vst [vmem:[%s5145] ss:$4 sm:$0xff] %v5014
      %5252 = vst [vmem:[%s5147] ss:$4 sm:$0xff] %v4927
      %v5253 = vld.sshfl [vmem:[#allocation1 + $0x20] sm:$0xff pattern:$0x73625140]
      %5254 = vst [vmem:[#allocation1] ss:$4 sm:$0xff] %v5015
      %5255 = vst [vmem:[%s5135] ss:$4 sm:$0xff] %v5016
      %5256 = vst [vmem:[%s5137] ss:$4 sm:$0xff] %v5017
      %5257 = vst [vmem:[%s5139] ss:$4 sm:$0xff] %v4928
      %5258 = vst [vmem:[%s5141] ss:$4 sm:$0xff] %v5018
      %v5259 = vld.sshfl [vmem:[#allocation1] sm:$0xff pattern:$0x73625140]
      %v5260 = vld.sshfl [vmem:[#allocation1 + $0x20] sm:$0xff pattern:$0x73625140]
      %v5291 = vsel %vm5104, %v5149, 0.0
      %v5292 = vsel %vm5105, %v5150, 0.0
      %v5293 = vsel %vm5106, %v5152, 0.0
      %v5294 = vsel %vm5107, %v5157, 0.0
      %v5295 = vsel %vm5108, %v5163, 0.0
      %v5296 = vsel %vm5109, %v5164, 0.0
      %v5297 = vsel %vm5110, %v5173, 0.0
      %v5298 = vsel %vm5111, %v5174, 0.0
      %v5299 = vsel %vm5112, %v5176, 0.0
      %v5300 = vsel %vm5113, %v5181, 0.0
      %v5301 = vsel %vm5114, %v5187, 0.0
      %v5302 = vsel %vm5115, %v5188, 0.0
      %v5303 = vsel %vm5116, %v5197, 0.0
      %v5304 = vsel %vm5117, %v5198, 0.0
      %v5305 = vsel %vm5118, %v5200, 0.0
      %v5306 = vsel %vm5119, %v5205, 0.0
      %v5307 = vsel %vm5120, %v5211, 0.0
      %v5308 = vsel %vm5121, %v5212, 0.0
      %v5309 = vsel %vm5122, %v5221, 0.0
      %v5310 = vsel %vm5123, %v5222, 0.0
      %v5311 = vsel %vm5124, %v5224, 0.0
      %v5312 = vsel %vm5125, %v5229, 0.0
      %v5313 = vsel %vm5126, %v5235, 0.0
      %v5314 = vsel %vm5127, %v5236, 0.0
      %v5315 = vsel %vm5128, %v5245, 0.0
      %v5316 = vsel %vm5129, %v5246, 0.0
      %v5317 = vsel %vm5130, %v5248, 0.0
      %v5318 = vsel %vm5131, %v5253, 0.0
      %v5319 = vsel %vm5132, %v5259, 0.0
      %v5320 = vsel %vm5133, %v5260, 0.0
      %v5321 = vld [vmem:[%s5] sm:$0x3]
      %v5322 = vld [vmem:[%s5 + $0x2] sm:$0x3]
      %v5323 = vld [vmem:[%s5 + $0x4] sm:$0x3]
      %v5324 = vld [vmem:[%s5 + $0x6] sm:$0x3]
      %v5325 = vld [vmem:[%s5 + $0x8] sm:$0x3]
      %v5326 = vld [vmem:[%s5 + $0xa] sm:$0x3]
      %v5327 = vld [vmem:[%s5 + $0xc] sm:$0x3]
      %v5328 = vld [vmem:[%s5 + $0xe] sm:$0x3]
      %v5329 = vld [vmem:[%s5 + $0x10] sm:$0x3]
      %v5330 = vld [vmem:[%s6] sm:$0x1]
      %v5331 = vpack.c.bf16 %v5291, %v5291
      %v5332 = vpack.c.bf16 %v5292, %v5292
      %v5333 = vpack.c.bf16 %v5293, %v5293
      %v5334 = vpack.c.bf16 %v5294, %v5294
      %v5335 = vpack.c.bf16 %v5295, %v5295
      %v5336 = vpack.c.bf16 %v5296, %v5296
      %v5337 = vpack.c.bf16 %v5297, %v5297
      %v5338 = vpack.c.bf16 %v5298, %v5298
      %v5339 = vpack.c.bf16 %v5299, %v5299
      %v5340 = vpack.c.bf16 %v5300, %v5300
      %v5341 = vpack.c.bf16 %v5301, %v5301
      %v5342 = vpack.c.bf16 %v5302, %v5302
      %v5343 = vpack.c.bf16 %v5303, %v5303
      %v5344 = vpack.c.bf16 %v5304, %v5304
      %v5345 = vpack.c.bf16 %v5305, %v5305
      %v5346 = vpack.c.bf16 %v5306, %v5306
      %v5347 = vpack.c.bf16 %v5307, %v5307
      %v5348 = vpack.c.bf16 %v5308, %v5308
      %v5349 = vpack.c.bf16 %v5309, %v5309
      %v5350 = vpack.c.bf16 %v5310, %v5310
      %v5351 = vpack.c.bf16 %v5311, %v5311
      %v5352 = vpack.c.bf16 %v5312, %v5312
      %v5353 = vpack.c.bf16 %v5313, %v5313
      %v5354 = vpack.c.bf16 %v5314, %v5314
      %v5355 = vpack.c.bf16 %v5315, %v5315
      %v5356 = vpack.c.bf16 %v5316, %v5316
      %v5357 = vpack.c.bf16 %v5317, %v5317
      %v5358 = vpack.c.bf16 %v5318, %v5318
      %v5359 = vpack.c.bf16 %v5319, %v5319
      %v5360 = vpack.c.bf16 %v5320, %v5320
      %vm5361 = vsmask.f32 3328
      %vm5362 = vsmask.f32 7440
      %vm5363 = vmor %vm5361, %vm5362
      %v5365 = vshrl.u32 %v5331, 16
      %v5367 = vrot.slane %v5365, 4
      %v5368 = vshll.u32 %v5331, 16
      %v5370 = vrot.slane %v5368, 5
      %v5371 = vor.u32 %v5367, %v5370
      %v5372 = vrot.slane %v5371, 4
      %v5374 = vshll.u32 %v5332, 16
      %v5376 = vrot.slane %v5374, 5
      %v5377 = vsel %vm5363, %v5372, %v5376
      %v5378 = vshrl.u32 %v5332, 16
      %v5380 = vrot.slane %v5378, 4
      %v5381 = vor.u32 %v5380, %v5376
      %v5382 = vrot.slane %v5381, 4
      %v5384 = vshll.u32 %v5333, 16
      %v5386 = vrot.slane %v5384, 5
      %v5387 = vsel %vm5363, %v5382, %v5386
      %v5389 = vshrl.u32 %v5334, 16
      %v5391 = vrot.slane %v5389, 4
      %v5392 = vshll.u32 %v5334, 16
      %v5394 = vrot.slane %v5392, 5
      %v5395 = vor.u32 %v5391, %v5394
      %v5396 = vrot.slane %v5395, 4
      %v5398 = vshll.u32 %v5335, 16
      %v5400 = vrot.slane %v5398, 5
      %v5401 = vsel %vm5363, %v5396, %v5400
      %v5402 = vshrl.u32 %v5335, 16
      %v5404 = vrot.slane %v5402, 4
      %v5405 = vor.u32 %v5404, %v5400
      %v5406 = vrot.slane %v5405, 4
      %v5408 = vshll.u32 %v5336, 16
      %v5410 = vrot.slane %v5408, 5
      %v5411 = vsel %vm5363, %v5406, %v5410
      %v5413 = vshrl.u32 %v5337, 16
      %v5415 = vrot.slane %v5413, 4
      %v5416 = vshll.u32 %v5337, 16
      %v5418 = vrot.slane %v5416, 5
      %v5419 = vor.u32 %v5415, %v5418
      %v5420 = vrot.slane %v5419, 4
      %v5422 = vshll.u32 %v5338, 16
      %v5424 = vrot.slane %v5422, 5
      %v5425 = vsel %vm5363, %v5420, %v5424
      %v5426 = vshrl.u32 %v5338, 16
      %v5428 = vrot.slane %v5426, 4
      %v5429 = vor.u32 %v5428, %v5424
      %v5430 = vrot.slane %v5429, 4
      %v5432 = vshll.u32 %v5339, 16
      %v5434 = vrot.slane %v5432, 5
      %v5435 = vsel %vm5363, %v5430, %v5434
      %v5437 = vshrl.u32 %v5340, 16
      %v5439 = vrot.slane %v5437, 4
      %v5440 = vshll.u32 %v5340, 16
      %v5442 = vrot.slane %v5440, 5
      %v5443 = vor.u32 %v5439, %v5442
      %v5444 = vrot.slane %v5443, 4
      %v5446 = vshll.u32 %v5341, 16
      %v5448 = vrot.slane %v5446, 5
      %v5449 = vsel %vm5363, %v5444, %v5448
      %v5450 = vshrl.u32 %v5341, 16
      %v5452 = vrot.slane %v5450, 4
      %v5453 = vor.u32 %v5452, %v5448
      %v5454 = vrot.slane %v5453, 4
      %v5456 = vshll.u32 %v5342, 16
      %v5458 = vrot.slane %v5456, 5
      %v5459 = vsel %vm5363, %v5454, %v5458
      %v5461 = vshrl.u32 %v5343, 16
      %v5463 = vrot.slane %v5461, 4
      %v5464 = vshll.u32 %v5343, 16
      %v5466 = vrot.slane %v5464, 5
      %v5467 = vor.u32 %v5463, %v5466
      %v5468 = vrot.slane %v5467, 4
      %v5470 = vshll.u32 %v5344, 16
      %v5472 = vrot.slane %v5470, 5
      %v5473 = vsel %vm5363, %v5468, %v5472
      %v5474 = vshrl.u32 %v5344, 16
      %v5476 = vrot.slane %v5474, 4
      %v5477 = vor.u32 %v5476, %v5472
      %v5478 = vrot.slane %v5477, 4
      %v5480 = vshll.u32 %v5345, 16
      %v5482 = vrot.slane %v5480, 5
      %v5483 = vsel %vm5363, %v5478, %v5482
      %v5485 = vshrl.u32 %v5346, 16
      %v5487 = vrot.slane %v5485, 4
      %v5488 = vshll.u32 %v5346, 16
      %v5490 = vrot.slane %v5488, 5
      %v5491 = vor.u32 %v5487, %v5490
      %v5492 = vrot.slane %v5491, 4
      %v5494 = vshll.u32 %v5347, 16
      %v5496 = vrot.slane %v5494, 5
      %v5497 = vsel %vm5363, %v5492, %v5496
      %v5498 = vshrl.u32 %v5347, 16
      %v5500 = vrot.slane %v5498, 4
      %v5501 = vor.u32 %v5500, %v5496
      %v5502 = vrot.slane %v5501, 4
      %v5504 = vshll.u32 %v5348, 16
      %v5506 = vrot.slane %v5504, 5
      %v5507 = vsel %vm5363, %v5502, %v5506
      %v5509 = vshrl.u32 %v5349, 16
      %v5511 = vrot.slane %v5509, 4
      %v5512 = vshll.u32 %v5349, 16
      %v5514 = vrot.slane %v5512, 5
      %v5515 = vor.u32 %v5511, %v5514
      %v5516 = vrot.slane %v5515, 4
      %v5518 = vshll.u32 %v5350, 16
      %v5520 = vrot.slane %v5518, 5
      %v5521 = vsel %vm5363, %v5516, %v5520
      %v5522 = vshrl.u32 %v5350, 16
      %v5524 = vrot.slane %v5522, 4
      %v5525 = vor.u32 %v5524, %v5520
      %v5526 = vrot.slane %v5525, 4
      %v5528 = vshll.u32 %v5351, 16
      %v5530 = vrot.slane %v5528, 5
      %v5531 = vsel %vm5363, %v5526, %v5530
      %v5533 = vshrl.u32 %v5352, 16
      %v5535 = vrot.slane %v5533, 4
      %v5536 = vshll.u32 %v5352, 16
      %v5538 = vrot.slane %v5536, 5
      %v5539 = vor.u32 %v5535, %v5538
      %v5540 = vrot.slane %v5539, 4
      %v5542 = vshll.u32 %v5353, 16
      %v5544 = vrot.slane %v5542, 5
      %v5545 = vsel %vm5363, %v5540, %v5544
      %v5546 = vshrl.u32 %v5353, 16
      %v5548 = vrot.slane %v5546, 4
      %v5549 = vor.u32 %v5548, %v5544
      %v5550 = vrot.slane %v5549, 4
      %v5552 = vshll.u32 %v5354, 16
      %v5554 = vrot.slane %v5552, 5
      %v5555 = vsel %vm5363, %v5550, %v5554
      %v5556 = vunpack.c.l.b16 %v5377
      %v5557 = vunpack.c.l.b16 %v5387
      %v5558 = vunpack.c.l.b16 %v5401
      %v5559 = vunpack.c.l.b16 %v5411
      %v5560 = vunpack.c.l.b16 %v5425
      %v5561 = vunpack.c.l.b16 %v5435
      %v5562 = vunpack.c.l.b16 %v5449
      %v5563 = vunpack.c.l.b16 %v5459
      %v5564 = vunpack.c.l.b16 %v5473
      %v5565 = vunpack.c.l.b16 %v5483
      %v5566 = vunpack.c.l.b16 %v5497
      %v5567 = vunpack.c.l.b16 %v5507
      %v5568 = vunpack.c.l.b16 %v5521
      %v5569 = vunpack.c.l.b16 %v5531
      %v5570 = vunpack.c.l.b16 %v5545
      %v5571 = vunpack.c.l.b16 %v5555
      %v5572 = vpack.c.b16 %v5557, %v5556
      %v5573 = vpack.c.b16 %v5559, %v5558
      %v5574 = vpack.c.b16 %v5561, %v5560
      %v5575 = vpack.c.b16 %v5563, %v5562
      %v5576 = vpack.c.b16 %v5565, %v5564
      %v5577 = vpack.c.b16 %v5567, %v5566
      %v5578 = vpack.c.b16 %v5569, %v5568
      %v5579 = vpack.c.b16 %v5571, %v5570
      %v5581 = vsel %vm1943, %v5572, 0
      %v5584 = vsel %vm1943, %v5573, 0
      %v5587 = vsel %vm1943, %v5574, 0
      %v5590 = vsel %vm1943, %v5575, 0
      %v5593 = vsel %vm1943, %v5576, 0
      %v5596 = vsel %vm1943, %v5577, 0
      %v5599 = vsel %vm1943, %v5578, 0
      %v5602 = vsel %vm1943, %v5579, 0
      %v5605 = vsel %vm522, %v5322, 0
      %5607 = vmatpush.bf16.msra.mxu0 0
      %5608 = vmatpush.bf16.msra.mxu0 0
      %5609 = vmatpush.bf16.msra.mxu0 0
      %5610 = vmatpush.bf16.msra.mxu0 0
      %5611 = vmatpush.bf16.msra.mxu0 0
      %5612 = vmatpush.bf16.msra.mxu0 0
      %5613 = vmatpush.bf16.msra.mxu0 0
      %5614 = vmatpush.bf16.msra.mxu0 %v5605
      %5615 = vmatmul.bf16.gmra.mxu0 %v5581
      %v5616 = vpop.f32.mrf.mxu0
      %v5617 = vadd.f32 0.0, %v5616
      %v5618 = vpop.f32.mrf.mxu0
      %v5619 = vadd.f32 0.0, %v5618
      %5620 = vmatmul.bf16.gmra.mxu0 %v5584
      %v5621 = vpop.f32.mrf.mxu0
      %v5622 = vadd.f32 0.0, %v5621
      %v5623 = vpop.f32.mrf.mxu0
      %v5624 = vadd.f32 0.0, %v5623
      %5625 = vmatmul.bf16.gmra.mxu0 %v5587
      %v5626 = vpop.f32.mrf.mxu0
      %v5627 = vadd.f32 0.0, %v5626
      %v5628 = vpop.f32.mrf.mxu0
      %v5629 = vadd.f32 0.0, %v5628
      %5630 = vmatmul.bf16.gmra.mxu0 %v5590
      %v5631 = vpop.f32.mrf.mxu0
      %v5632 = vadd.f32 0.0, %v5631
      %v5633 = vpop.f32.mrf.mxu0
      %v5634 = vadd.f32 0.0, %v5633
      %5635 = vmatmul.bf16.gmra.mxu0 %v5593
      %v5636 = vpop.f32.mrf.mxu0
      %v5637 = vadd.f32 0.0, %v5636
      %v5638 = vpop.f32.mrf.mxu0
      %v5639 = vadd.f32 0.0, %v5638
      %5640 = vmatmul.bf16.gmra.mxu0 %v5596
      %v5641 = vpop.f32.mrf.mxu0
      %v5642 = vadd.f32 0.0, %v5641
      %v5643 = vpop.f32.mrf.mxu0
      %v5644 = vadd.f32 0.0, %v5643
      %5645 = vmatmul.bf16.gmra.mxu0 %v5599
      %v5646 = vpop.f32.mrf.mxu0
      %v5647 = vadd.f32 0.0, %v5646
      %v5648 = vpop.f32.mrf.mxu0
      %v5649 = vadd.f32 0.0, %v5648
      %5650 = vmatmul.bf16.gmra.mxu0 %v5602
      %v5651 = vpop.f32.mrf.mxu0
      %v5652 = vadd.f32 0.0, %v5651
      %v5653 = vpop.f32.mrf.mxu0
      %v5654 = vadd.f32 0.0, %v5653
      %5655 = vdwg.mxu0
      %v5672 = vunpack.c.l.b16 %v5331
      %v5673 = vunpack.c.l.b16 %v5332
      %v5674 = vunpack.c.l.b16 %v5334
      %v5675 = vunpack.c.l.b16 %v5335
      %v5676 = vunpack.c.l.b16 %v5337
      %v5677 = vunpack.c.l.b16 %v5338
      %v5678 = vunpack.c.l.b16 %v5340
      %v5679 = vunpack.c.l.b16 %v5341
      %v5680 = vunpack.c.l.b16 %v5343
      %v5681 = vunpack.c.l.b16 %v5344
      %v5682 = vunpack.c.l.b16 %v5346
      %v5683 = vunpack.c.l.b16 %v5347
      %v5684 = vunpack.c.l.b16 %v5349
      %v5685 = vunpack.c.l.b16 %v5350
      %v5686 = vunpack.c.l.b16 %v5352
      %v5687 = vunpack.c.l.b16 %v5353
      %v5688 = vpack.c.b16 %v5673, %v5672
      %v5689 = vpack.c.b16 %v5675, %v5674
      %v5690 = vpack.c.b16 %v5677, %v5676
      %v5691 = vpack.c.b16 %v5679, %v5678
      %v5692 = vpack.c.b16 %v5681, %v5680
      %v5693 = vpack.c.b16 %v5683, %v5682
      %v5694 = vpack.c.b16 %v5685, %v5684
      %v5695 = vpack.c.b16 %v5687, %v5686
      %v5697 = vsel %vm1943, %v5688, 0
      %v5700 = vsel %vm1943, %v5689, 0
      %v5703 = vsel %vm1943, %v5690, 0
      %v5706 = vsel %vm1943, %v5691, 0
      %v5709 = vsel %vm1943, %v5692, 0
      %v5712 = vsel %vm1943, %v5693, 0
      %v5715 = vsel %vm1943, %v5694, 0
      %v5718 = vsel %vm1943, %v5695, 0
      %v5721 = vsel %vm522, %v5321, 0
      %5723 = vmatpush.bf16.msra.mxu0 0
      %5724 = vmatpush.bf16.msra.mxu0 0
      %5725 = vmatpush.bf16.msra.mxu0 0
      %5726 = vmatpush.bf16.msra.mxu0 0
      %5727 = vmatpush.bf16.msra.mxu0 0
      %5728 = vmatpush.bf16.msra.mxu0 0
      %5729 = vmatpush.bf16.msra.mxu0 0
      %5730 = vmatpush.bf16.msra.mxu0 %v5721
      %5731 = vmatmul.bf16.gmra.mxu0 %v5697
      %v5732 = vpop.f32.mrf.mxu0
      %v5733 = vadd.f32 %v5617, %v5732
      %v5734 = vpop.f32.mrf.mxu0
      %v5735 = vadd.f32 %v5619, %v5734
      %5736 = vmatmul.bf16.gmra.mxu0 %v5700
      %v5737 = vpop.f32.mrf.mxu0
      %v5738 = vadd.f32 %v5622, %v5737
      %v5739 = vpop.f32.mrf.mxu0
      %v5740 = vadd.f32 %v5624, %v5739
      %5741 = vmatmul.bf16.gmra.mxu0 %v5703
      %v5742 = vpop.f32.mrf.mxu0
      %v5743 = vadd.f32 %v5627, %v5742
      %v5744 = vpop.f32.mrf.mxu0
      %v5745 = vadd.f32 %v5629, %v5744
      %5746 = vmatmul.bf16.gmra.mxu0 %v5706
      %v5747 = vpop.f32.mrf.mxu0
      %v5748 = vadd.f32 %v5632, %v5747
      %v5749 = vpop.f32.mrf.mxu0
      %v5750 = vadd.f32 %v5634, %v5749
      %5751 = vmatmul.bf16.gmra.mxu0 %v5709
      %v5752 = vpop.f32.mrf.mxu0
      %v5753 = vadd.f32 %v5637, %v5752
      %v5754 = vpop.f32.mrf.mxu0
      %v5755 = vadd.f32 %v5639, %v5754
      %5756 = vmatmul.bf16.gmra.mxu0 %v5712
      %v5757 = vpop.f32.mrf.mxu0
      %v5758 = vadd.f32 %v5642, %v5757
      %v5759 = vpop.f32.mrf.mxu0
      %v5760 = vadd.f32 %v5644, %v5759
      %5761 = vmatmul.bf16.gmra.mxu0 %v5715
      %v5762 = vpop.f32.mrf.mxu0
      %v5763 = vadd.f32 %v5647, %v5762
      %v5764 = vpop.f32.mrf.mxu0
      %v5765 = vadd.f32 %v5649, %v5764
      %5766 = vmatmul.bf16.gmra.mxu0 %v5718
      %v5767 = vpop.f32.mrf.mxu0
      %v5768 = vadd.f32 %v5652, %v5767
      %v5769 = vpop.f32.mrf.mxu0
      %v5770 = vadd.f32 %v5654, %v5769
      %5771 = vdwg.mxu0
      %vm5780 = vcmask 1042432
      %vm5781 = vcmask 1046532
      %vm5782 = vmor %vm5780, %vm5781
      %v5783 = vrot.slane %v5331, 5
      %v5784 = vrot.slane %v5783, 4
      %v5785 = vrot.slane %v5332, 5
      %v5786 = vsel %vm5782, %v5784, %v5785
      %v5787 = vrot.slane %v5785, 4
      %v5788 = vrot.slane %v5333, 5
      %v5789 = vsel %vm5782, %v5787, %v5788
      %v5790 = vrot.slane %v5334, 5
      %v5791 = vrot.slane %v5790, 4
      %v5792 = vrot.slane %v5335, 5
      %v5793 = vsel %vm5782, %v5791, %v5792
      %v5794 = vrot.slane %v5792, 4
      %v5795 = vrot.slane %v5336, 5
      %v5796 = vsel %vm5782, %v5794, %v5795
      %v5797 = vrot.slane %v5337, 5
      %v5798 = vrot.slane %v5797, 4
      %v5799 = vrot.slane %v5338, 5
      %v5800 = vsel %vm5782, %v5798, %v5799
      %v5801 = vrot.slane %v5799, 4
      %v5802 = vrot.slane %v5339, 5
      %v5803 = vsel %vm5782, %v5801, %v5802
      %v5804 = vrot.slane %v5340, 5
      %v5805 = vrot.slane %v5804, 4
      %v5806 = vrot.slane %v5341, 5
      %v5807 = vsel %vm5782, %v5805, %v5806
      %v5808 = vrot.slane %v5806, 4
      %v5809 = vrot.slane %v5342, 5
      %v5810 = vsel %vm5782, %v5808, %v5809
      %v5811 = vrot.slane %v5343, 5
      %v5812 = vrot.slane %v5811, 4
      %v5813 = vrot.slane %v5344, 5
      %v5814 = vsel %vm5782, %v5812, %v5813
      %v5815 = vrot.slane %v5813, 4
      %v5816 = vrot.slane %v5345, 5
      %v5817 = vsel %vm5782, %v5815, %v5816
      %v5818 = vrot.slane %v5346, 5
      %v5819 = vrot.slane %v5818, 4
      %v5820 = vrot.slane %v5347, 5
      %v5821 = vsel %vm5782, %v5819, %v5820
      %v5822 = vrot.slane %v5820, 4
      %v5823 = vrot.slane %v5348, 5
      %v5824 = vsel %vm5782, %v5822, %v5823
      %v5825 = vrot.slane %v5349, 5
      %v5826 = vrot.slane %v5825, 4
      %v5827 = vrot.slane %v5350, 5
      %v5828 = vsel %vm5782, %v5826, %v5827
      %v5829 = vrot.slane %v5827, 4
      %v5830 = vrot.slane %v5351, 5
      %v5831 = vsel %vm5782, %v5829, %v5830
      %v5832 = vrot.slane %v5352, 5
      %v5833 = vrot.slane %v5832, 4
      %v5834 = vrot.slane %v5353, 5
      %v5835 = vsel %vm5782, %v5833, %v5834
      %v5836 = vrot.slane %v5834, 4
      %v5837 = vrot.slane %v5354, 5
      %v5838 = vsel %vm5782, %v5836, %v5837
      %v5839 = vunpack.c.l.b16 %v5786
      %v5840 = vunpack.c.l.b16 %v5789
      %v5841 = vunpack.c.l.b16 %v5793
      %v5842 = vunpack.c.l.b16 %v5796
      %v5843 = vunpack.c.l.b16 %v5800
      %v5844 = vunpack.c.l.b16 %v5803
      %v5845 = vunpack.c.l.b16 %v5807
      %v5846 = vunpack.c.l.b16 %v5810
      %v5847 = vunpack.c.l.b16 %v5814
      %v5848 = vunpack.c.l.b16 %v5817
      %v5849 = vunpack.c.l.b16 %v5821
      %v5850 = vunpack.c.l.b16 %v5824
      %v5851 = vunpack.c.l.b16 %v5828
      %v5852 = vunpack.c.l.b16 %v5831
      %v5853 = vunpack.c.l.b16 %v5835
      %v5854 = vunpack.c.l.b16 %v5838
      %v5855 = vpack.c.b16 %v5840, %v5839
      %v5856 = vpack.c.b16 %v5842, %v5841
      %v5857 = vpack.c.b16 %v5844, %v5843
      %v5858 = vpack.c.b16 %v5846, %v5845
      %v5859 = vpack.c.b16 %v5848, %v5847
      %v5860 = vpack.c.b16 %v5850, %v5849
      %v5861 = vpack.c.b16 %v5852, %v5851
      %v5862 = vpack.c.b16 %v5854, %v5853
      %v5864 = vsel %vm1943, %v5855, 0
      %v5867 = vsel %vm1943, %v5856, 0
      %v5870 = vsel %vm1943, %v5857, 0
      %v5873 = vsel %vm1943, %v5858, 0
      %v5876 = vsel %vm1943, %v5859, 0
      %v5879 = vsel %vm1943, %v5860, 0
      %v5882 = vsel %vm1943, %v5861, 0
      %v5885 = vsel %vm1943, %v5862, 0
      %v5888 = vsel %vm522, %v5323, 0
      %5890 = vmatpush.bf16.msra.mxu0 0
      %5891 = vmatpush.bf16.msra.mxu0 0
      %5892 = vmatpush.bf16.msra.mxu0 0
      %5893 = vmatpush.bf16.msra.mxu0 0
      %5894 = vmatpush.bf16.msra.mxu0 0
      %5895 = vmatpush.bf16.msra.mxu0 0
      %5896 = vmatpush.bf16.msra.mxu0 0
      %5897 = vmatpush.bf16.msra.mxu0 %v5888
      %5898 = vmatmul.bf16.gmra.mxu0 %v5864
      %v5899 = vpop.f32.mrf.mxu0
      %v5900 = vadd.f32 0.0, %v5899
      %v5901 = vpop.f32.mrf.mxu0
      %v5902 = vadd.f32 0.0, %v5901
      %5903 = vmatmul.bf16.gmra.mxu0 %v5867
      %v5904 = vpop.f32.mrf.mxu0
      %v5905 = vadd.f32 0.0, %v5904
      %v5906 = vpop.f32.mrf.mxu0
      %v5907 = vadd.f32 0.0, %v5906
      %5908 = vmatmul.bf16.gmra.mxu0 %v5870
      %v5909 = vpop.f32.mrf.mxu0
      %v5910 = vadd.f32 0.0, %v5909
      %v5911 = vpop.f32.mrf.mxu0
      %v5912 = vadd.f32 0.0, %v5911
      %5913 = vmatmul.bf16.gmra.mxu0 %v5873
      %v5914 = vpop.f32.mrf.mxu0
      %v5915 = vadd.f32 0.0, %v5914
      %v5916 = vpop.f32.mrf.mxu0
      %v5917 = vadd.f32 0.0, %v5916
      %5918 = vmatmul.bf16.gmra.mxu0 %v5876
      %v5919 = vpop.f32.mrf.mxu0
      %v5920 = vadd.f32 0.0, %v5919
      %v5921 = vpop.f32.mrf.mxu0
      %v5922 = vadd.f32 0.0, %v5921
      %5923 = vmatmul.bf16.gmra.mxu0 %v5879
      %v5924 = vpop.f32.mrf.mxu0
      %v5925 = vadd.f32 0.0, %v5924
      %v5926 = vpop.f32.mrf.mxu0
      %v5927 = vadd.f32 0.0, %v5926
      %5928 = vmatmul.bf16.gmra.mxu0 %v5882
      %v5929 = vpop.f32.mrf.mxu0
      %v5930 = vadd.f32 0.0, %v5929
      %v5931 = vpop.f32.mrf.mxu0
      %v5932 = vadd.f32 0.0, %v5931
      %5933 = vmatmul.bf16.gmra.mxu0 %v5885
      %v5934 = vpop.f32.mrf.mxu0
      %v5935 = vadd.f32 0.0, %v5934
      %v5936 = vpop.f32.mrf.mxu0
      %v5937 = vadd.f32 0.0, %v5936
      %5938 = vdwg.mxu0
      %v5939 = vadd.f32 %v5733, %v5900
      %v5940 = vadd.f32 %v5735, %v5902
      %v5941 = vadd.f32 %v5738, %v5905
      %v5942 = vadd.f32 %v5740, %v5907
      %v5943 = vadd.f32 %v5743, %v5910
      %v5944 = vadd.f32 %v5745, %v5912
      %v5945 = vadd.f32 %v5748, %v5915
      %v5946 = vadd.f32 %v5750, %v5917
      %v5947 = vadd.f32 %v5753, %v5920
      %v5948 = vadd.f32 %v5755, %v5922
      %v5949 = vadd.f32 %v5758, %v5925
      %v5950 = vadd.f32 %v5760, %v5927
      %v5951 = vadd.f32 %v5763, %v5930
      %v5952 = vadd.f32 %v5765, %v5932
      %v5953 = vadd.f32 %v5768, %v5935
      %v5954 = vadd.f32 %v5770, %v5937
      %v5957 = vunpack.c.l.b16 %v5355
      %v5958 = vunpack.c.l.b16 %v5356
      %v5959 = vpack.c.b16 %v5958, %v5957
      %v5961 = vsel %vm1943, %v5959, 0
      %v5964 = vsel %vm522, %v5324, 0
      %5966 = vmatpush.bf16.msra.mxu0 0
      %5967 = vmatpush.bf16.msra.mxu0 0
      %5968 = vmatpush.bf16.msra.mxu0 0
      %5969 = vmatpush.bf16.msra.mxu0 0
      %5970 = vmatpush.bf16.msra.mxu0 0
      %5971 = vmatpush.bf16.msra.mxu0 0
      %5972 = vmatpush.bf16.msra.mxu0 0
      %5973 = vmatpush.bf16.msra.mxu0 %v5964
      %5974 = vmatmul.bf16.gmra.mxu0 %v5700
      %v5975 = vpop.f32.mrf.mxu0
      %v5976 = vadd.f32 0.0, %v5975
      %v5977 = vpop.f32.mrf.mxu0
      %v5978 = vadd.f32 0.0, %v5977
      %5979 = vmatmul.bf16.gmra.mxu0 %v5703
      %v5980 = vpop.f32.mrf.mxu0
      %v5981 = vadd.f32 0.0, %v5980
      %v5982 = vpop.f32.mrf.mxu0
      %v5983 = vadd.f32 0.0, %v5982
      %5984 = vmatmul.bf16.gmra.mxu0 %v5706
      %v5985 = vpop.f32.mrf.mxu0
      %v5986 = vadd.f32 0.0, %v5985
      %v5987 = vpop.f32.mrf.mxu0
      %v5988 = vadd.f32 0.0, %v5987
      %5989 = vmatmul.bf16.gmra.mxu0 %v5709
      %v5990 = vpop.f32.mrf.mxu0
      %v5991 = vadd.f32 0.0, %v5990
      %v5992 = vpop.f32.mrf.mxu0
      %v5993 = vadd.f32 0.0, %v5992
      %5994 = vmatmul.bf16.gmra.mxu0 %v5712
      %v5995 = vpop.f32.mrf.mxu0
      %v5996 = vadd.f32 0.0, %v5995
      %v5997 = vpop.f32.mrf.mxu0
      %v5998 = vadd.f32 0.0, %v5997
      %5999 = vmatmul.bf16.gmra.mxu0 %v5715
      %v6000 = vpop.f32.mrf.mxu0
      %v6001 = vadd.f32 0.0, %v6000
      %v6002 = vpop.f32.mrf.mxu0
      %v6003 = vadd.f32 0.0, %v6002
      %6004 = vmatmul.bf16.gmra.mxu0 %v5718
      %v6005 = vpop.f32.mrf.mxu0
      %v6006 = vadd.f32 0.0, %v6005
      %v6007 = vpop.f32.mrf.mxu0
      %v6008 = vadd.f32 0.0, %v6007
      %6009 = vmatmul.bf16.gmra.mxu0 %v5961
      %v6010 = vpop.f32.mrf.mxu0
      %v6011 = vadd.f32 0.0, %v6010
      %v6012 = vpop.f32.mrf.mxu0
      %v6013 = vadd.f32 0.0, %v6012
      %6014 = vdwg.mxu0
      %v6015 = vadd.f32 %v5939, %v5976
      %v6016 = vadd.f32 %v5940, %v5978
      %v6017 = vadd.f32 %v5941, %v5981
      %v6018 = vadd.f32 %v5942, %v5983
      %v6019 = vadd.f32 %v5943, %v5986
      %v6020 = vadd.f32 %v5944, %v5988
      %v6021 = vadd.f32 %v5945, %v5991
      %v6022 = vadd.f32 %v5946, %v5993
      %v6023 = vadd.f32 %v5947, %v5996
      %v6024 = vadd.f32 %v5948, %v5998
      %v6025 = vadd.f32 %v5949, %v6001
      %v6026 = vadd.f32 %v5950, %v6003
      %v6027 = vadd.f32 %v5951, %v6006
      %v6028 = vadd.f32 %v5952, %v6008
      %v6029 = vadd.f32 %v5953, %v6011
      %v6030 = vadd.f32 %v5954, %v6013
      %v6032 = vshrl.u32 %v5355, 16
      %v6034 = vrot.slane %v6032, 4
      %v6035 = vshll.u32 %v5355, 16
      %v6037 = vrot.slane %v6035, 5
      %v6038 = vor.u32 %v6034, %v6037
      %v6039 = vrot.slane %v6038, 4
      %v6041 = vshll.u32 %v5356, 16
      %v6043 = vrot.slane %v6041, 5
      %v6044 = vsel %vm5363, %v6039, %v6043
      %v6045 = vshrl.u32 %v5356, 16
      %v6047 = vrot.slane %v6045, 4
      %v6048 = vor.u32 %v6047, %v6043
      %v6049 = vrot.slane %v6048, 4
      %v6051 = vshll.u32 %v5357, 16
      %v6053 = vrot.slane %v6051, 5
      %v6054 = vsel %vm5363, %v6049, %v6053
      %v6055 = vunpack.c.l.b16 %v6044
      %v6056 = vunpack.c.l.b16 %v6054
      %v6057 = vpack.c.b16 %v6056, %v6055
      %v6059 = vsel %vm1943, %v6057, 0
      %v6062 = vsel %vm522, %v5325, 0
      %6064 = vmatpush.bf16.msra.mxu0 0
      %6065 = vmatpush.bf16.msra.mxu0 0
      %6066 = vmatpush.bf16.msra.mxu0 0
      %6067 = vmatpush.bf16.msra.mxu0 0
      %6068 = vmatpush.bf16.msra.mxu0 0
      %6069 = vmatpush.bf16.msra.mxu0 0
      %6070 = vmatpush.bf16.msra.mxu0 0
      %6071 = vmatpush.bf16.msra.mxu0 %v6062
      %6072 = vmatmul.bf16.gmra.mxu0 %v5584
      %v6073 = vpop.f32.mrf.mxu0
      %v6074 = vadd.f32 0.0, %v6073
      %v6075 = vpop.f32.mrf.mxu0
      %v6076 = vadd.f32 0.0, %v6075
      %6077 = vmatmul.bf16.gmra.mxu0 %v5587
      %v6078 = vpop.f32.mrf.mxu0
      %v6079 = vadd.f32 0.0, %v6078
      %v6080 = vpop.f32.mrf.mxu0
      %v6081 = vadd.f32 0.0, %v6080
      %6082 = vmatmul.bf16.gmra.mxu0 %v5590
      %v6083 = vpop.f32.mrf.mxu0
      %v6084 = vadd.f32 0.0, %v6083
      %v6085 = vpop.f32.mrf.mxu0
      %v6086 = vadd.f32 0.0, %v6085
      %6087 = vmatmul.bf16.gmra.mxu0 %v5593
      %v6088 = vpop.f32.mrf.mxu0
      %v6089 = vadd.f32 0.0, %v6088
      %v6090 = vpop.f32.mrf.mxu0
      %v6091 = vadd.f32 0.0, %v6090
      %6092 = vmatmul.bf16.gmra.mxu0 %v5596
      %v6093 = vpop.f32.mrf.mxu0
      %v6094 = vadd.f32 0.0, %v6093
      %v6095 = vpop.f32.mrf.mxu0
      %v6096 = vadd.f32 0.0, %v6095
      %6097 = vmatmul.bf16.gmra.mxu0 %v5599
      %v6098 = vpop.f32.mrf.mxu0
      %v6099 = vadd.f32 0.0, %v6098
      %v6100 = vpop.f32.mrf.mxu0
      %v6101 = vadd.f32 0.0, %v6100
      %6102 = vmatmul.bf16.gmra.mxu0 %v5602
      %v6103 = vpop.f32.mrf.mxu0
      %v6104 = vadd.f32 0.0, %v6103
      %v6105 = vpop.f32.mrf.mxu0
      %v6106 = vadd.f32 0.0, %v6105
      %6107 = vmatmul.bf16.gmra.mxu0 %v6059
      %v6108 = vpop.f32.mrf.mxu0
      %v6109 = vadd.f32 0.0, %v6108
      %v6110 = vpop.f32.mrf.mxu0
      %v6111 = vadd.f32 0.0, %v6110
      %6112 = vdwg.mxu0
      %v6113 = vadd.f32 %v6015, %v6074
      %v6114 = vadd.f32 %v6016, %v6076
      %v6115 = vadd.f32 %v6017, %v6079
      %v6116 = vadd.f32 %v6018, %v6081
      %v6117 = vadd.f32 %v6019, %v6084
      %v6118 = vadd.f32 %v6020, %v6086
      %v6119 = vadd.f32 %v6021, %v6089
      %v6120 = vadd.f32 %v6022, %v6091
      %v6121 = vadd.f32 %v6023, %v6094
      %v6122 = vadd.f32 %v6024, %v6096
      %v6123 = vadd.f32 %v6025, %v6099
      %v6124 = vadd.f32 %v6026, %v6101
      %v6125 = vadd.f32 %v6027, %v6104
      %v6126 = vadd.f32 %v6028, %v6106
      %v6127 = vadd.f32 %v6029, %v6109
      %v6128 = vadd.f32 %v6030, %v6111
      %v6130 = vrot.slane %v5355, 5
      %v6131 = vrot.slane %v6130, 4
      %v6132 = vrot.slane %v5356, 5
      %v6133 = vsel %vm5782, %v6131, %v6132
      %v6134 = vrot.slane %v6132, 4
      %v6135 = vrot.slane %v5357, 5
      %v6136 = vsel %vm5782, %v6134, %v6135
      %v6137 = vunpack.c.l.b16 %v6133
      %v6138 = vunpack.c.l.b16 %v6136
      %v6139 = vpack.c.b16 %v6138, %v6137
      %v6141 = vsel %vm1943, %v6139, 0
      %v6144 = vsel %vm522, %v5326, 0
      %6146 = vmatpush.bf16.msra.mxu0 0
      %6147 = vmatpush.bf16.msra.mxu0 0
      %6148 = vmatpush.bf16.msra.mxu0 0
      %6149 = vmatpush.bf16.msra.mxu0 0
      %6150 = vmatpush.bf16.msra.mxu0 0
      %6151 = vmatpush.bf16.msra.mxu0 0
      %6152 = vmatpush.bf16.msra.mxu0 0
      %6153 = vmatpush.bf16.msra.mxu0 %v6144
      %6154 = vmatmul.bf16.gmra.mxu0 %v5867
      %v6155 = vpop.f32.mrf.mxu0
      %v6156 = vadd.f32 0.0, %v6155
      %v6157 = vpop.f32.mrf.mxu0
      %v6158 = vadd.f32 0.0, %v6157
      %6159 = vmatmul.bf16.gmra.mxu0 %v5870
      %v6160 = vpop.f32.mrf.mxu0
      %v6161 = vadd.f32 0.0, %v6160
      %v6162 = vpop.f32.mrf.mxu0
      %v6163 = vadd.f32 0.0, %v6162
      %6164 = vmatmul.bf16.gmra.mxu0 %v5873
      %v6165 = vpop.f32.mrf.mxu0
      %v6166 = vadd.f32 0.0, %v6165
      %v6167 = vpop.f32.mrf.mxu0
      %v6168 = vadd.f32 0.0, %v6167
      %6169 = vmatmul.bf16.gmra.mxu0 %v5876
      %v6170 = vpop.f32.mrf.mxu0
      %v6171 = vadd.f32 0.0, %v6170
      %v6172 = vpop.f32.mrf.mxu0
      %v6173 = vadd.f32 0.0, %v6172
      %6174 = vmatmul.bf16.gmra.mxu0 %v5879
      %v6175 = vpop.f32.mrf.mxu0
      %v6176 = vadd.f32 0.0, %v6175
      %v6177 = vpop.f32.mrf.mxu0
      %v6178 = vadd.f32 0.0, %v6177
      %6179 = vmatmul.bf16.gmra.mxu0 %v5882
      %v6180 = vpop.f32.mrf.mxu0
      %v6181 = vadd.f32 0.0, %v6180
      %v6182 = vpop.f32.mrf.mxu0
      %v6183 = vadd.f32 0.0, %v6182
      %6184 = vmatmul.bf16.gmra.mxu0 %v5885
      %v6185 = vpop.f32.mrf.mxu0
      %v6186 = vadd.f32 0.0, %v6185
      %v6187 = vpop.f32.mrf.mxu0
      %v6188 = vadd.f32 0.0, %v6187
      %6189 = vmatmul.bf16.gmra.mxu0 %v6141
      %v6190 = vpop.f32.mrf.mxu0
      %v6191 = vadd.f32 0.0, %v6190
      %v6192 = vpop.f32.mrf.mxu0
      %v6193 = vadd.f32 0.0, %v6192
      %6194 = vdwg.mxu0
      %v6195 = vadd.f32 %v6113, %v6156
      %v6196 = vadd.f32 %v6114, %v6158
      %v6197 = vadd.f32 %v6115, %v6161
      %v6198 = vadd.f32 %v6116, %v6163
      %v6199 = vadd.f32 %v6117, %v6166
      %v6200 = vadd.f32 %v6118, %v6168
      %v6201 = vadd.f32 %v6119, %v6171
      %v6202 = vadd.f32 %v6120, %v6173
      %v6203 = vadd.f32 %v6121, %v6176
      %v6204 = vadd.f32 %v6122, %v6178
      %v6205 = vadd.f32 %v6123, %v6181
      %v6206 = vadd.f32 %v6124, %v6183
      %v6207 = vadd.f32 %v6125, %v6186
      %v6208 = vadd.f32 %v6126, %v6188
      %v6209 = vadd.f32 %v6127, %v6191
      %v6210 = vadd.f32 %v6128, %v6193
      %v6213 = vunpack.c.l.b16 %v5358
      %v6214 = vunpack.c.l.b16 %v5359
      %v6215 = vpack.c.b16 %v6214, %v6213
      %v6217 = vsel %vm1943, %v6215, 0
      %v6220 = vsel %vm522, %v5327, 0
      %6222 = vmatpush.bf16.msra.mxu0 0
      %6223 = vmatpush.bf16.msra.mxu0 0
      %6224 = vmatpush.bf16.msra.mxu0 0
      %6225 = vmatpush.bf16.msra.mxu0 0
      %6226 = vmatpush.bf16.msra.mxu0 0
      %6227 = vmatpush.bf16.msra.mxu0 0
      %6228 = vmatpush.bf16.msra.mxu0 0
      %6229 = vmatpush.bf16.msra.mxu0 %v6220
      %6230 = vmatmul.bf16.gmra.mxu0 %v5703
      %v6231 = vpop.f32.mrf.mxu0
      %v6232 = vadd.f32 0.0, %v6231
      %v6233 = vpop.f32.mrf.mxu0
      %v6234 = vadd.f32 0.0, %v6233
      %6235 = vmatmul.bf16.gmra.mxu0 %v5706
      %v6236 = vpop.f32.mrf.mxu0
      %v6237 = vadd.f32 0.0, %v6236
      %v6238 = vpop.f32.mrf.mxu0
      %v6239 = vadd.f32 0.0, %v6238
      %6240 = vmatmul.bf16.gmra.mxu0 %v5709
      %v6241 = vpop.f32.mrf.mxu0
      %v6242 = vadd.f32 0.0, %v6241
      %v6243 = vpop.f32.mrf.mxu0
      %v6244 = vadd.f32 0.0, %v6243
      %6245 = vmatmul.bf16.gmra.mxu0 %v5712
      %v6246 = vpop.f32.mrf.mxu0
      %v6247 = vadd.f32 0.0, %v6246
      %v6248 = vpop.f32.mrf.mxu0
      %v6249 = vadd.f32 0.0, %v6248
      %6250 = vmatmul.bf16.gmra.mxu0 %v5715
      %v6251 = vpop.f32.mrf.mxu0
      %v6252 = vadd.f32 0.0, %v6251
      %v6253 = vpop.f32.mrf.mxu0
      %v6254 = vadd.f32 0.0, %v6253
      %6255 = vmatmul.bf16.gmra.mxu0 %v5718
      %v6256 = vpop.f32.mrf.mxu0
      %v6257 = vadd.f32 0.0, %v6256
      %v6258 = vpop.f32.mrf.mxu0
      %v6259 = vadd.f32 0.0, %v6258
      %6260 = vmatmul.bf16.gmra.mxu0 %v5961
      %v6261 = vpop.f32.mrf.mxu0
      %v6262 = vadd.f32 0.0, %v6261
      %v6263 = vpop.f32.mrf.mxu0
      %v6264 = vadd.f32 0.0, %v6263
      %6265 = vmatmul.bf16.gmra.mxu0 %v6217
      %v6266 = vpop.f32.mrf.mxu0
      %v6267 = vadd.f32 0.0, %v6266
      %v6268 = vpop.f32.mrf.mxu0
      %v6269 = vadd.f32 0.0, %v6268
      %6270 = vdwg.mxu0
      %v6271 = vadd.f32 %v6195, %v6232
      %v6272 = vadd.f32 %v6196, %v6234
      %v6273 = vadd.f32 %v6197, %v6237
      %v6274 = vadd.f32 %v6198, %v6239
      %v6275 = vadd.f32 %v6199, %v6242
      %v6276 = vadd.f32 %v6200, %v6244
      %v6277 = vadd.f32 %v6201, %v6247
      %v6278 = vadd.f32 %v6202, %v6249
      %v6279 = vadd.f32 %v6203, %v6252
      %v6280 = vadd.f32 %v6204, %v6254
      %v6281 = vadd.f32 %v6205, %v6257
      %v6282 = vadd.f32 %v6206, %v6259
      %v6283 = vadd.f32 %v6207, %v6262
      %v6284 = vadd.f32 %v6208, %v6264
      %v6285 = vadd.f32 %v6209, %v6267
      %v6286 = vadd.f32 %v6210, %v6269
      %v6288 = vshrl.u32 %v5358, 16
      %v6290 = vrot.slane %v6288, 4
      %v6291 = vshll.u32 %v5358, 16
      %v6293 = vrot.slane %v6291, 5
      %v6294 = vor.u32 %v6290, %v6293
      %v6295 = vrot.slane %v6294, 4
      %v6297 = vshll.u32 %v5359, 16
      %v6299 = vrot.slane %v6297, 5
      %v6300 = vsel %vm5363, %v6295, %v6299
      %v6301 = vshrl.u32 %v5359, 16
      %v6303 = vrot.slane %v6301, 4
      %v6304 = vor.u32 %v6303, %v6299
      %v6305 = vrot.slane %v6304, 4
      %v6307 = vshll.u32 %v5360, 16
      %v6309 = vrot.slane %v6307, 5
      %v6310 = vsel %vm5363, %v6305, %v6309
      %v6311 = vunpack.c.l.b16 %v6300
      %v6312 = vunpack.c.l.b16 %v6310
      %v6313 = vpack.c.b16 %v6312, %v6311
      %v6315 = vsel %vm1943, %v6313, 0
      %v6318 = vsel %vm522, %v5328, 0
      %6320 = vmatpush.bf16.msra.mxu0 0
      %6321 = vmatpush.bf16.msra.mxu0 0
      %6322 = vmatpush.bf16.msra.mxu0 0
      %6323 = vmatpush.bf16.msra.mxu0 0
      %6324 = vmatpush.bf16.msra.mxu0 0
      %6325 = vmatpush.bf16.msra.mxu0 0
      %6326 = vmatpush.bf16.msra.mxu0 0
      %6327 = vmatpush.bf16.msra.mxu0 %v6318
      %6328 = vmatmul.bf16.gmra.mxu0 %v5587
      %v6329 = vpop.f32.mrf.mxu0
      %v6330 = vadd.f32 0.0, %v6329
      %v6331 = vpop.f32.mrf.mxu0
      %v6332 = vadd.f32 0.0, %v6331
      %6333 = vmatmul.bf16.gmra.mxu0 %v5590
      %v6334 = vpop.f32.mrf.mxu0
      %v6335 = vadd.f32 0.0, %v6334
      %v6336 = vpop.f32.mrf.mxu0
      %v6337 = vadd.f32 0.0, %v6336
      %6338 = vmatmul.bf16.gmra.mxu0 %v5593
      %v6339 = vpop.f32.mrf.mxu0
      %v6340 = vadd.f32 0.0, %v6339
      %v6341 = vpop.f32.mrf.mxu0
      %v6342 = vadd.f32 0.0, %v6341
      %6343 = vmatmul.bf16.gmra.mxu0 %v5596
      %v6344 = vpop.f32.mrf.mxu0
      %v6345 = vadd.f32 0.0, %v6344
      %v6346 = vpop.f32.mrf.mxu0
      %v6347 = vadd.f32 0.0, %v6346
      %6348 = vmatmul.bf16.gmra.mxu0 %v5599
      %v6349 = vpop.f32.mrf.mxu0
      %v6350 = vadd.f32 0.0, %v6349
      %v6351 = vpop.f32.mrf.mxu0
      %v6352 = vadd.f32 0.0, %v6351
      %6353 = vmatmul.bf16.gmra.mxu0 %v5602
      %v6354 = vpop.f32.mrf.mxu0
      %v6355 = vadd.f32 0.0, %v6354
      %v6356 = vpop.f32.mrf.mxu0
      %v6357 = vadd.f32 0.0, %v6356
      %6358 = vmatmul.bf16.gmra.mxu0 %v6059
      %v6359 = vpop.f32.mrf.mxu0
      %v6360 = vadd.f32 0.0, %v6359
      %v6361 = vpop.f32.mrf.mxu0
      %v6362 = vadd.f32 0.0, %v6361
      %6363 = vmatmul.bf16.gmra.mxu0 %v6315
      %v6364 = vpop.f32.mrf.mxu0
      %v6365 = vadd.f32 0.0, %v6364
      %v6366 = vpop.f32.mrf.mxu0
      %v6367 = vadd.f32 0.0, %v6366
      %6368 = vdwg.mxu0
      %v6369 = vadd.f32 %v6271, %v6330
      %v6370 = vadd.f32 %v6272, %v6332
      %v6371 = vadd.f32 %v6273, %v6335
      %v6372 = vadd.f32 %v6274, %v6337
      %v6373 = vadd.f32 %v6275, %v6340
      %v6374 = vadd.f32 %v6276, %v6342
      %v6375 = vadd.f32 %v6277, %v6345
      %v6376 = vadd.f32 %v6278, %v6347
      %v6377 = vadd.f32 %v6279, %v6350
      %v6378 = vadd.f32 %v6280, %v6352
      %v6379 = vadd.f32 %v6281, %v6355
      %v6380 = vadd.f32 %v6282, %v6357
      %v6381 = vadd.f32 %v6283, %v6360
      %v6382 = vadd.f32 %v6284, %v6362
      %v6383 = vadd.f32 %v6285, %v6365
      %v6384 = vadd.f32 %v6286, %v6367
      %v6386 = vrot.slane %v5358, 5
      %v6387 = vrot.slane %v6386, 4
      %v6388 = vrot.slane %v5359, 5
      %v6389 = vsel %vm5782, %v6387, %v6388
      %v6390 = vrot.slane %v6388, 4
      %v6391 = vrot.slane %v5360, 5
      %v6392 = vsel %vm5782, %v6390, %v6391
      %v6393 = vunpack.c.l.b16 %v6389
      %v6394 = vunpack.c.l.b16 %v6392
      %v6395 = vpack.c.b16 %v6394, %v6393
      %v6397 = vsel %vm1943, %v6395, 0
      %v6400 = vsel %vm522, %v5329, 0
      %6402 = vmatpush.bf16.msra.mxu0 0
      %6403 = vmatpush.bf16.msra.mxu0 0
      %6404 = vmatpush.bf16.msra.mxu0 0
      %6405 = vmatpush.bf16.msra.mxu0 0
      %6406 = vmatpush.bf16.msra.mxu0 0
      %6407 = vmatpush.bf16.msra.mxu0 0
      %6408 = vmatpush.bf16.msra.mxu0 0
      %6409 = vmatpush.bf16.msra.mxu0 %v6400
      %6410 = vmatmul.bf16.gmra.mxu0 %v5870
      %v6411 = vpop.f32.mrf.mxu0
      %v6412 = vadd.f32 0.0, %v6411
      %v6413 = vpop.f32.mrf.mxu0
      %v6414 = vadd.f32 0.0, %v6413
      %6415 = vmatmul.bf16.gmra.mxu0 %v5873
      %v6416 = vpop.f32.mrf.mxu0
      %v6417 = vadd.f32 0.0, %v6416
      %v6418 = vpop.f32.mrf.mxu0
      %v6419 = vadd.f32 0.0, %v6418
      %6420 = vmatmul.bf16.gmra.mxu0 %v5876
      %v6421 = vpop.f32.mrf.mxu0
      %v6422 = vadd.f32 0.0, %v6421
      %v6423 = vpop.f32.mrf.mxu0
      %v6424 = vadd.f32 0.0, %v6423
      %6425 = vmatmul.bf16.gmra.mxu0 %v5879
      %v6426 = vpop.f32.mrf.mxu0
      %v6427 = vadd.f32 0.0, %v6426
      %v6428 = vpop.f32.mrf.mxu0
      %v6429 = vadd.f32 0.0, %v6428
      %6430 = vmatmul.bf16.gmra.mxu0 %v5882
      %v6431 = vpop.f32.mrf.mxu0
      %v6432 = vadd.f32 0.0, %v6431
      %v6433 = vpop.f32.mrf.mxu0
      %v6434 = vadd.f32 0.0, %v6433
      %6435 = vmatmul.bf16.gmra.mxu0 %v5885
      %v6436 = vpop.f32.mrf.mxu0
      %v6437 = vadd.f32 0.0, %v6436
      %v6438 = vpop.f32.mrf.mxu0
      %v6439 = vadd.f32 0.0, %v6438
      %6440 = vmatmul.bf16.gmra.mxu0 %v6141
      %v6441 = vpop.f32.mrf.mxu0
      %v6442 = vadd.f32 0.0, %v6441
      %v6443 = vpop.f32.mrf.mxu0
      %v6444 = vadd.f32 0.0, %v6443
      %6445 = vmatmul.bf16.gmra.mxu0 %v6397
      %v6446 = vpop.f32.mrf.mxu0
      %v6447 = vadd.f32 0.0, %v6446
      %v6448 = vpop.f32.mrf.mxu0
      %v6449 = vadd.f32 0.0, %v6448
      %6450 = vdwg.mxu0
      %v6451 = vadd.f32 %v6369, %v6412
      %v6452 = vadd.f32 %v6370, %v6414
      %v6453 = vadd.f32 %v6371, %v6417
      %v6454 = vadd.f32 %v6372, %v6419
      %v6455 = vadd.f32 %v6373, %v6422
      %v6456 = vadd.f32 %v6374, %v6424
      %v6457 = vadd.f32 %v6375, %v6427
      %v6458 = vadd.f32 %v6376, %v6429
      %v6459 = vadd.f32 %v6377, %v6432
      %v6460 = vadd.f32 %v6378, %v6434
      %v6461 = vadd.f32 %v6379, %v6437
      %v6462 = vadd.f32 %v6380, %v6439
      %v6463 = vadd.f32 %v6381, %v6442
      %v6464 = vadd.f32 %v6382, %v6444
      %v6465 = vadd.f32 %v6383, %v6447
      %v6466 = vadd.f32 %v6384, %v6449
      %v6468 = vperm.slane %v5330, 0
      %v6470 = vadd.f32 %v6451, %v6468
      %v6471 = vadd.f32 %v6452, %v6468
      %v6472 = vadd.f32 %v6453, %v6468
      %v6473 = vadd.f32 %v6454, %v6468
      %v6474 = vadd.f32 %v6455, %v6468
      %v6475 = vadd.f32 %v6456, %v6468
      %v6476 = vadd.f32 %v6457, %v6468
      %v6477 = vadd.f32 %v6458, %v6468
      %v6478 = vadd.f32 %v6459, %v6468
      %v6479 = vadd.f32 %v6460, %v6468
      %v6480 = vadd.f32 %v6461, %v6468
      %v6481 = vadd.f32 %v6462, %v6468
      %v6482 = vadd.f32 %v6463, %v6468
      %v6483 = vadd.f32 %v6464, %v6468
      %v6484 = vadd.f32 %v6465, %v6468
      %v6485 = vadd.f32 %v6466, %v6468
      %v6486 = vxor.u32 %v6470, 2147483648
      %v6487 = vxor.u32 %v6471, 2147483648
      %v6488 = vxor.u32 %v6472, 2147483648
      %v6489 = vxor.u32 %v6473, 2147483648
      %v6490 = vxor.u32 %v6474, 2147483648
      %v6491 = vxor.u32 %v6475, 2147483648
      %v6492 = vxor.u32 %v6476, 2147483648
      %v6493 = vxor.u32 %v6477, 2147483648
      %v6494 = vxor.u32 %v6478, 2147483648
      %v6495 = vxor.u32 %v6479, 2147483648
      %v6496 = vxor.u32 %v6480, 2147483648
      %v6497 = vxor.u32 %v6481, 2147483648
      %v6498 = vxor.u32 %v6482, 2147483648
      %v6499 = vxor.u32 %v6483, 2147483648
      %v6500 = vxor.u32 %v6484, 2147483648
      %v6501 = vxor.u32 %v6485, 2147483648
      %v6502 = vmul.f32 %v6486, 1.442695
      %v6503 = vpow.pop %v6502
      %v6504 = vmul.f32 %v6487, 1.442695
      %v6505 = vpow.pop %v6504
      %v6506 = vmul.f32 %v6488, 1.442695
      %v6507 = vpow.pop %v6506
      %v6508 = vmul.f32 %v6489, 1.442695
      %v6509 = vpow.pop %v6508
      %v6510 = vmul.f32 %v6490, 1.442695
      %v6511 = vpow.pop %v6510
      %v6512 = vmul.f32 %v6491, 1.442695
      %v6513 = vpow.pop %v6512
      %v6514 = vmul.f32 %v6492, 1.442695
      %v6515 = vpow.pop %v6514
      %v6516 = vmul.f32 %v6493, 1.442695
      %v6517 = vpow.pop %v6516
      %v6518 = vmul.f32 %v6494, 1.442695
      %v6519 = vpow.pop %v6518
      %v6520 = vmul.f32 %v6495, 1.442695
      %v6521 = vpow.pop %v6520
      %v6522 = vmul.f32 %v6496, 1.442695
      %v6523 = vpow.pop %v6522
      %v6524 = vmul.f32 %v6497, 1.442695
      %v6525 = vpow.pop %v6524
      %v6526 = vmul.f32 %v6498, 1.442695
      %v6527 = vpow.pop %v6526
      %v6528 = vmul.f32 %v6499, 1.442695
      %v6529 = vpow.pop %v6528
      %v6530 = vmul.f32 %v6500, 1.442695
      %v6531 = vpow.pop %v6530
      %v6532 = vmul.f32 %v6501, 1.442695
      %v6533 = vpow.pop %v6532
      %v6534 = vadd.f32 %v6503, 1.0
      %v6535 = vadd.f32 %v6505, 1.0
      %v6536 = vadd.f32 %v6507, 1.0
      %v6537 = vadd.f32 %v6509, 1.0
      %v6538 = vadd.f32 %v6511, 1.0
      %v6539 = vadd.f32 %v6513, 1.0
      %v6540 = vadd.f32 %v6515, 1.0
      %v6541 = vadd.f32 %v6517, 1.0
      %v6542 = vadd.f32 %v6519, 1.0
      %v6543 = vadd.f32 %v6521, 1.0
      %v6544 = vadd.f32 %v6523, 1.0
      %v6545 = vadd.f32 %v6525, 1.0
      %v6546 = vadd.f32 %v6527, 1.0
      %v6547 = vadd.f32 %v6529, 1.0
      %v6548 = vadd.f32 %v6531, 1.0
      %v6549 = vadd.f32 %v6533, 1.0
      %v6550 = vrcp.pop %v6534
      %v6551 = vmul.f32 %v6534, %v6550
      %v6552 = vsub.f32 1.0, %v6551
      %v6553 = vmul.f32 %v6550, %v6552
      %v6554 = vadd.f32 %v6550, %v6553
      %vm6555 = vweird.f32 %v6534
      %vm6556 = vweird.f32 %v6550
      %vm6557 = vmor %vm6555, %vm6556
      %v6558 = vsel %vm6557, %v6550, %v6554
      %v6559 = vand.u32 2147483647, %v6534
      %vm6560 = vcmp.eq.f32.partialorder %v6559, 8.507059e+37
      %v6561 = vand.u32 %v6534, 2147483648
      %v6562 = vor.u32 1.1754944e-38, %v6561
      %v6563 = vsel %vm6560, %v6562, %v6558
      %v6564 = vmul.f32 1.0, %v6563
      %v6565 = vrcp.pop %v6535
      %v6566 = vmul.f32 %v6535, %v6565
      %v6567 = vsub.f32 1.0, %v6566
      %v6568 = vmul.f32 %v6565, %v6567
      %v6569 = vadd.f32 %v6565, %v6568
      %vm6570 = vweird.f32 %v6535
      %vm6571 = vweird.f32 %v6565
      %vm6572 = vmor %vm6570, %vm6571
      %v6573 = vsel %vm6572, %v6565, %v6569
      %v6574 = vand.u32 2147483647, %v6535
      %vm6575 = vcmp.eq.f32.partialorder %v6574, 8.507059e+37
      %v6576 = vand.u32 %v6535, 2147483648
      %v6577 = vor.u32 1.1754944e-38, %v6576
      %v6578 = vsel %vm6575, %v6577, %v6573
      %v6579 = vmul.f32 1.0, %v6578
      %v6580 = vrcp.pop %v6536
      %v6581 = vmul.f32 %v6536, %v6580
      %v6582 = vsub.f32 1.0, %v6581
      %v6583 = vmul.f32 %v6580, %v6582
      %v6584 = vadd.f32 %v6580, %v6583
      %vm6585 = vweird.f32 %v6536
      %vm6586 = vweird.f32 %v6580
      %vm6587 = vmor %vm6585, %vm6586
      %v6588 = vsel %vm6587, %v6580, %v6584
      %v6589 = vand.u32 2147483647, %v6536
      %vm6590 = vcmp.eq.f32.partialorder %v6589, 8.507059e+37
      %v6591 = vand.u32 %v6536, 2147483648
      %v6592 = vor.u32 1.1754944e-38, %v6591
      %v6593 = vsel %vm6590, %v6592, %v6588
      %v6594 = vmul.f32 1.0, %v6593
      %v6595 = vrcp.pop %v6537
      %v6596 = vmul.f32 %v6537, %v6595
      %v6597 = vsub.f32 1.0, %v6596
      %v6598 = vmul.f32 %v6595, %v6597
      %v6599 = vadd.f32 %v6595, %v6598
      %vm6600 = vweird.f32 %v6537
      %vm6601 = vweird.f32 %v6595
      %vm6602 = vmor %vm6600, %vm6601
      %v6603 = vsel %vm6602, %v6595, %v6599
      %v6604 = vand.u32 2147483647, %v6537
      %vm6605 = vcmp.eq.f32.partialorder %v6604, 8.507059e+37
      %v6606 = vand.u32 %v6537, 2147483648
      %v6607 = vor.u32 1.1754944e-38, %v6606
      %v6608 = vsel %vm6605, %v6607, %v6603
      %v6609 = vmul.f32 1.0, %v6608
      %v6610 = vrcp.pop %v6538
      %v6611 = vmul.f32 %v6538, %v6610
      %v6612 = vsub.f32 1.0, %v6611
      %v6613 = vmul.f32 %v6610, %v6612
      %v6614 = vadd.f32 %v6610, %v6613
      %vm6615 = vweird.f32 %v6538
      %vm6616 = vweird.f32 %v6610
      %vm6617 = vmor %vm6615, %vm6616
      %v6618 = vsel %vm6617, %v6610, %v6614
      %v6619 = vand.u32 2147483647, %v6538
      %vm6620 = vcmp.eq.f32.partialorder %v6619, 8.507059e+37
      %v6621 = vand.u32 %v6538, 2147483648
      %v6622 = vor.u32 1.1754944e-38, %v6621
      %v6623 = vsel %vm6620, %v6622, %v6618
      %v6624 = vmul.f32 1.0, %v6623
      %v6625 = vrcp.pop %v6539
      %v6626 = vmul.f32 %v6539, %v6625
      %v6627 = vsub.f32 1.0, %v6626
      %v6628 = vmul.f32 %v6625, %v6627
      %v6629 = vadd.f32 %v6625, %v6628
      %vm6630 = vweird.f32 %v6539
      %vm6631 = vweird.f32 %v6625
      %vm6632 = vmor %vm6630, %vm6631
      %v6633 = vsel %vm6632, %v6625, %v6629
      %v6634 = vand.u32 2147483647, %v6539
      %vm6635 = vcmp.eq.f32.partialorder %v6634, 8.507059e+37
      %v6636 = vand.u32 %v6539, 2147483648
      %v6637 = vor.u32 1.1754944e-38, %v6636
      %v6638 = vsel %vm6635, %v6637, %v6633
      %v6639 = vmul.f32 1.0, %v6638
      %v6640 = vrcp.pop %v6540
      %v6641 = vmul.f32 %v6540, %v6640
      %v6642 = vsub.f32 1.0, %v6641
      %v6643 = vmul.f32 %v6640, %v6642
      %v6644 = vadd.f32 %v6640, %v6643
      %vm6645 = vweird.f32 %v6540
      %vm6646 = vweird.f32 %v6640
      %vm6647 = vmor %vm6645, %vm6646
      %v6648 = vsel %vm6647, %v6640, %v6644
      %v6649 = vand.u32 2147483647, %v6540
      %vm6650 = vcmp.eq.f32.partialorder %v6649, 8.507059e+37
      %v6651 = vand.u32 %v6540, 2147483648
      %v6652 = vor.u32 1.1754944e-38, %v6651
      %v6653 = vsel %vm6650, %v6652, %v6648
      %v6654 = vmul.f32 1.0, %v6653
      %v6655 = vrcp.pop %v6541
      %v6656 = vmul.f32 %v6541, %v6655
      %v6657 = vsub.f32 1.0, %v6656
      %v6658 = vmul.f32 %v6655, %v6657
      %v6659 = vadd.f32 %v6655, %v6658
      %vm6660 = vweird.f32 %v6541
      %vm6661 = vweird.f32 %v6655
      %vm6662 = vmor %vm6660, %vm6661
      %v6663 = vsel %vm6662, %v6655, %v6659
      %v6664 = vand.u32 2147483647, %v6541
      %vm6665 = vcmp.eq.f32.partialorder %v6664, 8.507059e+37
      %v6666 = vand.u32 %v6541, 2147483648
      %v6667 = vor.u32 1.1754944e-38, %v6666
      %v6668 = vsel %vm6665, %v6667, %v6663
      %v6669 = vmul.f32 1.0, %v6668
      %v6670 = vrcp.pop %v6542
      %v6671 = vmul.f32 %v6542, %v6670
      %v6672 = vsub.f32 1.0, %v6671
      %v6673 = vmul.f32 %v6670, %v6672
      %v6674 = vadd.f32 %v6670, %v6673
      %vm6675 = vweird.f32 %v6542
      %vm6676 = vweird.f32 %v6670
      %vm6677 = vmor %vm6675, %vm6676
      %v6678 = vsel %vm6677, %v6670, %v6674
      %v6679 = vand.u32 2147483647, %v6542
      %vm6680 = vcmp.eq.f32.partialorder %v6679, 8.507059e+37
      %v6681 = vand.u32 %v6542, 2147483648
      %v6682 = vor.u32 1.1754944e-38, %v6681
      %v6683 = vsel %vm6680, %v6682, %v6678
      %v6684 = vmul.f32 1.0, %v6683
      %v6685 = vrcp.pop %v6543
      %v6686 = vmul.f32 %v6543, %v6685
      %v6687 = vsub.f32 1.0, %v6686
      %v6688 = vmul.f32 %v6685, %v6687
      %v6689 = vadd.f32 %v6685, %v6688
      %vm6690 = vweird.f32 %v6543
      %vm6691 = vweird.f32 %v6685
      %vm6692 = vmor %vm6690, %vm6691
      %v6693 = vsel %vm6692, %v6685, %v6689
      %v6694 = vand.u32 2147483647, %v6543
      %vm6695 = vcmp.eq.f32.partialorder %v6694, 8.507059e+37
      %v6696 = vand.u32 %v6543, 2147483648
      %v6697 = vor.u32 1.1754944e-38, %v6696
      %v6698 = vsel %vm6695, %v6697, %v6693
      %v6699 = vmul.f32 1.0, %v6698
      %v6700 = vrcp.pop %v6544
      %v6701 = vmul.f32 %v6544, %v6700
      %v6702 = vsub.f32 1.0, %v6701
      %v6703 = vmul.f32 %v6700, %v6702
      %v6704 = vadd.f32 %v6700, %v6703
      %vm6705 = vweird.f32 %v6544
      %vm6706 = vweird.f32 %v6700
      %vm6707 = vmor %vm6705, %vm6706
      %v6708 = vsel %vm6707, %v6700, %v6704
      %v6709 = vand.u32 2147483647, %v6544
      %vm6710 = vcmp.eq.f32.partialorder %v6709, 8.507059e+37
      %v6711 = vand.u32 %v6544, 2147483648
      %v6712 = vor.u32 1.1754944e-38, %v6711
      %v6713 = vsel %vm6710, %v6712, %v6708
      %v6714 = vmul.f32 1.0, %v6713
      %v6715 = vrcp.pop %v6545
      %v6716 = vmul.f32 %v6545, %v6715
      %v6717 = vsub.f32 1.0, %v6716
      %v6718 = vmul.f32 %v6715, %v6717
      %v6719 = vadd.f32 %v6715, %v6718
      %vm6720 = vweird.f32 %v6545
      %vm6721 = vweird.f32 %v6715
      %vm6722 = vmor %vm6720, %vm6721
      %v6723 = vsel %vm6722, %v6715, %v6719
      %v6724 = vand.u32 2147483647, %v6545
      %vm6725 = vcmp.eq.f32.partialorder %v6724, 8.507059e+37
      %v6726 = vand.u32 %v6545, 2147483648
      %v6727 = vor.u32 1.1754944e-38, %v6726
      %v6728 = vsel %vm6725, %v6727, %v6723
      %v6729 = vmul.f32 1.0, %v6728
      %v6730 = vrcp.pop %v6546
      %v6731 = vmul.f32 %v6546, %v6730
      %v6732 = vsub.f32 1.0, %v6731
      %v6733 = vmul.f32 %v6730, %v6732
      %v6734 = vadd.f32 %v6730, %v6733
      %vm6735 = vweird.f32 %v6546
      %vm6736 = vweird.f32 %v6730
      %vm6737 = vmor %vm6735, %vm6736
      %v6738 = vsel %vm6737, %v6730, %v6734
      %v6739 = vand.u32 2147483647, %v6546
      %vm6740 = vcmp.eq.f32.partialorder %v6739, 8.507059e+37
      %v6741 = vand.u32 %v6546, 2147483648
      %v6742 = vor.u32 1.1754944e-38, %v6741
      %v6743 = vsel %vm6740, %v6742, %v6738
      %v6744 = vmul.f32 1.0, %v6743
      %v6745 = vrcp.pop %v6547
      %v6746 = vmul.f32 %v6547, %v6745
      %v6747 = vsub.f32 1.0, %v6746
      %v6748 = vmul.f32 %v6745, %v6747
      %v6749 = vadd.f32 %v6745, %v6748
      %vm6750 = vweird.f32 %v6547
      %vm6751 = vweird.f32 %v6745
      %vm6752 = vmor %vm6750, %vm6751
      %v6753 = vsel %vm6752, %v6745, %v6749
      %v6754 = vand.u32 2147483647, %v6547
      %vm6755 = vcmp.eq.f32.partialorder %v6754, 8.507059e+37
      %v6756 = vand.u32 %v6547, 2147483648
      %v6757 = vor.u32 1.1754944e-38, %v6756
      %v6758 = vsel %vm6755, %v6757, %v6753
      %v6759 = vmul.f32 1.0, %v6758
      %v6760 = vrcp.pop %v6548
      %v6761 = vmul.f32 %v6548, %v6760
      %v6762 = vsub.f32 1.0, %v6761
      %v6763 = vmul.f32 %v6760, %v6762
      %v6764 = vadd.f32 %v6760, %v6763
      %vm6765 = vweird.f32 %v6548
      %vm6766 = vweird.f32 %v6760
      %vm6767 = vmor %vm6765, %vm6766
      %v6768 = vsel %vm6767, %v6760, %v6764
      %v6769 = vand.u32 2147483647, %v6548
      %vm6770 = vcmp.eq.f32.partialorder %v6769, 8.507059e+37
      %v6771 = vand.u32 %v6548, 2147483648
      %v6772 = vor.u32 1.1754944e-38, %v6771
      %v6773 = vsel %vm6770, %v6772, %v6768
      %v6774 = vmul.f32 1.0, %v6773
      %v6775 = vrcp.pop %v6549
      %v6776 = vmul.f32 %v6549, %v6775
      %v6777 = vsub.f32 1.0, %v6776
      %v6778 = vmul.f32 %v6775, %v6777
      %v6779 = vadd.f32 %v6775, %v6778
      %vm6780 = vweird.f32 %v6549
      %vm6781 = vweird.f32 %v6775
      %vm6782 = vmor %vm6780, %vm6781
      %v6783 = vsel %vm6782, %v6775, %v6779
      %v6784 = vand.u32 2147483647, %v6549
      %vm6785 = vcmp.eq.f32.partialorder %v6784, 8.507059e+37
      %v6786 = vand.u32 %v6549, 2147483648
      %v6787 = vor.u32 1.1754944e-38, %v6786
      %v6788 = vsel %vm6785, %v6787, %v6783
      %v6789 = vmul.f32 1.0, %v6788
      %v6790 = vmul.f32 %v6470, %v6564
      %v6791 = vmul.f32 %v6471, %v6579
      %v6792 = vmul.f32 %v6472, %v6594
      %v6793 = vmul.f32 %v6473, %v6609
      %v6794 = vmul.f32 %v6474, %v6624
      %v6795 = vmul.f32 %v6475, %v6639
      %v6796 = vmul.f32 %v6476, %v6654
      %v6797 = vmul.f32 %v6477, %v6669
      %v6798 = vmul.f32 %v6478, %v6684
      %v6799 = vmul.f32 %v6479, %v6699
      %v6800 = vmul.f32 %v6480, %v6714
      %v6801 = vmul.f32 %v6481, %v6729
      %v6802 = vmul.f32 %v6482, %v6744
      %v6803 = vmul.f32 %v6483, %v6759
      %v6804 = vmul.f32 %v6484, %v6774
      %v6805 = vmul.f32 %v6485, %v6789
      %v6806 = vadd.f32 %v458, %v6790
      %v6807 = vadd.f32 %v459, %v6791
      %v6808 = vadd.f32 %v460, %v6792
      %v6809 = vadd.f32 %v461, %v6793
      %v6810 = vadd.f32 %v462, %v6794
      %v6811 = vadd.f32 %v463, %v6795
      %v6812 = vadd.f32 %v464, %v6796
      %v6813 = vadd.f32 %v465, %v6797
      %v6814 = vadd.f32 %v466, %v6798
      %v6815 = vadd.f32 %v467, %v6799
      %v6816 = vadd.f32 %v468, %v6800
      %v6817 = vadd.f32 %v469, %v6801
      %v6818 = vadd.f32 %v470, %v6802
      %v6819 = vadd.f32 %v471, %v6803
      %v6820 = vadd.f32 %v472, %v6804
      %v6821 = vadd.f32 %v473, %v6805
      %6822 = vst.msk [vmem:[%s455] sm:$0xff] %vm1943, %v6806
      %6823 = vst.msk [vmem:[%s455 + $0x8] sm:$0xff] %vm1943, %v6807
      %6824 = vst.msk [vmem:[%s455 + $0x10] sm:$0xff] %vm1943, %v6808
      %6825 = vst.msk [vmem:[%s455 + $0x18] sm:$0xff] %vm1943, %v6809
      %6826 = vst.msk [vmem:[%s455 + $0x20] sm:$0xff] %vm1943, %v6810
      %6827 = vst.msk [vmem:[%s455 + $0x28] sm:$0xff] %vm1943, %v6811
      %6828 = vst.msk [vmem:[%s455 + $0x30] sm:$0xff] %vm1943, %v6812
      %6829 = vst.msk [vmem:[%s455 + $0x38] sm:$0xff] %vm1943, %v6813
      %6830 = vst.msk [vmem:[%s455 + $0x40] sm:$0xff] %vm1943, %v6814
      %6831 = vst.msk [vmem:[%s455 + $0x48] sm:$0xff] %vm1943, %v6815
      %6832 = vst.msk [vmem:[%s455 + $0x50] sm:$0xff] %vm1943, %v6816
      %6833 = vst.msk [vmem:[%s455 + $0x58] sm:$0xff] %vm1943, %v6817
      %6834 = vst.msk [vmem:[%s455 + $0x60] sm:$0xff] %vm1943, %v6818
      %6835 = vst.msk [vmem:[%s455 + $0x68] sm:$0xff] %vm1943, %v6819
      %6836 = vst.msk [vmem:[%s455 + $0x70] sm:$0xff] %vm1943, %v6820
      %6837 = vst.msk [vmem:[%s455 + $0x78] sm:$0xff] %vm1943, %v6821
      %s6838 = smul.u32 8, %s23
      %p6839 = scmp.lt.s32.totalorder %s22, 1
      %s6840 = scalar_select %p6839, %s22, 1
      %p6841 = scmp.lt.s32.totalorder %s6838, 15
      %s6842 = scalar_select %p6841, %s6838, 15
      %s6843 = smul.addr %s6842, 2
      %s6844 = smul.addr %s6840, 32
      %s6845 = sadd.s32 %s6843, %s6844
      %s6846 = smul.addr %s6845, 8
      %s6847 = scalar_lea.vmem %s7, %s6846
      // Predicated region
      $region49: #{cbl_n_forward.2} parent=47 // pred_check
        %p6848 = pneg %p234
      $region50: #{cbl_n_forward.2} parent=47 // pred_check_branch
        %6850 = sbr.rel (%p6848) target = $region52
      $region51: #{cbl_n_forward.2} parent=47 // pred_region
        %s6851 = smul.u32 8, %s23
      $region52: #{cbl_n_forward.2} parent=47 // pred_fallthru
        _
    $region48: #{cbl_n_forward.2} parent=5 // pred_fallthru
      _
    %p6852 = scmp.le.s32.totalorder 2, %s13
    // Predicated region
    $region53: #{cbl_n_forward.2} parent=5 // pred_check
      %p6853 = pneg %p6852
    $region54: #{cbl_n_forward.2} parent=5 // pred_check_branch
      %6855 = sbr.rel (%p6853) target = $region56
    $region55: #{cbl_n_forward.2} parent=5 // pred_region
      %s6856 = ssub.s32 %s13, 2
      // Predicated region
      $region57: #{cbl_n_forward.2} parent=55 // pred_check
        %p6857 = pneg %p240
      $region58: #{cbl_n_forward.2} parent=55 // pred_check_branch
        %6859 = sbr.rel (%p6857) target = $region60
      $region59: #{cbl_n_forward.2} parent=55 // pred_region
        %s6860 = smul.u32 8, %s25
        %p6861 = scmp.lt.s32.totalorder %s24, 1
        %s6862 = scalar_select %p6861, %s24, 1
        %p6863 = scmp.lt.s32.totalorder %s6860, 15
        %s6864 = scalar_select %p6863, %s6860, 15
        %s6865 = smul.addr %s6864, 2
        %s6866 = smul.addr %s6862, 32
        %s6867 = sadd.s32 %s6865, %s6866
        %s6868 = smul.addr %s6867, 8
        %s6869 = scalar_lea.vmem %s7, %s6868
      $region60: #{cbl_n_forward.2} parent=55 // pred_fallthru
        _
    $region56: #{cbl_n_forward.2} parent=5 // pred_fallthru
      _
  $region6: #{cbl_n_forward.2} parent=0 // loop_footer
    %s17 = sadd.s32 1, %s13
  $region7: #{cbl_n_forward.2} parent=0 // loop_footer_branch
    %12 = sbr.rel target = $region3
  $region8: #{cbl_n_forward.2} parent=0 // loop_exit
    _

</llo_original>
